<compile_context>
chip_gen: v7x
topology: tpu7x:2x2x1
jax: 0.10.0
libtpu: 0.0.40
codegen_flags: <defaults>
</compile_context>

<pallas_src>
import functools

import jax
import jax.numpy as jnp
import numpy as np
from jax.experimental import pallas as pl
from jax.experimental.pallas import tpu as pltpu

GROUPS = 32
LANES = 128


def _spatial_weight_kernel(mean_mask_ref, fold_mask_ref, w_ref, b_ref,
                           x1_ref, x2_ref, x3_ref, o_ref, *, hw):
    # mean_mask_ref : (128,128) f32, [p,j] = 1/hw if p,j in same hw-lane segment
    # fold_mask_ref : (128,128) f32, [p,j] = 1   if p ≡ j (mod hw)
    # w_ref, b_ref  : (3, gt, 1) f32 per-branch, per-group affine
    # x*_ref, o_ref : (bt, gt, sub, 128) lane-packed tiles
    bt, gt, sub, lanes = x1_ref.shape
    cpr = lanes // hw                          # channels packed per 128-lane row
    inv_lanes = 1.0 / lanes                    # spatial mean over duplicated lanes
    inv_nm1 = 1.0 / (cpr * max(hw - 1, 1))     # torch.std ddof=1, duplicated lanes
    # TODO(synk): hw == 1 would make torch.std(ddof=1) NaN; guarded here instead
    # (irrelevant for the module's real 8x8 maps).

    mean_mask = mean_mask_ref[...]
    fold_mask = fold_mask_ref[...]

    def gate(x, idx):
        # Per-channel spatial mean, broadcast in place over each hw-lane segment,
        # via a constant mask matmul on the otherwise idle MXU.
        m = jnp.dot(x.reshape(bt * gt * sub, lanes), mean_mask,
                    preferred_element_type=jnp.float32,
                    precision=jax.lax.Precision.HIGHEST)
        m = m.reshape(bt, gt, sub, lanes)
        # Channel-weighted spatial map: sum over the group's channels (sublanes).
        part = jnp.sum(x * m, axis=2)                                # (bt, gt, 128)
        # Fold the cpr lane segments: every lane then holds the full channel sum
        # for its spatial position (duplicated across segments -> stays lane dense).
        xn = jnp.dot(part.reshape(bt * gt, lanes), fold_mask,
                     preferred_element_type=jnp.float32,
                     precision=jax.lax.Precision.HIGHEST)
        xn = xn.reshape(bt, gt, lanes)
        # Normalize over spatial (unbiased std + eps), per-group affine, sigmoid.
        mu = jnp.sum(xn, axis=-1, keepdims=True) * inv_lanes         # (bt, gt, 1)
        t = xn - mu
        var = jnp.sum(t * t, axis=-1, keepdims=True) * inv_nm1       # (bt, gt, 1)
        t = t * pl.reciprocal(jnp.sqrt(var) + 1e-5, approx=False)
        t = t * w_ref[idx] + b_ref[idx]                              # (gt,1) bcast
        return jax.nn.sigmoid(t)                                     # (bt, gt, 128)

    # Loop over branches so only one branch's full-tile temporaries are live.
    xsum = None
    s = None
    for idx, ref in enumerate((x1_ref, x2_ref, x3_ref)):
        x = ref[...].astype(jnp.float32)
        g = gate(x, idx)
        xsum = x if xsum is None else xsum + x
        s = g if s is None else s + g

    # (x1+x2+x3) * (f1+f2+f3)/9 : fold the 1/9 into the 16x-smaller gate tensor.
    s = s * (1.0 / 9.0)
    o_ref[...] = (xsum * s[:, :, None, :]).astype(o_ref.dtype)


def _pick_batch_tile(b, bytes_per_image, target_bytes):
    # Largest divisor of b whose per-array tile stays under the budget
    # (keeps 3 inputs + 1 output, double-buffered, far below v7x's 64 MiB VMEM).
    bt = max(1, min(b, target_bytes // max(bytes_per_image, 1)))
    while b % bt:
        bt -= 1
    return bt


@jax.jit
def spatial_weight_forward(x1, x2, x3, weights, biases):
    """weights, biases: (3, GROUPS) float32 — one row per Spatialweight module."""
    b, c, h, w = x1.shape
    assert c % GROUPS == 0
    cpg = c // GROUPS
    hw = h * w
    assert hw <= LANES and LANES % hw == 0, "spatial size must pack into 128 lanes"
    cpr = LANES // hw                       # channels per packed 128-lane row
    assert cpg % cpr == 0, "channels-per-group must pack evenly into 128 lanes"
    sub = cpg // cpr                        # packed sublane rows per group
    assert sub % 8 == 0, "packed sublane count must be a multiple of 8"

    # Free, contiguous NCHW view: (b, GROUPS, sub, 128) lane-packed layout.
    xs = [x.reshape(b, GROUPS, sub, LANES) for x in (x1, x2, x3)]
    w3 = weights.astype(jnp.float32).reshape(3, GROUPS, 1)
    b3 = biases.astype(jnp.float32).reshape(3, GROUPS, 1)

    # Constant lane masks (fetched once: constant index_map -> no per-step DMA).
    lane = np.arange(LANES)
    seg = lane // hw
    mean_mask = jnp.asarray((seg[:, None] == seg[None, :]).astype(np.float32) / hw)
    fold_mask = jnp.asarray(
        ((lane[:, None] % hw) == (lane[None, :] % hw)).astype(np.float32))

    gt = 8                                  # 4 group steps -> grid >= 4 always
    itemsize = jnp.dtype(x1.dtype).itemsize
    per_image = gt * sub * LANES * itemsize
    bt = _pick_batch_tile(b, per_image, target_bytes=2 * 1024 * 1024)

    x_spec = pl.BlockSpec((bt, gt, sub, LANES), lambda i, j: (i, j, 0, 0))
    m_spec = pl.BlockSpec((LANES, LANES), lambda i, j: (0, 0))
    p_spec = pl.BlockSpec((3, gt, 1), lambda i, j: (0, j, 0))

    out = pl.pallas_call(
        functools.partial(_spatial_weight_kernel, hw=hw),
        grid=(b // bt, GROUPS // gt),
        in_specs=[m_spec, m_spec, p_spec, p_spec, x_spec, x_spec, x_spec],
        out_specs=x_spec,
        out_shape=jax.ShapeDtypeStruct((b, GROUPS, sub, LANES), x1.dtype),
        compiler_params=pltpu.CompilerParams(
            dimension_semantics=("parallel", "parallel"),
            vmem_limit_bytes=48 * 1024 * 1024),
    )(mean_mask, fold_mask, w3, b3, *xs)

    return out.reshape(b, c, h, w)


# ---------------- pure-JAX reference (mirrors the PyTorch code) ----------------
def _spatialweight_ref(x, w_g, b_g):
    b, c, h, w = x.shape
    xg = x.reshape(b * GROUPS, c // GROUPS, h, w)
    avg = xg.mean(axis=(2, 3), keepdims=True)
    xn = (xg * avg).sum(axis=1, keepdims=True)
    t = xn.reshape(b * GROUPS, -1)
    t = t - t.mean(axis=1, keepdims=True)
    std = jnp.std(t, axis=1, keepdims=True, ddof=1) + 1e-5
    t = t / std
    t = t.reshape(b, GROUPS, h, w)
    t = t * w_g.reshape(1, GROUPS, 1, 1) + b_g.reshape(1, GROUPS, 1, 1)
    t = t.reshape(b * GROUPS, 1, h, w)
    return jax.nn.sigmoid(t)


def _spatial_weight_ref(x1, x2, x3, weights, biases):
    b, c, h, w = x1.shape
    f1 = _spatialweight_ref(x1, weights[0], biases[0])
    f2 = _spatialweight_ref(x2, weights[1], biases[1])
    f3 = _spatialweight_ref(x3, weights[2], biases[2])
    f_en = (f1 + f2 + f3) / 3.0
    o1 = x1.reshape(b * GROUPS, -1, h, w)
    o2 = x2.reshape(b * GROUPS, -1, h, w)
    o3 = x3.reshape(b * GROUPS, -1, h, w)
    v = (o1 + o2 + o3) * f_en / 3.0
    return v.reshape(b, c, h, w)


if __name__ == "__main__":
    key = jax.random.PRNGKey(0)
    k1, k2, k3, kw, kb = jax.random.split(key, 5)

    # Shapes matching the module's real call site in VGG: three (b, 512, 8, 8)
    # feature maps (spatial_weight(H=8, W=8, M=3)) -> cpg = 16, hw = 64.
    b, c, h, w = 2, 512, 8, 8
    x1 = jax.random.normal(k1, (b, c, h, w), dtype=jnp.float32)
    x2 = jax.random.normal(k2, (b, c, h, w), dtype=jnp.float32)
    x3 = jax.random.normal(k3, (b, c, h, w), dtype=jnp.float32)

    # Module __init__ uses weight=zeros, bias=ones; perturb so the
    # normalization/affine path is actually exercised.
    weights = 0.1 * jax.random.normal(kw, (3, GROUPS), dtype=jnp.float32)
    biases = 1.0 + 0.1 * jax.random.normal(kb, (3, GROUPS), dtype=jnp.float32)

    out = spatial_weight_forward(x1, x2, x3, weights, biases)
    out = jax.block_until_ready(out)

    ref = _spatial_weight_ref(x1, x2, x3, weights, biases)
    np.testing.assert_allclose(np.asarray(out), np.asarray(ref),
                               rtol=5e-5, atol=5e-5)
    print("KERNEL_OK")
</pallas_src>

<mosaic_0001>
module attributes {stable_mosaic.version = 11 : i64} {
  func.func @_spatial_weight_kernel(%arg0: i32, %arg1: i32, %arg2: memref<128x128xf32, #tpu.memory_space<vmem>>, %arg3: memref<128x128xf32, #tpu.memory_space<vmem>>, %arg4: memref<3x8x1xf32, #tpu.memory_space<vmem>>, %arg5: memref<3x8x1xf32, #tpu.memory_space<vmem>>, %arg6: memref<2x8x8x128xf32, #tpu.memory_space<vmem>>, %arg7: memref<2x8x8x128xf32, #tpu.memory_space<vmem>>, %arg8: memref<2x8x8x128xf32, #tpu.memory_space<vmem>>, %arg9: memref<2x8x8x128xf32, #tpu.memory_space<vmem>>) attributes {dimension_semantics = [#tpu.dimension_semantics<parallel>, #tpu.dimension_semantics<parallel>], iteration_bounds = array<i64: 1, 4>, scalar_prefetch = 0 : i64, scratch_operands = 0 : i64, tpu.core_type = #tpu.core_type<tc>, window_params = [{pipeline_mode = #tpu.pipeline_mode<synchronous>, transform_indices = @transform_0, window_bounds = array<i64: 128, 128>}, {pipeline_mode = #tpu.pipeline_mode<synchronous>, transform_indices = @transform_1, window_bounds = array<i64: 128, 128>}, {transform_indices = @transform_2, window_bounds = array<i64: 3, 8, 1>}, {transform_indices = @transform_3, window_bounds = array<i64: 3, 8, 1>}, {transform_indices = @transform_4, window_bounds = array<i64: 2, 8, 8, 128>}, {transform_indices = @transform_5, window_bounds = array<i64: 2, 8, 8, 128>}, {transform_indices = @transform_6, window_bounds = array<i64: 2, 8, 8, 128>}, {transform_indices = @transform_7, window_bounds = array<i64: 2, 8, 8, 128>}]} {
    %c0 = arith.constant 0 : index
    %c0_0 = arith.constant 0 : index
    %0 = vector.load %arg2[%c0, %c0_0] : memref<128x128xf32, #tpu.memory_space<vmem>>, vector<128x128xf32>
    %c0_1 = arith.constant 0 : index
    %c0_2 = arith.constant 0 : index
    %1 = vector.load %arg3[%c0_1, %c0_2] : memref<128x128xf32, #tpu.memory_space<vmem>>, vector<128x128xf32>
    %c0_3 = arith.constant 0 : index
    %c0_4 = arith.constant 0 : index
    %c0_5 = arith.constant 0 : index
    %c0_6 = arith.constant 0 : index
    %2 = vector.load %arg6[%c0_3, %c0_4, %c0_5, %c0_6] : memref<2x8x8x128xf32, #tpu.memory_space<vmem>>, vector<2x8x8x128xf32>
    %3 = vector.shape_cast %2 : vector<2x8x8x128xf32> to vector<128x128xf32>
    %cst = arith.constant dense<0.000000e+00> : vector<128x128xf32>
    %4 = tpu.matmul %3, %0, %cst {dimension_numbers = #tpu.dot_dimension_numbers<[1], [0], [0], [1], [0, 0, 1, 1], [], []>, precision = #tpu.contract_precision<fp32>} : vector<128x128xf32>, vector<128x128xf32>, vector<128x128xf32> -> vector<128x128xf32>
    %5 = vector.shape_cast %4 : vector<128x128xf32> to vector<2x8x8x128xf32>
    %6 = arith.mulf %2, %5 : vector<2x8x8x128xf32>
    %cst_7 = arith.constant dense<0.000000e+00> : vector<2x8x128xf32>
    %7 = vector.multi_reduction <add>, %6, %cst_7 [2] : vector<2x8x8x128xf32> to vector<2x8x128xf32>
    %8 = vector.shape_cast %7 : vector<2x8x128xf32> to vector<16x128xf32>
    %cst_8 = arith.constant dense<0.000000e+00> : vector<16x128xf32>
    %9 = tpu.matmul %8, %1, %cst_8 {dimension_numbers = #tpu.dot_dimension_numbers<[1], [0], [0], [1], [0, 0, 1, 1], [], []>, precision = #tpu.contract_precision<fp32>} : vector<16x128xf32>, vector<128x128xf32>, vector<16x128xf32> -> vector<16x128xf32>
    %10 = vector.shape_cast %9 : vector<16x128xf32> to vector<2x8x128xf32>
    %cst_9 = arith.constant dense<0.000000e+00> : vector<2x8xf32>
    %11 = vector.multi_reduction <add>, %10, %cst_9 [2] : vector<2x8x128xf32> to vector<2x8xf32>
    %12 = vector.shape_cast %11 : vector<2x8xf32> to vector<2x8x1xf32>
    %cst_10 = arith.constant 7.812500e-03 : f32
    %13 = vector.broadcast %cst_10 : f32 to vector<2x8x1xf32>
    %14 = arith.mulf %12, %13 : vector<2x8x1xf32>
    %15 = vector.broadcast %14 : vector<2x8x1xf32> to vector<2x8x128xf32>
    %16 = arith.subf %10, %15 : vector<2x8x128xf32>
    %17 = arith.mulf %16, %16 : vector<2x8x128xf32>
    %cst_11 = arith.constant dense<0.000000e+00> : vector<2x8xf32>
    %18 = vector.multi_reduction <add>, %17, %cst_11 [2] : vector<2x8x128xf32> to vector<2x8xf32>
    %19 = vector.shape_cast %18 : vector<2x8xf32> to vector<2x8x1xf32>
    %cst_12 = arith.constant 0.00793650839 : f32
    %20 = vector.broadcast %cst_12 : f32 to vector<2x8x1xf32>
    %21 = arith.mulf %19, %20 : vector<2x8x1xf32>
    %22 = math.sqrt %21 : vector<2x8x1xf32>
    %cst_13 = arith.constant 9.99999974E-6 : f32
    %23 = vector.broadcast %cst_13 : f32 to vector<2x8x1xf32>
    %24 = arith.addf %22, %23 : vector<2x8x1xf32>
    %25 = tpu.reciprocal %24 : vector<2x8x1xf32> -> vector<2x8x1xf32>
    %26 = vector.broadcast %25 : vector<2x8x1xf32> to vector<2x8x128xf32>
    %27 = arith.mulf %16, %26 : vector<2x8x128xf32>
    %c0_14 = arith.constant 0 : index
    %c0_15 = arith.constant 0 : index
    %c0_16 = arith.constant 0 : index
    %28 = vector.load %arg4[%c0_14, %c0_15, %c0_16] : memref<3x8x1xf32, #tpu.memory_space<vmem>>, vector<1x8x1xf32>
    %29 = vector.shape_cast %28 : vector<1x8x1xf32> to vector<8x1xf32>
    %30 = vector.shape_cast %29 : vector<8x1xf32> to vector<1x8x1xf32>
    %31 = vector.broadcast %30 : vector<1x8x1xf32> to vector<2x8x128xf32>
    %32 = arith.mulf %27, %31 : vector<2x8x128xf32>
    %c0_17 = arith.constant 0 : index
    %c0_18 = arith.constant 0 : index
    %c0_19 = arith.constant 0 : index
    %33 = vector.load %arg5[%c0_17, %c0_18, %c0_19] : memref<3x8x1xf32, #tpu.memory_space<vmem>>, vector<1x8x1xf32>
    %34 = vector.shape_cast %33 : vector<1x8x1xf32> to vector<8x1xf32>
    %35 = vector.shape_cast %34 : vector<8x1xf32> to vector<1x8x1xf32>
    %36 = vector.broadcast %35 : vector<1x8x1xf32> to vector<2x8x128xf32>
    %37 = arith.addf %32, %36 : vector<2x8x128xf32>
    %38 = arith.negf %37 : vector<2x8x128xf32>
    %39 = math.exp %38 : vector<2x8x128xf32>
    %cst_20 = arith.constant 1.000000e+00 : f32
    %40 = vector.broadcast %cst_20 : f32 to vector<2x8x128xf32>
    %41 = arith.addf %40, %39 : vector<2x8x128xf32>
    %42 = arith.divf %40, %41 : vector<2x8x128xf32>
    %c0_21 = arith.constant 0 : index
    %c0_22 = arith.constant 0 : index
    %c0_23 = arith.constant 0 : index
    %c0_24 = arith.constant 0 : index
    %43 = vector.load %arg7[%c0_21, %c0_22, %c0_23, %c0_24] : memref<2x8x8x128xf32, #tpu.memory_space<vmem>>, vector<2x8x8x128xf32>
    %44 = vector.shape_cast %43 : vector<2x8x8x128xf32> to vector<128x128xf32>
    %cst_25 = arith.constant dense<0.000000e+00> : vector<128x128xf32>
    %45 = tpu.matmul %44, %0, %cst_25 {dimension_numbers = #tpu.dot_dimension_numbers<[1], [0], [0], [1], [0, 0, 1, 1], [], []>, precision = #tpu.contract_precision<fp32>} : vector<128x128xf32>, vector<128x128xf32>, vector<128x128xf32> -> vector<128x128xf32>
    %46 = vector.shape_cast %45 : vector<128x128xf32> to vector<2x8x8x128xf32>
    %47 = arith.mulf %43, %46 : vector<2x8x8x128xf32>
    %cst_26 = arith.constant dense<0.000000e+00> : vector<2x8x128xf32>
    %48 = vector.multi_reduction <add>, %47, %cst_26 [2] : vector<2x8x8x128xf32> to vector<2x8x128xf32>
    %49 = vector.shape_cast %48 : vector<2x8x128xf32> to vector<16x128xf32>
    %cst_27 = arith.constant dense<0.000000e+00> : vector<16x128xf32>
    %50 = tpu.matmul %49, %1, %cst_27 {dimension_numbers = #tpu.dot_dimension_numbers<[1], [0], [0], [1], [0, 0, 1, 1], [], []>, precision = #tpu.contract_precision<fp32>} : vector<16x128xf32>, vector<128x128xf32>, vector<16x128xf32> -> vector<16x128xf32>
    %51 = vector.shape_cast %50 : vector<16x128xf32> to vector<2x8x128xf32>
    %cst_28 = arith.constant dense<0.000000e+00> : vector<2x8xf32>
    %52 = vector.multi_reduction <add>, %51, %cst_28 [2] : vector<2x8x128xf32> to vector<2x8xf32>
    %53 = vector.shape_cast %52 : vector<2x8xf32> to vector<2x8x1xf32>
    %cst_29 = arith.constant 7.812500e-03 : f32
    %54 = vector.broadcast %cst_29 : f32 to vector<2x8x1xf32>
    %55 = arith.mulf %53, %54 : vector<2x8x1xf32>
    %56 = vector.broadcast %55 : vector<2x8x1xf32> to vector<2x8x128xf32>
    %57 = arith.subf %51, %56 : vector<2x8x128xf32>
    %58 = arith.mulf %57, %57 : vector<2x8x128xf32>
    %cst_30 = arith.constant dense<0.000000e+00> : vector<2x8xf32>
    %59 = vector.multi_reduction <add>, %58, %cst_30 [2] : vector<2x8x128xf32> to vector<2x8xf32>
    %60 = vector.shape_cast %59 : vector<2x8xf32> to vector<2x8x1xf32>
    %cst_31 = arith.constant 0.00793650839 : f32
    %61 = vector.broadcast %cst_31 : f32 to vector<2x8x1xf32>
    %62 = arith.mulf %60, %61 : vector<2x8x1xf32>
    %63 = math.sqrt %62 : vector<2x8x1xf32>
    %cst_32 = arith.constant 9.99999974E-6 : f32
    %64 = vector.broadcast %cst_32 : f32 to vector<2x8x1xf32>
    %65 = arith.addf %63, %64 : vector<2x8x1xf32>
    %66 = tpu.reciprocal %65 : vector<2x8x1xf32> -> vector<2x8x1xf32>
    %67 = vector.broadcast %66 : vector<2x8x1xf32> to vector<2x8x128xf32>
    %68 = arith.mulf %57, %67 : vector<2x8x128xf32>
    %c1 = arith.constant 1 : index
    %c0_33 = arith.constant 0 : index
    %c0_34 = arith.constant 0 : index
    %69 = vector.load %arg4[%c1, %c0_33, %c0_34] : memref<3x8x1xf32, #tpu.memory_space<vmem>>, vector<1x8x1xf32>
    %70 = vector.shape_cast %69 : vector<1x8x1xf32> to vector<8x1xf32>
    %71 = vector.shape_cast %70 : vector<8x1xf32> to vector<1x8x1xf32>
    %72 = vector.broadcast %71 : vector<1x8x1xf32> to vector<2x8x128xf32>
    %73 = arith.mulf %68, %72 : vector<2x8x128xf32>
    %c1_35 = arith.constant 1 : index
    %c0_36 = arith.constant 0 : index
    %c0_37 = arith.constant 0 : index
    %74 = vector.load %arg5[%c1_35, %c0_36, %c0_37] : memref<3x8x1xf32, #tpu.memory_space<vmem>>, vector<1x8x1xf32>
    %75 = vector.shape_cast %74 : vector<1x8x1xf32> to vector<8x1xf32>
    %76 = vector.shape_cast %75 : vector<8x1xf32> to vector<1x8x1xf32>
    %77 = vector.broadcast %76 : vector<1x8x1xf32> to vector<2x8x128xf32>
    %78 = arith.addf %73, %77 : vector<2x8x128xf32>
    %79 = arith.negf %78 : vector<2x8x128xf32>
    %80 = math.exp %79 : vector<2x8x128xf32>
    %cst_38 = arith.constant 1.000000e+00 : f32
    %81 = vector.broadcast %cst_38 : f32 to vector<2x8x128xf32>
    %82 = arith.addf %81, %80 : vector<2x8x128xf32>
    %83 = arith.divf %81, %82 : vector<2x8x128xf32>
    %84 = arith.addf %2, %43 : vector<2x8x8x128xf32>
    %85 = arith.addf %42, %83 : vector<2x8x128xf32>
    %c0_39 = arith.constant 0 : index
    %c0_40 = arith.constant 0 : index
    %c0_41 = arith.constant 0 : index
    %c0_42 = arith.constant 0 : index
    %86 = vector.load %arg8[%c0_39, %c0_40, %c0_41, %c0_42] : memref<2x8x8x128xf32, #tpu.memory_space<vmem>>, vector<2x8x8x128xf32>
    %87 = vector.shape_cast %86 : vector<2x8x8x128xf32> to vector<128x128xf32>
    %cst_43 = arith.constant dense<0.000000e+00> : vector<128x128xf32>
    %88 = tpu.matmul %87, %0, %cst_43 {dimension_numbers = #tpu.dot_dimension_numbers<[1], [0], [0], [1], [0, 0, 1, 1], [], []>, precision = #tpu.contract_precision<fp32>} : vector<128x128xf32>, vector<128x128xf32>, vector<128x128xf32> -> vector<128x128xf32>
    %89 = vector.shape_cast %88 : vector<128x128xf32> to vector<2x8x8x128xf32>
    %90 = arith.mulf %86, %89 : vector<2x8x8x128xf32>
    %cst_44 = arith.constant dense<0.000000e+00> : vector<2x8x128xf32>
    %91 = vector.multi_reduction <add>, %90, %cst_44 [2] : vector<2x8x8x128xf32> to vector<2x8x128xf32>
    %92 = vector.shape_cast %91 : vector<2x8x128xf32> to vector<16x128xf32>
    %cst_45 = arith.constant dense<0.000000e+00> : vector<16x128xf32>
    %93 = tpu.matmul %92, %1, %cst_45 {dimension_numbers = #tpu.dot_dimension_numbers<[1], [0], [0], [1], [0, 0, 1, 1], [], []>, precision = #tpu.contract_precision<fp32>} : vector<16x128xf32>, vector<128x128xf32>, vector<16x128xf32> -> vector<16x128xf32>
    %94 = vector.shape_cast %93 : vector<16x128xf32> to vector<2x8x128xf32>
    %cst_46 = arith.constant dense<0.000000e+00> : vector<2x8xf32>
    %95 = vector.multi_reduction <add>, %94, %cst_46 [2] : vector<2x8x128xf32> to vector<2x8xf32>
    %96 = vector.shape_cast %95 : vector<2x8xf32> to vector<2x8x1xf32>
    %cst_47 = arith.constant 7.812500e-03 : f32
    %97 = vector.broadcast %cst_47 : f32 to vector<2x8x1xf32>
    %98 = arith.mulf %96, %97 : vector<2x8x1xf32>
    %99 = vector.broadcast %98 : vector<2x8x1xf32> to vector<2x8x128xf32>
    %100 = arith.subf %94, %99 : vector<2x8x128xf32>
    %101 = arith.mulf %100, %100 : vector<2x8x128xf32>
    %cst_48 = arith.constant dense<0.000000e+00> : vector<2x8xf32>
    %102 = vector.multi_reduction <add>, %101, %cst_48 [2] : vector<2x8x128xf32> to vector<2x8xf32>
    %103 = vector.shape_cast %102 : vector<2x8xf32> to vector<2x8x1xf32>
    %cst_49 = arith.constant 0.00793650839 : f32
    %104 = vector.broadcast %cst_49 : f32 to vector<2x8x1xf32>
    %105 = arith.mulf %103, %104 : vector<2x8x1xf32>
    %106 = math.sqrt %105 : vector<2x8x1xf32>
    %cst_50 = arith.constant 9.99999974E-6 : f32
    %107 = vector.broadcast %cst_50 : f32 to vector<2x8x1xf32>
    %108 = arith.addf %106, %107 : vector<2x8x1xf32>
    %109 = tpu.reciprocal %108 : vector<2x8x1xf32> -> vector<2x8x1xf32>
    %110 = vector.broadcast %109 : vector<2x8x1xf32> to vector<2x8x128xf32>
    %111 = arith.mulf %100, %110 : vector<2x8x128xf32>
    %c2 = arith.constant 2 : index
    %c0_51 = arith.constant 0 : index
    %c0_52 = arith.constant 0 : index
    %112 = vector.load %arg4[%c2, %c0_51, %c0_52] : memref<3x8x1xf32, #tpu.memory_space<vmem>>, vector<1x8x1xf32>
    %113 = vector.shape_cast %112 : vector<1x8x1xf32> to vector<8x1xf32>
    %114 = vector.shape_cast %113 : vector<8x1xf32> to vector<1x8x1xf32>
    %115 = vector.broadcast %114 : vector<1x8x1xf32> to vector<2x8x128xf32>
    %116 = arith.mulf %111, %115 : vector<2x8x128xf32>
    %c2_53 = arith.constant 2 : index
    %c0_54 = arith.constant 0 : index
    %c0_55 = arith.constant 0 : index
    %117 = vector.load %arg5[%c2_53, %c0_54, %c0_55] : memref<3x8x1xf32, #tpu.memory_space<vmem>>, vector<1x8x1xf32>
    %118 = vector.shape_cast %117 : vector<1x8x1xf32> to vector<8x1xf32>
    %119 = vector.shape_cast %118 : vector<8x1xf32> to vector<1x8x1xf32>
    %120 = vector.broadcast %119 : vector<1x8x1xf32> to vector<2x8x128xf32>
    %121 = arith.addf %116, %120 : vector<2x8x128xf32>
    %122 = arith.negf %121 : vector<2x8x128xf32>
    %123 = math.exp %122 : vector<2x8x128xf32>
    %cst_56 = arith.constant 1.000000e+00 : f32
    %124 = vector.broadcast %cst_56 : f32 to vector<2x8x128xf32>
    %125 = arith.addf %124, %123 : vector<2x8x128xf32>
    %126 = arith.divf %124, %125 : vector<2x8x128xf32>
    %127 = arith.addf %84, %86 : vector<2x8x8x128xf32>
    %128 = arith.addf %85, %126 : vector<2x8x128xf32>
    %cst_57 = arith.constant 0.111111112 : f32
    %129 = vector.broadcast %cst_57 : f32 to vector<2x8x128xf32>
    %130 = arith.mulf %128, %129 : vector<2x8x128xf32>
    %131 = vector.shape_cast %130 : vector<2x8x128xf32> to vector<2x8x1x128xf32>
    %132 = vector.broadcast %131 : vector<2x8x1x128xf32> to vector<2x8x8x128xf32>
    %133 = arith.mulf %127, %132 : vector<2x8x8x128xf32>
    %c0_58 = arith.constant 0 : index
    %c0_59 = arith.constant 0 : index
    %c0_60 = arith.constant 0 : index
    %c0_61 = arith.constant 0 : index
    %134 = vector.load %arg9[%c0_58, %c0_59, %c0_60, %c0_61] : memref<2x8x8x128xf32, #tpu.memory_space<vmem>>, vector<2x8x8x128xf32>
    tpu.vector_store %arg9[%c0_58, %c0_59, %c0_60, %c0_61], %133 {strides = array<i32>} : memref<2x8x8x128xf32, #tpu.memory_space<vmem>>, vector<2x8x8x128xf32>,
    return
  }
  func.func @transform_0(%arg0: i32, %arg1: i32) -> (i32, i32) {
    %c0_i32 = arith.constant 0 : i32
    %c0_i32_0 = arith.constant 0 : i32
    %c0_i32_1 = arith.constant 0 : i32
    return %c0_i32, %c0_i32_0 : i32, i32
  }
  func.func @transform_1(%arg0: i32, %arg1: i32) -> (i32, i32) {
    %c0_i32 = arith.constant 0 : i32
    %c0_i32_0 = arith.constant 0 : i32
    %c0_i32_1 = arith.constant 0 : i32
    return %c0_i32, %c0_i32_0 : i32, i32
  }
  func.func @transform_2(%arg0: i32, %arg1: i32) -> (i32, i32, i32) {
    %c0_i32 = arith.constant 0 : i32
    %c0_i32_0 = arith.constant 0 : i32
    %c0_i32_1 = arith.constant 0 : i32
    return %c0_i32, %arg1, %c0_i32_0 : i32, i32, i32
  }
  func.func @transform_3(%arg0: i32, %arg1: i32) -> (i32, i32, i32) {
    %c0_i32 = arith.constant 0 : i32
    %c0_i32_0 = arith.constant 0 : i32
    %c0_i32_1 = arith.constant 0 : i32
    return %c0_i32, %arg1, %c0_i32_0 : i32, i32, i32
  }
  func.func @transform_4(%arg0: i32, %arg1: i32) -> (i32, i32, i32, i32) {
    %c0_i32 = arith.constant 0 : i32
    %c0_i32_0 = arith.constant 0 : i32
    %c0_i32_1 = arith.constant 0 : i32
    return %arg0, %arg1, %c0_i32, %c0_i32_0 : i32, i32, i32, i32
  }
  func.func @transform_5(%arg0: i32, %arg1: i32) -> (i32, i32, i32, i32) {
    %c0_i32 = arith.constant 0 : i32
    %c0_i32_0 = arith.constant 0 : i32
    %c0_i32_1 = arith.constant 0 : i32
    return %arg0, %arg1, %c0_i32, %c0_i32_0 : i32, i32, i32, i32
  }
  func.func @transform_6(%arg0: i32, %arg1: i32) -> (i32, i32, i32, i32) {
    %c0_i32 = arith.constant 0 : i32
    %c0_i32_0 = arith.constant 0 : i32
    %c0_i32_1 = arith.constant 0 : i32
    return %arg0, %arg1, %c0_i32, %c0_i32_0 : i32, i32, i32, i32
  }
  func.func @transform_7(%arg0: i32, %arg1: i32) -> (i32, i32, i32, i32) {
    %c0_i32 = arith.constant 0 : i32
    %c0_i32_0 = arith.constant 0 : i32
    %c0_i32_1 = arith.constant 0 : i32
    return %arg0, %arg1, %c0_i32, %c0_i32_0 : i32, i32, i32, i32
  }
}

</mosaic_0001>

<llo_original>
// kernel: spatial_weight_forward.1
$region0: #{spatial_weight_forward.1}
  #allocation0 [shape = 'u32[]', space=smem, size = 0x4, offset = 0x4, fixed_abs, tag = 'smem constant byte address 0x4 - core index']
  #allocation1 [shape = 'u32[144,128]{1,0:T(1,128)}', space=vmem, size = 0x12000, scoped, tag = 'internal scratch']
  %s0 = inlined_call_operand.vmem [shape: f32[128,128], index: 0, kind: input, shape index: {}]
  %s1 = inlined_call_operand.vmem [shape: f32[128,128], index: 1, kind: input, shape index: {}]
  %s2 = inlined_call_operand.vmem [shape: f32[3,32,1], index: 2, kind: input, shape index: {}]
  %s3 = inlined_call_operand.vmem [shape: f32[3,32,1], index: 3, kind: input, shape index: {}]
  %s4 = inlined_call_operand.vmem [shape: f32[2,32,8,128], index: 4, kind: input, shape index: {}]
  %s5 = inlined_call_operand.vmem [shape: f32[2,32,8,128], index: 5, kind: input, shape index: {}]
  %s6 = inlined_call_operand.vmem [shape: f32[2,32,8,128], index: 6, kind: input, shape index: {}]
  %s7 = inlined_call_operand.vmem [shape: f32[2,32,8,128], index: 7, kind: output, shape index: {}]
  %s8 = sld [smem:[#allocation0]]
  $region285: #{spatial_weight_forward.1} parent=0
    _
  %s10 = ssub.s32 1, %s8
  %s11 = scalar_select 0, %s10, %s8
  $region1: #{spatial_weight_forward.1} parent=0
    #allocation2 [shape = 'u8[24576]{0}', space=vmem, size = 0x6000, scoped, tag = 'input window, operand 2']
    #allocation3 [shape = 'u8[24576]{0}', space=vmem, size = 0x6000, scoped, tag = 'input window, operand 3']
    #allocation4 [shape = 'u8[131072]{0}', space=vmem, size = 0x20000, scoped, tag = 'input window, operand 4']
    #allocation5 [shape = 'u8[131072]{0}', space=vmem, size = 0x20000, scoped, tag = 'input window, operand 5']
    #allocation6 [shape = 'u8[131072]{0}', space=vmem, size = 0x20000, scoped, tag = 'input window, operand 6']
    #allocation7 [shape = 'u8[131072]{0}', space=vmem, size = 0x20000, scoped, tag = 'output window, operand 0']
    loop: start=0, step=1, limit=6
    $region2: #{spatial_weight_forward.1} parent=1 // loop_pre_header
      _
    $region3: #{spatial_weight_forward.1} parent=1 // loop_header
      %s13 = sphi 0, %s17
      %p14 = scmp.ge.s32.totalorder %s13, 6
      %s20 = sphi 0, %s32
      %s21 = sphi 0, %s28
      %s22 = sphi 0, %s20
      %s23 = sphi 0, %s21
      %s24 = sphi 0, %s22
      %s25 = sphi 0, %s23
      %s33 = sphi 0, %s33
      %s35 = sphi 0, %s33
      %s36 = sphi 0, %s35
      %s50 = sphi 0, %s36
      %s54 = sphi 0, %s54
      %s56 = sphi 0, %s54
      %s57 = sphi 0, %s56
      %s71 = sphi 0, %s57
      %s77 = sphi 0, %s79
      %s80 = sphi 0, %s77
      %s81 = sphi 0, %s80
      %s97 = sphi 0, %s81
      %s103 = sphi 0, %s105
      %s106 = sphi 0, %s103
      %s107 = sphi 0, %s106
      %s123 = sphi 0, %s107
      %s131 = sphi 0, %s133
      %s134 = sphi 0, %s131
      %s135 = sphi 0, %s134
      %s151 = sphi 0, %s135
      %s159 = sphi 0, %s161
      %s162 = sphi 0, %s159
      %s163 = sphi 0, %s162
      %s179 = sphi 0, %s163
      %s187 = sphi 0, %s189
      %s190 = sphi 0, %s187
      %s191 = sphi 0, %s190
      %s207 = sphi 0, %s191
      %s215 = sphi 0, %s217
      %s218 = sphi 0, %s215
      %s219 = sphi 0, %s218
      %s235 = sphi 0, %s219
    $region4: #{spatial_weight_forward.1} parent=1 // loop_header_branch
      %16 = sbr.rel (%p14) target = $region8
    $region5: #{spatial_weight_forward.1} parent=1 // loop_body
      %s18 = ssub.s32 %s13, 1
      %s19 = ssub.s32 %s13, 2
      %s26 = sadd.s32 1, %s21
      %p27 = scmp.ge.s32.totalorder %s26, 4
      %s28 = scalar_select %p27, 0, %s26
      %s29 = sadd.s32 1, %s20
      %s30 = scalar_select %p27, %s29, %s20
      %p31 = scmp.ge.s32.totalorder %s30, 1
      %s32 = scalar_select %p31, 0, %s30
      %s34 = sadd.s32 %s33, 1
      %p37 = scmp.eq.s32.totalorder %s13, 3
      %p38 = scmp.ne.s32.totalorder %s33, %s35
      %p39 = scmp.eq.s32.totalorder %s13, 0
      %p40 = por %p38, %p39
      %p41 = scmp.ne.s32.totalorder %s33, %s35
      %p42 = scmp.eq.s32.totalorder %s18, 3
      %p43 = por %p41, %p42
      %p44 = scmp.ne.s32.totalorder %s35, %s36
      %p45 = scmp.eq.s32.totalorder %s18, 0
      %p46 = por %p44, %p45
      %p47 = scmp.ne.s32.totalorder %s35, %s36
      %p48 = scmp.eq.s32.totalorder %s19, 3
      %p49 = por %p47, %p48
      %p51 = scmp.ne.s32.totalorder %s36, %s50
      %p52 = scmp.eq.s32.totalorder %s19, 0
      %p53 = por %p51, %p52
      %s55 = sadd.s32 %s54, 1
      %p58 = scmp.eq.s32.totalorder %s13, 3
      %p59 = scmp.ne.s32.totalorder %s54, %s56
      %p60 = scmp.eq.s32.totalorder %s13, 0
      %p61 = por %p59, %p60
      %p62 = scmp.ne.s32.totalorder %s54, %s56
      %p63 = scmp.eq.s32.totalorder %s18, 3
      %p64 = por %p62, %p63
      %p65 = scmp.ne.s32.totalorder %s56, %s57
      %p66 = scmp.eq.s32.totalorder %s18, 0
      %p67 = por %p65, %p66
      %p68 = scmp.ne.s32.totalorder %s56, %s57
      %p69 = scmp.eq.s32.totalorder %s19, 3
      %p70 = por %p68, %p69
      %p72 = scmp.ne.s32.totalorder %s57, %s71
      %p73 = scmp.eq.s32.totalorder %s19, 0
      %p74 = por %p72, %p73
      %s75 = ssub.s32 %s21, %s28
      %p76 = scmp.eq.s32.totalorder %s75, 0
      %s78 = sadd.s32 %s77, 1
      %s79 = scalar_select %p76, %s77, %s78
      %p82 = pneg %p76
      %p83 = scmp.eq.s32.totalorder %s13, 3
      %p84 = por %p82, %p83
      %p85 = scmp.ne.s32.totalorder %s77, %s80
      %p86 = scmp.eq.s32.totalorder %s13, 0
      %p87 = por %p85, %p86
      %p88 = scmp.ne.s32.totalorder %s77, %s80
      %p89 = scmp.eq.s32.totalorder %s18, 3
      %p90 = por %p88, %p89
      %p91 = scmp.ne.s32.totalorder %s80, %s81
      %p92 = scmp.eq.s32.totalorder %s18, 0
      %p93 = por %p91, %p92
      %p94 = scmp.ne.s32.totalorder %s80, %s81
      %p95 = scmp.eq.s32.totalorder %s19, 3
      %p96 = por %p94, %p95
      %p98 = scmp.ne.s32.totalorder %s81, %s97
      %p99 = scmp.eq.s32.totalorder %s19, 0
      %p100 = por %p98, %p99
      %s101 = ssub.s32 %s21, %s28
      %p102 = scmp.eq.s32.totalorder %s101, 0
      %s104 = sadd.s32 %s103, 1
      %s105 = scalar_select %p102, %s103, %s104
      %p108 = pneg %p102
      %p109 = scmp.eq.s32.totalorder %s13, 3
      %p110 = por %p108, %p109
      %p111 = scmp.ne.s32.totalorder %s103, %s106
      %p112 = scmp.eq.s32.totalorder %s13, 0
      %p113 = por %p111, %p112
      %p114 = scmp.ne.s32.totalorder %s103, %s106
      %p115 = scmp.eq.s32.totalorder %s18, 3
      %p116 = por %p114, %p115
      %p117 = scmp.ne.s32.totalorder %s106, %s107
      %p118 = scmp.eq.s32.totalorder %s18, 0
      %p119 = por %p117, %p118
      %p120 = scmp.ne.s32.totalorder %s106, %s107
      %p121 = scmp.eq.s32.totalorder %s19, 3
      %p122 = por %p120, %p121
      %p124 = scmp.ne.s32.totalorder %s107, %s123
      %p125 = scmp.eq.s32.totalorder %s19, 0
      %p126 = por %p124, %p125
      %s127 = ssub.s32 %s20, %s32
      %s128 = ssub.s32 %s21, %s28
      %s129 = sor.u32 %s127, %s128
      %p130 = scmp.eq.s32.totalorder %s129, 0
      %s132 = sadd.s32 %s131, 1
      %s133 = scalar_select %p130, %s131, %s132
      %p136 = pneg %p130
      %p137 = scmp.eq.s32.totalorder %s13, 3
      %p138 = por %p136, %p137
      %p139 = scmp.ne.s32.totalorder %s131, %s134
      %p140 = scmp.eq.s32.totalorder %s13, 0
      %p141 = por %p139, %p140
      %p142 = scmp.ne.s32.totalorder %s131, %s134
      %p143 = scmp.eq.s32.totalorder %s18, 3
      %p144 = por %p142, %p143
      %p145 = scmp.ne.s32.totalorder %s134, %s135
      %p146 = scmp.eq.s32.totalorder %s18, 0
      %p147 = por %p145, %p146
      %p148 = scmp.ne.s32.totalorder %s134, %s135
      %p149 = scmp.eq.s32.totalorder %s19, 3
      %p150 = por %p148, %p149
      %p152 = scmp.ne.s32.totalorder %s135, %s151
      %p153 = scmp.eq.s32.totalorder %s19, 0
      %p154 = por %p152, %p153
      %s155 = ssub.s32 %s20, %s32
      %s156 = ssub.s32 %s21, %s28
      %s157 = sor.u32 %s155, %s156
      %p158 = scmp.eq.s32.totalorder %s157, 0
      %s160 = sadd.s32 %s159, 1
      %s161 = scalar_select %p158, %s159, %s160
      %p164 = pneg %p158
      %p165 = scmp.eq.s32.totalorder %s13, 3
      %p166 = por %p164, %p165
      %p167 = scmp.ne.s32.totalorder %s159, %s162
      %p168 = scmp.eq.s32.totalorder %s13, 0
      %p169 = por %p167, %p168
      %p170 = scmp.ne.s32.totalorder %s159, %s162
      %p171 = scmp.eq.s32.totalorder %s18, 3
      %p172 = por %p170, %p171
      %p173 = scmp.ne.s32.totalorder %s162, %s163
      %p174 = scmp.eq.s32.totalorder %s18, 0
      %p175 = por %p173, %p174
      %p176 = scmp.ne.s32.totalorder %s162, %s163
      %p177 = scmp.eq.s32.totalorder %s19, 3
      %p178 = por %p176, %p177
      %p180 = scmp.ne.s32.totalorder %s163, %s179
      %p181 = scmp.eq.s32.totalorder %s19, 0
      %p182 = por %p180, %p181
      %s183 = ssub.s32 %s20, %s32
      %s184 = ssub.s32 %s21, %s28
      %s185 = sor.u32 %s183, %s184
      %p186 = scmp.eq.s32.totalorder %s185, 0
      %s188 = sadd.s32 %s187, 1
      %s189 = scalar_select %p186, %s187, %s188
      %p192 = pneg %p186
      %p193 = scmp.eq.s32.totalorder %s13, 3
      %p194 = por %p192, %p193
      %p195 = scmp.ne.s32.totalorder %s187, %s190
      %p196 = scmp.eq.s32.totalorder %s13, 0
      %p197 = por %p195, %p196
      %p198 = scmp.ne.s32.totalorder %s187, %s190
      %p199 = scmp.eq.s32.totalorder %s18, 3
      %p200 = por %p198, %p199
      %p201 = scmp.ne.s32.totalorder %s190, %s191
      %p202 = scmp.eq.s32.totalorder %s18, 0
      %p203 = por %p201, %p202
      %p204 = scmp.ne.s32.totalorder %s190, %s191
      %p205 = scmp.eq.s32.totalorder %s19, 3
      %p206 = por %p204, %p205
      %p208 = scmp.ne.s32.totalorder %s191, %s207
      %p209 = scmp.eq.s32.totalorder %s19, 0
      %p210 = por %p208, %p209
      %s211 = ssub.s32 %s20, %s32
      %s212 = ssub.s32 %s21, %s28
      %s213 = sor.u32 %s211, %s212
      %p214 = scmp.eq.s32.totalorder %s213, 0
      %s216 = sadd.s32 %s215, 1
      %s217 = scalar_select %p214, %s215, %s216
      %p220 = pneg %p214
      %p221 = scmp.eq.s32.totalorder %s13, 3
      %p222 = por %p220, %p221
      %p223 = scmp.ne.s32.totalorder %s215, %s218
      %p224 = scmp.eq.s32.totalorder %s13, 0
      %p225 = por %p223, %p224
      %p226 = scmp.ne.s32.totalorder %s215, %s218
      %p227 = scmp.eq.s32.totalorder %s18, 3
      %p228 = por %p226, %p227
      %p229 = scmp.ne.s32.totalorder %s218, %s219
      %p230 = scmp.eq.s32.totalorder %s18, 0
      %p231 = por %p229, %p230
      %p232 = scmp.ne.s32.totalorder %s218, %s219
      %p233 = scmp.eq.s32.totalorder %s19, 3
      %p234 = por %p232, %p233
      %p236 = scmp.ne.s32.totalorder %s219, %s235
      %p237 = scmp.eq.s32.totalorder %s19, 0
      %p238 = por %p236, %p237
      %p239 = scmp.le.s32.totalorder 1, %s13
      %p240 = scmp.lt.s32.totalorder %s13, 5
      %p241 = pnand %p239, %p240
      %p242 = pneg %p241
      // Predicated region
      $region9: #{spatial_weight_forward.1} parent=5 // pred_check
        _
      $region10: #{spatial_weight_forward.1} parent=5 // pred_check_branch
        %244 = sbr.rel (%p241) target = $region12
      $region11: #{spatial_weight_forward.1} parent=5 // pred_region
        %s245 = ssub.s32 %s13, 1
        // Predicated region
        $region13: #{spatial_weight_forward.1} parent=11 // pred_check
          %p246 = pneg %p46
        $region14: #{spatial_weight_forward.1} parent=11 // pred_check_branch
          %248 = sbr.rel (%p246) target = $region16
        $region15: #{spatial_weight_forward.1} parent=11 // pred_region
          _
        $region16: #{spatial_weight_forward.1} parent=11 // pred_fallthru
          _
        // Predicated region
        $region17: #{spatial_weight_forward.1} parent=11 // pred_check
          %p249 = pneg %p67
        $region18: #{spatial_weight_forward.1} parent=11 // pred_check_branch
          %251 = sbr.rel (%p249) target = $region20
        $region19: #{spatial_weight_forward.1} parent=11 // pred_region
          _
        $region20: #{spatial_weight_forward.1} parent=11 // pred_fallthru
          _
      $region12: #{spatial_weight_forward.1} parent=5 // pred_fallthru
        _
      %p252 = scmp.lt.s32.totalorder %s13, 4
      // Predicated region
      $region21: #{spatial_weight_forward.1} parent=5 // pred_check
        %p253 = pneg %p252
      $region22: #{spatial_weight_forward.1} parent=5 // pred_check_branch
        %255 = sbr.rel (%p253) target = $region24
      $region23: #{spatial_weight_forward.1} parent=5 // pred_region
        // Predicated region
        $region25: #{spatial_weight_forward.1} parent=23 // pred_check
          %p256 = pneg %p87
        $region26: #{spatial_weight_forward.1} parent=23 // pred_check_branch
          %258 = sbr.rel (%p256) target = $region28
        $region27: #{spatial_weight_forward.1} parent=23 // pred_region
          %s259 = sand.u32 %s77, 1
          %s260 = sand.u32 %s77, 1
          %s261 = smul.addr %s260, 24
          %s262 = scalar_lea.vmem [#allocation2], %s261
          %s263 = smul.addr %s21, 8
          %s264 = scalar_lea.vmem %s2, %s263
          // Predicated region
          $region29: #{spatial_weight_forward.1} parent=27 // pred_check
            _
          $region30: #{spatial_weight_forward.1} parent=27 // pred_check_branch
            %266 = sbr.rel (0) target = $region32
          $region31: #{spatial_weight_forward.1} parent=27 // pred_region
            // Predicated region
            $region33: #{spatial_weight_forward.1} parent=31 // pred_check
              _
            $region34: #{spatial_weight_forward.1} parent=31 // pred_check_branch
              %268 = sbr.rel (0) target = $region36
            $region35: #{spatial_weight_forward.1} parent=31 // pred_region
              // Predicated region
              $region48: #{spatial_weight_forward.1} parent=35 // pred_check
                _
              $region49: #{spatial_weight_forward.1} parent=35 // pred_check_branch
                %287 = sbr.rel (0) target = $region51
              $region50: #{spatial_weight_forward.1} parent=35 // pred_region
                loop: start=0, step=1, limit=1
                $region52: #{spatial_weight_forward.1} parent=50 // loop_pre_header
                  _
                $region53: #{spatial_weight_forward.1} parent=50 // loop_header
                  %s289 = sphi 0, %s293
                  %p290 = scmp.ge.s32.totalorder %s289, 1
                  %s294 = sphi %s264, %s264
                  %s295 = sphi %s262, %s262
                $region54: #{spatial_weight_forward.1} parent=50 // loop_header_branch
                  %292 = sbr.rel (%p290) target = $region58
                $region55: #{spatial_weight_forward.1} parent=50 // loop_body
                  %v296 = vld [vmem:[%s294] sm:$0xff]
                  %297 = vst [vmem:[%s295] sm:$0xff] %v296
                  %v298 = vld [vmem:[%s294 + $0x20] sm:$0xff]
                  %299 = vst [vmem:[%s295 + $0x8] sm:$0xff] %v298
                  %v300 = vld [vmem:[%s294 + $0x40] sm:$0xff]
                  %301 = vst [vmem:[%s295 + $0x10] sm:$0xff] %v300
                $region56: #{spatial_weight_forward.1} parent=50 // loop_footer
                  %s293 = sadd.s32 1, %s289
                $region57: #{spatial_weight_forward.1} parent=50 // loop_footer_branch
                  %288 = sbr.rel target = $region53
                $region58: #{spatial_weight_forward.1} parent=50 // loop_exit
                  _
              $region51: #{spatial_weight_forward.1} parent=35 // pred_fallthru
                _
              // Predicated region
              $region59: #{spatial_weight_forward.1} parent=35 // pred_check
                _
              $region60: #{spatial_weight_forward.1} parent=35 // pred_check_branch
                %303 = sbr.rel target = $region62
              $region61: #{spatial_weight_forward.1} parent=35 // pred_region
                _
              $region62: #{spatial_weight_forward.1} parent=35 // pred_fallthru
                _
            $region36: #{spatial_weight_forward.1} parent=31 // pred_fallthru
              _
            // Predicated region
            $region37: #{spatial_weight_forward.1} parent=31 // pred_check
              _
            $region38: #{spatial_weight_forward.1} parent=31 // pred_check_branch
              %270 = sbr.rel target = $region40
            $region39: #{spatial_weight_forward.1} parent=31 // pred_region
              loop: start=0, step=1, limit=1
              $region41: #{spatial_weight_forward.1} parent=39 // loop_pre_header
                _
              $region42: #{spatial_weight_forward.1} parent=39 // loop_header
                %s273 = sphi 0, %s277
                %p274 = scmp.ge.s32.totalorder %s273, 1
                %s278 = sphi %s264, %s264
                %s279 = sphi %s262, %s262
              $region43: #{spatial_weight_forward.1} parent=39 // loop_header_branch
                %276 = sbr.rel (%p274) target = $region47
              $region44: #{spatial_weight_forward.1} parent=39 // loop_body
                %v280 = vld [vmem:[%s278] sm:$0xff]
                %281 = vst [vmem:[%s279] sm:$0xff] %v280
                %v282 = vld [vmem:[%s278 + $0x20] sm:$0xff]
                %283 = vst [vmem:[%s279 + $0x8] sm:$0xff] %v282
                %v284 = vld [vmem:[%s278 + $0x40] sm:$0xff]
                %285 = vst [vmem:[%s279 + $0x10] sm:$0xff] %v284
              $region45: #{spatial_weight_forward.1} parent=39 // loop_footer
                %s277 = sadd.s32 1, %s273
              $region46: #{spatial_weight_forward.1} parent=39 // loop_footer_branch
                %272 = sbr.rel target = $region42
              $region47: #{spatial_weight_forward.1} parent=39 // loop_exit
                _
            $region40: #{spatial_weight_forward.1} parent=31 // pred_fallthru
              _
          $region32: #{spatial_weight_forward.1} parent=27 // pred_fallthru
            _
          %304 = vnop
        $region28: #{spatial_weight_forward.1} parent=23 // pred_fallthru
          _
        // Predicated region
        $region63: #{spatial_weight_forward.1} parent=23 // pred_check
          %p305 = pneg %p113
        $region64: #{spatial_weight_forward.1} parent=23 // pred_check_branch
          %307 = sbr.rel (%p305) target = $region66
        $region65: #{spatial_weight_forward.1} parent=23 // pred_region
          %s308 = sand.u32 %s103, 1
          %s309 = sand.u32 %s103, 1
          %s310 = smul.addr %s309, 24
          %s311 = scalar_lea.vmem [#allocation3], %s310
          %s312 = smul.addr %s21, 8
          %s313 = scalar_lea.vmem %s3, %s312
          // Predicated region
          $region67: #{spatial_weight_forward.1} parent=65 // pred_check
            _
          $region68: #{spatial_weight_forward.1} parent=65 // pred_check_branch
            %315 = sbr.rel (0) target = $region70
          $region69: #{spatial_weight_forward.1} parent=65 // pred_region
            // Predicated region
            $region71: #{spatial_weight_forward.1} parent=69 // pred_check
              _
            $region72: #{spatial_weight_forward.1} parent=69 // pred_check_branch
              %317 = sbr.rel (0) target = $region74
            $region73: #{spatial_weight_forward.1} parent=69 // pred_region
              // Predicated region
              $region86: #{spatial_weight_forward.1} parent=73 // pred_check
                _
              $region87: #{spatial_weight_forward.1} parent=73 // pred_check_branch
                %336 = sbr.rel (0) target = $region89
              $region88: #{spatial_weight_forward.1} parent=73 // pred_region
                loop: start=0, step=1, limit=1
                $region90: #{spatial_weight_forward.1} parent=88 // loop_pre_header
                  _
                $region91: #{spatial_weight_forward.1} parent=88 // loop_header
                  %s338 = sphi 0, %s342
                  %p339 = scmp.ge.s32.totalorder %s338, 1
                  %s343 = sphi %s313, %s313
                  %s344 = sphi %s311, %s311
                $region92: #{spatial_weight_forward.1} parent=88 // loop_header_branch
                  %341 = sbr.rel (%p339) target = $region96
                $region93: #{spatial_weight_forward.1} parent=88 // loop_body
                  %v345 = vld [vmem:[%s343] sm:$0xff]
                  %346 = vst [vmem:[%s344] sm:$0xff] %v345
                  %v347 = vld [vmem:[%s343 + $0x20] sm:$0xff]
                  %348 = vst [vmem:[%s344 + $0x8] sm:$0xff] %v347
                  %v349 = vld [vmem:[%s343 + $0x40] sm:$0xff]
                  %350 = vst [vmem:[%s344 + $0x10] sm:$0xff] %v349
                $region94: #{spatial_weight_forward.1} parent=88 // loop_footer
                  %s342 = sadd.s32 1, %s338
                $region95: #{spatial_weight_forward.1} parent=88 // loop_footer_branch
                  %337 = sbr.rel target = $region91
                $region96: #{spatial_weight_forward.1} parent=88 // loop_exit
                  _
              $region89: #{spatial_weight_forward.1} parent=73 // pred_fallthru
                _
              // Predicated region
              $region97: #{spatial_weight_forward.1} parent=73 // pred_check
                _
              $region98: #{spatial_weight_forward.1} parent=73 // pred_check_branch
                %352 = sbr.rel target = $region100
              $region99: #{spatial_weight_forward.1} parent=73 // pred_region
                _
              $region100: #{spatial_weight_forward.1} parent=73 // pred_fallthru
                _
            $region74: #{spatial_weight_forward.1} parent=69 // pred_fallthru
              _
            // Predicated region
            $region75: #{spatial_weight_forward.1} parent=69 // pred_check
              _
            $region76: #{spatial_weight_forward.1} parent=69 // pred_check_branch
              %319 = sbr.rel target = $region78
            $region77: #{spatial_weight_forward.1} parent=69 // pred_region
              loop: start=0, step=1, limit=1
              $region79: #{spatial_weight_forward.1} parent=77 // loop_pre_header
                _
              $region80: #{spatial_weight_forward.1} parent=77 // loop_header
                %s322 = sphi 0, %s326
                %p323 = scmp.ge.s32.totalorder %s322, 1
                %s327 = sphi %s313, %s313
                %s328 = sphi %s311, %s311
              $region81: #{spatial_weight_forward.1} parent=77 // loop_header_branch
                %325 = sbr.rel (%p323) target = $region85
              $region82: #{spatial_weight_forward.1} parent=77 // loop_body
                %v329 = vld [vmem:[%s327] sm:$0xff]
                %330 = vst [vmem:[%s328] sm:$0xff] %v329
                %v331 = vld [vmem:[%s327 + $0x20] sm:$0xff]
                %332 = vst [vmem:[%s328 + $0x8] sm:$0xff] %v331
                %v333 = vld [vmem:[%s327 + $0x40] sm:$0xff]
                %334 = vst [vmem:[%s328 + $0x10] sm:$0xff] %v333
              $region83: #{spatial_weight_forward.1} parent=77 // loop_footer
                %s326 = sadd.s32 1, %s322
              $region84: #{spatial_weight_forward.1} parent=77 // loop_footer_branch
                %321 = sbr.rel target = $region80
              $region85: #{spatial_weight_forward.1} parent=77 // loop_exit
                _
            $region78: #{spatial_weight_forward.1} parent=69 // pred_fallthru
              _
          $region70: #{spatial_weight_forward.1} parent=65 // pred_fallthru
            _
          %353 = vnop
        $region66: #{spatial_weight_forward.1} parent=23 // pred_fallthru
          _
        // Predicated region
        $region101: #{spatial_weight_forward.1} parent=23 // pred_check
          %p354 = pneg %p141
        $region102: #{spatial_weight_forward.1} parent=23 // pred_check_branch
          %356 = sbr.rel (%p354) target = $region104
        $region103: #{spatial_weight_forward.1} parent=23 // pred_region
          %s357 = sand.u32 %s131, 1
          %s358 = sand.u32 %s131, 1
          %s359 = smul.addr %s358, 128
          %s360 = scalar_lea.vmem [#allocation4], %s359
          %s361 = smul.u32 2, %s20
          %s362 = smul.u32 8, %s21
          %s363 = smul.addr %s361, 32
          %s364 = sadd.s32 %s362, %s363
          %s365 = smul.addr %s364, 8
          %s366 = scalar_lea.vmem %s4, %s365
          // Predicated region
          $region105: #{spatial_weight_forward.1} parent=103 // pred_check
            _
          $region106: #{spatial_weight_forward.1} parent=103 // pred_check_branch
            %368 = sbr.rel (0) target = $region108
          $region107: #{spatial_weight_forward.1} parent=103 // pred_region
            // Predicated region
            $region109: #{spatial_weight_forward.1} parent=107 // pred_check
              _
            $region110: #{spatial_weight_forward.1} parent=107 // pred_check_branch
              %370 = sbr.rel (0) target = $region112
            $region111: #{spatial_weight_forward.1} parent=107 // pred_region
              // Predicated region
              $region124: #{spatial_weight_forward.1} parent=111 // pred_check
                _
              $region125: #{spatial_weight_forward.1} parent=111 // pred_check_branch
                %415 = sbr.rel (0) target = $region127
              $region126: #{spatial_weight_forward.1} parent=111 // pred_region
                loop: start=0, step=1, limit=1
                $region128: #{spatial_weight_forward.1} parent=126 // loop_pre_header
                  _
                $region129: #{spatial_weight_forward.1} parent=126 // loop_header
                  %s417 = sphi 0, %s421
                  %p418 = scmp.ge.s32.totalorder %s417, 1
                  %s422 = sphi %s366, %s366
                  %s423 = sphi %s360, %s360
                $region130: #{spatial_weight_forward.1} parent=126 // loop_header_branch
                  %420 = sbr.rel (%p418) target = $region134
                $region131: #{spatial_weight_forward.1} parent=126 // loop_body
                  %v424 = vld [vmem:[%s422] sm:$0xff]
                  %425 = vst [vmem:[%s423] sm:$0xff] %v424
                  %v426 = vld [vmem:[%s422 + $0x8] sm:$0xff]
                  %427 = vst [vmem:[%s423 + $0x8] sm:$0xff] %v426
                  %v428 = vld [vmem:[%s422 + $0x10] sm:$0xff]
                  %429 = vst [vmem:[%s423 + $0x10] sm:$0xff] %v428
                  %v430 = vld [vmem:[%s422 + $0x18] sm:$0xff]
                  %431 = vst [vmem:[%s423 + $0x18] sm:$0xff] %v430
                  %v432 = vld [vmem:[%s422 + $0x20] sm:$0xff]
                  %433 = vst [vmem:[%s423 + $0x20] sm:$0xff] %v432
                  %v434 = vld [vmem:[%s422 + $0x28] sm:$0xff]
                  %435 = vst [vmem:[%s423 + $0x28] sm:$0xff] %v434
                  %v436 = vld [vmem:[%s422 + $0x30] sm:$0xff]
                  %437 = vst [vmem:[%s423 + $0x30] sm:$0xff] %v436
                  %v438 = vld [vmem:[%s422 + $0x38] sm:$0xff]
                  %439 = vst [vmem:[%s423 + $0x38] sm:$0xff] %v438
                  %v440 = vld [vmem:[%s422 + $0x100] sm:$0xff]
                  %441 = vst [vmem:[%s423 + $0x40] sm:$0xff] %v440
                  %v442 = vld [vmem:[%s422 + $0x108] sm:$0xff]
                  %443 = vst [vmem:[%s423 + $0x48] sm:$0xff] %v442
                  %v444 = vld [vmem:[%s422 + $0x110] sm:$0xff]
                  %445 = vst [vmem:[%s423 + $0x50] sm:$0xff] %v444
                  %v446 = vld [vmem:[%s422 + $0x118] sm:$0xff]
                  %447 = vst [vmem:[%s423 + $0x58] sm:$0xff] %v446
                  %v448 = vld [vmem:[%s422 + $0x120] sm:$0xff]
                  %449 = vst [vmem:[%s423 + $0x60] sm:$0xff] %v448
                  %v450 = vld [vmem:[%s422 + $0x128] sm:$0xff]
                  %451 = vst [vmem:[%s423 + $0x68] sm:$0xff] %v450
                  %v452 = vld [vmem:[%s422 + $0x130] sm:$0xff]
                  %453 = vst [vmem:[%s423 + $0x70] sm:$0xff] %v452
                  %v454 = vld [vmem:[%s422 + $0x138] sm:$0xff]
                  %455 = vst [vmem:[%s423 + $0x78] sm:$0xff] %v454
                $region132: #{spatial_weight_forward.1} parent=126 // loop_footer
                  %s421 = sadd.s32 1, %s417
                $region133: #{spatial_weight_forward.1} parent=126 // loop_footer_branch
                  %416 = sbr.rel target = $region129
                $region134: #{spatial_weight_forward.1} parent=126 // loop_exit
                  _
              $region127: #{spatial_weight_forward.1} parent=111 // pred_fallthru
                _
              // Predicated region
              $region135: #{spatial_weight_forward.1} parent=111 // pred_check
                _
              $region136: #{spatial_weight_forward.1} parent=111 // pred_check_branch
                %457 = sbr.rel target = $region138
              $region137: #{spatial_weight_forward.1} parent=111 // pred_region
                _
              $region138: #{spatial_weight_forward.1} parent=111 // pred_fallthru
                _
            $region112: #{spatial_weight_forward.1} parent=107 // pred_fallthru
              _
            // Predicated region
            $region113: #{spatial_weight_forward.1} parent=107 // pred_check
              _
            $region114: #{spatial_weight_forward.1} parent=107 // pred_check_branch
              %372 = sbr.rel target = $region116
            $region115: #{spatial_weight_forward.1} parent=107 // pred_region
              loop: start=0, step=1, limit=1
              $region117: #{spatial_weight_forward.1} parent=115 // loop_pre_header
                _
              $region118: #{spatial_weight_forward.1} parent=115 // loop_header
                %s375 = sphi 0, %s379
                %p376 = scmp.ge.s32.totalorder %s375, 1
                %s380 = sphi %s366, %s366
                %s381 = sphi %s360, %s360
              $region119: #{spatial_weight_forward.1} parent=115 // loop_header_branch
                %378 = sbr.rel (%p376) target = $region123
              $region120: #{spatial_weight_forward.1} parent=115 // loop_body
                %v382 = vld [vmem:[%s380] sm:$0xff]
                %383 = vst [vmem:[%s381] sm:$0xff] %v382
                %v384 = vld [vmem:[%s380 + $0x8] sm:$0xff]
                %385 = vst [vmem:[%s381 + $0x8] sm:$0xff] %v384
                %v386 = vld [vmem:[%s380 + $0x10] sm:$0xff]
                %387 = vst [vmem:[%s381 + $0x10] sm:$0xff] %v386
                %v388 = vld [vmem:[%s380 + $0x18] sm:$0xff]
                %389 = vst [vmem:[%s381 + $0x18] sm:$0xff] %v388
                %v390 = vld [vmem:[%s380 + $0x20] sm:$0xff]
                %391 = vst [vmem:[%s381 + $0x20] sm:$0xff] %v390
                %v392 = vld [vmem:[%s380 + $0x28] sm:$0xff]
                %393 = vst [vmem:[%s381 + $0x28] sm:$0xff] %v392
                %v394 = vld [vmem:[%s380 + $0x30] sm:$0xff]
                %395 = vst [vmem:[%s381 + $0x30] sm:$0xff] %v394
                %v396 = vld [vmem:[%s380 + $0x38] sm:$0xff]
                %397 = vst [vmem:[%s381 + $0x38] sm:$0xff] %v396
                %v398 = vld [vmem:[%s380 + $0x100] sm:$0xff]
                %399 = vst [vmem:[%s381 + $0x40] sm:$0xff] %v398
                %v400 = vld [vmem:[%s380 + $0x108] sm:$0xff]
                %401 = vst [vmem:[%s381 + $0x48] sm:$0xff] %v400
                %v402 = vld [vmem:[%s380 + $0x110] sm:$0xff]
                %403 = vst [vmem:[%s381 + $0x50] sm:$0xff] %v402
                %v404 = vld [vmem:[%s380 + $0x118] sm:$0xff]
                %405 = vst [vmem:[%s381 + $0x58] sm:$0xff] %v404
                %v406 = vld [vmem:[%s380 + $0x120] sm:$0xff]
                %407 = vst [vmem:[%s381 + $0x60] sm:$0xff] %v406
                %v408 = vld [vmem:[%s380 + $0x128] sm:$0xff]
                %409 = vst [vmem:[%s381 + $0x68] sm:$0xff] %v408
                %v410 = vld [vmem:[%s380 + $0x130] sm:$0xff]
                %411 = vst [vmem:[%s381 + $0x70] sm:$0xff] %v410
                %v412 = vld [vmem:[%s380 + $0x138] sm:$0xff]
                %413 = vst [vmem:[%s381 + $0x78] sm:$0xff] %v412
              $region121: #{spatial_weight_forward.1} parent=115 // loop_footer
                %s379 = sadd.s32 1, %s375
              $region122: #{spatial_weight_forward.1} parent=115 // loop_footer_branch
                %374 = sbr.rel target = $region118
              $region123: #{spatial_weight_forward.1} parent=115 // loop_exit
                _
            $region116: #{spatial_weight_forward.1} parent=107 // pred_fallthru
              _
          $region108: #{spatial_weight_forward.1} parent=103 // pred_fallthru
            _
          %458 = vnop
        $region104: #{spatial_weight_forward.1} parent=23 // pred_fallthru
          _
        // Predicated region
        $region139: #{spatial_weight_forward.1} parent=23 // pred_check
          %p459 = pneg %p169
        $region140: #{spatial_weight_forward.1} parent=23 // pred_check_branch
          %461 = sbr.rel (%p459) target = $region142
        $region141: #{spatial_weight_forward.1} parent=23 // pred_region
          %s462 = sand.u32 %s159, 1
          %s463 = sand.u32 %s159, 1
          %s464 = smul.addr %s463, 128
          %s465 = scalar_lea.vmem [#allocation5], %s464
          %s466 = smul.u32 2, %s20
          %s467 = smul.u32 8, %s21
          %s468 = smul.addr %s466, 32
          %s469 = sadd.s32 %s467, %s468
          %s470 = smul.addr %s469, 8
          %s471 = scalar_lea.vmem %s5, %s470
          // Predicated region
          $region143: #{spatial_weight_forward.1} parent=141 // pred_check
            _
          $region144: #{spatial_weight_forward.1} parent=141 // pred_check_branch
            %473 = sbr.rel (0) target = $region146
          $region145: #{spatial_weight_forward.1} parent=141 // pred_region
            // Predicated region
            $region147: #{spatial_weight_forward.1} parent=145 // pred_check
              _
            $region148: #{spatial_weight_forward.1} parent=145 // pred_check_branch
              %475 = sbr.rel (0) target = $region150
            $region149: #{spatial_weight_forward.1} parent=145 // pred_region
              // Predicated region
              $region162: #{spatial_weight_forward.1} parent=149 // pred_check
                _
              $region163: #{spatial_weight_forward.1} parent=149 // pred_check_branch
                %520 = sbr.rel (0) target = $region165
              $region164: #{spatial_weight_forward.1} parent=149 // pred_region
                loop: start=0, step=1, limit=1
                $region166: #{spatial_weight_forward.1} parent=164 // loop_pre_header
                  _
                $region167: #{spatial_weight_forward.1} parent=164 // loop_header
                  %s522 = sphi 0, %s526
                  %p523 = scmp.ge.s32.totalorder %s522, 1
                  %s527 = sphi %s471, %s471
                  %s528 = sphi %s465, %s465
                $region168: #{spatial_weight_forward.1} parent=164 // loop_header_branch
                  %525 = sbr.rel (%p523) target = $region172
                $region169: #{spatial_weight_forward.1} parent=164 // loop_body
                  %v529 = vld [vmem:[%s527] sm:$0xff]
                  %530 = vst [vmem:[%s528] sm:$0xff] %v529
                  %v531 = vld [vmem:[%s527 + $0x8] sm:$0xff]
                  %532 = vst [vmem:[%s528 + $0x8] sm:$0xff] %v531
                  %v533 = vld [vmem:[%s527 + $0x10] sm:$0xff]
                  %534 = vst [vmem:[%s528 + $0x10] sm:$0xff] %v533
                  %v535 = vld [vmem:[%s527 + $0x18] sm:$0xff]
                  %536 = vst [vmem:[%s528 + $0x18] sm:$0xff] %v535
                  %v537 = vld [vmem:[%s527 + $0x20] sm:$0xff]
                  %538 = vst [vmem:[%s528 + $0x20] sm:$0xff] %v537
                  %v539 = vld [vmem:[%s527 + $0x28] sm:$0xff]
                  %540 = vst [vmem:[%s528 + $0x28] sm:$0xff] %v539
                  %v541 = vld [vmem:[%s527 + $0x30] sm:$0xff]
                  %542 = vst [vmem:[%s528 + $0x30] sm:$0xff] %v541
                  %v543 = vld [vmem:[%s527 + $0x38] sm:$0xff]
                  %544 = vst [vmem:[%s528 + $0x38] sm:$0xff] %v543
                  %v545 = vld [vmem:[%s527 + $0x100] sm:$0xff]
                  %546 = vst [vmem:[%s528 + $0x40] sm:$0xff] %v545
                  %v547 = vld [vmem:[%s527 + $0x108] sm:$0xff]
                  %548 = vst [vmem:[%s528 + $0x48] sm:$0xff] %v547
                  %v549 = vld [vmem:[%s527 + $0x110] sm:$0xff]
                  %550 = vst [vmem:[%s528 + $0x50] sm:$0xff] %v549
                  %v551 = vld [vmem:[%s527 + $0x118] sm:$0xff]
                  %552 = vst [vmem:[%s528 + $0x58] sm:$0xff] %v551
                  %v553 = vld [vmem:[%s527 + $0x120] sm:$0xff]
                  %554 = vst [vmem:[%s528 + $0x60] sm:$0xff] %v553
                  %v555 = vld [vmem:[%s527 + $0x128] sm:$0xff]
                  %556 = vst [vmem:[%s528 + $0x68] sm:$0xff] %v555
                  %v557 = vld [vmem:[%s527 + $0x130] sm:$0xff]
                  %558 = vst [vmem:[%s528 + $0x70] sm:$0xff] %v557
                  %v559 = vld [vmem:[%s527 + $0x138] sm:$0xff]
                  %560 = vst [vmem:[%s528 + $0x78] sm:$0xff] %v559
                $region170: #{spatial_weight_forward.1} parent=164 // loop_footer
                  %s526 = sadd.s32 1, %s522
                $region171: #{spatial_weight_forward.1} parent=164 // loop_footer_branch
                  %521 = sbr.rel target = $region167
                $region172: #{spatial_weight_forward.1} parent=164 // loop_exit
                  _
              $region165: #{spatial_weight_forward.1} parent=149 // pred_fallthru
                _
              // Predicated region
              $region173: #{spatial_weight_forward.1} parent=149 // pred_check
                _
              $region174: #{spatial_weight_forward.1} parent=149 // pred_check_branch
                %562 = sbr.rel target = $region176
              $region175: #{spatial_weight_forward.1} parent=149 // pred_region
                _
              $region176: #{spatial_weight_forward.1} parent=149 // pred_fallthru
                _
            $region150: #{spatial_weight_forward.1} parent=145 // pred_fallthru
              _
            // Predicated region
            $region151: #{spatial_weight_forward.1} parent=145 // pred_check
              _
            $region152: #{spatial_weight_forward.1} parent=145 // pred_check_branch
              %477 = sbr.rel target = $region154
            $region153: #{spatial_weight_forward.1} parent=145 // pred_region
              loop: start=0, step=1, limit=1
              $region155: #{spatial_weight_forward.1} parent=153 // loop_pre_header
                _
              $region156: #{spatial_weight_forward.1} parent=153 // loop_header
                %s480 = sphi 0, %s484
                %p481 = scmp.ge.s32.totalorder %s480, 1
                %s485 = sphi %s471, %s471
                %s486 = sphi %s465, %s465
              $region157: #{spatial_weight_forward.1} parent=153 // loop_header_branch
                %483 = sbr.rel (%p481) target = $region161
              $region158: #{spatial_weight_forward.1} parent=153 // loop_body
                %v487 = vld [vmem:[%s485] sm:$0xff]
                %488 = vst [vmem:[%s486] sm:$0xff] %v487
                %v489 = vld [vmem:[%s485 + $0x8] sm:$0xff]
                %490 = vst [vmem:[%s486 + $0x8] sm:$0xff] %v489
                %v491 = vld [vmem:[%s485 + $0x10] sm:$0xff]
                %492 = vst [vmem:[%s486 + $0x10] sm:$0xff] %v491
                %v493 = vld [vmem:[%s485 + $0x18] sm:$0xff]
                %494 = vst [vmem:[%s486 + $0x18] sm:$0xff] %v493
                %v495 = vld [vmem:[%s485 + $0x20] sm:$0xff]
                %496 = vst [vmem:[%s486 + $0x20] sm:$0xff] %v495
                %v497 = vld [vmem:[%s485 + $0x28] sm:$0xff]
                %498 = vst [vmem:[%s486 + $0x28] sm:$0xff] %v497
                %v499 = vld [vmem:[%s485 + $0x30] sm:$0xff]
                %500 = vst [vmem:[%s486 + $0x30] sm:$0xff] %v499
                %v501 = vld [vmem:[%s485 + $0x38] sm:$0xff]
                %502 = vst [vmem:[%s486 + $0x38] sm:$0xff] %v501
                %v503 = vld [vmem:[%s485 + $0x100] sm:$0xff]
                %504 = vst [vmem:[%s486 + $0x40] sm:$0xff] %v503
                %v505 = vld [vmem:[%s485 + $0x108] sm:$0xff]
                %506 = vst [vmem:[%s486 + $0x48] sm:$0xff] %v505
                %v507 = vld [vmem:[%s485 + $0x110] sm:$0xff]
                %508 = vst [vmem:[%s486 + $0x50] sm:$0xff] %v507
                %v509 = vld [vmem:[%s485 + $0x118] sm:$0xff]
                %510 = vst [vmem:[%s486 + $0x58] sm:$0xff] %v509
                %v511 = vld [vmem:[%s485 + $0x120] sm:$0xff]
                %512 = vst [vmem:[%s486 + $0x60] sm:$0xff] %v511
                %v513 = vld [vmem:[%s485 + $0x128] sm:$0xff]
                %514 = vst [vmem:[%s486 + $0x68] sm:$0xff] %v513
                %v515 = vld [vmem:[%s485 + $0x130] sm:$0xff]
                %516 = vst [vmem:[%s486 + $0x70] sm:$0xff] %v515
                %v517 = vld [vmem:[%s485 + $0x138] sm:$0xff]
                %518 = vst [vmem:[%s486 + $0x78] sm:$0xff] %v517
              $region159: #{spatial_weight_forward.1} parent=153 // loop_footer
                %s484 = sadd.s32 1, %s480
              $region160: #{spatial_weight_forward.1} parent=153 // loop_footer_branch
                %479 = sbr.rel target = $region156
              $region161: #{spatial_weight_forward.1} parent=153 // loop_exit
                _
            $region154: #{spatial_weight_forward.1} parent=145 // pred_fallthru
              _
          $region146: #{spatial_weight_forward.1} parent=141 // pred_fallthru
            _
          %563 = vnop
        $region142: #{spatial_weight_forward.1} parent=23 // pred_fallthru
          _
        // Predicated region
        $region177: #{spatial_weight_forward.1} parent=23 // pred_check
          %p564 = pneg %p197
        $region178: #{spatial_weight_forward.1} parent=23 // pred_check_branch
          %566 = sbr.rel (%p564) target = $region180
        $region179: #{spatial_weight_forward.1} parent=23 // pred_region
          %s567 = sand.u32 %s187, 1
          %s568 = sand.u32 %s187, 1
          %s569 = smul.addr %s568, 128
          %s570 = scalar_lea.vmem [#allocation6], %s569
          %s571 = smul.u32 2, %s20
          %s572 = smul.u32 8, %s21
          %s573 = smul.addr %s571, 32
          %s574 = sadd.s32 %s572, %s573
          %s575 = smul.addr %s574, 8
          %s576 = scalar_lea.vmem %s6, %s575
          // Predicated region
          $region181: #{spatial_weight_forward.1} parent=179 // pred_check
            _
          $region182: #{spatial_weight_forward.1} parent=179 // pred_check_branch
            %578 = sbr.rel (0) target = $region184
          $region183: #{spatial_weight_forward.1} parent=179 // pred_region
            // Predicated region
            $region185: #{spatial_weight_forward.1} parent=183 // pred_check
              _
            $region186: #{spatial_weight_forward.1} parent=183 // pred_check_branch
              %580 = sbr.rel (0) target = $region188
            $region187: #{spatial_weight_forward.1} parent=183 // pred_region
              // Predicated region
              $region200: #{spatial_weight_forward.1} parent=187 // pred_check
                _
              $region201: #{spatial_weight_forward.1} parent=187 // pred_check_branch
                %625 = sbr.rel (0) target = $region203
              $region202: #{spatial_weight_forward.1} parent=187 // pred_region
                loop: start=0, step=1, limit=1
                $region204: #{spatial_weight_forward.1} parent=202 // loop_pre_header
                  _
                $region205: #{spatial_weight_forward.1} parent=202 // loop_header
                  %s627 = sphi 0, %s631
                  %p628 = scmp.ge.s32.totalorder %s627, 1
                  %s632 = sphi %s576, %s576
                  %s633 = sphi %s570, %s570
                $region206: #{spatial_weight_forward.1} parent=202 // loop_header_branch
                  %630 = sbr.rel (%p628) target = $region210
                $region207: #{spatial_weight_forward.1} parent=202 // loop_body
                  %v634 = vld [vmem:[%s632] sm:$0xff]
                  %635 = vst [vmem:[%s633] sm:$0xff] %v634
                  %v636 = vld [vmem:[%s632 + $0x8] sm:$0xff]
                  %637 = vst [vmem:[%s633 + $0x8] sm:$0xff] %v636
                  %v638 = vld [vmem:[%s632 + $0x10] sm:$0xff]
                  %639 = vst [vmem:[%s633 + $0x10] sm:$0xff] %v638
                  %v640 = vld [vmem:[%s632 + $0x18] sm:$0xff]
                  %641 = vst [vmem:[%s633 + $0x18] sm:$0xff] %v640
                  %v642 = vld [vmem:[%s632 + $0x20] sm:$0xff]
                  %643 = vst [vmem:[%s633 + $0x20] sm:$0xff] %v642
                  %v644 = vld [vmem:[%s632 + $0x28] sm:$0xff]
                  %645 = vst [vmem:[%s633 + $0x28] sm:$0xff] %v644
                  %v646 = vld [vmem:[%s632 + $0x30] sm:$0xff]
                  %647 = vst [vmem:[%s633 + $0x30] sm:$0xff] %v646
                  %v648 = vld [vmem:[%s632 + $0x38] sm:$0xff]
                  %649 = vst [vmem:[%s633 + $0x38] sm:$0xff] %v648
                  %v650 = vld [vmem:[%s632 + $0x100] sm:$0xff]
                  %651 = vst [vmem:[%s633 + $0x40] sm:$0xff] %v650
                  %v652 = vld [vmem:[%s632 + $0x108] sm:$0xff]
                  %653 = vst [vmem:[%s633 + $0x48] sm:$0xff] %v652
                  %v654 = vld [vmem:[%s632 + $0x110] sm:$0xff]
                  %655 = vst [vmem:[%s633 + $0x50] sm:$0xff] %v654
                  %v656 = vld [vmem:[%s632 + $0x118] sm:$0xff]
                  %657 = vst [vmem:[%s633 + $0x58] sm:$0xff] %v656
                  %v658 = vld [vmem:[%s632 + $0x120] sm:$0xff]
                  %659 = vst [vmem:[%s633 + $0x60] sm:$0xff] %v658
                  %v660 = vld [vmem:[%s632 + $0x128] sm:$0xff]
                  %661 = vst [vmem:[%s633 + $0x68] sm:$0xff] %v660
                  %v662 = vld [vmem:[%s632 + $0x130] sm:$0xff]
                  %663 = vst [vmem:[%s633 + $0x70] sm:$0xff] %v662
                  %v664 = vld [vmem:[%s632 + $0x138] sm:$0xff]
                  %665 = vst [vmem:[%s633 + $0x78] sm:$0xff] %v664
                $region208: #{spatial_weight_forward.1} parent=202 // loop_footer
                  %s631 = sadd.s32 1, %s627
                $region209: #{spatial_weight_forward.1} parent=202 // loop_footer_branch
                  %626 = sbr.rel target = $region205
                $region210: #{spatial_weight_forward.1} parent=202 // loop_exit
                  _
              $region203: #{spatial_weight_forward.1} parent=187 // pred_fallthru
                _
              // Predicated region
              $region211: #{spatial_weight_forward.1} parent=187 // pred_check
                _
              $region212: #{spatial_weight_forward.1} parent=187 // pred_check_branch
                %667 = sbr.rel target = $region214
              $region213: #{spatial_weight_forward.1} parent=187 // pred_region
                _
              $region214: #{spatial_weight_forward.1} parent=187 // pred_fallthru
                _
            $region188: #{spatial_weight_forward.1} parent=183 // pred_fallthru
              _
            // Predicated region
            $region189: #{spatial_weight_forward.1} parent=183 // pred_check
              _
            $region190: #{spatial_weight_forward.1} parent=183 // pred_check_branch
              %582 = sbr.rel target = $region192
            $region191: #{spatial_weight_forward.1} parent=183 // pred_region
              loop: start=0, step=1, limit=1
              $region193: #{spatial_weight_forward.1} parent=191 // loop_pre_header
                _
              $region194: #{spatial_weight_forward.1} parent=191 // loop_header
                %s585 = sphi 0, %s589
                %p586 = scmp.ge.s32.totalorder %s585, 1
                %s590 = sphi %s576, %s576
                %s591 = sphi %s570, %s570
              $region195: #{spatial_weight_forward.1} parent=191 // loop_header_branch
                %588 = sbr.rel (%p586) target = $region199
              $region196: #{spatial_weight_forward.1} parent=191 // loop_body
                %v592 = vld [vmem:[%s590] sm:$0xff]
                %593 = vst [vmem:[%s591] sm:$0xff] %v592
                %v594 = vld [vmem:[%s590 + $0x8] sm:$0xff]
                %595 = vst [vmem:[%s591 + $0x8] sm:$0xff] %v594
                %v596 = vld [vmem:[%s590 + $0x10] sm:$0xff]
                %597 = vst [vmem:[%s591 + $0x10] sm:$0xff] %v596
                %v598 = vld [vmem:[%s590 + $0x18] sm:$0xff]
                %599 = vst [vmem:[%s591 + $0x18] sm:$0xff] %v598
                %v600 = vld [vmem:[%s590 + $0x20] sm:$0xff]
                %601 = vst [vmem:[%s591 + $0x20] sm:$0xff] %v600
                %v602 = vld [vmem:[%s590 + $0x28] sm:$0xff]
                %603 = vst [vmem:[%s591 + $0x28] sm:$0xff] %v602
                %v604 = vld [vmem:[%s590 + $0x30] sm:$0xff]
                %605 = vst [vmem:[%s591 + $0x30] sm:$0xff] %v604
                %v606 = vld [vmem:[%s590 + $0x38] sm:$0xff]
                %607 = vst [vmem:[%s591 + $0x38] sm:$0xff] %v606
                %v608 = vld [vmem:[%s590 + $0x100] sm:$0xff]
                %609 = vst [vmem:[%s591 + $0x40] sm:$0xff] %v608
                %v610 = vld [vmem:[%s590 + $0x108] sm:$0xff]
                %611 = vst [vmem:[%s591 + $0x48] sm:$0xff] %v610
                %v612 = vld [vmem:[%s590 + $0x110] sm:$0xff]
                %613 = vst [vmem:[%s591 + $0x50] sm:$0xff] %v612
                %v614 = vld [vmem:[%s590 + $0x118] sm:$0xff]
                %615 = vst [vmem:[%s591 + $0x58] sm:$0xff] %v614
                %v616 = vld [vmem:[%s590 + $0x120] sm:$0xff]
                %617 = vst [vmem:[%s591 + $0x60] sm:$0xff] %v616
                %v618 = vld [vmem:[%s590 + $0x128] sm:$0xff]
                %619 = vst [vmem:[%s591 + $0x68] sm:$0xff] %v618
                %v620 = vld [vmem:[%s590 + $0x130] sm:$0xff]
                %621 = vst [vmem:[%s591 + $0x70] sm:$0xff] %v620
                %v622 = vld [vmem:[%s590 + $0x138] sm:$0xff]
                %623 = vst [vmem:[%s591 + $0x78] sm:$0xff] %v622
              $region197: #{spatial_weight_forward.1} parent=191 // loop_footer
                %s589 = sadd.s32 1, %s585
              $region198: #{spatial_weight_forward.1} parent=191 // loop_footer_branch
                %584 = sbr.rel target = $region194
              $region199: #{spatial_weight_forward.1} parent=191 // loop_exit
                _
            $region192: #{spatial_weight_forward.1} parent=183 // pred_fallthru
              _
          $region184: #{spatial_weight_forward.1} parent=179 // pred_fallthru
            _
          %668 = vnop
        $region180: #{spatial_weight_forward.1} parent=23 // pred_fallthru
          _
      $region24: #{spatial_weight_forward.1} parent=5 // pred_fallthru
        _
      %p669 = scmp.le.s32.totalorder 1, %s13
      %p670 = scmp.lt.s32.totalorder %s13, 5
      %p671 = pnand %p669, %p670
      %p672 = pneg %p671
      // Predicated region
      $region215: #{spatial_weight_forward.1} parent=5 // pred_check
        _
      $region216: #{spatial_weight_forward.1} parent=5 // pred_check_branch
        %674 = sbr.rel (%p671) target = $region218
      $region217: #{spatial_weight_forward.1} parent=5 // pred_region
        %s675 = ssub.s32 %s13, 1
        %s676 = sand.u32 %s80, 1
        %s677 = sand.u32 %s80, 1
        %s678 = smul.addr %s677, 24
        %s679 = scalar_lea.vmem [#allocation2], %s678
        // Predicated region
        $region219: #{spatial_weight_forward.1} parent=217 // pred_check
          %p680 = pneg %p93
        $region220: #{spatial_weight_forward.1} parent=217 // pred_check_branch
          %682 = sbr.rel (%p680) target = $region222
        $region221: #{spatial_weight_forward.1} parent=217 // pred_region
          _
        $region222: #{spatial_weight_forward.1} parent=217 // pred_fallthru
          _
        %s683 = sand.u32 %s106, 1
        %s684 = sand.u32 %s106, 1
        %s685 = smul.addr %s684, 24
        %s686 = scalar_lea.vmem [#allocation3], %s685
        // Predicated region
        $region223: #{spatial_weight_forward.1} parent=217 // pred_check
          %p687 = pneg %p119
        $region224: #{spatial_weight_forward.1} parent=217 // pred_check_branch
          %689 = sbr.rel (%p687) target = $region226
        $region225: #{spatial_weight_forward.1} parent=217 // pred_region
          _
        $region226: #{spatial_weight_forward.1} parent=217 // pred_fallthru
          _
        %s690 = sand.u32 %s134, 1
        %s691 = sand.u32 %s134, 1
        %s692 = smul.addr %s691, 128
        %s693 = scalar_lea.vmem [#allocation4], %s692
        // Predicated region
        $region227: #{spatial_weight_forward.1} parent=217 // pred_check
          %p694 = pneg %p147
        $region228: #{spatial_weight_forward.1} parent=217 // pred_check_branch
          %696 = sbr.rel (%p694) target = $region230
        $region229: #{spatial_weight_forward.1} parent=217 // pred_region
          _
        $region230: #{spatial_weight_forward.1} parent=217 // pred_fallthru
          _
        %s697 = sand.u32 %s162, 1
        %s698 = sand.u32 %s162, 1
        %s699 = smul.addr %s698, 128
        %s700 = scalar_lea.vmem [#allocation5], %s699
        // Predicated region
        $region231: #{spatial_weight_forward.1} parent=217 // pred_check
          %p701 = pneg %p175
        $region232: #{spatial_weight_forward.1} parent=217 // pred_check_branch
          %703 = sbr.rel (%p701) target = $region234
        $region233: #{spatial_weight_forward.1} parent=217 // pred_region
          _
        $region234: #{spatial_weight_forward.1} parent=217 // pred_fallthru
          _
        %s704 = sand.u32 %s190, 1
        %s705 = sand.u32 %s190, 1
        %s706 = smul.addr %s705, 128
        %s707 = scalar_lea.vmem [#allocation6], %s706
        // Predicated region
        $region235: #{spatial_weight_forward.1} parent=217 // pred_check
          %p708 = pneg %p203
        $region236: #{spatial_weight_forward.1} parent=217 // pred_check_branch
          %710 = sbr.rel (%p708) target = $region238
        $region237: #{spatial_weight_forward.1} parent=217 // pred_region
          _
        $region238: #{spatial_weight_forward.1} parent=217 // pred_fallthru
          _
        %p711 = pneg %p46
        %p712 = pneg %p43
        %p713 = pneg %p67
        %p714 = pneg %p64
        %s715 = sand.u32 %s80, 1
        %s716 = sand.u32 %s80, 1
        %s717 = smul.addr %s716, 24
        %s718 = scalar_lea.vmem [#allocation2], %s717
        %p719 = pneg %p93
        %p720 = pneg %p90
        %s721 = sand.u32 %s106, 1
        %s722 = sand.u32 %s106, 1
        %s723 = smul.addr %s722, 24
        %s724 = scalar_lea.vmem [#allocation3], %s723
        %p725 = pneg %p119
        %p726 = pneg %p116
        %s727 = sand.u32 %s134, 1
        %s728 = sand.u32 %s134, 1
        %s729 = smul.addr %s728, 128
        %s730 = scalar_lea.vmem [#allocation4], %s729
        %p731 = pneg %p147
        %p732 = pneg %p144
        %s733 = sand.u32 %s162, 1
        %s734 = sand.u32 %s162, 1
        %s735 = smul.addr %s734, 128
        %s736 = scalar_lea.vmem [#allocation5], %s735
        %p737 = pneg %p175
        %p738 = pneg %p172
        %s739 = sand.u32 %s190, 1
        %s740 = sand.u32 %s190, 1
        %s741 = smul.addr %s740, 128
        %s742 = scalar_lea.vmem [#allocation6], %s741
        %p743 = pneg %p203
        %p744 = pneg %p200
        %p745 = pneg %p231
        %p746 = pneg %p228
        %s747 = sand.u32 %s218, 1
        %s748 = sand.u32 %s218, 1
        %s749 = smul.addr %s748, 128
        %s750 = scalar_lea.vmem [#allocation7], %s749
        %s751 = smul.u32 2, %s22
        %s752 = smul.u32 8, %s23
        %s753 = smul.u32 2, %s22
        %s754 = smul.u32 8, %s23
        %s755 = smul.u32 2, %s22
        %s756 = smul.u32 8, %s23
        %s757 = smul.u32 2, %s22
        %s758 = smul.u32 8, %s23
        %v759 = vld [vmem:[%s0] sm:$0xff]
        %v760 = vld [vmem:[%s0 + $0x8] sm:$0xff]
        %v761 = vld [vmem:[%s0 + $0x10] sm:$0xff]
        %v762 = vld [vmem:[%s0 + $0x18] sm:$0xff]
        %v763 = vld [vmem:[%s0 + $0x20] sm:$0xff]
        %v764 = vld [vmem:[%s0 + $0x28] sm:$0xff]
        %v765 = vld [vmem:[%s0 + $0x30] sm:$0xff]
        %v766 = vld [vmem:[%s0 + $0x38] sm:$0xff]
        %v767 = vld [vmem:[%s0 + $0x40] sm:$0xff]
        %v768 = vld [vmem:[%s0 + $0x48] sm:$0xff]
        %v769 = vld [vmem:[%s0 + $0x50] sm:$0xff]
        %v770 = vld [vmem:[%s0 + $0x58] sm:$0xff]
        %v771 = vld [vmem:[%s0 + $0x60] sm:$0xff]
        %v772 = vld [vmem:[%s0 + $0x68] sm:$0xff]
        %v773 = vld [vmem:[%s0 + $0x70] sm:$0xff]
        %v774 = vld [vmem:[%s0 + $0x78] sm:$0xff]
        %v775 = vld [vmem:[%s1] sm:$0xff]
        %v776 = vld [vmem:[%s1 + $0x8] sm:$0xff]
        %v777 = vld [vmem:[%s1 + $0x10] sm:$0xff]
        %v778 = vld [vmem:[%s1 + $0x18] sm:$0xff]
        %v779 = vld [vmem:[%s1 + $0x20] sm:$0xff]
        %v780 = vld [vmem:[%s1 + $0x28] sm:$0xff]
        %v781 = vld [vmem:[%s1 + $0x30] sm:$0xff]
        %v782 = vld [vmem:[%s1 + $0x38] sm:$0xff]
        %v783 = vld [vmem:[%s1 + $0x40] sm:$0xff]
        %v784 = vld [vmem:[%s1 + $0x48] sm:$0xff]
        %v785 = vld [vmem:[%s1 + $0x50] sm:$0xff]
        %v786 = vld [vmem:[%s1 + $0x58] sm:$0xff]
        %v787 = vld [vmem:[%s1 + $0x60] sm:$0xff]
        %v788 = vld [vmem:[%s1 + $0x68] sm:$0xff]
        %v789 = vld [vmem:[%s1 + $0x70] sm:$0xff]
        %v790 = vld [vmem:[%s1 + $0x78] sm:$0xff]
        %v791 = vld [vmem:[%s693] sm:$0xff]
        %v792 = vld [vmem:[%s693 + $0x8] sm:$0xff]
        %v793 = vld [vmem:[%s693 + $0x10] sm:$0xff]
        %v794 = vld [vmem:[%s693 + $0x18] sm:$0xff]
        %v795 = vld [vmem:[%s693 + $0x20] sm:$0xff]
        %v796 = vld [vmem:[%s693 + $0x28] sm:$0xff]
        %v797 = vld [vmem:[%s693 + $0x30] sm:$0xff]
        %v798 = vld [vmem:[%s693 + $0x38] sm:$0xff]
        %v799 = vld [vmem:[%s693 + $0x40] sm:$0xff]
        %v800 = vld [vmem:[%s693 + $0x48] sm:$0xff]
        %v801 = vld [vmem:[%s693 + $0x50] sm:$0xff]
        %v802 = vld [vmem:[%s693 + $0x58] sm:$0xff]
        %v803 = vld [vmem:[%s693 + $0x60] sm:$0xff]
        %v804 = vld [vmem:[%s693 + $0x68] sm:$0xff]
        %v805 = vld [vmem:[%s693 + $0x70] sm:$0xff]
        %v806 = vld [vmem:[%s693 + $0x78] sm:$0xff]
        %807 = vmatprep.subr.mxu0 0.0
        %v808 = vand.u32 %v759, 4294901760
        %809 = vmatpush1.msra.mxu0 %v808
        %810 = vmatprep.subr.mxu0 0.0
        %v811 = vand.u32 %v760, 4294901760
        %812 = vmatpush1.msra.mxu0 %v811
        %813 = vmatprep.subr.mxu0 0.0
        %v814 = vand.u32 %v761, 4294901760
        %815 = vmatpush1.msra.mxu0 %v814
        %816 = vmatprep.subr.mxu0 0.0
        %v817 = vand.u32 %v762, 4294901760
        %818 = vmatpush1.msra.mxu0 %v817
        %819 = vmatprep.subr.mxu0 0.0
        %v820 = vand.u32 %v763, 4294901760
        %821 = vmatpush1.msra.mxu0 %v820
        %822 = vmatprep.subr.mxu0 0.0
        %v823 = vand.u32 %v764, 4294901760
        %824 = vmatpush1.msra.mxu0 %v823
        %825 = vmatprep.subr.mxu0 0.0
        %v826 = vand.u32 %v765, 4294901760
        %827 = vmatpush1.msra.mxu0 %v826
        %828 = vmatprep.subr.mxu0 0.0
        %v829 = vand.u32 %v766, 4294901760
        %830 = vmatpush1.msra.mxu0 %v829
        %831 = vmatprep.subr.mxu0 0.0
        %v832 = vand.u32 %v767, 4294901760
        %833 = vmatpush1.msra.mxu0 %v832
        %834 = vmatprep.subr.mxu0 0.0
        %v835 = vand.u32 %v768, 4294901760
        %836 = vmatpush1.msra.mxu0 %v835
        %837 = vmatprep.subr.mxu0 0.0
        %v838 = vand.u32 %v769, 4294901760
        %839 = vmatpush1.msra.mxu0 %v838
        %840 = vmatprep.subr.mxu0 0.0
        %v841 = vand.u32 %v770, 4294901760
        %842 = vmatpush1.msra.mxu0 %v841
        %843 = vmatprep.subr.mxu0 0.0
        %v844 = vand.u32 %v771, 4294901760
        %845 = vmatpush1.msra.mxu0 %v844
        %846 = vmatprep.subr.mxu0 0.0
        %v847 = vand.u32 %v772, 4294901760
        %848 = vmatpush1.msra.mxu0 %v847
        %849 = vmatprep.subr.mxu0 0.0
        %v850 = vand.u32 %v773, 4294901760
        %851 = vmatpush1.msra.mxu0 %v850
        %852 = vmatprep.subr.mxu0 0.0
        %v853 = vand.u32 %v774, 4294901760
        %854 = vmatpush1.msra.mxu0 %v853
        %855 = vmatprep.subr.mxu0 0.0
        %856 = vmatpush1.msra.mxu0 0.0
        %857 = vmatprep.subr.mxu0 0.0
        %858 = vmatpush1.msra.mxu0 0.0
        %859 = vmatprep.subr.mxu0 0.0
        %860 = vmatpush1.msra.mxu0 0.0
        %861 = vmatprep.subr.mxu0 0.0
        %862 = vmatpush1.msra.mxu0 0.0
        %863 = vmatprep.subr.mxu0 0.0
        %864 = vmatpush1.msra.mxu0 0.0
        %865 = vmatprep.subr.mxu0 0.0
        %866 = vmatpush1.msra.mxu0 0.0
        %867 = vmatprep.subr.mxu0 0.0
        %868 = vmatpush1.msra.mxu0 0.0
        %869 = vmatprep.subr.mxu0 0.0
        %870 = vmatpush1.msra.mxu0 0.0
        %871 = vmatprep.subr.mxu0 0.0
        %872 = vmatpush1.msra.mxu0 0.0
        %873 = vmatprep.subr.mxu0 0.0
        %874 = vmatpush1.msra.mxu0 0.0
        %875 = vmatprep.subr.mxu0 0.0
        %876 = vmatpush1.msra.mxu0 0.0
        %877 = vmatprep.subr.mxu0 0.0
        %878 = vmatpush1.msra.mxu0 0.0
        %879 = vmatprep.subr.mxu0 0.0
        %880 = vmatpush1.msra.mxu0 0.0
        %881 = vmatprep.subr.mxu0 0.0
        %882 = vmatpush1.msra.mxu0 0.0
        %883 = vmatprep.subr.mxu0 0.0
        %884 = vmatpush1.msra.mxu0 0.0
        %885 = vmatprep.subr.mxu0 0.0
        %886 = vmatpush1.msra.mxu0 0.0
        %887 = vmatprep.mubr.f32.mxu0 0.0
        %v888 = vand.u32 %v791, 4294901760
        %v889 = vsub.f32 %v791, %v888
        %v890 = vand.u32 %v889, 4294901760
        %v891 = vsub.f32 %v889, %v890
        %v892 = vand.u32 %v891, 4294901760
        %893 = vmatmul.mubr.f32.gmra.mrb[0].mxu0 %v892
        %v894 = vpop.f32.mrb[0].mxu0
        %v895 = vadd.f32 0.0, %v894
        %v896 = vpop.f32.mrb[0].mxu0
        %897 = vmatprep.mubr.f32.mxu0 0.0
        %v898 = vand.u32 %v792, 4294901760
        %v899 = vsub.f32 %v792, %v898
        %v900 = vand.u32 %v899, 4294901760
        %v901 = vsub.f32 %v899, %v900
        %v902 = vand.u32 %v901, 4294901760
        %903 = vmatmul.mubr.f32.gmra.mrb[0].mxu0 %v902
        %v904 = vpop.f32.mrb[0].mxu0
        %v905 = vadd.f32 0.0, %v904
        %v906 = vpop.f32.mrb[0].mxu0
        %907 = vmatprep.mubr.f32.mxu0 0.0
        %v908 = vand.u32 %v793, 4294901760
        %v909 = vsub.f32 %v793, %v908
        %v910 = vand.u32 %v909, 4294901760
        %v911 = vsub.f32 %v909, %v910
        %v912 = vand.u32 %v911, 4294901760
        %913 = vmatmul.mubr.f32.gmra.mrb[0].mxu0 %v912
        %v914 = vpop.f32.mrb[0].mxu0
        %v915 = vadd.f32 0.0, %v914
        %v916 = vpop.f32.mrb[0].mxu0
        %917 = vmatprep.mubr.f32.mxu0 0.0
        %v918 = vand.u32 %v794, 4294901760
        %v919 = vsub.f32 %v794, %v918
        %v920 = vand.u32 %v919, 4294901760
        %v921 = vsub.f32 %v919, %v920
        %v922 = vand.u32 %v921, 4294901760
        %923 = vmatmul.mubr.f32.gmra.mrb[0].mxu0 %v922
        %v924 = vpop.f32.mrb[0].mxu0
        %v925 = vadd.f32 0.0, %v924
        %v926 = vpop.f32.mrb[0].mxu0
        %927 = vmatprep.mubr.f32.mxu0 0.0
        %v928 = vand.u32 %v795, 4294901760
        %v929 = vsub.f32 %v795, %v928
        %v930 = vand.u32 %v929, 4294901760
        %v931 = vsub.f32 %v929, %v930
        %v932 = vand.u32 %v931, 4294901760
        %933 = vmatmul.mubr.f32.gmra.mrb[0].mxu0 %v932
        %v934 = vpop.f32.mrb[0].mxu0
        %v935 = vadd.f32 0.0, %v934
        %v936 = vpop.f32.mrb[0].mxu0
        %937 = vmatprep.mubr.f32.mxu0 0.0
        %v938 = vand.u32 %v796, 4294901760
        %v939 = vsub.f32 %v796, %v938
        %v940 = vand.u32 %v939, 4294901760
        %v941 = vsub.f32 %v939, %v940
        %v942 = vand.u32 %v941, 4294901760
        %943 = vmatmul.mubr.f32.gmra.mrb[0].mxu0 %v942
        %v944 = vpop.f32.mrb[0].mxu0
        %v945 = vadd.f32 0.0, %v944
        %v946 = vpop.f32.mrb[0].mxu0
        %947 = vmatprep.mubr.f32.mxu0 0.0
        %v948 = vand.u32 %v797, 4294901760
        %v949 = vsub.f32 %v797, %v948
        %v950 = vand.u32 %v949, 4294901760
        %v951 = vsub.f32 %v949, %v950
        %v952 = vand.u32 %v951, 4294901760
        %953 = vmatmul.mubr.f32.gmra.mrb[0].mxu0 %v952
        %v954 = vpop.f32.mrb[0].mxu0
        %v955 = vadd.f32 0.0, %v954
        %v956 = vpop.f32.mrb[0].mxu0
        %957 = vmatprep.mubr.f32.mxu0 0.0
        %v958 = vand.u32 %v798, 4294901760
        %v959 = vsub.f32 %v798, %v958
        %v960 = vand.u32 %v959, 4294901760
        %v961 = vsub.f32 %v959, %v960
        %v962 = vand.u32 %v961, 4294901760
        %963 = vmatmul.mubr.f32.gmra.mrb[0].mxu0 %v962
        %v964 = vpop.f32.mrb[0].mxu0
        %v965 = vadd.f32 0.0, %v964
        %v966 = vpop.f32.mrb[0].mxu0
        %967 = vmatprep.mubr.f32.mxu0 0.0
        %v968 = vand.u32 %v799, 4294901760
        %v969 = vsub.f32 %v799, %v968
        %v970 = vand.u32 %v969, 4294901760
        %v971 = vsub.f32 %v969, %v970
        %v972 = vand.u32 %v971, 4294901760
        %973 = vmatmul.mubr.f32.gmra.mrb[0].mxu0 %v972
        %v974 = vpop.f32.mrb[0].mxu0
        %v975 = vadd.f32 0.0, %v974
        %v976 = vpop.f32.mrb[0].mxu0
        %977 = vmatprep.mubr.f32.mxu0 0.0
        %v978 = vand.u32 %v800, 4294901760
        %v979 = vsub.f32 %v800, %v978
        %v980 = vand.u32 %v979, 4294901760
        %v981 = vsub.f32 %v979, %v980
        %v982 = vand.u32 %v981, 4294901760
        %983 = vmatmul.mubr.f32.gmra.mrb[0].mxu0 %v982
        %v984 = vpop.f32.mrb[0].mxu0
        %v985 = vadd.f32 0.0, %v984
        %v986 = vpop.f32.mrb[0].mxu0
        %987 = vmatprep.mubr.f32.mxu0 0.0
        %v988 = vand.u32 %v801, 4294901760
        %v989 = vsub.f32 %v801, %v988
        %v990 = vand.u32 %v989, 4294901760
        %v991 = vsub.f32 %v989, %v990
        %v992 = vand.u32 %v991, 4294901760
        %993 = vmatmul.mubr.f32.gmra.mrb[0].mxu0 %v992
        %v994 = vpop.f32.mrb[0].mxu0
        %v995 = vadd.f32 0.0, %v994
        %v996 = vpop.f32.mrb[0].mxu0
        %997 = vmatprep.mubr.f32.mxu0 0.0
        %v998 = vand.u32 %v802, 4294901760
        %v999 = vsub.f32 %v802, %v998
        %v1000 = vand.u32 %v999, 4294901760
        %v1001 = vsub.f32 %v999, %v1000
        %v1002 = vand.u32 %v1001, 4294901760
        %1003 = vmatmul.mubr.f32.gmra.mrb[0].mxu0 %v1002
        %v1004 = vpop.f32.mrb[0].mxu0
        %v1005 = vadd.f32 0.0, %v1004
        %v1006 = vpop.f32.mrb[0].mxu0
        %1007 = vmatprep.mubr.f32.mxu0 0.0
        %v1008 = vand.u32 %v803, 4294901760
        %v1009 = vsub.f32 %v803, %v1008
        %v1010 = vand.u32 %v1009, 4294901760
        %v1011 = vsub.f32 %v1009, %v1010
        %v1012 = vand.u32 %v1011, 4294901760
        %1013 = vmatmul.mubr.f32.gmra.mrb[0].mxu0 %v1012
        %v1014 = vpop.f32.mrb[0].mxu0
        %v1015 = vadd.f32 0.0, %v1014
        %v1016 = vpop.f32.mrb[0].mxu0
        %1017 = vmatprep.mubr.f32.mxu0 0.0
        %v1018 = vand.u32 %v804, 4294901760
        %v1019 = vsub.f32 %v804, %v1018
        %v1020 = vand.u32 %v1019, 4294901760
        %v1021 = vsub.f32 %v1019, %v1020
        %v1022 = vand.u32 %v1021, 4294901760
        %1023 = vmatmul.mubr.f32.gmra.mrb[0].mxu0 %v1022
        %v1024 = vpop.f32.mrb[0].mxu0
        %v1025 = vadd.f32 0.0, %v1024
        %v1026 = vpop.f32.mrb[0].mxu0
        %1027 = vmatprep.mubr.f32.mxu0 0.0
        %v1028 = vand.u32 %v805, 4294901760
        %v1029 = vsub.f32 %v805, %v1028
        %v1030 = vand.u32 %v1029, 4294901760
        %v1031 = vsub.f32 %v1029, %v1030
        %v1032 = vand.u32 %v1031, 4294901760
        %1033 = vmatmul.mubr.f32.gmra.mrb[0].mxu0 %v1032
        %v1034 = vpop.f32.mrb[0].mxu0
        %v1035 = vadd.f32 0.0, %v1034
        %v1036 = vpop.f32.mrb[0].mxu0
        %1037 = vmatprep.mubr.f32.mxu0 0.0
        %v1038 = vand.u32 %v806, 4294901760
        %v1039 = vsub.f32 %v806, %v1038
        %v1040 = vand.u32 %v1039, 4294901760
        %v1041 = vsub.f32 %v1039, %v1040
        %v1042 = vand.u32 %v1041, 4294901760
        %1043 = vmatmul.mubr.f32.gmra.mrb[0].mxu0 %v1042
        %v1044 = vpop.f32.mrb[0].mxu0
        %v1045 = vadd.f32 0.0, %v1044
        %v1046 = vpop.f32.mrb[0].mxu0
        %1047 = vdwg.mxu0
        %1048 = vmatprep.subr.mxu0 0.0
        %v1049 = vand.u32 %v759, 4294901760
        %v1050 = vsub.f32 %v759, %v1049
        %v1051 = vand.u32 %v1050, 4294901760
        %v1052 = vsub.f32 %v1050, %v1051
        %v1053 = vand.u32 %v1052, 4294901760
        %1054 = vmatpush1.msra.mxu0 %v1053
        %1055 = vmatprep.subr.mxu0 0.0
        %v1056 = vand.u32 %v760, 4294901760
        %v1057 = vsub.f32 %v760, %v1056
        %v1058 = vand.u32 %v1057, 4294901760
        %v1059 = vsub.f32 %v1057, %v1058
        %v1060 = vand.u32 %v1059, 4294901760
        %1061 = vmatpush1.msra.mxu0 %v1060
        %1062 = vmatprep.subr.mxu0 0.0
        %v1063 = vand.u32 %v761, 4294901760
        %v1064 = vsub.f32 %v761, %v1063
        %v1065 = vand.u32 %v1064, 4294901760
        %v1066 = vsub.f32 %v1064, %v1065
        %v1067 = vand.u32 %v1066, 4294901760
        %1068 = vmatpush1.msra.mxu0 %v1067
        %1069 = vmatprep.subr.mxu0 0.0
        %v1070 = vand.u32 %v762, 4294901760
        %v1071 = vsub.f32 %v762, %v1070
        %v1072 = vand.u32 %v1071, 4294901760
        %v1073 = vsub.f32 %v1071, %v1072
        %v1074 = vand.u32 %v1073, 4294901760
        %1075 = vmatpush1.msra.mxu0 %v1074
        %1076 = vmatprep.subr.mxu0 0.0
        %v1077 = vand.u32 %v763, 4294901760
        %v1078 = vsub.f32 %v763, %v1077
        %v1079 = vand.u32 %v1078, 4294901760
        %v1080 = vsub.f32 %v1078, %v1079
        %v1081 = vand.u32 %v1080, 4294901760
        %1082 = vmatpush1.msra.mxu0 %v1081
        %1083 = vmatprep.subr.mxu0 0.0
        %v1084 = vand.u32 %v764, 4294901760
        %v1085 = vsub.f32 %v764, %v1084
        %v1086 = vand.u32 %v1085, 4294901760
        %v1087 = vsub.f32 %v1085, %v1086
        %v1088 = vand.u32 %v1087, 4294901760
        %1089 = vmatpush1.msra.mxu0 %v1088
        %1090 = vmatprep.subr.mxu0 0.0
        %v1091 = vand.u32 %v765, 4294901760
        %v1092 = vsub.f32 %v765, %v1091
        %v1093 = vand.u32 %v1092, 4294901760
        %v1094 = vsub.f32 %v1092, %v1093
        %v1095 = vand.u32 %v1094, 4294901760
        %1096 = vmatpush1.msra.mxu0 %v1095
        %1097 = vmatprep.subr.mxu0 0.0
        %v1098 = vand.u32 %v766, 4294901760
        %v1099 = vsub.f32 %v766, %v1098
        %v1100 = vand.u32 %v1099, 4294901760
        %v1101 = vsub.f32 %v1099, %v1100
        %v1102 = vand.u32 %v1101, 4294901760
        %1103 = vmatpush1.msra.mxu0 %v1102
        %1104 = vmatprep.subr.mxu0 0.0
        %v1105 = vand.u32 %v767, 4294901760
        %v1106 = vsub.f32 %v767, %v1105
        %v1107 = vand.u32 %v1106, 4294901760
        %v1108 = vsub.f32 %v1106, %v1107
        %v1109 = vand.u32 %v1108, 4294901760
        %1110 = vmatpush1.msra.mxu0 %v1109
        %1111 = vmatprep.subr.mxu0 0.0
        %v1112 = vand.u32 %v768, 4294901760
        %v1113 = vsub.f32 %v768, %v1112
        %v1114 = vand.u32 %v1113, 4294901760
        %v1115 = vsub.f32 %v1113, %v1114
        %v1116 = vand.u32 %v1115, 4294901760
        %1117 = vmatpush1.msra.mxu0 %v1116
        %1118 = vmatprep.subr.mxu0 0.0
        %v1119 = vand.u32 %v769, 4294901760
        %v1120 = vsub.f32 %v769, %v1119
        %v1121 = vand.u32 %v1120, 4294901760
        %v1122 = vsub.f32 %v1120, %v1121
        %v1123 = vand.u32 %v1122, 4294901760
        %1124 = vmatpush1.msra.mxu0 %v1123
        %1125 = vmatprep.subr.mxu0 0.0
        %v1126 = vand.u32 %v770, 4294901760
        %v1127 = vsub.f32 %v770, %v1126
        %v1128 = vand.u32 %v1127, 4294901760
        %v1129 = vsub.f32 %v1127, %v1128
        %v1130 = vand.u32 %v1129, 4294901760
        %1131 = vmatpush1.msra.mxu0 %v1130
        %1132 = vmatprep.subr.mxu0 0.0
        %v1133 = vand.u32 %v771, 4294901760
        %v1134 = vsub.f32 %v771, %v1133
        %v1135 = vand.u32 %v1134, 4294901760
        %v1136 = vsub.f32 %v1134, %v1135
        %v1137 = vand.u32 %v1136, 4294901760
        %1138 = vmatpush1.msra.mxu0 %v1137
        %1139 = vmatprep.subr.mxu0 0.0
        %v1140 = vand.u32 %v772, 4294901760
        %v1141 = vsub.f32 %v772, %v1140
        %v1142 = vand.u32 %v1141, 4294901760
        %v1143 = vsub.f32 %v1141, %v1142
        %v1144 = vand.u32 %v1143, 4294901760
        %1145 = vmatpush1.msra.mxu0 %v1144
        %1146 = vmatprep.subr.mxu0 0.0
        %v1147 = vand.u32 %v773, 4294901760
        %v1148 = vsub.f32 %v773, %v1147
        %v1149 = vand.u32 %v1148, 4294901760
        %v1150 = vsub.f32 %v1148, %v1149
        %v1151 = vand.u32 %v1150, 4294901760
        %1152 = vmatpush1.msra.mxu0 %v1151
        %1153 = vmatprep.subr.mxu0 0.0
        %v1154 = vand.u32 %v774, 4294901760
        %v1155 = vsub.f32 %v774, %v1154
        %v1156 = vand.u32 %v1155, 4294901760
        %v1157 = vsub.f32 %v1155, %v1156
        %v1158 = vand.u32 %v1157, 4294901760
        %1159 = vmatpush1.msra.mxu0 %v1158
        %1160 = vmatprep.subr.mxu0 0.0
        %1161 = vmatpush1.msra.mxu0 0.0
        %1162 = vmatprep.subr.mxu0 0.0
        %1163 = vmatpush1.msra.mxu0 0.0
        %1164 = vmatprep.subr.mxu0 0.0
        %1165 = vmatpush1.msra.mxu0 0.0
        %1166 = vmatprep.subr.mxu0 0.0
        %1167 = vmatpush1.msra.mxu0 0.0
        %1168 = vmatprep.subr.mxu0 0.0
        %1169 = vmatpush1.msra.mxu0 0.0
        %1170 = vmatprep.subr.mxu0 0.0
        %1171 = vmatpush1.msra.mxu0 0.0
        %1172 = vmatprep.subr.mxu0 0.0
        %1173 = vmatpush1.msra.mxu0 0.0
        %1174 = vmatprep.subr.mxu0 0.0
        %1175 = vmatpush1.msra.mxu0 0.0
        %1176 = vmatprep.subr.mxu0 0.0
        %1177 = vmatpush1.msra.mxu0 0.0
        %1178 = vmatprep.subr.mxu0 0.0
        %1179 = vmatpush1.msra.mxu0 0.0
        %1180 = vmatprep.subr.mxu0 0.0
        %1181 = vmatpush1.msra.mxu0 0.0
        %1182 = vmatprep.subr.mxu0 0.0
        %1183 = vmatpush1.msra.mxu0 0.0
        %1184 = vmatprep.subr.mxu0 0.0
        %1185 = vmatpush1.msra.mxu0 0.0
        %1186 = vmatprep.subr.mxu0 0.0
        %1187 = vmatpush1.msra.mxu0 0.0
        %1188 = vmatprep.subr.mxu0 0.0
        %1189 = vmatpush1.msra.mxu0 0.0
        %1190 = vmatprep.subr.mxu0 0.0
        %1191 = vmatpush1.msra.mxu0 0.0
        %1192 = vmatprep.mubr.f32.mxu0 0.0
        %v1193 = vand.u32 %v791, 4294901760
        %1194 = vmatmul.mubr.f32.gmra.mrb[0].mxu0 %v1193
        %v1195 = vpop.f32.mrb[0].mxu0
        %v1196 = vadd.f32 %v895, %v1195
        %v1197 = vpop.f32.mrb[0].mxu0
        %1198 = vmatprep.mubr.f32.mxu0 0.0
        %v1199 = vand.u32 %v792, 4294901760
        %1200 = vmatmul.mubr.f32.gmra.mrb[0].mxu0 %v1199
        %v1201 = vpop.f32.mrb[0].mxu0
        %v1202 = vadd.f32 %v905, %v1201
        %v1203 = vpop.f32.mrb[0].mxu0
        %1204 = vmatprep.mubr.f32.mxu0 0.0
        %v1205 = vand.u32 %v793, 4294901760
        %1206 = vmatmul.mubr.f32.gmra.mrb[0].mxu0 %v1205
        %v1207 = vpop.f32.mrb[0].mxu0
        %v1208 = vadd.f32 %v915, %v1207
        %v1209 = vpop.f32.mrb[0].mxu0
        %1210 = vmatprep.mubr.f32.mxu0 0.0
        %v1211 = vand.u32 %v794, 4294901760
        %1212 = vmatmul.mubr.f32.gmra.mrb[0].mxu0 %v1211
        %v1213 = vpop.f32.mrb[0].mxu0
        %v1214 = vadd.f32 %v925, %v1213
        %v1215 = vpop.f32.mrb[0].mxu0
        %1216 = vmatprep.mubr.f32.mxu0 0.0
        %v1217 = vand.u32 %v795, 4294901760
        %1218 = vmatmul.mubr.f32.gmra.mrb[0].mxu0 %v1217
        %v1219 = vpop.f32.mrb[0].mxu0
        %v1220 = vadd.f32 %v935, %v1219
        %v1221 = vpop.f32.mrb[0].mxu0
        %1222 = vmatprep.mubr.f32.mxu0 0.0
        %v1223 = vand.u32 %v796, 4294901760
        %1224 = vmatmul.mubr.f32.gmra.mrb[0].mxu0 %v1223
        %v1225 = vpop.f32.mrb[0].mxu0
        %v1226 = vadd.f32 %v945, %v1225
        %v1227 = vpop.f32.mrb[0].mxu0
        %1228 = vmatprep.mubr.f32.mxu0 0.0
        %v1229 = vand.u32 %v797, 4294901760
        %1230 = vmatmul.mubr.f32.gmra.mrb[0].mxu0 %v1229
        %v1231 = vpop.f32.mrb[0].mxu0
        %v1232 = vadd.f32 %v955, %v1231
        %v1233 = vpop.f32.mrb[0].mxu0
        %1234 = vmatprep.mubr.f32.mxu0 0.0
        %v1235 = vand.u32 %v798, 4294901760
        %1236 = vmatmul.mubr.f32.gmra.mrb[0].mxu0 %v1235
        %v1237 = vpop.f32.mrb[0].mxu0
        %v1238 = vadd.f32 %v965, %v1237
        %v1239 = vpop.f32.mrb[0].mxu0
        %1240 = vmatprep.mubr.f32.mxu0 0.0
        %v1241 = vand.u32 %v799, 4294901760
        %1242 = vmatmul.mubr.f32.gmra.mrb[0].mxu0 %v1241
        %v1243 = vpop.f32.mrb[0].mxu0
        %v1244 = vadd.f32 %v975, %v1243
        %v1245 = vpop.f32.mrb[0].mxu0
        %1246 = vmatprep.mubr.f32.mxu0 0.0
        %v1247 = vand.u32 %v800, 4294901760
        %1248 = vmatmul.mubr.f32.gmra.mrb[0].mxu0 %v1247
        %v1249 = vpop.f32.mrb[0].mxu0
        %v1250 = vadd.f32 %v985, %v1249
        %v1251 = vpop.f32.mrb[0].mxu0
        %1252 = vmatprep.mubr.f32.mxu0 0.0
        %v1253 = vand.u32 %v801, 4294901760
        %1254 = vmatmul.mubr.f32.gmra.mrb[0].mxu0 %v1253
        %v1255 = vpop.f32.mrb[0].mxu0
        %v1256 = vadd.f32 %v995, %v1255
        %v1257 = vpop.f32.mrb[0].mxu0
        %1258 = vmatprep.mubr.f32.mxu0 0.0
        %v1259 = vand.u32 %v802, 4294901760
        %1260 = vmatmul.mubr.f32.gmra.mrb[0].mxu0 %v1259
        %v1261 = vpop.f32.mrb[0].mxu0
        %v1262 = vadd.f32 %v1005, %v1261
        %v1263 = vpop.f32.mrb[0].mxu0
        %1264 = vmatprep.mubr.f32.mxu0 0.0
        %v1265 = vand.u32 %v803, 4294901760
        %1266 = vmatmul.mubr.f32.gmra.mrb[0].mxu0 %v1265
        %v1267 = vpop.f32.mrb[0].mxu0
        %v1268 = vadd.f32 %v1015, %v1267
        %v1269 = vpop.f32.mrb[0].mxu0
        %1270 = vmatprep.mubr.f32.mxu0 0.0
        %v1271 = vand.u32 %v804, 4294901760
        %1272 = vmatmul.mubr.f32.gmra.mrb[0].mxu0 %v1271
        %v1273 = vpop.f32.mrb[0].mxu0
        %v1274 = vadd.f32 %v1025, %v1273
        %v1275 = vpop.f32.mrb[0].mxu0
        %1276 = vmatprep.mubr.f32.mxu0 0.0
        %v1277 = vand.u32 %v805, 4294901760
        %1278 = vmatmul.mubr.f32.gmra.mrb[0].mxu0 %v1277
        %v1279 = vpop.f32.mrb[0].mxu0
        %v1280 = vadd.f32 %v1035, %v1279
        %v1281 = vpop.f32.mrb[0].mxu0
        %1282 = vmatprep.mubr.f32.mxu0 0.0
        %v1283 = vand.u32 %v806, 4294901760
        %1284 = vmatmul.mubr.f32.gmra.mrb[0].mxu0 %v1283
        %v1285 = vpop.f32.mrb[0].mxu0
        %v1286 = vadd.f32 %v1045, %v1285
        %v1287 = vpop.f32.mrb[0].mxu0
        %1288 = vdwg.mxu0
        %1289 = vmatprep.subr.mxu0 0.0
        %v1290 = vand.u32 %v759, 4294901760
        %v1291 = vsub.f32 %v759, %v1290
        %1292 = vmatpush1.msra.mxu0 %v1291
        %1293 = vmatprep.subr.mxu0 0.0
        %v1294 = vand.u32 %v760, 4294901760
        %v1295 = vsub.f32 %v760, %v1294
        %1296 = vmatpush1.msra.mxu0 %v1295
        %1297 = vmatprep.subr.mxu0 0.0
        %v1298 = vand.u32 %v761, 4294901760
        %v1299 = vsub.f32 %v761, %v1298
        %1300 = vmatpush1.msra.mxu0 %v1299
        %1301 = vmatprep.subr.mxu0 0.0
        %v1302 = vand.u32 %v762, 4294901760
        %v1303 = vsub.f32 %v762, %v1302
        %1304 = vmatpush1.msra.mxu0 %v1303
        %1305 = vmatprep.subr.mxu0 0.0
        %v1306 = vand.u32 %v763, 4294901760
        %v1307 = vsub.f32 %v763, %v1306
        %1308 = vmatpush1.msra.mxu0 %v1307
        %1309 = vmatprep.subr.mxu0 0.0
        %v1310 = vand.u32 %v764, 4294901760
        %v1311 = vsub.f32 %v764, %v1310
        %1312 = vmatpush1.msra.mxu0 %v1311
        %1313 = vmatprep.subr.mxu0 0.0
        %v1314 = vand.u32 %v765, 4294901760
        %v1315 = vsub.f32 %v765, %v1314
        %1316 = vmatpush1.msra.mxu0 %v1315
        %1317 = vmatprep.subr.mxu0 0.0
        %v1318 = vand.u32 %v766, 4294901760
        %v1319 = vsub.f32 %v766, %v1318
        %1320 = vmatpush1.msra.mxu0 %v1319
        %1321 = vmatprep.subr.mxu0 0.0
        %v1322 = vand.u32 %v767, 4294901760
        %v1323 = vsub.f32 %v767, %v1322
        %1324 = vmatpush1.msra.mxu0 %v1323
        %1325 = vmatprep.subr.mxu0 0.0
        %v1326 = vand.u32 %v768, 4294901760
        %v1327 = vsub.f32 %v768, %v1326
        %1328 = vmatpush1.msra.mxu0 %v1327
        %1329 = vmatprep.subr.mxu0 0.0
        %v1330 = vand.u32 %v769, 4294901760
        %v1331 = vsub.f32 %v769, %v1330
        %1332 = vmatpush1.msra.mxu0 %v1331
        %1333 = vmatprep.subr.mxu0 0.0
        %v1334 = vand.u32 %v770, 4294901760
        %v1335 = vsub.f32 %v770, %v1334
        %1336 = vmatpush1.msra.mxu0 %v1335
        %1337 = vmatprep.subr.mxu0 0.0
        %v1338 = vand.u32 %v771, 4294901760
        %v1339 = vsub.f32 %v771, %v1338
        %1340 = vmatpush1.msra.mxu0 %v1339
        %1341 = vmatprep.subr.mxu0 0.0
        %v1342 = vand.u32 %v772, 4294901760
        %v1343 = vsub.f32 %v772, %v1342
        %1344 = vmatpush1.msra.mxu0 %v1343
        %1345 = vmatprep.subr.mxu0 0.0
        %v1346 = vand.u32 %v773, 4294901760
        %v1347 = vsub.f32 %v773, %v1346
        %1348 = vmatpush1.msra.mxu0 %v1347
        %1349 = vmatprep.subr.mxu0 0.0
        %v1350 = vand.u32 %v774, 4294901760
        %v1351 = vsub.f32 %v774, %v1350
        %1352 = vmatpush1.msra.mxu0 %v1351
        %1353 = vmatprep.subr.mxu0 0.0
        %1354 = vmatpush1.msra.mxu0 0.0
        %1355 = vmatprep.subr.mxu0 0.0
        %1356 = vmatpush1.msra.mxu0 0.0
        %1357 = vmatprep.subr.mxu0 0.0
        %1358 = vmatpush1.msra.mxu0 0.0
        %1359 = vmatprep.subr.mxu0 0.0
        %1360 = vmatpush1.msra.mxu0 0.0
        %1361 = vmatprep.subr.mxu0 0.0
        %1362 = vmatpush1.msra.mxu0 0.0
        %1363 = vmatprep.subr.mxu0 0.0
        %1364 = vmatpush1.msra.mxu0 0.0
        %1365 = vmatprep.subr.mxu0 0.0
        %1366 = vmatpush1.msra.mxu0 0.0
        %1367 = vmatprep.subr.mxu0 0.0
        %1368 = vmatpush1.msra.mxu0 0.0
        %1369 = vmatprep.subr.mxu0 0.0
        %1370 = vmatpush1.msra.mxu0 0.0
        %1371 = vmatprep.subr.mxu0 0.0
        %1372 = vmatpush1.msra.mxu0 0.0
        %1373 = vmatprep.subr.mxu0 0.0
        %1374 = vmatpush1.msra.mxu0 0.0
        %1375 = vmatprep.subr.mxu0 0.0
        %1376 = vmatpush1.msra.mxu0 0.0
        %1377 = vmatprep.subr.mxu0 0.0
        %1378 = vmatpush1.msra.mxu0 0.0
        %1379 = vmatprep.subr.mxu0 0.0
        %1380 = vmatpush1.msra.mxu0 0.0
        %1381 = vmatprep.subr.mxu0 0.0
        %1382 = vmatpush1.msra.mxu0 0.0
        %1383 = vmatprep.subr.mxu0 0.0
        %1384 = vmatpush1.msra.mxu0 0.0
        %1385 = vmatprep.mubr.f32.mxu0 0.0
        %v1386 = vand.u32 %v791, 4294901760
        %v1387 = vsub.f32 %v791, %v1386
        %1388 = vmatmul.mubr.f32.gmra.mrb[0].mxu0 %v1387
        %v1389 = vpop.f32.mrb[0].mxu0
        %v1390 = vadd.f32 %v1196, %v1389
        %v1391 = vpop.f32.mrb[0].mxu0
        %1392 = vmatprep.mubr.f32.mxu0 0.0
        %v1393 = vand.u32 %v792, 4294901760
        %v1394 = vsub.f32 %v792, %v1393
        %1395 = vmatmul.mubr.f32.gmra.mrb[0].mxu0 %v1394
        %v1396 = vpop.f32.mrb[0].mxu0
        %v1397 = vadd.f32 %v1202, %v1396
        %v1398 = vpop.f32.mrb[0].mxu0
        %1399 = vmatprep.mubr.f32.mxu0 0.0
        %v1400 = vand.u32 %v793, 4294901760
        %v1401 = vsub.f32 %v793, %v1400
        %1402 = vmatmul.mubr.f32.gmra.mrb[0].mxu0 %v1401
        %v1403 = vpop.f32.mrb[0].mxu0
        %v1404 = vadd.f32 %v1208, %v1403
        %v1405 = vpop.f32.mrb[0].mxu0
        %1406 = vmatprep.mubr.f32.mxu0 0.0
        %v1407 = vand.u32 %v794, 4294901760
        %v1408 = vsub.f32 %v794, %v1407
        %1409 = vmatmul.mubr.f32.gmra.mrb[0].mxu0 %v1408
        %v1410 = vpop.f32.mrb[0].mxu0
        %v1411 = vadd.f32 %v1214, %v1410
        %v1412 = vpop.f32.mrb[0].mxu0
        %1413 = vmatprep.mubr.f32.mxu0 0.0
        %v1414 = vand.u32 %v795, 4294901760
        %v1415 = vsub.f32 %v795, %v1414
        %1416 = vmatmul.mubr.f32.gmra.mrb[0].mxu0 %v1415
        %v1417 = vpop.f32.mrb[0].mxu0
        %v1418 = vadd.f32 %v1220, %v1417
        %v1419 = vpop.f32.mrb[0].mxu0
        %1420 = vmatprep.mubr.f32.mxu0 0.0
        %v1421 = vand.u32 %v796, 4294901760
        %v1422 = vsub.f32 %v796, %v1421
        %1423 = vmatmul.mubr.f32.gmra.mrb[0].mxu0 %v1422
        %v1424 = vpop.f32.mrb[0].mxu0
        %v1425 = vadd.f32 %v1226, %v1424
        %v1426 = vpop.f32.mrb[0].mxu0
        %1427 = vmatprep.mubr.f32.mxu0 0.0
        %v1428 = vand.u32 %v797, 4294901760
        %v1429 = vsub.f32 %v797, %v1428
        %1430 = vmatmul.mubr.f32.gmra.mrb[0].mxu0 %v1429
        %v1431 = vpop.f32.mrb[0].mxu0
        %v1432 = vadd.f32 %v1232, %v1431
        %v1433 = vpop.f32.mrb[0].mxu0
        %1434 = vmatprep.mubr.f32.mxu0 0.0
        %v1435 = vand.u32 %v798, 4294901760
        %v1436 = vsub.f32 %v798, %v1435
        %1437 = vmatmul.mubr.f32.gmra.mrb[0].mxu0 %v1436
        %v1438 = vpop.f32.mrb[0].mxu0
        %v1439 = vadd.f32 %v1238, %v1438
        %v1440 = vpop.f32.mrb[0].mxu0
        %1441 = vmatprep.mubr.f32.mxu0 0.0
        %v1442 = vand.u32 %v799, 4294901760
        %v1443 = vsub.f32 %v799, %v1442
        %1444 = vmatmul.mubr.f32.gmra.mrb[0].mxu0 %v1443
        %v1445 = vpop.f32.mrb[0].mxu0
        %v1446 = vadd.f32 %v1244, %v1445
        %v1447 = vpop.f32.mrb[0].mxu0
        %1448 = vmatprep.mubr.f32.mxu0 0.0
        %v1449 = vand.u32 %v800, 4294901760
        %v1450 = vsub.f32 %v800, %v1449
        %1451 = vmatmul.mubr.f32.gmra.mrb[0].mxu0 %v1450
        %v1452 = vpop.f32.mrb[0].mxu0
        %v1453 = vadd.f32 %v1250, %v1452
        %v1454 = vpop.f32.mrb[0].mxu0
        %1455 = vmatprep.mubr.f32.mxu0 0.0
        %v1456 = vand.u32 %v801, 4294901760
        %v1457 = vsub.f32 %v801, %v1456
        %1458 = vmatmul.mubr.f32.gmra.mrb[0].mxu0 %v1457
        %v1459 = vpop.f32.mrb[0].mxu0
        %v1460 = vadd.f32 %v1256, %v1459
        %v1461 = vpop.f32.mrb[0].mxu0
        %1462 = vmatprep.mubr.f32.mxu0 0.0
        %v1463 = vand.u32 %v802, 4294901760
        %v1464 = vsub.f32 %v802, %v1463
        %1465 = vmatmul.mubr.f32.gmra.mrb[0].mxu0 %v1464
        %v1466 = vpop.f32.mrb[0].mxu0
        %v1467 = vadd.f32 %v1262, %v1466
        %v1468 = vpop.f32.mrb[0].mxu0
        %1469 = vmatprep.mubr.f32.mxu0 0.0
        %v1470 = vand.u32 %v803, 4294901760
        %v1471 = vsub.f32 %v803, %v1470
        %1472 = vmatmul.mubr.f32.gmra.mrb[0].mxu0 %v1471
        %v1473 = vpop.f32.mrb[0].mxu0
        %v1474 = vadd.f32 %v1268, %v1473
        %v1475 = vpop.f32.mrb[0].mxu0
        %1476 = vmatprep.mubr.f32.mxu0 0.0
        %v1477 = vand.u32 %v804, 4294901760
        %v1478 = vsub.f32 %v804, %v1477
        %1479 = vmatmul.mubr.f32.gmra.mrb[0].mxu0 %v1478
        %v1480 = vpop.f32.mrb[0].mxu0
        %v1481 = vadd.f32 %v1274, %v1480
        %v1482 = vpop.f32.mrb[0].mxu0
        %1483 = vmatprep.mubr.f32.mxu0 0.0
        %v1484 = vand.u32 %v805, 4294901760
        %v1485 = vsub.f32 %v805, %v1484
        %1486 = vmatmul.mubr.f32.gmra.mrb[0].mxu0 %v1485
        %v1487 = vpop.f32.mrb[0].mxu0
        %v1488 = vadd.f32 %v1280, %v1487
        %v1489 = vpop.f32.mrb[0].mxu0
        %1490 = vmatprep.mubr.f32.mxu0 0.0
        %v1491 = vand.u32 %v806, 4294901760
        %v1492 = vsub.f32 %v806, %v1491
        %1493 = vmatmul.mubr.f32.gmra.mrb[0].mxu0 %v1492
        %v1494 = vpop.f32.mrb[0].mxu0
        %v1495 = vadd.f32 %v1286, %v1494
        %v1496 = vpop.f32.mrb[0].mxu0
        %1497 = vdwg.mxu0
        %1498 = vmatprep.subr.mxu0 0.0
        %v1499 = vand.u32 %v759, 4294901760
        %1500 = vmatpush1.msra.mxu0 %v1499
        %1501 = vmatprep.subr.mxu0 0.0
        %v1502 = vand.u32 %v760, 4294901760
        %1503 = vmatpush1.msra.mxu0 %v1502
        %1504 = vmatprep.subr.mxu0 0.0
        %v1505 = vand.u32 %v761, 4294901760
        %1506 = vmatpush1.msra.mxu0 %v1505
        %1507 = vmatprep.subr.mxu0 0.0
        %v1508 = vand.u32 %v762, 4294901760
        %1509 = vmatpush1.msra.mxu0 %v1508
        %1510 = vmatprep.subr.mxu0 0.0
        %v1511 = vand.u32 %v763, 4294901760
        %1512 = vmatpush1.msra.mxu0 %v1511
        %1513 = vmatprep.subr.mxu0 0.0
        %v1514 = vand.u32 %v764, 4294901760
        %1515 = vmatpush1.msra.mxu0 %v1514
        %1516 = vmatprep.subr.mxu0 0.0
        %v1517 = vand.u32 %v765, 4294901760
        %1518 = vmatpush1.msra.mxu0 %v1517
        %1519 = vmatprep.subr.mxu0 0.0
        %v1520 = vand.u32 %v766, 4294901760
        %1521 = vmatpush1.msra.mxu0 %v1520
        %1522 = vmatprep.subr.mxu0 0.0
        %v1523 = vand.u32 %v767, 4294901760
        %1524 = vmatpush1.msra.mxu0 %v1523
        %1525 = vmatprep.subr.mxu0 0.0
        %v1526 = vand.u32 %v768, 4294901760
        %1527 = vmatpush1.msra.mxu0 %v1526
        %1528 = vmatprep.subr.mxu0 0.0
        %v1529 = vand.u32 %v769, 4294901760
        %1530 = vmatpush1.msra.mxu0 %v1529
        %1531 = vmatprep.subr.mxu0 0.0
        %v1532 = vand.u32 %v770, 4294901760
        %1533 = vmatpush1.msra.mxu0 %v1532
        %1534 = vmatprep.subr.mxu0 0.0
        %v1535 = vand.u32 %v771, 4294901760
        %1536 = vmatpush1.msra.mxu0 %v1535
        %1537 = vmatprep.subr.mxu0 0.0
        %v1538 = vand.u32 %v772, 4294901760
        %1539 = vmatpush1.msra.mxu0 %v1538
        %1540 = vmatprep.subr.mxu0 0.0
        %v1541 = vand.u32 %v773, 4294901760
        %1542 = vmatpush1.msra.mxu0 %v1541
        %1543 = vmatprep.subr.mxu0 0.0
        %v1544 = vand.u32 %v774, 4294901760
        %1545 = vmatpush1.msra.mxu0 %v1544
        %1546 = vmatprep.subr.mxu0 0.0
        %1547 = vmatpush1.msra.mxu0 0.0
        %1548 = vmatprep.subr.mxu0 0.0
        %1549 = vmatpush1.msra.mxu0 0.0
        %1550 = vmatprep.subr.mxu0 0.0
        %1551 = vmatpush1.msra.mxu0 0.0
        %1552 = vmatprep.subr.mxu0 0.0
        %1553 = vmatpush1.msra.mxu0 0.0
        %1554 = vmatprep.subr.mxu0 0.0
        %1555 = vmatpush1.msra.mxu0 0.0
        %1556 = vmatprep.subr.mxu0 0.0
        %1557 = vmatpush1.msra.mxu0 0.0
        %1558 = vmatprep.subr.mxu0 0.0
        %1559 = vmatpush1.msra.mxu0 0.0
        %1560 = vmatprep.subr.mxu0 0.0
        %1561 = vmatpush1.msra.mxu0 0.0
        %1562 = vmatprep.subr.mxu0 0.0
        %1563 = vmatpush1.msra.mxu0 0.0
        %1564 = vmatprep.subr.mxu0 0.0
        %1565 = vmatpush1.msra.mxu0 0.0
        %1566 = vmatprep.subr.mxu0 0.0
        %1567 = vmatpush1.msra.mxu0 0.0
        %1568 = vmatprep.subr.mxu0 0.0
        %1569 = vmatpush1.msra.mxu0 0.0
        %1570 = vmatprep.subr.mxu0 0.0
        %1571 = vmatpush1.msra.mxu0 0.0
        %1572 = vmatprep.subr.mxu0 0.0
        %1573 = vmatpush1.msra.mxu0 0.0
        %1574 = vmatprep.subr.mxu0 0.0
        %1575 = vmatpush1.msra.mxu0 0.0
        %1576 = vmatprep.subr.mxu0 0.0
        %1577 = vmatpush1.msra.mxu0 0.0
        %1578 = vmatprep.mubr.f32.mxu0 0.0
        %v1579 = vand.u32 %v791, 4294901760
        %v1580 = vsub.f32 %v791, %v1579
        %v1581 = vand.u32 %v1580, 4294901760
        %1582 = vmatmul.mubr.f32.gmra.mrb[0].mxu0 %v1581
        %v1583 = vpop.f32.mrb[0].mxu0
        %v1584 = vadd.f32 %v1390, %v1583
        %v1585 = vpop.f32.mrb[0].mxu0
        %1586 = vmatprep.mubr.f32.mxu0 0.0
        %v1587 = vand.u32 %v792, 4294901760
        %v1588 = vsub.f32 %v792, %v1587
        %v1589 = vand.u32 %v1588, 4294901760
        %1590 = vmatmul.mubr.f32.gmra.mrb[0].mxu0 %v1589
        %v1591 = vpop.f32.mrb[0].mxu0
        %v1592 = vadd.f32 %v1397, %v1591
        %v1593 = vpop.f32.mrb[0].mxu0
        %1594 = vmatprep.mubr.f32.mxu0 0.0
        %v1595 = vand.u32 %v793, 4294901760
        %v1596 = vsub.f32 %v793, %v1595
        %v1597 = vand.u32 %v1596, 4294901760
        %1598 = vmatmul.mubr.f32.gmra.mrb[0].mxu0 %v1597
        %v1599 = vpop.f32.mrb[0].mxu0
        %v1600 = vadd.f32 %v1404, %v1599
        %v1601 = vpop.f32.mrb[0].mxu0
        %1602 = vmatprep.mubr.f32.mxu0 0.0
        %v1603 = vand.u32 %v794, 4294901760
        %v1604 = vsub.f32 %v794, %v1603
        %v1605 = vand.u32 %v1604, 4294901760
        %1606 = vmatmul.mubr.f32.gmra.mrb[0].mxu0 %v1605
        %v1607 = vpop.f32.mrb[0].mxu0
        %v1608 = vadd.f32 %v1411, %v1607
        %v1609 = vpop.f32.mrb[0].mxu0
        %1610 = vmatprep.mubr.f32.mxu0 0.0
        %v1611 = vand.u32 %v795, 4294901760
        %v1612 = vsub.f32 %v795, %v1611
        %v1613 = vand.u32 %v1612, 4294901760
        %1614 = vmatmul.mubr.f32.gmra.mrb[0].mxu0 %v1613
        %v1615 = vpop.f32.mrb[0].mxu0
        %v1616 = vadd.f32 %v1418, %v1615
        %v1617 = vpop.f32.mrb[0].mxu0
        %1618 = vmatprep.mubr.f32.mxu0 0.0
        %v1619 = vand.u32 %v796, 4294901760
        %v1620 = vsub.f32 %v796, %v1619
        %v1621 = vand.u32 %v1620, 4294901760
        %1622 = vmatmul.mubr.f32.gmra.mrb[0].mxu0 %v1621
        %v1623 = vpop.f32.mrb[0].mxu0
        %v1624 = vadd.f32 %v1425, %v1623
        %v1625 = vpop.f32.mrb[0].mxu0
        %1626 = vmatprep.mubr.f32.mxu0 0.0
        %v1627 = vand.u32 %v797, 4294901760
        %v1628 = vsub.f32 %v797, %v1627
        %v1629 = vand.u32 %v1628, 4294901760
        %1630 = vmatmul.mubr.f32.gmra.mrb[0].mxu0 %v1629
        %v1631 = vpop.f32.mrb[0].mxu0
        %v1632 = vadd.f32 %v1432, %v1631
        %v1633 = vpop.f32.mrb[0].mxu0
        %1634 = vmatprep.mubr.f32.mxu0 0.0
        %v1635 = vand.u32 %v798, 4294901760
        %v1636 = vsub.f32 %v798, %v1635
        %v1637 = vand.u32 %v1636, 4294901760
        %1638 = vmatmul.mubr.f32.gmra.mrb[0].mxu0 %v1637
        %v1639 = vpop.f32.mrb[0].mxu0
        %v1640 = vadd.f32 %v1439, %v1639
        %v1641 = vpop.f32.mrb[0].mxu0
        %1642 = vmatprep.mubr.f32.mxu0 0.0
        %v1643 = vand.u32 %v799, 4294901760
        %v1644 = vsub.f32 %v799, %v1643
        %v1645 = vand.u32 %v1644, 4294901760
        %1646 = vmatmul.mubr.f32.gmra.mrb[0].mxu0 %v1645
        %v1647 = vpop.f32.mrb[0].mxu0
        %v1648 = vadd.f32 %v1446, %v1647
        %v1649 = vpop.f32.mrb[0].mxu0
        %1650 = vmatprep.mubr.f32.mxu0 0.0
        %v1651 = vand.u32 %v800, 4294901760
        %v1652 = vsub.f32 %v800, %v1651
        %v1653 = vand.u32 %v1652, 4294901760
        %1654 = vmatmul.mubr.f32.gmra.mrb[0].mxu0 %v1653
        %v1655 = vpop.f32.mrb[0].mxu0
        %v1656 = vadd.f32 %v1453, %v1655
        %v1657 = vpop.f32.mrb[0].mxu0
        %1658 = vmatprep.mubr.f32.mxu0 0.0
        %v1659 = vand.u32 %v801, 4294901760
        %v1660 = vsub.f32 %v801, %v1659
        %v1661 = vand.u32 %v1660, 4294901760
        %1662 = vmatmul.mubr.f32.gmra.mrb[0].mxu0 %v1661
        %v1663 = vpop.f32.mrb[0].mxu0
        %v1664 = vadd.f32 %v1460, %v1663
        %v1665 = vpop.f32.mrb[0].mxu0
        %1666 = vmatprep.mubr.f32.mxu0 0.0
        %v1667 = vand.u32 %v802, 4294901760
        %v1668 = vsub.f32 %v802, %v1667
        %v1669 = vand.u32 %v1668, 4294901760
        %1670 = vmatmul.mubr.f32.gmra.mrb[0].mxu0 %v1669
        %v1671 = vpop.f32.mrb[0].mxu0
        %v1672 = vadd.f32 %v1467, %v1671
        %v1673 = vpop.f32.mrb[0].mxu0
        %1674 = vmatprep.mubr.f32.mxu0 0.0
        %v1675 = vand.u32 %v803, 4294901760
        %v1676 = vsub.f32 %v803, %v1675
        %v1677 = vand.u32 %v1676, 4294901760
        %1678 = vmatmul.mubr.f32.gmra.mrb[0].mxu0 %v1677
        %v1679 = vpop.f32.mrb[0].mxu0
        %v1680 = vadd.f32 %v1474, %v1679
        %v1681 = vpop.f32.mrb[0].mxu0
        %1682 = vmatprep.mubr.f32.mxu0 0.0
        %v1683 = vand.u32 %v804, 4294901760
        %v1684 = vsub.f32 %v804, %v1683
        %v1685 = vand.u32 %v1684, 4294901760
        %1686 = vmatmul.mubr.f32.gmra.mrb[0].mxu0 %v1685
        %v1687 = vpop.f32.mrb[0].mxu0
        %v1688 = vadd.f32 %v1481, %v1687
        %v1689 = vpop.f32.mrb[0].mxu0
        %1690 = vmatprep.mubr.f32.mxu0 0.0
        %v1691 = vand.u32 %v805, 4294901760
        %v1692 = vsub.f32 %v805, %v1691
        %v1693 = vand.u32 %v1692, 4294901760
        %1694 = vmatmul.mubr.f32.gmra.mrb[0].mxu0 %v1693
        %v1695 = vpop.f32.mrb[0].mxu0
        %v1696 = vadd.f32 %v1488, %v1695
        %v1697 = vpop.f32.mrb[0].mxu0
        %1698 = vmatprep.mubr.f32.mxu0 0.0
        %v1699 = vand.u32 %v806, 4294901760
        %v1700 = vsub.f32 %v806, %v1699
        %v1701 = vand.u32 %v1700, 4294901760
        %1702 = vmatmul.mubr.f32.gmra.mrb[0].mxu0 %v1701
        %v1703 = vpop.f32.mrb[0].mxu0
        %v1704 = vadd.f32 %v1495, %v1703
        %v1705 = vpop.f32.mrb[0].mxu0
        %1706 = vdwg.mxu0
        %1707 = vmatprep.subr.mxu0 0.0
        %v1708 = vand.u32 %v759, 4294901760
        %v1709 = vsub.f32 %v759, %v1708
        %v1710 = vand.u32 %v1709, 4294901760
        %1711 = vmatpush1.msra.mxu0 %v1710
        %1712 = vmatprep.subr.mxu0 0.0
        %v1713 = vand.u32 %v760, 4294901760
        %v1714 = vsub.f32 %v760, %v1713
        %v1715 = vand.u32 %v1714, 4294901760
        %1716 = vmatpush1.msra.mxu0 %v1715
        %1717 = vmatprep.subr.mxu0 0.0
        %v1718 = vand.u32 %v761, 4294901760
        %v1719 = vsub.f32 %v761, %v1718
        %v1720 = vand.u32 %v1719, 4294901760
        %1721 = vmatpush1.msra.mxu0 %v1720
        %1722 = vmatprep.subr.mxu0 0.0
        %v1723 = vand.u32 %v762, 4294901760
        %v1724 = vsub.f32 %v762, %v1723
        %v1725 = vand.u32 %v1724, 4294901760
        %1726 = vmatpush1.msra.mxu0 %v1725
        %1727 = vmatprep.subr.mxu0 0.0
        %v1728 = vand.u32 %v763, 4294901760
        %v1729 = vsub.f32 %v763, %v1728
        %v1730 = vand.u32 %v1729, 4294901760
        %1731 = vmatpush1.msra.mxu0 %v1730
        %1732 = vmatprep.subr.mxu0 0.0
        %v1733 = vand.u32 %v764, 4294901760
        %v1734 = vsub.f32 %v764, %v1733
        %v1735 = vand.u32 %v1734, 4294901760
        %1736 = vmatpush1.msra.mxu0 %v1735
        %1737 = vmatprep.subr.mxu0 0.0
        %v1738 = vand.u32 %v765, 4294901760
        %v1739 = vsub.f32 %v765, %v1738
        %v1740 = vand.u32 %v1739, 4294901760
        %1741 = vmatpush1.msra.mxu0 %v1740
        %1742 = vmatprep.subr.mxu0 0.0
        %v1743 = vand.u32 %v766, 4294901760
        %v1744 = vsub.f32 %v766, %v1743
        %v1745 = vand.u32 %v1744, 4294901760
        %1746 = vmatpush1.msra.mxu0 %v1745
        %1747 = vmatprep.subr.mxu0 0.0
        %v1748 = vand.u32 %v767, 4294901760
        %v1749 = vsub.f32 %v767, %v1748
        %v1750 = vand.u32 %v1749, 4294901760
        %1751 = vmatpush1.msra.mxu0 %v1750
        %1752 = vmatprep.subr.mxu0 0.0
        %v1753 = vand.u32 %v768, 4294901760
        %v1754 = vsub.f32 %v768, %v1753
        %v1755 = vand.u32 %v1754, 4294901760
        %1756 = vmatpush1.msra.mxu0 %v1755
        %1757 = vmatprep.subr.mxu0 0.0
        %v1758 = vand.u32 %v769, 4294901760
        %v1759 = vsub.f32 %v769, %v1758
        %v1760 = vand.u32 %v1759, 4294901760
        %1761 = vmatpush1.msra.mxu0 %v1760
        %1762 = vmatprep.subr.mxu0 0.0
        %v1763 = vand.u32 %v770, 4294901760
        %v1764 = vsub.f32 %v770, %v1763
        %v1765 = vand.u32 %v1764, 4294901760
        %1766 = vmatpush1.msra.mxu0 %v1765
        %1767 = vmatprep.subr.mxu0 0.0
        %v1768 = vand.u32 %v771, 4294901760
        %v1769 = vsub.f32 %v771, %v1768
        %v1770 = vand.u32 %v1769, 4294901760
        %1771 = vmatpush1.msra.mxu0 %v1770
        %1772 = vmatprep.subr.mxu0 0.0
        %v1773 = vand.u32 %v772, 4294901760
        %v1774 = vsub.f32 %v772, %v1773
        %v1775 = vand.u32 %v1774, 4294901760
        %1776 = vmatpush1.msra.mxu0 %v1775
        %1777 = vmatprep.subr.mxu0 0.0
        %v1778 = vand.u32 %v773, 4294901760
        %v1779 = vsub.f32 %v773, %v1778
        %v1780 = vand.u32 %v1779, 4294901760
        %1781 = vmatpush1.msra.mxu0 %v1780
        %1782 = vmatprep.subr.mxu0 0.0
        %v1783 = vand.u32 %v774, 4294901760
        %v1784 = vsub.f32 %v774, %v1783
        %v1785 = vand.u32 %v1784, 4294901760
        %1786 = vmatpush1.msra.mxu0 %v1785
        %1787 = vmatprep.subr.mxu0 0.0
        %1788 = vmatpush1.msra.mxu0 0.0
        %1789 = vmatprep.subr.mxu0 0.0
        %1790 = vmatpush1.msra.mxu0 0.0
        %1791 = vmatprep.subr.mxu0 0.0
        %1792 = vmatpush1.msra.mxu0 0.0
        %1793 = vmatprep.subr.mxu0 0.0
        %1794 = vmatpush1.msra.mxu0 0.0
        %1795 = vmatprep.subr.mxu0 0.0
        %1796 = vmatpush1.msra.mxu0 0.0
        %1797 = vmatprep.subr.mxu0 0.0
        %1798 = vmatpush1.msra.mxu0 0.0
        %1799 = vmatprep.subr.mxu0 0.0
        %1800 = vmatpush1.msra.mxu0 0.0
        %1801 = vmatprep.subr.mxu0 0.0
        %1802 = vmatpush1.msra.mxu0 0.0
        %1803 = vmatprep.subr.mxu0 0.0
        %1804 = vmatpush1.msra.mxu0 0.0
        %1805 = vmatprep.subr.mxu0 0.0
        %1806 = vmatpush1.msra.mxu0 0.0
        %1807 = vmatprep.subr.mxu0 0.0
        %1808 = vmatpush1.msra.mxu0 0.0
        %1809 = vmatprep.subr.mxu0 0.0
        %1810 = vmatpush1.msra.mxu0 0.0
        %1811 = vmatprep.subr.mxu0 0.0
        %1812 = vmatpush1.msra.mxu0 0.0
        %1813 = vmatprep.subr.mxu0 0.0
        %1814 = vmatpush1.msra.mxu0 0.0
        %1815 = vmatprep.subr.mxu0 0.0
        %1816 = vmatpush1.msra.mxu0 0.0
        %1817 = vmatprep.subr.mxu0 0.0
        %1818 = vmatpush1.msra.mxu0 0.0
        %1819 = vmatprep.mubr.f32.mxu0 0.0
        %v1820 = vand.u32 %v791, 4294901760
        %1821 = vmatmul.mubr.f32.gmra.mrb[0].mxu0 %v1820
        %v1822 = vpop.f32.mrb[0].mxu0
        %v1823 = vadd.f32 %v1584, %v1822
        %v1824 = vpop.f32.mrb[0].mxu0
        %1825 = vmatprep.mubr.f32.mxu0 0.0
        %v1826 = vand.u32 %v792, 4294901760
        %1827 = vmatmul.mubr.f32.gmra.mrb[0].mxu0 %v1826
        %v1828 = vpop.f32.mrb[0].mxu0
        %v1829 = vadd.f32 %v1592, %v1828
        %v1830 = vpop.f32.mrb[0].mxu0
        %1831 = vmatprep.mubr.f32.mxu0 0.0
        %v1832 = vand.u32 %v793, 4294901760
        %1833 = vmatmul.mubr.f32.gmra.mrb[0].mxu0 %v1832
        %v1834 = vpop.f32.mrb[0].mxu0
        %v1835 = vadd.f32 %v1600, %v1834
        %v1836 = vpop.f32.mrb[0].mxu0
        %1837 = vmatprep.mubr.f32.mxu0 0.0
        %v1838 = vand.u32 %v794, 4294901760
        %1839 = vmatmul.mubr.f32.gmra.mrb[0].mxu0 %v1838
        %v1840 = vpop.f32.mrb[0].mxu0
        %v1841 = vadd.f32 %v1608, %v1840
        %v1842 = vpop.f32.mrb[0].mxu0
        %1843 = vmatprep.mubr.f32.mxu0 0.0
        %v1844 = vand.u32 %v795, 4294901760
        %1845 = vmatmul.mubr.f32.gmra.mrb[0].mxu0 %v1844
        %v1846 = vpop.f32.mrb[0].mxu0
        %v1847 = vadd.f32 %v1616, %v1846
        %v1848 = vpop.f32.mrb[0].mxu0
        %1849 = vmatprep.mubr.f32.mxu0 0.0
        %v1850 = vand.u32 %v796, 4294901760
        %1851 = vmatmul.mubr.f32.gmra.mrb[0].mxu0 %v1850
        %v1852 = vpop.f32.mrb[0].mxu0
        %v1853 = vadd.f32 %v1624, %v1852
        %v1854 = vpop.f32.mrb[0].mxu0
        %1855 = vmatprep.mubr.f32.mxu0 0.0
        %v1856 = vand.u32 %v797, 4294901760
        %1857 = vmatmul.mubr.f32.gmra.mrb[0].mxu0 %v1856
        %v1858 = vpop.f32.mrb[0].mxu0
        %v1859 = vadd.f32 %v1632, %v1858
        %v1860 = vpop.f32.mrb[0].mxu0
        %1861 = vmatprep.mubr.f32.mxu0 0.0
        %v1862 = vand.u32 %v798, 4294901760
        %1863 = vmatmul.mubr.f32.gmra.mrb[0].mxu0 %v1862
        %v1864 = vpop.f32.mrb[0].mxu0
        %v1865 = vadd.f32 %v1640, %v1864
        %v1866 = vpop.f32.mrb[0].mxu0
        %1867 = vmatprep.mubr.f32.mxu0 0.0
        %v1868 = vand.u32 %v799, 4294901760
        %1869 = vmatmul.mubr.f32.gmra.mrb[0].mxu0 %v1868
        %v1870 = vpop.f32.mrb[0].mxu0
        %v1871 = vadd.f32 %v1648, %v1870
        %v1872 = vpop.f32.mrb[0].mxu0
        %1873 = vmatprep.mubr.f32.mxu0 0.0
        %v1874 = vand.u32 %v800, 4294901760
        %1875 = vmatmul.mubr.f32.gmra.mrb[0].mxu0 %v1874
        %v1876 = vpop.f32.mrb[0].mxu0
        %v1877 = vadd.f32 %v1656, %v1876
        %v1878 = vpop.f32.mrb[0].mxu0
        %1879 = vmatprep.mubr.f32.mxu0 0.0
        %v1880 = vand.u32 %v801, 4294901760
        %1881 = vmatmul.mubr.f32.gmra.mrb[0].mxu0 %v1880
        %v1882 = vpop.f32.mrb[0].mxu0
        %v1883 = vadd.f32 %v1664, %v1882
        %v1884 = vpop.f32.mrb[0].mxu0
        %1885 = vmatprep.mubr.f32.mxu0 0.0
        %v1886 = vand.u32 %v802, 4294901760
        %1887 = vmatmul.mubr.f32.gmra.mrb[0].mxu0 %v1886
        %v1888 = vpop.f32.mrb[0].mxu0
        %v1889 = vadd.f32 %v1672, %v1888
        %v1890 = vpop.f32.mrb[0].mxu0
        %1891 = vmatprep.mubr.f32.mxu0 0.0
        %v1892 = vand.u32 %v803, 4294901760
        %1893 = vmatmul.mubr.f32.gmra.mrb[0].mxu0 %v1892
        %v1894 = vpop.f32.mrb[0].mxu0
        %v1895 = vadd.f32 %v1680, %v1894
        %v1896 = vpop.f32.mrb[0].mxu0
        %1897 = vmatprep.mubr.f32.mxu0 0.0
        %v1898 = vand.u32 %v804, 4294901760
        %1899 = vmatmul.mubr.f32.gmra.mrb[0].mxu0 %v1898
        %v1900 = vpop.f32.mrb[0].mxu0
        %v1901 = vadd.f32 %v1688, %v1900
        %v1902 = vpop.f32.mrb[0].mxu0
        %1903 = vmatprep.mubr.f32.mxu0 0.0
        %v1904 = vand.u32 %v805, 4294901760
        %1905 = vmatmul.mubr.f32.gmra.mrb[0].mxu0 %v1904
        %v1906 = vpop.f32.mrb[0].mxu0
        %v1907 = vadd.f32 %v1696, %v1906
        %v1908 = vpop.f32.mrb[0].mxu0
        %1909 = vmatprep.mubr.f32.mxu0 0.0
        %v1910 = vand.u32 %v806, 4294901760
        %1911 = vmatmul.mubr.f32.gmra.mrb[0].mxu0 %v1910
        %v1912 = vpop.f32.mrb[0].mxu0
        %v1913 = vadd.f32 %v1704, %v1912
        %v1914 = vpop.f32.mrb[0].mxu0
        %1915 = vdwg.mxu0
        %1916 = vmatprep.subr.mxu0 0.0
        %v1917 = vand.u32 %v759, 4294901760
        %1918 = vmatpush1.msra.mxu0 %v1917
        %1919 = vmatprep.subr.mxu0 0.0
        %v1920 = vand.u32 %v760, 4294901760
        %1921 = vmatpush1.msra.mxu0 %v1920
        %1922 = vmatprep.subr.mxu0 0.0
        %v1923 = vand.u32 %v761, 4294901760
        %1924 = vmatpush1.msra.mxu0 %v1923
        %1925 = vmatprep.subr.mxu0 0.0
        %v1926 = vand.u32 %v762, 4294901760
        %1927 = vmatpush1.msra.mxu0 %v1926
        %1928 = vmatprep.subr.mxu0 0.0
        %v1929 = vand.u32 %v763, 4294901760
        %1930 = vmatpush1.msra.mxu0 %v1929
        %1931 = vmatprep.subr.mxu0 0.0
        %v1932 = vand.u32 %v764, 4294901760
        %1933 = vmatpush1.msra.mxu0 %v1932
        %1934 = vmatprep.subr.mxu0 0.0
        %v1935 = vand.u32 %v765, 4294901760
        %1936 = vmatpush1.msra.mxu0 %v1935
        %1937 = vmatprep.subr.mxu0 0.0
        %v1938 = vand.u32 %v766, 4294901760
        %1939 = vmatpush1.msra.mxu0 %v1938
        %1940 = vmatprep.subr.mxu0 0.0
        %v1941 = vand.u32 %v767, 4294901760
        %1942 = vmatpush1.msra.mxu0 %v1941
        %1943 = vmatprep.subr.mxu0 0.0
        %v1944 = vand.u32 %v768, 4294901760
        %1945 = vmatpush1.msra.mxu0 %v1944
        %1946 = vmatprep.subr.mxu0 0.0
        %v1947 = vand.u32 %v769, 4294901760
        %1948 = vmatpush1.msra.mxu0 %v1947
        %1949 = vmatprep.subr.mxu0 0.0
        %v1950 = vand.u32 %v770, 4294901760
        %1951 = vmatpush1.msra.mxu0 %v1950
        %1952 = vmatprep.subr.mxu0 0.0
        %v1953 = vand.u32 %v771, 4294901760
        %1954 = vmatpush1.msra.mxu0 %v1953
        %1955 = vmatprep.subr.mxu0 0.0
        %v1956 = vand.u32 %v772, 4294901760
        %1957 = vmatpush1.msra.mxu0 %v1956
        %1958 = vmatprep.subr.mxu0 0.0
        %v1959 = vand.u32 %v773, 4294901760
        %1960 = vmatpush1.msra.mxu0 %v1959
        %1961 = vmatprep.subr.mxu0 0.0
        %v1962 = vand.u32 %v774, 4294901760
        %1963 = vmatpush1.msra.mxu0 %v1962
        %1964 = vmatprep.subr.mxu0 0.0
        %1965 = vmatpush1.msra.mxu0 0.0
        %1966 = vmatprep.subr.mxu0 0.0
        %1967 = vmatpush1.msra.mxu0 0.0
        %1968 = vmatprep.subr.mxu0 0.0
        %1969 = vmatpush1.msra.mxu0 0.0
        %1970 = vmatprep.subr.mxu0 0.0
        %1971 = vmatpush1.msra.mxu0 0.0
        %1972 = vmatprep.subr.mxu0 0.0
        %1973 = vmatpush1.msra.mxu0 0.0
        %1974 = vmatprep.subr.mxu0 0.0
        %1975 = vmatpush1.msra.mxu0 0.0
        %1976 = vmatprep.subr.mxu0 0.0
        %1977 = vmatpush1.msra.mxu0 0.0
        %1978 = vmatprep.subr.mxu0 0.0
        %1979 = vmatpush1.msra.mxu0 0.0
        %1980 = vmatprep.subr.mxu0 0.0
        %1981 = vmatpush1.msra.mxu0 0.0
        %1982 = vmatprep.subr.mxu0 0.0
        %1983 = vmatpush1.msra.mxu0 0.0
        %1984 = vmatprep.subr.mxu0 0.0
        %1985 = vmatpush1.msra.mxu0 0.0
        %1986 = vmatprep.subr.mxu0 0.0
        %1987 = vmatpush1.msra.mxu0 0.0
        %1988 = vmatprep.subr.mxu0 0.0
        %1989 = vmatpush1.msra.mxu0 0.0
        %1990 = vmatprep.subr.mxu0 0.0
        %1991 = vmatpush1.msra.mxu0 0.0
        %1992 = vmatprep.subr.mxu0 0.0
        %1993 = vmatpush1.msra.mxu0 0.0
        %1994 = vmatprep.subr.mxu0 0.0
        %1995 = vmatpush1.msra.mxu0 0.0
        %1996 = vmatprep.mubr.f32.mxu0 0.0
        %v1997 = vand.u32 %v791, 4294901760
        %1998 = vmatmul.mubr.f32.gmra.mrb[0].mxu0 %v1997
        %v1999 = vpop.f32.mrb[0].mxu0
        %v2000 = vadd.f32 %v1823, %v1999
        %v2001 = vpop.f32.mrb[0].mxu0
        %2002 = vmatprep.mubr.f32.mxu0 0.0
        %v2003 = vand.u32 %v792, 4294901760
        %2004 = vmatmul.mubr.f32.gmra.mrb[0].mxu0 %v2003
        %v2005 = vpop.f32.mrb[0].mxu0
        %v2006 = vadd.f32 %v1829, %v2005
        %v2007 = vpop.f32.mrb[0].mxu0
        %2008 = vmatprep.mubr.f32.mxu0 0.0
        %v2009 = vand.u32 %v793, 4294901760
        %2010 = vmatmul.mubr.f32.gmra.mrb[0].mxu0 %v2009
        %v2011 = vpop.f32.mrb[0].mxu0
        %v2012 = vadd.f32 %v1835, %v2011
        %v2013 = vpop.f32.mrb[0].mxu0
        %2014 = vmatprep.mubr.f32.mxu0 0.0
        %v2015 = vand.u32 %v794, 4294901760
        %2016 = vmatmul.mubr.f32.gmra.mrb[0].mxu0 %v2015
        %v2017 = vpop.f32.mrb[0].mxu0
        %v2018 = vadd.f32 %v1841, %v2017
        %v2019 = vpop.f32.mrb[0].mxu0
        %2020 = vmatprep.mubr.f32.mxu0 0.0
        %v2021 = vand.u32 %v795, 4294901760
        %2022 = vmatmul.mubr.f32.gmra.mrb[0].mxu0 %v2021
        %v2023 = vpop.f32.mrb[0].mxu0
        %v2024 = vadd.f32 %v1847, %v2023
        %v2025 = vpop.f32.mrb[0].mxu0
        %2026 = vmatprep.mubr.f32.mxu0 0.0
        %v2027 = vand.u32 %v796, 4294901760
        %2028 = vmatmul.mubr.f32.gmra.mrb[0].mxu0 %v2027
        %v2029 = vpop.f32.mrb[0].mxu0
        %v2030 = vadd.f32 %v1853, %v2029
        %v2031 = vpop.f32.mrb[0].mxu0
        %2032 = vmatprep.mubr.f32.mxu0 0.0
        %v2033 = vand.u32 %v797, 4294901760
        %2034 = vmatmul.mubr.f32.gmra.mrb[0].mxu0 %v2033
        %v2035 = vpop.f32.mrb[0].mxu0
        %v2036 = vadd.f32 %v1859, %v2035
        %v2037 = vpop.f32.mrb[0].mxu0
        %2038 = vmatprep.mubr.f32.mxu0 0.0
        %v2039 = vand.u32 %v798, 4294901760
        %2040 = vmatmul.mubr.f32.gmra.mrb[0].mxu0 %v2039
        %v2041 = vpop.f32.mrb[0].mxu0
        %v2042 = vadd.f32 %v1865, %v2041
        %v2043 = vpop.f32.mrb[0].mxu0
        %2044 = vmatprep.mubr.f32.mxu0 0.0
        %v2045 = vand.u32 %v799, 4294901760
        %2046 = vmatmul.mubr.f32.gmra.mrb[0].mxu0 %v2045
        %v2047 = vpop.f32.mrb[0].mxu0
        %v2048 = vadd.f32 %v1871, %v2047
        %v2049 = vpop.f32.mrb[0].mxu0
        %2050 = vmatprep.mubr.f32.mxu0 0.0
        %v2051 = vand.u32 %v800, 4294901760
        %2052 = vmatmul.mubr.f32.gmra.mrb[0].mxu0 %v2051
        %v2053 = vpop.f32.mrb[0].mxu0
        %v2054 = vadd.f32 %v1877, %v2053
        %v2055 = vpop.f32.mrb[0].mxu0
        %2056 = vmatprep.mubr.f32.mxu0 0.0
        %v2057 = vand.u32 %v801, 4294901760
        %2058 = vmatmul.mubr.f32.gmra.mrb[0].mxu0 %v2057
        %v2059 = vpop.f32.mrb[0].mxu0
        %v2060 = vadd.f32 %v1883, %v2059
        %v2061 = vpop.f32.mrb[0].mxu0
        %2062 = vmatprep.mubr.f32.mxu0 0.0
        %v2063 = vand.u32 %v802, 4294901760
        %2064 = vmatmul.mubr.f32.gmra.mrb[0].mxu0 %v2063
        %v2065 = vpop.f32.mrb[0].mxu0
        %v2066 = vadd.f32 %v1889, %v2065
        %v2067 = vpop.f32.mrb[0].mxu0
        %2068 = vmatprep.mubr.f32.mxu0 0.0
        %v2069 = vand.u32 %v803, 4294901760
        %2070 = vmatmul.mubr.f32.gmra.mrb[0].mxu0 %v2069
        %v2071 = vpop.f32.mrb[0].mxu0
        %v2072 = vadd.f32 %v1895, %v2071
        %v2073 = vpop.f32.mrb[0].mxu0
        %2074 = vmatprep.mubr.f32.mxu0 0.0
        %v2075 = vand.u32 %v804, 4294901760
        %2076 = vmatmul.mubr.f32.gmra.mrb[0].mxu0 %v2075
        %v2077 = vpop.f32.mrb[0].mxu0
        %v2078 = vadd.f32 %v1901, %v2077
        %v2079 = vpop.f32.mrb[0].mxu0
        %2080 = vmatprep.mubr.f32.mxu0 0.0
        %v2081 = vand.u32 %v805, 4294901760
        %2082 = vmatmul.mubr.f32.gmra.mrb[0].mxu0 %v2081
        %v2083 = vpop.f32.mrb[0].mxu0
        %v2084 = vadd.f32 %v1907, %v2083
        %v2085 = vpop.f32.mrb[0].mxu0
        %2086 = vmatprep.mubr.f32.mxu0 0.0
        %v2087 = vand.u32 %v806, 4294901760
        %2088 = vmatmul.mubr.f32.gmra.mrb[0].mxu0 %v2087
        %v2089 = vpop.f32.mrb[0].mxu0
        %v2090 = vadd.f32 %v1913, %v2089
        %v2091 = vpop.f32.mrb[0].mxu0
        %2092 = vdwg.mxu0
        %v2093 = vmul.f32 %v791, %v2000
        %v2094 = vmul.f32 %v792, %v2006
        %v2095 = vmul.f32 %v793, %v2012
        %v2096 = vmul.f32 %v794, %v2018
        %v2097 = vmul.f32 %v795, %v2024
        %v2098 = vmul.f32 %v796, %v2030
        %v2099 = vmul.f32 %v797, %v2036
        %v2100 = vmul.f32 %v798, %v2042
        %v2101 = vmul.f32 %v799, %v2048
        %v2102 = vmul.f32 %v800, %v2054
        %v2103 = vmul.f32 %v801, %v2060
        %v2104 = vmul.f32 %v802, %v2066
        %v2105 = vmul.f32 %v803, %v2072
        %v2106 = vmul.f32 %v804, %v2078
        %v2107 = vmul.f32 %v805, %v2084
        %v2108 = vmul.f32 %v806, %v2090
        %v2109 = vrot.slane %v2093, 4
        %v2110 = vadd.f32 %v2093, %v2109
        %v2111 = vrot.slane %v2110, 2
        %v2112 = vadd.f32 %v2110, %v2111
        %v2113 = vrot.slane %v2112, 1
        %v2114 = vadd.f32 %v2112, %v2113
        %v2115 = vrot.slane %v2094, 4
        %v2116 = vadd.f32 %v2094, %v2115
        %v2117 = vrot.slane %v2116, 2
        %v2118 = vadd.f32 %v2116, %v2117
        %v2119 = vrot.slane %v2118, 1
        %v2120 = vadd.f32 %v2118, %v2119
        %v2121 = vrot.slane %v2095, 4
        %v2122 = vadd.f32 %v2095, %v2121
        %v2123 = vrot.slane %v2122, 2
        %v2124 = vadd.f32 %v2122, %v2123
        %v2125 = vrot.slane %v2124, 1
        %v2126 = vadd.f32 %v2124, %v2125
        %v2127 = vrot.slane %v2096, 4
        %v2128 = vadd.f32 %v2096, %v2127
        %v2129 = vrot.slane %v2128, 2
        %v2130 = vadd.f32 %v2128, %v2129
        %v2131 = vrot.slane %v2130, 1
        %v2132 = vadd.f32 %v2130, %v2131
        %v2133 = vrot.slane %v2097, 4
        %v2134 = vadd.f32 %v2097, %v2133
        %v2135 = vrot.slane %v2134, 2
        %v2136 = vadd.f32 %v2134, %v2135
        %v2137 = vrot.slane %v2136, 1
        %v2138 = vadd.f32 %v2136, %v2137
        %v2139 = vrot.slane %v2098, 4
        %v2140 = vadd.f32 %v2098, %v2139
        %v2141 = vrot.slane %v2140, 2
        %v2142 = vadd.f32 %v2140, %v2141
        %v2143 = vrot.slane %v2142, 1
        %v2144 = vadd.f32 %v2142, %v2143
        %v2145 = vrot.slane %v2099, 4
        %v2146 = vadd.f32 %v2099, %v2145
        %v2147 = vrot.slane %v2146, 2
        %v2148 = vadd.f32 %v2146, %v2147
        %v2149 = vrot.slane %v2148, 1
        %v2150 = vadd.f32 %v2148, %v2149
        %v2151 = vrot.slane %v2100, 4
        %v2152 = vadd.f32 %v2100, %v2151
        %v2153 = vrot.slane %v2152, 2
        %v2154 = vadd.f32 %v2152, %v2153
        %v2155 = vrot.slane %v2154, 1
        %v2156 = vadd.f32 %v2154, %v2155
        %v2157 = vrot.slane %v2101, 4
        %v2158 = vadd.f32 %v2101, %v2157
        %v2159 = vrot.slane %v2158, 2
        %v2160 = vadd.f32 %v2158, %v2159
        %v2161 = vrot.slane %v2160, 1
        %v2162 = vadd.f32 %v2160, %v2161
        %v2163 = vrot.slane %v2102, 4
        %v2164 = vadd.f32 %v2102, %v2163
        %v2165 = vrot.slane %v2164, 2
        %v2166 = vadd.f32 %v2164, %v2165
        %v2167 = vrot.slane %v2166, 1
        %v2168 = vadd.f32 %v2166, %v2167
        %v2169 = vrot.slane %v2103, 4
        %v2170 = vadd.f32 %v2103, %v2169
        %v2171 = vrot.slane %v2170, 2
        %v2172 = vadd.f32 %v2170, %v2171
        %v2173 = vrot.slane %v2172, 1
        %v2174 = vadd.f32 %v2172, %v2173
        %v2175 = vrot.slane %v2104, 4
        %v2176 = vadd.f32 %v2104, %v2175
        %v2177 = vrot.slane %v2176, 2
        %v2178 = vadd.f32 %v2176, %v2177
        %v2179 = vrot.slane %v2178, 1
        %v2180 = vadd.f32 %v2178, %v2179
        %v2181 = vrot.slane %v2105, 4
        %v2182 = vadd.f32 %v2105, %v2181
        %v2183 = vrot.slane %v2182, 2
        %v2184 = vadd.f32 %v2182, %v2183
        %v2185 = vrot.slane %v2184, 1
        %v2186 = vadd.f32 %v2184, %v2185
        %v2187 = vrot.slane %v2106, 4
        %v2188 = vadd.f32 %v2106, %v2187
        %v2189 = vrot.slane %v2188, 2
        %v2190 = vadd.f32 %v2188, %v2189
        %v2191 = vrot.slane %v2190, 1
        %v2192 = vadd.f32 %v2190, %v2191
        %v2193 = vrot.slane %v2107, 4
        %v2194 = vadd.f32 %v2107, %v2193
        %v2195 = vrot.slane %v2194, 2
        %v2196 = vadd.f32 %v2194, %v2195
        %v2197 = vrot.slane %v2196, 1
        %v2198 = vadd.f32 %v2196, %v2197
        %v2199 = vrot.slane %v2108, 4
        %v2200 = vadd.f32 %v2108, %v2199
        %v2201 = vrot.slane %v2200, 2
        %v2202 = vadd.f32 %v2200, %v2201
        %v2203 = vrot.slane %v2202, 1
        %v2204 = vadd.f32 %v2202, %v2203
        %vm2221 = vcmask 1041409
        %v2222 = vsel %vm2221, %v2120, %v2114
        %vm2223 = vcmask 1042434
        %v2224 = vsel %vm2223, %v2126, %v2222
        %vm2225 = vcmask 1043459
        %v2226 = vsel %vm2225, %v2132, %v2224
        %vm2227 = vcmask 1044484
        %v2228 = vsel %vm2227, %v2138, %v2226
        %vm2229 = vcmask 1045509
        %v2230 = vsel %vm2229, %v2144, %v2228
        %vm2231 = vcmask 1046534
        %v2232 = vsel %vm2231, %v2150, %v2230
        %vm2233 = vcmask 1047559
        %v2234 = vsel %vm2233, %v2156, %v2232
        %v2235 = vsel %vm2221, %v2168, %v2162
        %v2236 = vsel %vm2223, %v2174, %v2235
        %v2237 = vsel %vm2225, %v2180, %v2236
        %v2238 = vsel %vm2227, %v2186, %v2237
        %v2239 = vsel %vm2229, %v2192, %v2238
        %v2240 = vsel %vm2231, %v2198, %v2239
        %v2241 = vsel %vm2233, %v2204, %v2240
        %2244 = vmatprep.subr.mxu0 0.0
        %v2245 = vand.u32 %v775, 4294901760
        %2246 = vmatpush1.msra.mxu0 %v2245
        %2247 = vmatprep.subr.mxu0 0.0
        %v2248 = vand.u32 %v776, 4294901760
        %2249 = vmatpush1.msra.mxu0 %v2248
        %2250 = vmatprep.subr.mxu0 0.0
        %v2251 = vand.u32 %v777, 4294901760
        %2252 = vmatpush1.msra.mxu0 %v2251
        %2253 = vmatprep.subr.mxu0 0.0
        %v2254 = vand.u32 %v778, 4294901760
        %2255 = vmatpush1.msra.mxu0 %v2254
        %2256 = vmatprep.subr.mxu0 0.0
        %v2257 = vand.u32 %v779, 4294901760
        %2258 = vmatpush1.msra.mxu0 %v2257
        %2259 = vmatprep.subr.mxu0 0.0
        %v2260 = vand.u32 %v780, 4294901760
        %2261 = vmatpush1.msra.mxu0 %v2260
        %2262 = vmatprep.subr.mxu0 0.0
        %v2263 = vand.u32 %v781, 4294901760
        %2264 = vmatpush1.msra.mxu0 %v2263
        %2265 = vmatprep.subr.mxu0 0.0
        %v2266 = vand.u32 %v782, 4294901760
        %2267 = vmatpush1.msra.mxu0 %v2266
        %2268 = vmatprep.subr.mxu0 0.0
        %v2269 = vand.u32 %v783, 4294901760
        %2270 = vmatpush1.msra.mxu0 %v2269
        %2271 = vmatprep.subr.mxu0 0.0
        %v2272 = vand.u32 %v784, 4294901760
        %2273 = vmatpush1.msra.mxu0 %v2272
        %2274 = vmatprep.subr.mxu0 0.0
        %v2275 = vand.u32 %v785, 4294901760
        %2276 = vmatpush1.msra.mxu0 %v2275
        %2277 = vmatprep.subr.mxu0 0.0
        %v2278 = vand.u32 %v786, 4294901760
        %2279 = vmatpush1.msra.mxu0 %v2278
        %2280 = vmatprep.subr.mxu0 0.0
        %v2281 = vand.u32 %v787, 4294901760
        %2282 = vmatpush1.msra.mxu0 %v2281
        %2283 = vmatprep.subr.mxu0 0.0
        %v2284 = vand.u32 %v788, 4294901760
        %2285 = vmatpush1.msra.mxu0 %v2284
        %2286 = vmatprep.subr.mxu0 0.0
        %v2287 = vand.u32 %v789, 4294901760
        %2288 = vmatpush1.msra.mxu0 %v2287
        %2289 = vmatprep.subr.mxu0 0.0
        %v2290 = vand.u32 %v790, 4294901760
        %2291 = vmatpush1.msra.mxu0 %v2290
        %2292 = vmatprep.subr.mxu0 0.0
        %2293 = vmatpush1.msra.mxu0 0.0
        %2294 = vmatprep.subr.mxu0 0.0
        %2295 = vmatpush1.msra.mxu0 0.0
        %2296 = vmatprep.subr.mxu0 0.0
        %2297 = vmatpush1.msra.mxu0 0.0
        %2298 = vmatprep.subr.mxu0 0.0
        %2299 = vmatpush1.msra.mxu0 0.0
        %2300 = vmatprep.subr.mxu0 0.0
        %2301 = vmatpush1.msra.mxu0 0.0
        %2302 = vmatprep.subr.mxu0 0.0
        %2303 = vmatpush1.msra.mxu0 0.0
        %2304 = vmatprep.subr.mxu0 0.0
        %2305 = vmatpush1.msra.mxu0 0.0
        %2306 = vmatprep.subr.mxu0 0.0
        %2307 = vmatpush1.msra.mxu0 0.0
        %2308 = vmatprep.subr.mxu0 0.0
        %2309 = vmatpush1.msra.mxu0 0.0
        %2310 = vmatprep.subr.mxu0 0.0
        %2311 = vmatpush1.msra.mxu0 0.0
        %2312 = vmatprep.subr.mxu0 0.0
        %2313 = vmatpush1.msra.mxu0 0.0
        %2314 = vmatprep.subr.mxu0 0.0
        %2315 = vmatpush1.msra.mxu0 0.0
        %2316 = vmatprep.subr.mxu0 0.0
        %2317 = vmatpush1.msra.mxu0 0.0
        %2318 = vmatprep.subr.mxu0 0.0
        %2319 = vmatpush1.msra.mxu0 0.0
        %2320 = vmatprep.subr.mxu0 0.0
        %2321 = vmatpush1.msra.mxu0 0.0
        %2322 = vmatprep.subr.mxu0 0.0
        %2323 = vmatpush1.msra.mxu0 0.0
        %2324 = vmatprep.mubr.f32.mxu0 0.0
        %v2325 = vand.u32 %v2234, 4294901760
        %v2326 = vsub.f32 %v2234, %v2325
        %v2327 = vand.u32 %v2326, 4294901760
        %v2328 = vsub.f32 %v2326, %v2327
        %v2329 = vand.u32 %v2328, 4294901760
        %2330 = vmatmul.mubr.f32.gmra.mrb[0].mxu0 %v2329
        %v2331 = vpop.f32.mrb[0].mxu0
        %v2332 = vadd.f32 0.0, %v2331
        %v2333 = vpop.f32.mrb[0].mxu0
        %2334 = vmatprep.mubr.f32.mxu0 0.0
        %v2335 = vand.u32 %v2241, 4294901760
        %v2336 = vsub.f32 %v2241, %v2335
        %v2337 = vand.u32 %v2336, 4294901760
        %v2338 = vsub.f32 %v2336, %v2337
        %v2339 = vand.u32 %v2338, 4294901760
        %2340 = vmatmul.mubr.f32.gmra.mrb[0].mxu0 %v2339
        %v2341 = vpop.f32.mrb[0].mxu0
        %v2342 = vadd.f32 0.0, %v2341
        %v2343 = vpop.f32.mrb[0].mxu0
        %2344 = vdwg.mxu0
        %2345 = vmatprep.subr.mxu0 0.0
        %v2346 = vand.u32 %v775, 4294901760
        %v2347 = vsub.f32 %v775, %v2346
        %v2348 = vand.u32 %v2347, 4294901760
        %v2349 = vsub.f32 %v2347, %v2348
        %v2350 = vand.u32 %v2349, 4294901760
        %2351 = vmatpush1.msra.mxu0 %v2350
        %2352 = vmatprep.subr.mxu0 0.0
        %v2353 = vand.u32 %v776, 4294901760
        %v2354 = vsub.f32 %v776, %v2353
        %v2355 = vand.u32 %v2354, 4294901760
        %v2356 = vsub.f32 %v2354, %v2355
        %v2357 = vand.u32 %v2356, 4294901760
        %2358 = vmatpush1.msra.mxu0 %v2357
        %2359 = vmatprep.subr.mxu0 0.0
        %v2360 = vand.u32 %v777, 4294901760
        %v2361 = vsub.f32 %v777, %v2360
        %v2362 = vand.u32 %v2361, 4294901760
        %v2363 = vsub.f32 %v2361, %v2362
        %v2364 = vand.u32 %v2363, 4294901760
        %2365 = vmatpush1.msra.mxu0 %v2364
        %2366 = vmatprep.subr.mxu0 0.0
        %v2367 = vand.u32 %v778, 4294901760
        %v2368 = vsub.f32 %v778, %v2367
        %v2369 = vand.u32 %v2368, 4294901760
        %v2370 = vsub.f32 %v2368, %v2369
        %v2371 = vand.u32 %v2370, 4294901760
        %2372 = vmatpush1.msra.mxu0 %v2371
        %2373 = vmatprep.subr.mxu0 0.0
        %v2374 = vand.u32 %v779, 4294901760
        %v2375 = vsub.f32 %v779, %v2374
        %v2376 = vand.u32 %v2375, 4294901760
        %v2377 = vsub.f32 %v2375, %v2376
        %v2378 = vand.u32 %v2377, 4294901760
        %2379 = vmatpush1.msra.mxu0 %v2378
        %2380 = vmatprep.subr.mxu0 0.0
        %v2381 = vand.u32 %v780, 4294901760
        %v2382 = vsub.f32 %v780, %v2381
        %v2383 = vand.u32 %v2382, 4294901760
        %v2384 = vsub.f32 %v2382, %v2383
        %v2385 = vand.u32 %v2384, 4294901760
        %2386 = vmatpush1.msra.mxu0 %v2385
        %2387 = vmatprep.subr.mxu0 0.0
        %v2388 = vand.u32 %v781, 4294901760
        %v2389 = vsub.f32 %v781, %v2388
        %v2390 = vand.u32 %v2389, 4294901760
        %v2391 = vsub.f32 %v2389, %v2390
        %v2392 = vand.u32 %v2391, 4294901760
        %2393 = vmatpush1.msra.mxu0 %v2392
        %2394 = vmatprep.subr.mxu0 0.0
        %v2395 = vand.u32 %v782, 4294901760
        %v2396 = vsub.f32 %v782, %v2395
        %v2397 = vand.u32 %v2396, 4294901760
        %v2398 = vsub.f32 %v2396, %v2397
        %v2399 = vand.u32 %v2398, 4294901760
        %2400 = vmatpush1.msra.mxu0 %v2399
        %2401 = vmatprep.subr.mxu0 0.0
        %v2402 = vand.u32 %v783, 4294901760
        %v2403 = vsub.f32 %v783, %v2402
        %v2404 = vand.u32 %v2403, 4294901760
        %v2405 = vsub.f32 %v2403, %v2404
        %v2406 = vand.u32 %v2405, 4294901760
        %2407 = vmatpush1.msra.mxu0 %v2406
        %2408 = vmatprep.subr.mxu0 0.0
        %v2409 = vand.u32 %v784, 4294901760
        %v2410 = vsub.f32 %v784, %v2409
        %v2411 = vand.u32 %v2410, 4294901760
        %v2412 = vsub.f32 %v2410, %v2411
        %v2413 = vand.u32 %v2412, 4294901760
        %2414 = vmatpush1.msra.mxu0 %v2413
        %2415 = vmatprep.subr.mxu0 0.0
        %v2416 = vand.u32 %v785, 4294901760
        %v2417 = vsub.f32 %v785, %v2416
        %v2418 = vand.u32 %v2417, 4294901760
        %v2419 = vsub.f32 %v2417, %v2418
        %v2420 = vand.u32 %v2419, 4294901760
        %2421 = vmatpush1.msra.mxu0 %v2420
        %2422 = vmatprep.subr.mxu0 0.0
        %v2423 = vand.u32 %v786, 4294901760
        %v2424 = vsub.f32 %v786, %v2423
        %v2425 = vand.u32 %v2424, 4294901760
        %v2426 = vsub.f32 %v2424, %v2425
        %v2427 = vand.u32 %v2426, 4294901760
        %2428 = vmatpush1.msra.mxu0 %v2427
        %2429 = vmatprep.subr.mxu0 0.0
        %v2430 = vand.u32 %v787, 4294901760
        %v2431 = vsub.f32 %v787, %v2430
        %v2432 = vand.u32 %v2431, 4294901760
        %v2433 = vsub.f32 %v2431, %v2432
        %v2434 = vand.u32 %v2433, 4294901760
        %2435 = vmatpush1.msra.mxu0 %v2434
        %2436 = vmatprep.subr.mxu0 0.0
        %v2437 = vand.u32 %v788, 4294901760
        %v2438 = vsub.f32 %v788, %v2437
        %v2439 = vand.u32 %v2438, 4294901760
        %v2440 = vsub.f32 %v2438, %v2439
        %v2441 = vand.u32 %v2440, 4294901760
        %2442 = vmatpush1.msra.mxu0 %v2441
        %2443 = vmatprep.subr.mxu0 0.0
        %v2444 = vand.u32 %v789, 4294901760
        %v2445 = vsub.f32 %v789, %v2444
        %v2446 = vand.u32 %v2445, 4294901760
        %v2447 = vsub.f32 %v2445, %v2446
        %v2448 = vand.u32 %v2447, 4294901760
        %2449 = vmatpush1.msra.mxu0 %v2448
        %2450 = vmatprep.subr.mxu0 0.0
        %v2451 = vand.u32 %v790, 4294901760
        %v2452 = vsub.f32 %v790, %v2451
        %v2453 = vand.u32 %v2452, 4294901760
        %v2454 = vsub.f32 %v2452, %v2453
        %v2455 = vand.u32 %v2454, 4294901760
        %2456 = vmatpush1.msra.mxu0 %v2455
        %2457 = vmatprep.subr.mxu0 0.0
        %2458 = vmatpush1.msra.mxu0 0.0
        %2459 = vmatprep.subr.mxu0 0.0
        %2460 = vmatpush1.msra.mxu0 0.0
        %2461 = vmatprep.subr.mxu0 0.0
        %2462 = vmatpush1.msra.mxu0 0.0
        %2463 = vmatprep.subr.mxu0 0.0
        %2464 = vmatpush1.msra.mxu0 0.0
        %2465 = vmatprep.subr.mxu0 0.0
        %2466 = vmatpush1.msra.mxu0 0.0
        %2467 = vmatprep.subr.mxu0 0.0
        %2468 = vmatpush1.msra.mxu0 0.0
        %2469 = vmatprep.subr.mxu0 0.0
        %2470 = vmatpush1.msra.mxu0 0.0
        %2471 = vmatprep.subr.mxu0 0.0
        %2472 = vmatpush1.msra.mxu0 0.0
        %2473 = vmatprep.subr.mxu0 0.0
        %2474 = vmatpush1.msra.mxu0 0.0
        %2475 = vmatprep.subr.mxu0 0.0
        %2476 = vmatpush1.msra.mxu0 0.0
        %2477 = vmatprep.subr.mxu0 0.0
        %2478 = vmatpush1.msra.mxu0 0.0
        %2479 = vmatprep.subr.mxu0 0.0
        %2480 = vmatpush1.msra.mxu0 0.0
        %2481 = vmatprep.subr.mxu0 0.0
        %2482 = vmatpush1.msra.mxu0 0.0
        %2483 = vmatprep.subr.mxu0 0.0
        %2484 = vmatpush1.msra.mxu0 0.0
        %2485 = vmatprep.subr.mxu0 0.0
        %2486 = vmatpush1.msra.mxu0 0.0
        %2487 = vmatprep.subr.mxu0 0.0
        %2488 = vmatpush1.msra.mxu0 0.0
        %2489 = vmatprep.mubr.f32.mxu0 0.0
        %v2490 = vand.u32 %v2234, 4294901760
        %2491 = vmatmul.mubr.f32.gmra.mrb[0].mxu0 %v2490
        %v2492 = vpop.f32.mrb[0].mxu0
        %v2493 = vadd.f32 %v2332, %v2492
        %v2494 = vpop.f32.mrb[0].mxu0
        %2495 = vmatprep.mubr.f32.mxu0 0.0
        %v2496 = vand.u32 %v2241, 4294901760
        %2497 = vmatmul.mubr.f32.gmra.mrb[0].mxu0 %v2496
        %v2498 = vpop.f32.mrb[0].mxu0
        %v2499 = vadd.f32 %v2342, %v2498
        %v2500 = vpop.f32.mrb[0].mxu0
        %2501 = vdwg.mxu0
        %2502 = vmatprep.subr.mxu0 0.0
        %v2503 = vand.u32 %v775, 4294901760
        %v2504 = vsub.f32 %v775, %v2503
        %2505 = vmatpush1.msra.mxu0 %v2504
        %2506 = vmatprep.subr.mxu0 0.0
        %v2507 = vand.u32 %v776, 4294901760
        %v2508 = vsub.f32 %v776, %v2507
        %2509 = vmatpush1.msra.mxu0 %v2508
        %2510 = vmatprep.subr.mxu0 0.0
        %v2511 = vand.u32 %v777, 4294901760
        %v2512 = vsub.f32 %v777, %v2511
        %2513 = vmatpush1.msra.mxu0 %v2512
        %2514 = vmatprep.subr.mxu0 0.0
        %v2515 = vand.u32 %v778, 4294901760
        %v2516 = vsub.f32 %v778, %v2515
        %2517 = vmatpush1.msra.mxu0 %v2516
        %2518 = vmatprep.subr.mxu0 0.0
        %v2519 = vand.u32 %v779, 4294901760
        %v2520 = vsub.f32 %v779, %v2519
        %2521 = vmatpush1.msra.mxu0 %v2520
        %2522 = vmatprep.subr.mxu0 0.0
        %v2523 = vand.u32 %v780, 4294901760
        %v2524 = vsub.f32 %v780, %v2523
        %2525 = vmatpush1.msra.mxu0 %v2524
        %2526 = vmatprep.subr.mxu0 0.0
        %v2527 = vand.u32 %v781, 4294901760
        %v2528 = vsub.f32 %v781, %v2527
        %2529 = vmatpush1.msra.mxu0 %v2528
        %2530 = vmatprep.subr.mxu0 0.0
        %v2531 = vand.u32 %v782, 4294901760
        %v2532 = vsub.f32 %v782, %v2531
        %2533 = vmatpush1.msra.mxu0 %v2532
        %2534 = vmatprep.subr.mxu0 0.0
        %v2535 = vand.u32 %v783, 4294901760
        %v2536 = vsub.f32 %v783, %v2535
        %2537 = vmatpush1.msra.mxu0 %v2536
        %2538 = vmatprep.subr.mxu0 0.0
        %v2539 = vand.u32 %v784, 4294901760
        %v2540 = vsub.f32 %v784, %v2539
        %2541 = vmatpush1.msra.mxu0 %v2540
        %2542 = vmatprep.subr.mxu0 0.0
        %v2543 = vand.u32 %v785, 4294901760
        %v2544 = vsub.f32 %v785, %v2543
        %2545 = vmatpush1.msra.mxu0 %v2544
        %2546 = vmatprep.subr.mxu0 0.0
        %v2547 = vand.u32 %v786, 4294901760
        %v2548 = vsub.f32 %v786, %v2547
        %2549 = vmatpush1.msra.mxu0 %v2548
        %2550 = vmatprep.subr.mxu0 0.0
        %v2551 = vand.u32 %v787, 4294901760
        %v2552 = vsub.f32 %v787, %v2551
        %2553 = vmatpush1.msra.mxu0 %v2552
        %2554 = vmatprep.subr.mxu0 0.0
        %v2555 = vand.u32 %v788, 4294901760
        %v2556 = vsub.f32 %v788, %v2555
        %2557 = vmatpush1.msra.mxu0 %v2556
        %2558 = vmatprep.subr.mxu0 0.0
        %v2559 = vand.u32 %v789, 4294901760
        %v2560 = vsub.f32 %v789, %v2559
        %2561 = vmatpush1.msra.mxu0 %v2560
        %2562 = vmatprep.subr.mxu0 0.0
        %v2563 = vand.u32 %v790, 4294901760
        %v2564 = vsub.f32 %v790, %v2563
        %2565 = vmatpush1.msra.mxu0 %v2564
        %2566 = vmatprep.subr.mxu0 0.0
        %2567 = vmatpush1.msra.mxu0 0.0
        %2568 = vmatprep.subr.mxu0 0.0
        %2569 = vmatpush1.msra.mxu0 0.0
        %2570 = vmatprep.subr.mxu0 0.0
        %2571 = vmatpush1.msra.mxu0 0.0
        %2572 = vmatprep.subr.mxu0 0.0
        %2573 = vmatpush1.msra.mxu0 0.0
        %2574 = vmatprep.subr.mxu0 0.0
        %2575 = vmatpush1.msra.mxu0 0.0
        %2576 = vmatprep.subr.mxu0 0.0
        %2577 = vmatpush1.msra.mxu0 0.0
        %2578 = vmatprep.subr.mxu0 0.0
        %2579 = vmatpush1.msra.mxu0 0.0
        %2580 = vmatprep.subr.mxu0 0.0
        %2581 = vmatpush1.msra.mxu0 0.0
        %2582 = vmatprep.subr.mxu0 0.0
        %2583 = vmatpush1.msra.mxu0 0.0
        %2584 = vmatprep.subr.mxu0 0.0
        %2585 = vmatpush1.msra.mxu0 0.0
        %2586 = vmatprep.subr.mxu0 0.0
        %2587 = vmatpush1.msra.mxu0 0.0
        %2588 = vmatprep.subr.mxu0 0.0
        %2589 = vmatpush1.msra.mxu0 0.0
        %2590 = vmatprep.subr.mxu0 0.0
        %2591 = vmatpush1.msra.mxu0 0.0
        %2592 = vmatprep.subr.mxu0 0.0
        %2593 = vmatpush1.msra.mxu0 0.0
        %2594 = vmatprep.subr.mxu0 0.0
        %2595 = vmatpush1.msra.mxu0 0.0
        %2596 = vmatprep.subr.mxu0 0.0
        %2597 = vmatpush1.msra.mxu0 0.0
        %2598 = vmatprep.mubr.f32.mxu0 0.0
        %v2599 = vand.u32 %v2234, 4294901760
        %v2600 = vsub.f32 %v2234, %v2599
        %2601 = vmatmul.mubr.f32.gmra.mrb[0].mxu0 %v2600
        %v2602 = vpop.f32.mrb[0].mxu0
        %v2603 = vadd.f32 %v2493, %v2602
        %v2604 = vpop.f32.mrb[0].mxu0
        %2605 = vmatprep.mubr.f32.mxu0 0.0
        %v2606 = vand.u32 %v2241, 4294901760
        %v2607 = vsub.f32 %v2241, %v2606
        %2608 = vmatmul.mubr.f32.gmra.mrb[0].mxu0 %v2607
        %v2609 = vpop.f32.mrb[0].mxu0
        %v2610 = vadd.f32 %v2499, %v2609
        %v2611 = vpop.f32.mrb[0].mxu0
        %2612 = vdwg.mxu0
        %2613 = vmatprep.subr.mxu0 0.0
        %v2614 = vand.u32 %v775, 4294901760
        %2615 = vmatpush1.msra.mxu0 %v2614
        %2616 = vmatprep.subr.mxu0 0.0
        %v2617 = vand.u32 %v776, 4294901760
        %2618 = vmatpush1.msra.mxu0 %v2617
        %2619 = vmatprep.subr.mxu0 0.0
        %v2620 = vand.u32 %v777, 4294901760
        %2621 = vmatpush1.msra.mxu0 %v2620
        %2622 = vmatprep.subr.mxu0 0.0
        %v2623 = vand.u32 %v778, 4294901760
        %2624 = vmatpush1.msra.mxu0 %v2623
        %2625 = vmatprep.subr.mxu0 0.0
        %v2626 = vand.u32 %v779, 4294901760
        %2627 = vmatpush1.msra.mxu0 %v2626
        %2628 = vmatprep.subr.mxu0 0.0
        %v2629 = vand.u32 %v780, 4294901760
        %2630 = vmatpush1.msra.mxu0 %v2629
        %2631 = vmatprep.subr.mxu0 0.0
        %v2632 = vand.u32 %v781, 4294901760
        %2633 = vmatpush1.msra.mxu0 %v2632
        %2634 = vmatprep.subr.mxu0 0.0
        %v2635 = vand.u32 %v782, 4294901760
        %2636 = vmatpush1.msra.mxu0 %v2635
        %2637 = vmatprep.subr.mxu0 0.0
        %v2638 = vand.u32 %v783, 4294901760
        %2639 = vmatpush1.msra.mxu0 %v2638
        %2640 = vmatprep.subr.mxu0 0.0
        %v2641 = vand.u32 %v784, 4294901760
        %2642 = vmatpush1.msra.mxu0 %v2641
        %2643 = vmatprep.subr.mxu0 0.0
        %v2644 = vand.u32 %v785, 4294901760
        %2645 = vmatpush1.msra.mxu0 %v2644
        %2646 = vmatprep.subr.mxu0 0.0
        %v2647 = vand.u32 %v786, 4294901760
        %2648 = vmatpush1.msra.mxu0 %v2647
        %2649 = vmatprep.subr.mxu0 0.0
        %v2650 = vand.u32 %v787, 4294901760
        %2651 = vmatpush1.msra.mxu0 %v2650
        %2652 = vmatprep.subr.mxu0 0.0
        %v2653 = vand.u32 %v788, 4294901760
        %2654 = vmatpush1.msra.mxu0 %v2653
        %2655 = vmatprep.subr.mxu0 0.0
        %v2656 = vand.u32 %v789, 4294901760
        %2657 = vmatpush1.msra.mxu0 %v2656
        %2658 = vmatprep.subr.mxu0 0.0
        %v2659 = vand.u32 %v790, 4294901760
        %2660 = vmatpush1.msra.mxu0 %v2659
        %2661 = vmatprep.subr.mxu0 0.0
        %2662 = vmatpush1.msra.mxu0 0.0
        %2663 = vmatprep.subr.mxu0 0.0
        %2664 = vmatpush1.msra.mxu0 0.0
        %2665 = vmatprep.subr.mxu0 0.0
        %2666 = vmatpush1.msra.mxu0 0.0
        %2667 = vmatprep.subr.mxu0 0.0
        %2668 = vmatpush1.msra.mxu0 0.0
        %2669 = vmatprep.subr.mxu0 0.0
        %2670 = vmatpush1.msra.mxu0 0.0
        %2671 = vmatprep.subr.mxu0 0.0
        %2672 = vmatpush1.msra.mxu0 0.0
        %2673 = vmatprep.subr.mxu0 0.0
        %2674 = vmatpush1.msra.mxu0 0.0
        %2675 = vmatprep.subr.mxu0 0.0
        %2676 = vmatpush1.msra.mxu0 0.0
        %2677 = vmatprep.subr.mxu0 0.0
        %2678 = vmatpush1.msra.mxu0 0.0
        %2679 = vmatprep.subr.mxu0 0.0
        %2680 = vmatpush1.msra.mxu0 0.0
        %2681 = vmatprep.subr.mxu0 0.0
        %2682 = vmatpush1.msra.mxu0 0.0
        %2683 = vmatprep.subr.mxu0 0.0
        %2684 = vmatpush1.msra.mxu0 0.0
        %2685 = vmatprep.subr.mxu0 0.0
        %2686 = vmatpush1.msra.mxu0 0.0
        %2687 = vmatprep.subr.mxu0 0.0
        %2688 = vmatpush1.msra.mxu0 0.0
        %2689 = vmatprep.subr.mxu0 0.0
        %2690 = vmatpush1.msra.mxu0 0.0
        %2691 = vmatprep.subr.mxu0 0.0
        %2692 = vmatpush1.msra.mxu0 0.0
        %2693 = vmatprep.mubr.f32.mxu0 0.0
        %v2694 = vand.u32 %v2234, 4294901760
        %v2695 = vsub.f32 %v2234, %v2694
        %v2696 = vand.u32 %v2695, 4294901760
        %2697 = vmatmul.mubr.f32.gmra.mrb[0].mxu0 %v2696
        %v2698 = vpop.f32.mrb[0].mxu0
        %v2699 = vadd.f32 %v2603, %v2698
        %v2700 = vpop.f32.mrb[0].mxu0
        %2701 = vmatprep.mubr.f32.mxu0 0.0
        %v2702 = vand.u32 %v2241, 4294901760
        %v2703 = vsub.f32 %v2241, %v2702
        %v2704 = vand.u32 %v2703, 4294901760
        %2705 = vmatmul.mubr.f32.gmra.mrb[0].mxu0 %v2704
        %v2706 = vpop.f32.mrb[0].mxu0
        %v2707 = vadd.f32 %v2610, %v2706
        %v2708 = vpop.f32.mrb[0].mxu0
        %2709 = vdwg.mxu0
        %2710 = vmatprep.subr.mxu0 0.0
        %v2711 = vand.u32 %v775, 4294901760
        %v2712 = vsub.f32 %v775, %v2711
        %v2713 = vand.u32 %v2712, 4294901760
        %2714 = vmatpush1.msra.mxu0 %v2713
        %2715 = vmatprep.subr.mxu0 0.0
        %v2716 = vand.u32 %v776, 4294901760
        %v2717 = vsub.f32 %v776, %v2716
        %v2718 = vand.u32 %v2717, 4294901760
        %2719 = vmatpush1.msra.mxu0 %v2718
        %2720 = vmatprep.subr.mxu0 0.0
        %v2721 = vand.u32 %v777, 4294901760
        %v2722 = vsub.f32 %v777, %v2721
        %v2723 = vand.u32 %v2722, 4294901760
        %2724 = vmatpush1.msra.mxu0 %v2723
        %2725 = vmatprep.subr.mxu0 0.0
        %v2726 = vand.u32 %v778, 4294901760
        %v2727 = vsub.f32 %v778, %v2726
        %v2728 = vand.u32 %v2727, 4294901760
        %2729 = vmatpush1.msra.mxu0 %v2728
        %2730 = vmatprep.subr.mxu0 0.0
        %v2731 = vand.u32 %v779, 4294901760
        %v2732 = vsub.f32 %v779, %v2731
        %v2733 = vand.u32 %v2732, 4294901760
        %2734 = vmatpush1.msra.mxu0 %v2733
        %2735 = vmatprep.subr.mxu0 0.0
        %v2736 = vand.u32 %v780, 4294901760
        %v2737 = vsub.f32 %v780, %v2736
        %v2738 = vand.u32 %v2737, 4294901760
        %2739 = vmatpush1.msra.mxu0 %v2738
        %2740 = vmatprep.subr.mxu0 0.0
        %v2741 = vand.u32 %v781, 4294901760
        %v2742 = vsub.f32 %v781, %v2741
        %v2743 = vand.u32 %v2742, 4294901760
        %2744 = vmatpush1.msra.mxu0 %v2743
        %2745 = vmatprep.subr.mxu0 0.0
        %v2746 = vand.u32 %v782, 4294901760
        %v2747 = vsub.f32 %v782, %v2746
        %v2748 = vand.u32 %v2747, 4294901760
        %2749 = vmatpush1.msra.mxu0 %v2748
        %2750 = vmatprep.subr.mxu0 0.0
        %v2751 = vand.u32 %v783, 4294901760
        %v2752 = vsub.f32 %v783, %v2751
        %v2753 = vand.u32 %v2752, 4294901760
        %2754 = vmatpush1.msra.mxu0 %v2753
        %2755 = vmatprep.subr.mxu0 0.0
        %v2756 = vand.u32 %v784, 4294901760
        %v2757 = vsub.f32 %v784, %v2756
        %v2758 = vand.u32 %v2757, 4294901760
        %2759 = vmatpush1.msra.mxu0 %v2758
        %2760 = vmatprep.subr.mxu0 0.0
        %v2761 = vand.u32 %v785, 4294901760
        %v2762 = vsub.f32 %v785, %v2761
        %v2763 = vand.u32 %v2762, 4294901760
        %2764 = vmatpush1.msra.mxu0 %v2763
        %2765 = vmatprep.subr.mxu0 0.0
        %v2766 = vand.u32 %v786, 4294901760
        %v2767 = vsub.f32 %v786, %v2766
        %v2768 = vand.u32 %v2767, 4294901760
        %2769 = vmatpush1.msra.mxu0 %v2768
        %2770 = vmatprep.subr.mxu0 0.0
        %v2771 = vand.u32 %v787, 4294901760
        %v2772 = vsub.f32 %v787, %v2771
        %v2773 = vand.u32 %v2772, 4294901760
        %2774 = vmatpush1.msra.mxu0 %v2773
        %2775 = vmatprep.subr.mxu0 0.0
        %v2776 = vand.u32 %v788, 4294901760
        %v2777 = vsub.f32 %v788, %v2776
        %v2778 = vand.u32 %v2777, 4294901760
        %2779 = vmatpush1.msra.mxu0 %v2778
        %2780 = vmatprep.subr.mxu0 0.0
        %v2781 = vand.u32 %v789, 4294901760
        %v2782 = vsub.f32 %v789, %v2781
        %v2783 = vand.u32 %v2782, 4294901760
        %2784 = vmatpush1.msra.mxu0 %v2783
        %2785 = vmatprep.subr.mxu0 0.0
        %v2786 = vand.u32 %v790, 4294901760
        %v2787 = vsub.f32 %v790, %v2786
        %v2788 = vand.u32 %v2787, 4294901760
        %2789 = vmatpush1.msra.mxu0 %v2788
        %2790 = vmatprep.subr.mxu0 0.0
        %2791 = vmatpush1.msra.mxu0 0.0
        %2792 = vmatprep.subr.mxu0 0.0
        %2793 = vmatpush1.msra.mxu0 0.0
        %2794 = vmatprep.subr.mxu0 0.0
        %2795 = vmatpush1.msra.mxu0 0.0
        %2796 = vmatprep.subr.mxu0 0.0
        %2797 = vmatpush1.msra.mxu0 0.0
        %2798 = vmatprep.subr.mxu0 0.0
        %2799 = vmatpush1.msra.mxu0 0.0
        %2800 = vmatprep.subr.mxu0 0.0
        %2801 = vmatpush1.msra.mxu0 0.0
        %2802 = vmatprep.subr.mxu0 0.0
        %2803 = vmatpush1.msra.mxu0 0.0
        %2804 = vmatprep.subr.mxu0 0.0
        %2805 = vmatpush1.msra.mxu0 0.0
        %2806 = vmatprep.subr.mxu0 0.0
        %2807 = vmatpush1.msra.mxu0 0.0
        %2808 = vmatprep.subr.mxu0 0.0
        %2809 = vmatpush1.msra.mxu0 0.0
        %2810 = vmatprep.subr.mxu0 0.0
        %2811 = vmatpush1.msra.mxu0 0.0
        %2812 = vmatprep.subr.mxu0 0.0
        %2813 = vmatpush1.msra.mxu0 0.0
        %2814 = vmatprep.subr.mxu0 0.0
        %2815 = vmatpush1.msra.mxu0 0.0
        %2816 = vmatprep.subr.mxu0 0.0
        %2817 = vmatpush1.msra.mxu0 0.0
        %2818 = vmatprep.subr.mxu0 0.0
        %2819 = vmatpush1.msra.mxu0 0.0
        %2820 = vmatprep.subr.mxu0 0.0
        %2821 = vmatpush1.msra.mxu0 0.0
        %2822 = vmatprep.mubr.f32.mxu0 0.0
        %v2823 = vand.u32 %v2234, 4294901760
        %2824 = vmatmul.mubr.f32.gmra.mrb[0].mxu0 %v2823
        %v2825 = vpop.f32.mrb[0].mxu0
        %v2826 = vadd.f32 %v2699, %v2825
        %v2827 = vpop.f32.mrb[0].mxu0
        %2828 = vmatprep.mubr.f32.mxu0 0.0
        %v2829 = vand.u32 %v2241, 4294901760
        %2830 = vmatmul.mubr.f32.gmra.mrb[0].mxu0 %v2829
        %v2831 = vpop.f32.mrb[0].mxu0
        %v2832 = vadd.f32 %v2707, %v2831
        %v2833 = vpop.f32.mrb[0].mxu0
        %2834 = vdwg.mxu0
        %2835 = vmatprep.subr.mxu0 0.0
        %v2836 = vand.u32 %v775, 4294901760
        %2837 = vmatpush1.msra.mxu0 %v2836
        %2838 = vmatprep.subr.mxu0 0.0
        %v2839 = vand.u32 %v776, 4294901760
        %2840 = vmatpush1.msra.mxu0 %v2839
        %2841 = vmatprep.subr.mxu0 0.0
        %v2842 = vand.u32 %v777, 4294901760
        %2843 = vmatpush1.msra.mxu0 %v2842
        %2844 = vmatprep.subr.mxu0 0.0
        %v2845 = vand.u32 %v778, 4294901760
        %2846 = vmatpush1.msra.mxu0 %v2845
        %2847 = vmatprep.subr.mxu0 0.0
        %v2848 = vand.u32 %v779, 4294901760
        %2849 = vmatpush1.msra.mxu0 %v2848
        %2850 = vmatprep.subr.mxu0 0.0
        %v2851 = vand.u32 %v780, 4294901760
        %2852 = vmatpush1.msra.mxu0 %v2851
        %2853 = vmatprep.subr.mxu0 0.0
        %v2854 = vand.u32 %v781, 4294901760
        %2855 = vmatpush1.msra.mxu0 %v2854
        %2856 = vmatprep.subr.mxu0 0.0
        %v2857 = vand.u32 %v782, 4294901760
        %2858 = vmatpush1.msra.mxu0 %v2857
        %2859 = vmatprep.subr.mxu0 0.0
        %v2860 = vand.u32 %v783, 4294901760
        %2861 = vmatpush1.msra.mxu0 %v2860
        %2862 = vmatprep.subr.mxu0 0.0
        %v2863 = vand.u32 %v784, 4294901760
        %2864 = vmatpush1.msra.mxu0 %v2863
        %2865 = vmatprep.subr.mxu0 0.0
        %v2866 = vand.u32 %v785, 4294901760
        %2867 = vmatpush1.msra.mxu0 %v2866
        %2868 = vmatprep.subr.mxu0 0.0
        %v2869 = vand.u32 %v786, 4294901760
        %2870 = vmatpush1.msra.mxu0 %v2869
        %2871 = vmatprep.subr.mxu0 0.0
        %v2872 = vand.u32 %v787, 4294901760
        %2873 = vmatpush1.msra.mxu0 %v2872
        %2874 = vmatprep.subr.mxu0 0.0
        %v2875 = vand.u32 %v788, 4294901760
        %2876 = vmatpush1.msra.mxu0 %v2875
        %2877 = vmatprep.subr.mxu0 0.0
        %v2878 = vand.u32 %v789, 4294901760
        %2879 = vmatpush1.msra.mxu0 %v2878
        %2880 = vmatprep.subr.mxu0 0.0
        %v2881 = vand.u32 %v790, 4294901760
        %2882 = vmatpush1.msra.mxu0 %v2881
        %2883 = vmatprep.subr.mxu0 0.0
        %2884 = vmatpush1.msra.mxu0 0.0
        %2885 = vmatprep.subr.mxu0 0.0
        %2886 = vmatpush1.msra.mxu0 0.0
        %2887 = vmatprep.subr.mxu0 0.0
        %2888 = vmatpush1.msra.mxu0 0.0
        %2889 = vmatprep.subr.mxu0 0.0
        %2890 = vmatpush1.msra.mxu0 0.0
        %2891 = vmatprep.subr.mxu0 0.0
        %2892 = vmatpush1.msra.mxu0 0.0
        %2893 = vmatprep.subr.mxu0 0.0
        %2894 = vmatpush1.msra.mxu0 0.0
        %2895 = vmatprep.subr.mxu0 0.0
        %2896 = vmatpush1.msra.mxu0 0.0
        %2897 = vmatprep.subr.mxu0 0.0
        %2898 = vmatpush1.msra.mxu0 0.0
        %2899 = vmatprep.subr.mxu0 0.0
        %2900 = vmatpush1.msra.mxu0 0.0
        %2901 = vmatprep.subr.mxu0 0.0
        %2902 = vmatpush1.msra.mxu0 0.0
        %2903 = vmatprep.subr.mxu0 0.0
        %2904 = vmatpush1.msra.mxu0 0.0
        %2905 = vmatprep.subr.mxu0 0.0
        %2906 = vmatpush1.msra.mxu0 0.0
        %2907 = vmatprep.subr.mxu0 0.0
        %2908 = vmatpush1.msra.mxu0 0.0
        %2909 = vmatprep.subr.mxu0 0.0
        %2910 = vmatpush1.msra.mxu0 0.0
        %2911 = vmatprep.subr.mxu0 0.0
        %2912 = vmatpush1.msra.mxu0 0.0
        %2913 = vmatprep.subr.mxu0 0.0
        %2914 = vmatpush1.msra.mxu0 0.0
        %2915 = vmatprep.mubr.f32.mxu0 0.0
        %v2916 = vand.u32 %v2234, 4294901760
        %2917 = vmatmul.mubr.f32.gmra.mrb[0].mxu0 %v2916
        %v2918 = vpop.f32.mrb[0].mxu0
        %v2919 = vadd.f32 %v2826, %v2918
        %v2920 = vpop.f32.mrb[0].mxu0
        %2921 = vmatprep.mubr.f32.mxu0 0.0
        %v2922 = vand.u32 %v2241, 4294901760
        %2923 = vmatmul.mubr.f32.gmra.mrb[0].mxu0 %v2922
        %v2924 = vpop.f32.mrb[0].mxu0
        %v2925 = vadd.f32 %v2832, %v2924
        %v2926 = vpop.f32.mrb[0].mxu0
        %2927 = vdwg.mxu0
        %2928 = vadd.xlane.f32.xlu0 %v2919
        %v2929 = vpop.xlane.xlu0 %2928
        %2930 = vadd.xlane.f32.xlu0 %v2925
        %v2931 = vpop.xlane.xlu0 %2930
        %v2932 = vmul.f32 %v2929, 0.0078125
        %v2933 = vmul.f32 %v2931, 0.0078125
        %v2934 = vsub.f32 %v2919, %v2932
        %v2935 = vsub.f32 %v2925, %v2933
        %v2936 = vmul.f32 %v2934, %v2934
        %v2937 = vmul.f32 %v2935, %v2935
        %2938 = vadd.xlane.f32.xlu0 %v2936
        %v2939 = vpop.xlane.xlu0 %2938
        %2940 = vadd.xlane.f32.xlu0 %v2937
        %v2941 = vpop.xlane.xlu0 %2940
        %v2942 = vmul.f32 %v2939, 0.007936508
        %v2943 = vmul.f32 %v2941, 0.007936508
        %v2944 = vrsqrt.pop %v2942
        %v2945 = vmul.f32 %v2942, %v2944
        %vm2946 = vcmp.eq.f32.partialorder %v2942, inf
        %v2947 = vsel %vm2946, %v2942, %v2945
        %vm2948 = vcmp.eq.f32.partialorder %v2942, 0.0
        %v2949 = vand.u32 %v2942, 2147483648
        %v2950 = vsel %vm2948, %v2949, %v2947
        %v2951 = vrsqrt.pop %v2943
        %v2952 = vmul.f32 %v2943, %v2951
        %vm2953 = vcmp.eq.f32.partialorder %v2943, inf
        %v2954 = vsel %vm2953, %v2943, %v2952
        %vm2955 = vcmp.eq.f32.partialorder %v2943, 0.0
        %v2956 = vand.u32 %v2943, 2147483648
        %v2957 = vsel %vm2955, %v2956, %v2954
        %v2958 = vadd.f32 %v2950, 1e-05
        %v2959 = vadd.f32 %v2957, 1e-05
        %v2960 = vrcp.pop %v2958
        %v2961 = vrcp.pop %v2959
        %v2962 = vmul.f32 %v2934, %v2960
        %v2963 = vmul.f32 %v2935, %v2961
        %v2964 = vld [vmem:[%s679] sm:$0xff]
        %2966 = vset.pattern.permute.xlu0 0
        %2967 = vperm.xlu0 %2966, %v2964
        %v2968 = vpop.permute.xlu0 %2967
        %v2970 = vmul.f32 %v2962, %v2968
        %v2971 = vmul.f32 %v2963, %v2968
        %v2972 = vld [vmem:[%s686] sm:$0xff]
        %2974 = vset.pattern.permute.xlu0 0
        %2975 = vperm.xlu0 %2974, %v2972
        %v2976 = vpop.permute.xlu0 %2975
        %v2978 = vadd.f32 %v2970, %v2976
        %v2979 = vadd.f32 %v2971, %v2976
        %v2980 = vxor.u32 %v2978, 2147483648
        %v2981 = vxor.u32 %v2979, 2147483648
        %v2982 = vmul.f32 %v2980, 1.442695
        %v2983 = vpow.pop %v2982
        %v2984 = vmul.f32 %v2981, 1.442695
        %v2985 = vpow.pop %v2984
        %v2986 = vadd.f32 %v2983, 1.0
        %v2987 = vadd.f32 %v2985, 1.0
        %v2988 = vrcp.pop %v2986
        %v2989 = vmul.f32 1.0, %v2988
        %v2990 = vrcp.pop %v2987
        %v2991 = vmul.f32 1.0, %v2990
        %v2992 = vld [vmem:[%s700] sm:$0xff]
        %v2993 = vld [vmem:[%s700 + $0x8] sm:$0xff]
        %v2994 = vld [vmem:[%s700 + $0x10] sm:$0xff]
        %v2995 = vld [vmem:[%s700 + $0x18] sm:$0xff]
        %v2996 = vld [vmem:[%s700 + $0x20] sm:$0xff]
        %v2997 = vld [vmem:[%s700 + $0x28] sm:$0xff]
        %v2998 = vld [vmem:[%s700 + $0x30] sm:$0xff]
        %v2999 = vld [vmem:[%s700 + $0x38] sm:$0xff]
        %v3000 = vld [vmem:[%s700 + $0x40] sm:$0xff]
        %v3001 = vld [vmem:[%s700 + $0x48] sm:$0xff]
        %v3002 = vld [vmem:[%s700 + $0x50] sm:$0xff]
        %v3003 = vld [vmem:[%s700 + $0x58] sm:$0xff]
        %v3004 = vld [vmem:[%s700 + $0x60] sm:$0xff]
        %v3005 = vld [vmem:[%s700 + $0x68] sm:$0xff]
        %v3006 = vld [vmem:[%s700 + $0x70] sm:$0xff]
        %v3007 = vld [vmem:[%s700 + $0x78] sm:$0xff]
        %3008 = vmatprep.subr.mxu0 0.0
        %v3009 = vand.u32 %v759, 4294901760
        %3010 = vmatpush1.msra.mxu0 %v3009
        %3011 = vmatprep.subr.mxu0 0.0
        %v3012 = vand.u32 %v760, 4294901760
        %3013 = vmatpush1.msra.mxu0 %v3012
        %3014 = vmatprep.subr.mxu0 0.0
        %v3015 = vand.u32 %v761, 4294901760
        %3016 = vmatpush1.msra.mxu0 %v3015
        %3017 = vmatprep.subr.mxu0 0.0
        %v3018 = vand.u32 %v762, 4294901760
        %3019 = vmatpush1.msra.mxu0 %v3018
        %3020 = vmatprep.subr.mxu0 0.0
        %v3021 = vand.u32 %v763, 4294901760
        %3022 = vmatpush1.msra.mxu0 %v3021
        %3023 = vmatprep.subr.mxu0 0.0
        %v3024 = vand.u32 %v764, 4294901760
        %3025 = vmatpush1.msra.mxu0 %v3024
        %3026 = vmatprep.subr.mxu0 0.0
        %v3027 = vand.u32 %v765, 4294901760
        %3028 = vmatpush1.msra.mxu0 %v3027
        %3029 = vmatprep.subr.mxu0 0.0
        %v3030 = vand.u32 %v766, 4294901760
        %3031 = vmatpush1.msra.mxu0 %v3030
        %3032 = vmatprep.subr.mxu0 0.0
        %v3033 = vand.u32 %v767, 4294901760
        %3034 = vmatpush1.msra.mxu0 %v3033
        %3035 = vmatprep.subr.mxu0 0.0
        %v3036 = vand.u32 %v768, 4294901760
        %3037 = vmatpush1.msra.mxu0 %v3036
        %3038 = vmatprep.subr.mxu0 0.0
        %v3039 = vand.u32 %v769, 4294901760
        %3040 = vmatpush1.msra.mxu0 %v3039
        %3041 = vmatprep.subr.mxu0 0.0
        %v3042 = vand.u32 %v770, 4294901760
        %3043 = vmatpush1.msra.mxu0 %v3042
        %3044 = vmatprep.subr.mxu0 0.0
        %v3045 = vand.u32 %v771, 4294901760
        %3046 = vmatpush1.msra.mxu0 %v3045
        %3047 = vmatprep.subr.mxu0 0.0
        %v3048 = vand.u32 %v772, 4294901760
        %3049 = vmatpush1.msra.mxu0 %v3048
        %3050 = vmatprep.subr.mxu0 0.0
        %v3051 = vand.u32 %v773, 4294901760
        %3052 = vmatpush1.msra.mxu0 %v3051
        %3053 = vmatprep.subr.mxu0 0.0
        %v3054 = vand.u32 %v774, 4294901760
        %3055 = vmatpush1.msra.mxu0 %v3054
        %3056 = vmatprep.subr.mxu0 0.0
        %3057 = vmatpush1.msra.mxu0 0.0
        %3058 = vmatprep.subr.mxu0 0.0
        %3059 = vmatpush1.msra.mxu0 0.0
        %3060 = vmatprep.subr.mxu0 0.0
        %3061 = vmatpush1.msra.mxu0 0.0
        %3062 = vmatprep.subr.mxu0 0.0
        %3063 = vmatpush1.msra.mxu0 0.0
        %3064 = vmatprep.subr.mxu0 0.0
        %3065 = vmatpush1.msra.mxu0 0.0
        %3066 = vmatprep.subr.mxu0 0.0
        %3067 = vmatpush1.msra.mxu0 0.0
        %3068 = vmatprep.subr.mxu0 0.0
        %3069 = vmatpush1.msra.mxu0 0.0
        %3070 = vmatprep.subr.mxu0 0.0
        %3071 = vmatpush1.msra.mxu0 0.0
        %3072 = vmatprep.subr.mxu0 0.0
        %3073 = vmatpush1.msra.mxu0 0.0
        %3074 = vmatprep.subr.mxu0 0.0
        %3075 = vmatpush1.msra.mxu0 0.0
        %3076 = vmatprep.subr.mxu0 0.0
        %3077 = vmatpush1.msra.mxu0 0.0
        %3078 = vmatprep.subr.mxu0 0.0
        %3079 = vmatpush1.msra.mxu0 0.0
        %3080 = vmatprep.subr.mxu0 0.0
        %3081 = vmatpush1.msra.mxu0 0.0
        %3082 = vmatprep.subr.mxu0 0.0
        %3083 = vmatpush1.msra.mxu0 0.0
        %3084 = vmatprep.subr.mxu0 0.0
        %3085 = vmatpush1.msra.mxu0 0.0
        %3086 = vmatprep.subr.mxu0 0.0
        %3087 = vmatpush1.msra.mxu0 0.0
        %3088 = vmatprep.mubr.f32.mxu0 0.0
        %v3089 = vand.u32 %v2992, 4294901760
        %v3090 = vsub.f32 %v2992, %v3089
        %v3091 = vand.u32 %v3090, 4294901760
        %v3092 = vsub.f32 %v3090, %v3091
        %v3093 = vand.u32 %v3092, 4294901760
        %3094 = vmatmul.mubr.f32.gmra.mrb[0].mxu0 %v3093
        %v3095 = vpop.f32.mrb[0].mxu0
        %v3096 = vadd.f32 0.0, %v3095
        %v3097 = vpop.f32.mrb[0].mxu0
        %3098 = vmatprep.mubr.f32.mxu0 0.0
        %v3099 = vand.u32 %v2993, 4294901760
        %v3100 = vsub.f32 %v2993, %v3099
        %v3101 = vand.u32 %v3100, 4294901760
        %v3102 = vsub.f32 %v3100, %v3101
        %v3103 = vand.u32 %v3102, 4294901760
        %3104 = vmatmul.mubr.f32.gmra.mrb[0].mxu0 %v3103
        %v3105 = vpop.f32.mrb[0].mxu0
        %v3106 = vadd.f32 0.0, %v3105
        %v3107 = vpop.f32.mrb[0].mxu0
        %3108 = vmatprep.mubr.f32.mxu0 0.0
        %v3109 = vand.u32 %v2994, 4294901760
        %v3110 = vsub.f32 %v2994, %v3109
        %v3111 = vand.u32 %v3110, 4294901760
        %v3112 = vsub.f32 %v3110, %v3111
        %v3113 = vand.u32 %v3112, 4294901760
        %3114 = vmatmul.mubr.f32.gmra.mrb[0].mxu0 %v3113
        %v3115 = vpop.f32.mrb[0].mxu0
        %v3116 = vadd.f32 0.0, %v3115
        %v3117 = vpop.f32.mrb[0].mxu0
        %3118 = vmatprep.mubr.f32.mxu0 0.0
        %v3119 = vand.u32 %v2995, 4294901760
        %v3120 = vsub.f32 %v2995, %v3119
        %v3121 = vand.u32 %v3120, 4294901760
        %v3122 = vsub.f32 %v3120, %v3121
        %v3123 = vand.u32 %v3122, 4294901760
        %3124 = vmatmul.mubr.f32.gmra.mrb[0].mxu0 %v3123
        %v3125 = vpop.f32.mrb[0].mxu0
        %v3126 = vadd.f32 0.0, %v3125
        %v3127 = vpop.f32.mrb[0].mxu0
        %3128 = vmatprep.mubr.f32.mxu0 0.0
        %v3129 = vand.u32 %v2996, 4294901760
        %v3130 = vsub.f32 %v2996, %v3129
        %v3131 = vand.u32 %v3130, 4294901760
        %v3132 = vsub.f32 %v3130, %v3131
        %v3133 = vand.u32 %v3132, 4294901760
        %3134 = vmatmul.mubr.f32.gmra.mrb[0].mxu0 %v3133
        %v3135 = vpop.f32.mrb[0].mxu0
        %v3136 = vadd.f32 0.0, %v3135
        %v3137 = vpop.f32.mrb[0].mxu0
        %3138 = vmatprep.mubr.f32.mxu0 0.0
        %v3139 = vand.u32 %v2997, 4294901760
        %v3140 = vsub.f32 %v2997, %v3139
        %v3141 = vand.u32 %v3140, 4294901760
        %v3142 = vsub.f32 %v3140, %v3141
        %v3143 = vand.u32 %v3142, 4294901760
        %3144 = vmatmul.mubr.f32.gmra.mrb[0].mxu0 %v3143
        %v3145 = vpop.f32.mrb[0].mxu0
        %v3146 = vadd.f32 0.0, %v3145
        %v3147 = vpop.f32.mrb[0].mxu0
        %3148 = vmatprep.mubr.f32.mxu0 0.0
        %v3149 = vand.u32 %v2998, 4294901760
        %v3150 = vsub.f32 %v2998, %v3149
        %v3151 = vand.u32 %v3150, 4294901760
        %v3152 = vsub.f32 %v3150, %v3151
        %v3153 = vand.u32 %v3152, 4294901760
        %3154 = vmatmul.mubr.f32.gmra.mrb[0].mxu0 %v3153
        %v3155 = vpop.f32.mrb[0].mxu0
        %v3156 = vadd.f32 0.0, %v3155
        %v3157 = vpop.f32.mrb[0].mxu0
        %3158 = vmatprep.mubr.f32.mxu0 0.0
        %v3159 = vand.u32 %v2999, 4294901760
        %v3160 = vsub.f32 %v2999, %v3159
        %v3161 = vand.u32 %v3160, 4294901760
        %v3162 = vsub.f32 %v3160, %v3161
        %v3163 = vand.u32 %v3162, 4294901760
        %3164 = vmatmul.mubr.f32.gmra.mrb[0].mxu0 %v3163
        %v3165 = vpop.f32.mrb[0].mxu0
        %v3166 = vadd.f32 0.0, %v3165
        %v3167 = vpop.f32.mrb[0].mxu0
        %3168 = vmatprep.mubr.f32.mxu0 0.0
        %v3169 = vand.u32 %v3000, 4294901760
        %v3170 = vsub.f32 %v3000, %v3169
        %v3171 = vand.u32 %v3170, 4294901760
        %v3172 = vsub.f32 %v3170, %v3171
        %v3173 = vand.u32 %v3172, 4294901760
        %3174 = vmatmul.mubr.f32.gmra.mrb[0].mxu0 %v3173
        %v3175 = vpop.f32.mrb[0].mxu0
        %v3176 = vadd.f32 0.0, %v3175
        %v3177 = vpop.f32.mrb[0].mxu0
        %3178 = vmatprep.mubr.f32.mxu0 0.0
        %v3179 = vand.u32 %v3001, 4294901760
        %v3180 = vsub.f32 %v3001, %v3179
        %v3181 = vand.u32 %v3180, 4294901760
        %v3182 = vsub.f32 %v3180, %v3181
        %v3183 = vand.u32 %v3182, 4294901760
        %3184 = vmatmul.mubr.f32.gmra.mrb[0].mxu0 %v3183
        %v3185 = vpop.f32.mrb[0].mxu0
        %v3186 = vadd.f32 0.0, %v3185
        %v3187 = vpop.f32.mrb[0].mxu0
        %3188 = vmatprep.mubr.f32.mxu0 0.0
        %v3189 = vand.u32 %v3002, 4294901760
        %v3190 = vsub.f32 %v3002, %v3189
        %v3191 = vand.u32 %v3190, 4294901760
        %v3192 = vsub.f32 %v3190, %v3191
        %v3193 = vand.u32 %v3192, 4294901760
        %3194 = vmatmul.mubr.f32.gmra.mrb[0].mxu0 %v3193
        %v3195 = vpop.f32.mrb[0].mxu0
        %v3196 = vadd.f32 0.0, %v3195
        %v3197 = vpop.f32.mrb[0].mxu0
        %3198 = vmatprep.mubr.f32.mxu0 0.0
        %v3199 = vand.u32 %v3003, 4294901760
        %v3200 = vsub.f32 %v3003, %v3199
        %v3201 = vand.u32 %v3200, 4294901760
        %v3202 = vsub.f32 %v3200, %v3201
        %v3203 = vand.u32 %v3202, 4294901760
        %3204 = vmatmul.mubr.f32.gmra.mrb[0].mxu0 %v3203
        %v3205 = vpop.f32.mrb[0].mxu0
        %v3206 = vadd.f32 0.0, %v3205
        %v3207 = vpop.f32.mrb[0].mxu0
        %3208 = vmatprep.mubr.f32.mxu0 0.0
        %v3209 = vand.u32 %v3004, 4294901760
        %v3210 = vsub.f32 %v3004, %v3209
        %v3211 = vand.u32 %v3210, 4294901760
        %v3212 = vsub.f32 %v3210, %v3211
        %v3213 = vand.u32 %v3212, 4294901760
        %3214 = vmatmul.mubr.f32.gmra.mrb[0].mxu0 %v3213
        %v3215 = vpop.f32.mrb[0].mxu0
        %v3216 = vadd.f32 0.0, %v3215
        %v3217 = vpop.f32.mrb[0].mxu0
        %3218 = vmatprep.mubr.f32.mxu0 0.0
        %v3219 = vand.u32 %v3005, 4294901760
        %v3220 = vsub.f32 %v3005, %v3219
        %v3221 = vand.u32 %v3220, 4294901760
        %v3222 = vsub.f32 %v3220, %v3221
        %v3223 = vand.u32 %v3222, 4294901760
        %3224 = vmatmul.mubr.f32.gmra.mrb[0].mxu0 %v3223
        %v3225 = vpop.f32.mrb[0].mxu0
        %v3226 = vadd.f32 0.0, %v3225
        %v3227 = vpop.f32.mrb[0].mxu0
        %3228 = vmatprep.mubr.f32.mxu0 0.0
        %v3229 = vand.u32 %v3006, 4294901760
        %v3230 = vsub.f32 %v3006, %v3229
        %v3231 = vand.u32 %v3230, 4294901760
        %v3232 = vsub.f32 %v3230, %v3231
        %v3233 = vand.u32 %v3232, 4294901760
        %3234 = vmatmul.mubr.f32.gmra.mrb[0].mxu0 %v3233
        %v3235 = vpop.f32.mrb[0].mxu0
        %v3236 = vadd.f32 0.0, %v3235
        %v3237 = vpop.f32.mrb[0].mxu0
        %3238 = vmatprep.mubr.f32.mxu0 0.0
        %v3239 = vand.u32 %v3007, 4294901760
        %v3240 = vsub.f32 %v3007, %v3239
        %v3241 = vand.u32 %v3240, 4294901760
        %v3242 = vsub.f32 %v3240, %v3241
        %v3243 = vand.u32 %v3242, 4294901760
        %3244 = vmatmul.mubr.f32.gmra.mrb[0].mxu0 %v3243
        %v3245 = vpop.f32.mrb[0].mxu0
        %v3246 = vadd.f32 0.0, %v3245
        %v3247 = vpop.f32.mrb[0].mxu0
        %3248 = vdwg.mxu0
        %3249 = vmatprep.subr.mxu0 0.0
        %v3250 = vand.u32 %v759, 4294901760
        %v3251 = vsub.f32 %v759, %v3250
        %v3252 = vand.u32 %v3251, 4294901760
        %v3253 = vsub.f32 %v3251, %v3252
        %v3254 = vand.u32 %v3253, 4294901760
        %3255 = vmatpush1.msra.mxu0 %v3254
        %3256 = vmatprep.subr.mxu0 0.0
        %v3257 = vand.u32 %v760, 4294901760
        %v3258 = vsub.f32 %v760, %v3257
        %v3259 = vand.u32 %v3258, 4294901760
        %v3260 = vsub.f32 %v3258, %v3259
        %v3261 = vand.u32 %v3260, 4294901760
        %3262 = vmatpush1.msra.mxu0 %v3261
        %3263 = vmatprep.subr.mxu0 0.0
        %v3264 = vand.u32 %v761, 4294901760
        %v3265 = vsub.f32 %v761, %v3264
        %v3266 = vand.u32 %v3265, 4294901760
        %v3267 = vsub.f32 %v3265, %v3266
        %v3268 = vand.u32 %v3267, 4294901760
        %3269 = vmatpush1.msra.mxu0 %v3268
        %3270 = vmatprep.subr.mxu0 0.0
        %v3271 = vand.u32 %v762, 4294901760
        %v3272 = vsub.f32 %v762, %v3271
        %v3273 = vand.u32 %v3272, 4294901760
        %v3274 = vsub.f32 %v3272, %v3273
        %v3275 = vand.u32 %v3274, 4294901760
        %3276 = vmatpush1.msra.mxu0 %v3275
        %3277 = vmatprep.subr.mxu0 0.0
        %v3278 = vand.u32 %v763, 4294901760
        %v3279 = vsub.f32 %v763, %v3278
        %v3280 = vand.u32 %v3279, 4294901760
        %v3281 = vsub.f32 %v3279, %v3280
        %v3282 = vand.u32 %v3281, 4294901760
        %3283 = vmatpush1.msra.mxu0 %v3282
        %3284 = vmatprep.subr.mxu0 0.0
        %v3285 = vand.u32 %v764, 4294901760
        %v3286 = vsub.f32 %v764, %v3285
        %v3287 = vand.u32 %v3286, 4294901760
        %v3288 = vsub.f32 %v3286, %v3287
        %v3289 = vand.u32 %v3288, 4294901760
        %3290 = vmatpush1.msra.mxu0 %v3289
        %3291 = vmatprep.subr.mxu0 0.0
        %v3292 = vand.u32 %v765, 4294901760
        %v3293 = vsub.f32 %v765, %v3292
        %v3294 = vand.u32 %v3293, 4294901760
        %v3295 = vsub.f32 %v3293, %v3294
        %v3296 = vand.u32 %v3295, 4294901760
        %3297 = vmatpush1.msra.mxu0 %v3296
        %3298 = vmatprep.subr.mxu0 0.0
        %v3299 = vand.u32 %v766, 4294901760
        %v3300 = vsub.f32 %v766, %v3299
        %v3301 = vand.u32 %v3300, 4294901760
        %v3302 = vsub.f32 %v3300, %v3301
        %v3303 = vand.u32 %v3302, 4294901760
        %3304 = vmatpush1.msra.mxu0 %v3303
        %3305 = vmatprep.subr.mxu0 0.0
        %v3306 = vand.u32 %v767, 4294901760
        %v3307 = vsub.f32 %v767, %v3306
        %v3308 = vand.u32 %v3307, 4294901760
        %v3309 = vsub.f32 %v3307, %v3308
        %v3310 = vand.u32 %v3309, 4294901760
        %3311 = vmatpush1.msra.mxu0 %v3310
        %3312 = vmatprep.subr.mxu0 0.0
        %v3313 = vand.u32 %v768, 4294901760
        %v3314 = vsub.f32 %v768, %v3313
        %v3315 = vand.u32 %v3314, 4294901760
        %v3316 = vsub.f32 %v3314, %v3315
        %v3317 = vand.u32 %v3316, 4294901760
        %3318 = vmatpush1.msra.mxu0 %v3317
        %3319 = vmatprep.subr.mxu0 0.0
        %v3320 = vand.u32 %v769, 4294901760
        %v3321 = vsub.f32 %v769, %v3320
        %v3322 = vand.u32 %v3321, 4294901760
        %v3323 = vsub.f32 %v3321, %v3322
        %v3324 = vand.u32 %v3323, 4294901760
        %3325 = vmatpush1.msra.mxu0 %v3324
        %3326 = vmatprep.subr.mxu0 0.0
        %v3327 = vand.u32 %v770, 4294901760
        %v3328 = vsub.f32 %v770, %v3327
        %v3329 = vand.u32 %v3328, 4294901760
        %v3330 = vsub.f32 %v3328, %v3329
        %v3331 = vand.u32 %v3330, 4294901760
        %3332 = vmatpush1.msra.mxu0 %v3331
        %3333 = vmatprep.subr.mxu0 0.0
        %v3334 = vand.u32 %v771, 4294901760
        %v3335 = vsub.f32 %v771, %v3334
        %v3336 = vand.u32 %v3335, 4294901760
        %v3337 = vsub.f32 %v3335, %v3336
        %v3338 = vand.u32 %v3337, 4294901760
        %3339 = vmatpush1.msra.mxu0 %v3338
        %3340 = vmatprep.subr.mxu0 0.0
        %v3341 = vand.u32 %v772, 4294901760
        %v3342 = vsub.f32 %v772, %v3341
        %v3343 = vand.u32 %v3342, 4294901760
        %v3344 = vsub.f32 %v3342, %v3343
        %v3345 = vand.u32 %v3344, 4294901760
        %3346 = vmatpush1.msra.mxu0 %v3345
        %3347 = vmatprep.subr.mxu0 0.0
        %v3348 = vand.u32 %v773, 4294901760
        %v3349 = vsub.f32 %v773, %v3348
        %v3350 = vand.u32 %v3349, 4294901760
        %v3351 = vsub.f32 %v3349, %v3350
        %v3352 = vand.u32 %v3351, 4294901760
        %3353 = vmatpush1.msra.mxu0 %v3352
        %3354 = vmatprep.subr.mxu0 0.0
        %v3355 = vand.u32 %v774, 4294901760
        %v3356 = vsub.f32 %v774, %v3355
        %v3357 = vand.u32 %v3356, 4294901760
        %v3358 = vsub.f32 %v3356, %v3357
        %v3359 = vand.u32 %v3358, 4294901760
        %3360 = vmatpush1.msra.mxu0 %v3359
        %3361 = vmatprep.subr.mxu0 0.0
        %3362 = vmatpush1.msra.mxu0 0.0
        %3363 = vmatprep.subr.mxu0 0.0
        %3364 = vmatpush1.msra.mxu0 0.0
        %3365 = vmatprep.subr.mxu0 0.0
        %3366 = vmatpush1.msra.mxu0 0.0
        %3367 = vmatprep.subr.mxu0 0.0
        %3368 = vmatpush1.msra.mxu0 0.0
        %3369 = vmatprep.subr.mxu0 0.0
        %3370 = vmatpush1.msra.mxu0 0.0
        %3371 = vmatprep.subr.mxu0 0.0
        %3372 = vmatpush1.msra.mxu0 0.0
        %3373 = vmatprep.subr.mxu0 0.0
        %3374 = vmatpush1.msra.mxu0 0.0
        %3375 = vmatprep.subr.mxu0 0.0
        %3376 = vmatpush1.msra.mxu0 0.0
        %3377 = vmatprep.subr.mxu0 0.0
        %3378 = vmatpush1.msra.mxu0 0.0
        %3379 = vmatprep.subr.mxu0 0.0
        %3380 = vmatpush1.msra.mxu0 0.0
        %3381 = vmatprep.subr.mxu0 0.0
        %3382 = vmatpush1.msra.mxu0 0.0
        %3383 = vmatprep.subr.mxu0 0.0
        %3384 = vmatpush1.msra.mxu0 0.0
        %3385 = vmatprep.subr.mxu0 0.0
        %3386 = vmatpush1.msra.mxu0 0.0
        %3387 = vmatprep.subr.mxu0 0.0
        %3388 = vmatpush1.msra.mxu0 0.0
        %3389 = vmatprep.subr.mxu0 0.0
        %3390 = vmatpush1.msra.mxu0 0.0
        %3391 = vmatprep.subr.mxu0 0.0
        %3392 = vmatpush1.msra.mxu0 0.0
        %3393 = vmatprep.mubr.f32.mxu0 0.0
        %v3394 = vand.u32 %v2992, 4294901760
        %3395 = vmatmul.mubr.f32.gmra.mrb[0].mxu0 %v3394
        %v3396 = vpop.f32.mrb[0].mxu0
        %v3397 = vadd.f32 %v3096, %v3396
        %v3398 = vpop.f32.mrb[0].mxu0
        %3399 = vmatprep.mubr.f32.mxu0 0.0
        %v3400 = vand.u32 %v2993, 4294901760
        %3401 = vmatmul.mubr.f32.gmra.mrb[0].mxu0 %v3400
        %v3402 = vpop.f32.mrb[0].mxu0
        %v3403 = vadd.f32 %v3106, %v3402
        %v3404 = vpop.f32.mrb[0].mxu0
        %3405 = vmatprep.mubr.f32.mxu0 0.0
        %v3406 = vand.u32 %v2994, 4294901760
        %3407 = vmatmul.mubr.f32.gmra.mrb[0].mxu0 %v3406
        %v3408 = vpop.f32.mrb[0].mxu0
        %v3409 = vadd.f32 %v3116, %v3408
        %v3410 = vpop.f32.mrb[0].mxu0
        %3411 = vmatprep.mubr.f32.mxu0 0.0
        %v3412 = vand.u32 %v2995, 4294901760
        %3413 = vmatmul.mubr.f32.gmra.mrb[0].mxu0 %v3412
        %v3414 = vpop.f32.mrb[0].mxu0
        %v3415 = vadd.f32 %v3126, %v3414
        %v3416 = vpop.f32.mrb[0].mxu0
        %3417 = vmatprep.mubr.f32.mxu0 0.0
        %v3418 = vand.u32 %v2996, 4294901760
        %3419 = vmatmul.mubr.f32.gmra.mrb[0].mxu0 %v3418
        %v3420 = vpop.f32.mrb[0].mxu0
        %v3421 = vadd.f32 %v3136, %v3420
        %v3422 = vpop.f32.mrb[0].mxu0
        %3423 = vmatprep.mubr.f32.mxu0 0.0
        %v3424 = vand.u32 %v2997, 4294901760
        %3425 = vmatmul.mubr.f32.gmra.mrb[0].mxu0 %v3424
        %v3426 = vpop.f32.mrb[0].mxu0
        %v3427 = vadd.f32 %v3146, %v3426
        %v3428 = vpop.f32.mrb[0].mxu0
        %3429 = vmatprep.mubr.f32.mxu0 0.0
        %v3430 = vand.u32 %v2998, 4294901760
        %3431 = vmatmul.mubr.f32.gmra.mrb[0].mxu0 %v3430
        %v3432 = vpop.f32.mrb[0].mxu0
        %v3433 = vadd.f32 %v3156, %v3432
        %v3434 = vpop.f32.mrb[0].mxu0
        %3435 = vmatprep.mubr.f32.mxu0 0.0
        %v3436 = vand.u32 %v2999, 4294901760
        %3437 = vmatmul.mubr.f32.gmra.mrb[0].mxu0 %v3436
        %v3438 = vpop.f32.mrb[0].mxu0
        %v3439 = vadd.f32 %v3166, %v3438
        %v3440 = vpop.f32.mrb[0].mxu0
        %3441 = vmatprep.mubr.f32.mxu0 0.0
        %v3442 = vand.u32 %v3000, 4294901760
        %3443 = vmatmul.mubr.f32.gmra.mrb[0].mxu0 %v3442
        %v3444 = vpop.f32.mrb[0].mxu0
        %v3445 = vadd.f32 %v3176, %v3444
        %v3446 = vpop.f32.mrb[0].mxu0
        %3447 = vmatprep.mubr.f32.mxu0 0.0
        %v3448 = vand.u32 %v3001, 4294901760
        %3449 = vmatmul.mubr.f32.gmra.mrb[0].mxu0 %v3448
        %v3450 = vpop.f32.mrb[0].mxu0
        %v3451 = vadd.f32 %v3186, %v3450
        %v3452 = vpop.f32.mrb[0].mxu0
        %3453 = vmatprep.mubr.f32.mxu0 0.0
        %v3454 = vand.u32 %v3002, 4294901760
        %3455 = vmatmul.mubr.f32.gmra.mrb[0].mxu0 %v3454
        %v3456 = vpop.f32.mrb[0].mxu0
        %v3457 = vadd.f32 %v3196, %v3456
        %v3458 = vpop.f32.mrb[0].mxu0
        %3459 = vmatprep.mubr.f32.mxu0 0.0
        %v3460 = vand.u32 %v3003, 4294901760
        %3461 = vmatmul.mubr.f32.gmra.mrb[0].mxu0 %v3460
        %v3462 = vpop.f32.mrb[0].mxu0
        %v3463 = vadd.f32 %v3206, %v3462
        %v3464 = vpop.f32.mrb[0].mxu0
        %3465 = vmatprep.mubr.f32.mxu0 0.0
        %v3466 = vand.u32 %v3004, 4294901760
        %3467 = vmatmul.mubr.f32.gmra.mrb[0].mxu0 %v3466
        %v3468 = vpop.f32.mrb[0].mxu0
        %v3469 = vadd.f32 %v3216, %v3468
        %v3470 = vpop.f32.mrb[0].mxu0
        %3471 = vmatprep.mubr.f32.mxu0 0.0
        %v3472 = vand.u32 %v3005, 4294901760
        %3473 = vmatmul.mubr.f32.gmra.mrb[0].mxu0 %v3472
        %v3474 = vpop.f32.mrb[0].mxu0
        %v3475 = vadd.f32 %v3226, %v3474
        %v3476 = vpop.f32.mrb[0].mxu0
        %3477 = vmatprep.mubr.f32.mxu0 0.0
        %v3478 = vand.u32 %v3006, 4294901760
        %3479 = vmatmul.mubr.f32.gmra.mrb[0].mxu0 %v3478
        %v3480 = vpop.f32.mrb[0].mxu0
        %v3481 = vadd.f32 %v3236, %v3480
        %v3482 = vpop.f32.mrb[0].mxu0
        %3483 = vmatprep.mubr.f32.mxu0 0.0
        %v3484 = vand.u32 %v3007, 4294901760
        %3485 = vmatmul.mubr.f32.gmra.mrb[0].mxu0 %v3484
        %v3486 = vpop.f32.mrb[0].mxu0
        %v3487 = vadd.f32 %v3246, %v3486
        %v3488 = vpop.f32.mrb[0].mxu0
        %3489 = vdwg.mxu0
        %3490 = vmatprep.subr.mxu0 0.0
        %v3491 = vand.u32 %v759, 4294901760
        %v3492 = vsub.f32 %v759, %v3491
        %3493 = vmatpush1.msra.mxu0 %v3492
        %3494 = vmatprep.subr.mxu0 0.0
        %v3495 = vand.u32 %v760, 4294901760
        %v3496 = vsub.f32 %v760, %v3495
        %3497 = vmatpush1.msra.mxu0 %v3496
        %3498 = vmatprep.subr.mxu0 0.0
        %v3499 = vand.u32 %v761, 4294901760
        %v3500 = vsub.f32 %v761, %v3499
        %3501 = vmatpush1.msra.mxu0 %v3500
        %3502 = vmatprep.subr.mxu0 0.0
        %v3503 = vand.u32 %v762, 4294901760
        %v3504 = vsub.f32 %v762, %v3503
        %3505 = vmatpush1.msra.mxu0 %v3504
        %3506 = vmatprep.subr.mxu0 0.0
        %v3507 = vand.u32 %v763, 4294901760
        %v3508 = vsub.f32 %v763, %v3507
        %3509 = vmatpush1.msra.mxu0 %v3508
        %3510 = vmatprep.subr.mxu0 0.0
        %v3511 = vand.u32 %v764, 4294901760
        %v3512 = vsub.f32 %v764, %v3511
        %3513 = vmatpush1.msra.mxu0 %v3512
        %3514 = vmatprep.subr.mxu0 0.0
        %v3515 = vand.u32 %v765, 4294901760
        %v3516 = vsub.f32 %v765, %v3515
        %3517 = vmatpush1.msra.mxu0 %v3516
        %3518 = vmatprep.subr.mxu0 0.0
        %v3519 = vand.u32 %v766, 4294901760
        %v3520 = vsub.f32 %v766, %v3519
        %3521 = vmatpush1.msra.mxu0 %v3520
        %3522 = vmatprep.subr.mxu0 0.0
        %v3523 = vand.u32 %v767, 4294901760
        %v3524 = vsub.f32 %v767, %v3523
        %3525 = vmatpush1.msra.mxu0 %v3524
        %3526 = vmatprep.subr.mxu0 0.0
        %v3527 = vand.u32 %v768, 4294901760
        %v3528 = vsub.f32 %v768, %v3527
        %3529 = vmatpush1.msra.mxu0 %v3528
        %3530 = vmatprep.subr.mxu0 0.0
        %v3531 = vand.u32 %v769, 4294901760
        %v3532 = vsub.f32 %v769, %v3531
        %3533 = vmatpush1.msra.mxu0 %v3532
        %3534 = vmatprep.subr.mxu0 0.0
        %v3535 = vand.u32 %v770, 4294901760
        %v3536 = vsub.f32 %v770, %v3535
        %3537 = vmatpush1.msra.mxu0 %v3536
        %3538 = vmatprep.subr.mxu0 0.0
        %v3539 = vand.u32 %v771, 4294901760
        %v3540 = vsub.f32 %v771, %v3539
        %3541 = vmatpush1.msra.mxu0 %v3540
        %3542 = vmatprep.subr.mxu0 0.0
        %v3543 = vand.u32 %v772, 4294901760
        %v3544 = vsub.f32 %v772, %v3543
        %3545 = vmatpush1.msra.mxu0 %v3544
        %3546 = vmatprep.subr.mxu0 0.0
        %v3547 = vand.u32 %v773, 4294901760
        %v3548 = vsub.f32 %v773, %v3547
        %3549 = vmatpush1.msra.mxu0 %v3548
        %3550 = vmatprep.subr.mxu0 0.0
        %v3551 = vand.u32 %v774, 4294901760
        %v3552 = vsub.f32 %v774, %v3551
        %3553 = vmatpush1.msra.mxu0 %v3552
        %3554 = vmatprep.subr.mxu0 0.0
        %3555 = vmatpush1.msra.mxu0 0.0
        %3556 = vmatprep.subr.mxu0 0.0
        %3557 = vmatpush1.msra.mxu0 0.0
        %3558 = vmatprep.subr.mxu0 0.0
        %3559 = vmatpush1.msra.mxu0 0.0
        %3560 = vmatprep.subr.mxu0 0.0
        %3561 = vmatpush1.msra.mxu0 0.0
        %3562 = vmatprep.subr.mxu0 0.0
        %3563 = vmatpush1.msra.mxu0 0.0
        %3564 = vmatprep.subr.mxu0 0.0
        %3565 = vmatpush1.msra.mxu0 0.0
        %3566 = vmatprep.subr.mxu0 0.0
        %3567 = vmatpush1.msra.mxu0 0.0
        %3568 = vmatprep.subr.mxu0 0.0
        %3569 = vmatpush1.msra.mxu0 0.0
        %3570 = vmatprep.subr.mxu0 0.0
        %3571 = vmatpush1.msra.mxu0 0.0
        %3572 = vmatprep.subr.mxu0 0.0
        %3573 = vmatpush1.msra.mxu0 0.0
        %3574 = vmatprep.subr.mxu0 0.0
        %3575 = vmatpush1.msra.mxu0 0.0
        %3576 = vmatprep.subr.mxu0 0.0
        %3577 = vmatpush1.msra.mxu0 0.0
        %3578 = vmatprep.subr.mxu0 0.0
        %3579 = vmatpush1.msra.mxu0 0.0
        %3580 = vmatprep.subr.mxu0 0.0
        %3581 = vmatpush1.msra.mxu0 0.0
        %3582 = vmatprep.subr.mxu0 0.0
        %3583 = vmatpush1.msra.mxu0 0.0
        %3584 = vmatprep.subr.mxu0 0.0
        %3585 = vmatpush1.msra.mxu0 0.0
        %3586 = vmatprep.mubr.f32.mxu0 0.0
        %v3587 = vand.u32 %v2992, 4294901760
        %v3588 = vsub.f32 %v2992, %v3587
        %3589 = vmatmul.mubr.f32.gmra.mrb[0].mxu0 %v3588
        %v3590 = vpop.f32.mrb[0].mxu0
        %v3591 = vadd.f32 %v3397, %v3590
        %v3592 = vpop.f32.mrb[0].mxu0
        %3593 = vmatprep.mubr.f32.mxu0 0.0
        %v3594 = vand.u32 %v2993, 4294901760
        %v3595 = vsub.f32 %v2993, %v3594
        %3596 = vmatmul.mubr.f32.gmra.mrb[0].mxu0 %v3595
        %v3597 = vpop.f32.mrb[0].mxu0
        %v3598 = vadd.f32 %v3403, %v3597
        %v3599 = vpop.f32.mrb[0].mxu0
        %3600 = vmatprep.mubr.f32.mxu0 0.0
        %v3601 = vand.u32 %v2994, 4294901760
        %v3602 = vsub.f32 %v2994, %v3601
        %3603 = vmatmul.mubr.f32.gmra.mrb[0].mxu0 %v3602
        %v3604 = vpop.f32.mrb[0].mxu0
        %v3605 = vadd.f32 %v3409, %v3604
        %v3606 = vpop.f32.mrb[0].mxu0
        %3607 = vmatprep.mubr.f32.mxu0 0.0
        %v3608 = vand.u32 %v2995, 4294901760
        %v3609 = vsub.f32 %v2995, %v3608
        %3610 = vmatmul.mubr.f32.gmra.mrb[0].mxu0 %v3609
        %v3611 = vpop.f32.mrb[0].mxu0
        %v3612 = vadd.f32 %v3415, %v3611
        %v3613 = vpop.f32.mrb[0].mxu0
        %3614 = vmatprep.mubr.f32.mxu0 0.0
        %v3615 = vand.u32 %v2996, 4294901760
        %v3616 = vsub.f32 %v2996, %v3615
        %3617 = vmatmul.mubr.f32.gmra.mrb[0].mxu0 %v3616
        %v3618 = vpop.f32.mrb[0].mxu0
        %v3619 = vadd.f32 %v3421, %v3618
        %v3620 = vpop.f32.mrb[0].mxu0
        %3621 = vmatprep.mubr.f32.mxu0 0.0
        %v3622 = vand.u32 %v2997, 4294901760
        %v3623 = vsub.f32 %v2997, %v3622
        %3624 = vmatmul.mubr.f32.gmra.mrb[0].mxu0 %v3623
        %v3625 = vpop.f32.mrb[0].mxu0
        %v3626 = vadd.f32 %v3427, %v3625
        %v3627 = vpop.f32.mrb[0].mxu0
        %3628 = vmatprep.mubr.f32.mxu0 0.0
        %v3629 = vand.u32 %v2998, 4294901760
        %v3630 = vsub.f32 %v2998, %v3629
        %3631 = vmatmul.mubr.f32.gmra.mrb[0].mxu0 %v3630
        %v3632 = vpop.f32.mrb[0].mxu0
        %v3633 = vadd.f32 %v3433, %v3632
        %v3634 = vpop.f32.mrb[0].mxu0
        %3635 = vmatprep.mubr.f32.mxu0 0.0
        %v3636 = vand.u32 %v2999, 4294901760
        %v3637 = vsub.f32 %v2999, %v3636
        %3638 = vmatmul.mubr.f32.gmra.mrb[0].mxu0 %v3637
        %v3639 = vpop.f32.mrb[0].mxu0
        %v3640 = vadd.f32 %v3439, %v3639
        %v3641 = vpop.f32.mrb[0].mxu0
        %3642 = vmatprep.mubr.f32.mxu0 0.0
        %v3643 = vand.u32 %v3000, 4294901760
        %v3644 = vsub.f32 %v3000, %v3643
        %3645 = vmatmul.mubr.f32.gmra.mrb[0].mxu0 %v3644
        %v3646 = vpop.f32.mrb[0].mxu0
        %v3647 = vadd.f32 %v3445, %v3646
        %v3648 = vpop.f32.mrb[0].mxu0
        %3649 = vmatprep.mubr.f32.mxu0 0.0
        %v3650 = vand.u32 %v3001, 4294901760
        %v3651 = vsub.f32 %v3001, %v3650
        %3652 = vmatmul.mubr.f32.gmra.mrb[0].mxu0 %v3651
        %v3653 = vpop.f32.mrb[0].mxu0
        %v3654 = vadd.f32 %v3451, %v3653
        %v3655 = vpop.f32.mrb[0].mxu0
        %3656 = vmatprep.mubr.f32.mxu0 0.0
        %v3657 = vand.u32 %v3002, 4294901760
        %v3658 = vsub.f32 %v3002, %v3657
        %3659 = vmatmul.mubr.f32.gmra.mrb[0].mxu0 %v3658
        %v3660 = vpop.f32.mrb[0].mxu0
        %v3661 = vadd.f32 %v3457, %v3660
        %v3662 = vpop.f32.mrb[0].mxu0
        %3663 = vmatprep.mubr.f32.mxu0 0.0
        %v3664 = vand.u32 %v3003, 4294901760
        %v3665 = vsub.f32 %v3003, %v3664
        %3666 = vmatmul.mubr.f32.gmra.mrb[0].mxu0 %v3665
        %v3667 = vpop.f32.mrb[0].mxu0
        %v3668 = vadd.f32 %v3463, %v3667
        %v3669 = vpop.f32.mrb[0].mxu0
        %3670 = vmatprep.mubr.f32.mxu0 0.0
        %v3671 = vand.u32 %v3004, 4294901760
        %v3672 = vsub.f32 %v3004, %v3671
        %3673 = vmatmul.mubr.f32.gmra.mrb[0].mxu0 %v3672
        %v3674 = vpop.f32.mrb[0].mxu0
        %v3675 = vadd.f32 %v3469, %v3674
        %v3676 = vpop.f32.mrb[0].mxu0
        %3677 = vmatprep.mubr.f32.mxu0 0.0
        %v3678 = vand.u32 %v3005, 4294901760
        %v3679 = vsub.f32 %v3005, %v3678
        %3680 = vmatmul.mubr.f32.gmra.mrb[0].mxu0 %v3679
        %v3681 = vpop.f32.mrb[0].mxu0
        %v3682 = vadd.f32 %v3475, %v3681
        %v3683 = vpop.f32.mrb[0].mxu0
        %3684 = vmatprep.mubr.f32.mxu0 0.0
        %v3685 = vand.u32 %v3006, 4294901760
        %v3686 = vsub.f32 %v3006, %v3685
        %3687 = vmatmul.mubr.f32.gmra.mrb[0].mxu0 %v3686
        %v3688 = vpop.f32.mrb[0].mxu0
        %v3689 = vadd.f32 %v3481, %v3688
        %v3690 = vpop.f32.mrb[0].mxu0
        %3691 = vmatprep.mubr.f32.mxu0 0.0
        %v3692 = vand.u32 %v3007, 4294901760
        %v3693 = vsub.f32 %v3007, %v3692
        %3694 = vmatmul.mubr.f32.gmra.mrb[0].mxu0 %v3693
        %v3695 = vpop.f32.mrb[0].mxu0
        %v3696 = vadd.f32 %v3487, %v3695
        %v3697 = vpop.f32.mrb[0].mxu0
        %3698 = vdwg.mxu0
        %3699 = vmatprep.subr.mxu0 0.0
        %v3700 = vand.u32 %v759, 4294901760
        %3701 = vmatpush1.msra.mxu0 %v3700
        %3702 = vmatprep.subr.mxu0 0.0
        %v3703 = vand.u32 %v760, 4294901760
        %3704 = vmatpush1.msra.mxu0 %v3703
        %3705 = vmatprep.subr.mxu0 0.0
        %v3706 = vand.u32 %v761, 4294901760
        %3707 = vmatpush1.msra.mxu0 %v3706
        %3708 = vmatprep.subr.mxu0 0.0
        %v3709 = vand.u32 %v762, 4294901760
        %3710 = vmatpush1.msra.mxu0 %v3709
        %3711 = vmatprep.subr.mxu0 0.0
        %v3712 = vand.u32 %v763, 4294901760
        %3713 = vmatpush1.msra.mxu0 %v3712
        %3714 = vmatprep.subr.mxu0 0.0
        %v3715 = vand.u32 %v764, 4294901760
        %3716 = vmatpush1.msra.mxu0 %v3715
        %3717 = vmatprep.subr.mxu0 0.0
        %v3718 = vand.u32 %v765, 4294901760
        %3719 = vmatpush1.msra.mxu0 %v3718
        %3720 = vmatprep.subr.mxu0 0.0
        %v3721 = vand.u32 %v766, 4294901760
        %3722 = vmatpush1.msra.mxu0 %v3721
        %3723 = vmatprep.subr.mxu0 0.0
        %v3724 = vand.u32 %v767, 4294901760
        %3725 = vmatpush1.msra.mxu0 %v3724
        %3726 = vmatprep.subr.mxu0 0.0
        %v3727 = vand.u32 %v768, 4294901760
        %3728 = vmatpush1.msra.mxu0 %v3727
        %3729 = vmatprep.subr.mxu0 0.0
        %v3730 = vand.u32 %v769, 4294901760
        %3731 = vmatpush1.msra.mxu0 %v3730
        %3732 = vmatprep.subr.mxu0 0.0
        %v3733 = vand.u32 %v770, 4294901760
        %3734 = vmatpush1.msra.mxu0 %v3733
        %3735 = vmatprep.subr.mxu0 0.0
        %v3736 = vand.u32 %v771, 4294901760
        %3737 = vmatpush1.msra.mxu0 %v3736
        %3738 = vmatprep.subr.mxu0 0.0
        %v3739 = vand.u32 %v772, 4294901760
        %3740 = vmatpush1.msra.mxu0 %v3739
        %3741 = vmatprep.subr.mxu0 0.0
        %v3742 = vand.u32 %v773, 4294901760
        %3743 = vmatpush1.msra.mxu0 %v3742
        %3744 = vmatprep.subr.mxu0 0.0
        %v3745 = vand.u32 %v774, 4294901760
        %3746 = vmatpush1.msra.mxu0 %v3745
        %3747 = vmatprep.subr.mxu0 0.0
        %3748 = vmatpush1.msra.mxu0 0.0
        %3749 = vmatprep.subr.mxu0 0.0
        %3750 = vmatpush1.msra.mxu0 0.0
        %3751 = vmatprep.subr.mxu0 0.0
        %3752 = vmatpush1.msra.mxu0 0.0
        %3753 = vmatprep.subr.mxu0 0.0
        %3754 = vmatpush1.msra.mxu0 0.0
        %3755 = vmatprep.subr.mxu0 0.0
        %3756 = vmatpush1.msra.mxu0 0.0
        %3757 = vmatprep.subr.mxu0 0.0
        %3758 = vmatpush1.msra.mxu0 0.0
        %3759 = vmatprep.subr.mxu0 0.0
        %3760 = vmatpush1.msra.mxu0 0.0
        %3761 = vmatprep.subr.mxu0 0.0
        %3762 = vmatpush1.msra.mxu0 0.0
        %3763 = vmatprep.subr.mxu0 0.0
        %3764 = vmatpush1.msra.mxu0 0.0
        %3765 = vmatprep.subr.mxu0 0.0
        %3766 = vmatpush1.msra.mxu0 0.0
        %3767 = vmatprep.subr.mxu0 0.0
        %3768 = vmatpush1.msra.mxu0 0.0
        %3769 = vmatprep.subr.mxu0 0.0
        %3770 = vmatpush1.msra.mxu0 0.0
        %3771 = vmatprep.subr.mxu0 0.0
        %3772 = vmatpush1.msra.mxu0 0.0
        %3773 = vmatprep.subr.mxu0 0.0
        %3774 = vmatpush1.msra.mxu0 0.0
        %3775 = vmatprep.subr.mxu0 0.0
        %3776 = vmatpush1.msra.mxu0 0.0
        %3777 = vmatprep.subr.mxu0 0.0
        %3778 = vmatpush1.msra.mxu0 0.0
        %3779 = vmatprep.mubr.f32.mxu0 0.0
        %v3780 = vand.u32 %v2992, 4294901760
        %v3781 = vsub.f32 %v2992, %v3780
        %v3782 = vand.u32 %v3781, 4294901760
        %3783 = vmatmul.mubr.f32.gmra.mrb[0].mxu0 %v3782
        %v3784 = vpop.f32.mrb[0].mxu0
        %v3785 = vadd.f32 %v3591, %v3784
        %v3786 = vpop.f32.mrb[0].mxu0
        %3787 = vmatprep.mubr.f32.mxu0 0.0
        %v3788 = vand.u32 %v2993, 4294901760
        %v3789 = vsub.f32 %v2993, %v3788
        %v3790 = vand.u32 %v3789, 4294901760
        %3791 = vmatmul.mubr.f32.gmra.mrb[0].mxu0 %v3790
        %v3792 = vpop.f32.mrb[0].mxu0
        %v3793 = vadd.f32 %v3598, %v3792
        %v3794 = vpop.f32.mrb[0].mxu0
        %3795 = vmatprep.mubr.f32.mxu0 0.0
        %v3796 = vand.u32 %v2994, 4294901760
        %v3797 = vsub.f32 %v2994, %v3796
        %v3798 = vand.u32 %v3797, 4294901760
        %3799 = vmatmul.mubr.f32.gmra.mrb[0].mxu0 %v3798
        %v3800 = vpop.f32.mrb[0].mxu0
        %v3801 = vadd.f32 %v3605, %v3800
        %v3802 = vpop.f32.mrb[0].mxu0
        %3803 = vmatprep.mubr.f32.mxu0 0.0
        %v3804 = vand.u32 %v2995, 4294901760
        %v3805 = vsub.f32 %v2995, %v3804
        %v3806 = vand.u32 %v3805, 4294901760
        %3807 = vmatmul.mubr.f32.gmra.mrb[0].mxu0 %v3806
        %v3808 = vpop.f32.mrb[0].mxu0
        %v3809 = vadd.f32 %v3612, %v3808
        %v3810 = vpop.f32.mrb[0].mxu0
        %3811 = vmatprep.mubr.f32.mxu0 0.0
        %v3812 = vand.u32 %v2996, 4294901760
        %v3813 = vsub.f32 %v2996, %v3812
        %v3814 = vand.u32 %v3813, 4294901760
        %3815 = vmatmul.mubr.f32.gmra.mrb[0].mxu0 %v3814
        %v3816 = vpop.f32.mrb[0].mxu0
        %v3817 = vadd.f32 %v3619, %v3816
        %v3818 = vpop.f32.mrb[0].mxu0
        %3819 = vmatprep.mubr.f32.mxu0 0.0
        %v3820 = vand.u32 %v2997, 4294901760
        %v3821 = vsub.f32 %v2997, %v3820
        %v3822 = vand.u32 %v3821, 4294901760
        %3823 = vmatmul.mubr.f32.gmra.mrb[0].mxu0 %v3822
        %v3824 = vpop.f32.mrb[0].mxu0
        %v3825 = vadd.f32 %v3626, %v3824
        %v3826 = vpop.f32.mrb[0].mxu0
        %3827 = vmatprep.mubr.f32.mxu0 0.0
        %v3828 = vand.u32 %v2998, 4294901760
        %v3829 = vsub.f32 %v2998, %v3828
        %v3830 = vand.u32 %v3829, 4294901760
        %3831 = vmatmul.mubr.f32.gmra.mrb[0].mxu0 %v3830
        %v3832 = vpop.f32.mrb[0].mxu0
        %v3833 = vadd.f32 %v3633, %v3832
        %v3834 = vpop.f32.mrb[0].mxu0
        %3835 = vmatprep.mubr.f32.mxu0 0.0
        %v3836 = vand.u32 %v2999, 4294901760
        %v3837 = vsub.f32 %v2999, %v3836
        %v3838 = vand.u32 %v3837, 4294901760
        %3839 = vmatmul.mubr.f32.gmra.mrb[0].mxu0 %v3838
        %v3840 = vpop.f32.mrb[0].mxu0
        %v3841 = vadd.f32 %v3640, %v3840
        %v3842 = vpop.f32.mrb[0].mxu0
        %3843 = vmatprep.mubr.f32.mxu0 0.0
        %v3844 = vand.u32 %v3000, 4294901760
        %v3845 = vsub.f32 %v3000, %v3844
        %v3846 = vand.u32 %v3845, 4294901760
        %3847 = vmatmul.mubr.f32.gmra.mrb[0].mxu0 %v3846
        %v3848 = vpop.f32.mrb[0].mxu0
        %v3849 = vadd.f32 %v3647, %v3848
        %v3850 = vpop.f32.mrb[0].mxu0
        %3851 = vmatprep.mubr.f32.mxu0 0.0
        %v3852 = vand.u32 %v3001, 4294901760
        %v3853 = vsub.f32 %v3001, %v3852
        %v3854 = vand.u32 %v3853, 4294901760
        %3855 = vmatmul.mubr.f32.gmra.mrb[0].mxu0 %v3854
        %v3856 = vpop.f32.mrb[0].mxu0
        %v3857 = vadd.f32 %v3654, %v3856
        %v3858 = vpop.f32.mrb[0].mxu0
        %3859 = vmatprep.mubr.f32.mxu0 0.0
        %v3860 = vand.u32 %v3002, 4294901760
        %v3861 = vsub.f32 %v3002, %v3860
        %v3862 = vand.u32 %v3861, 4294901760
        %3863 = vmatmul.mubr.f32.gmra.mrb[0].mxu0 %v3862
        %v3864 = vpop.f32.mrb[0].mxu0
        %v3865 = vadd.f32 %v3661, %v3864
        %v3866 = vpop.f32.mrb[0].mxu0
        %3867 = vmatprep.mubr.f32.mxu0 0.0
        %v3868 = vand.u32 %v3003, 4294901760
        %v3869 = vsub.f32 %v3003, %v3868
        %v3870 = vand.u32 %v3869, 4294901760
        %3871 = vmatmul.mubr.f32.gmra.mrb[0].mxu0 %v3870
        %v3872 = vpop.f32.mrb[0].mxu0
        %v3873 = vadd.f32 %v3668, %v3872
        %v3874 = vpop.f32.mrb[0].mxu0
        %3875 = vmatprep.mubr.f32.mxu0 0.0
        %v3876 = vand.u32 %v3004, 4294901760
        %v3877 = vsub.f32 %v3004, %v3876
        %v3878 = vand.u32 %v3877, 4294901760
        %3879 = vmatmul.mubr.f32.gmra.mrb[0].mxu0 %v3878
        %v3880 = vpop.f32.mrb[0].mxu0
        %v3881 = vadd.f32 %v3675, %v3880
        %v3882 = vpop.f32.mrb[0].mxu0
        %3883 = vmatprep.mubr.f32.mxu0 0.0
        %v3884 = vand.u32 %v3005, 4294901760
        %v3885 = vsub.f32 %v3005, %v3884
        %v3886 = vand.u32 %v3885, 4294901760
        %3887 = vmatmul.mubr.f32.gmra.mrb[0].mxu0 %v3886
        %v3888 = vpop.f32.mrb[0].mxu0
        %v3889 = vadd.f32 %v3682, %v3888
        %v3890 = vpop.f32.mrb[0].mxu0
        %3891 = vmatprep.mubr.f32.mxu0 0.0
        %v3892 = vand.u32 %v3006, 4294901760
        %v3893 = vsub.f32 %v3006, %v3892
        %v3894 = vand.u32 %v3893, 4294901760
        %3895 = vmatmul.mubr.f32.gmra.mrb[0].mxu0 %v3894
        %v3896 = vpop.f32.mrb[0].mxu0
        %v3897 = vadd.f32 %v3689, %v3896
        %v3898 = vpop.f32.mrb[0].mxu0
        %3899 = vmatprep.mubr.f32.mxu0 0.0
        %v3900 = vand.u32 %v3007, 4294901760
        %v3901 = vsub.f32 %v3007, %v3900
        %v3902 = vand.u32 %v3901, 4294901760
        %3903 = vmatmul.mubr.f32.gmra.mrb[0].mxu0 %v3902
        %v3904 = vpop.f32.mrb[0].mxu0
        %v3905 = vadd.f32 %v3696, %v3904
        %v3906 = vpop.f32.mrb[0].mxu0
        %3907 = vdwg.mxu0
        %3908 = vmatprep.subr.mxu0 0.0
        %v3909 = vand.u32 %v759, 4294901760
        %v3910 = vsub.f32 %v759, %v3909
        %v3911 = vand.u32 %v3910, 4294901760
        %3912 = vmatpush1.msra.mxu0 %v3911
        %3913 = vmatprep.subr.mxu0 0.0
        %v3914 = vand.u32 %v760, 4294901760
        %v3915 = vsub.f32 %v760, %v3914
        %v3916 = vand.u32 %v3915, 4294901760
        %3917 = vmatpush1.msra.mxu0 %v3916
        %3918 = vmatprep.subr.mxu0 0.0
        %v3919 = vand.u32 %v761, 4294901760
        %v3920 = vsub.f32 %v761, %v3919
        %v3921 = vand.u32 %v3920, 4294901760
        %3922 = vmatpush1.msra.mxu0 %v3921
        %3923 = vmatprep.subr.mxu0 0.0
        %v3924 = vand.u32 %v762, 4294901760
        %v3925 = vsub.f32 %v762, %v3924
        %v3926 = vand.u32 %v3925, 4294901760
        %3927 = vmatpush1.msra.mxu0 %v3926
        %3928 = vmatprep.subr.mxu0 0.0
        %v3929 = vand.u32 %v763, 4294901760
        %v3930 = vsub.f32 %v763, %v3929
        %v3931 = vand.u32 %v3930, 4294901760
        %3932 = vmatpush1.msra.mxu0 %v3931
        %3933 = vmatprep.subr.mxu0 0.0
        %v3934 = vand.u32 %v764, 4294901760
        %v3935 = vsub.f32 %v764, %v3934
        %v3936 = vand.u32 %v3935, 4294901760
        %3937 = vmatpush1.msra.mxu0 %v3936
        %3938 = vmatprep.subr.mxu0 0.0
        %v3939 = vand.u32 %v765, 4294901760
        %v3940 = vsub.f32 %v765, %v3939
        %v3941 = vand.u32 %v3940, 4294901760
        %3942 = vmatpush1.msra.mxu0 %v3941
        %3943 = vmatprep.subr.mxu0 0.0
        %v3944 = vand.u32 %v766, 4294901760
        %v3945 = vsub.f32 %v766, %v3944
        %v3946 = vand.u32 %v3945, 4294901760
        %3947 = vmatpush1.msra.mxu0 %v3946
        %3948 = vmatprep.subr.mxu0 0.0
        %v3949 = vand.u32 %v767, 4294901760
        %v3950 = vsub.f32 %v767, %v3949
        %v3951 = vand.u32 %v3950, 4294901760
        %3952 = vmatpush1.msra.mxu0 %v3951
        %3953 = vmatprep.subr.mxu0 0.0
        %v3954 = vand.u32 %v768, 4294901760
        %v3955 = vsub.f32 %v768, %v3954
        %v3956 = vand.u32 %v3955, 4294901760
        %3957 = vmatpush1.msra.mxu0 %v3956
        %3958 = vmatprep.subr.mxu0 0.0
        %v3959 = vand.u32 %v769, 4294901760
        %v3960 = vsub.f32 %v769, %v3959
        %v3961 = vand.u32 %v3960, 4294901760
        %3962 = vmatpush1.msra.mxu0 %v3961
        %3963 = vmatprep.subr.mxu0 0.0
        %v3964 = vand.u32 %v770, 4294901760
        %v3965 = vsub.f32 %v770, %v3964
        %v3966 = vand.u32 %v3965, 4294901760
        %3967 = vmatpush1.msra.mxu0 %v3966
        %3968 = vmatprep.subr.mxu0 0.0
        %v3969 = vand.u32 %v771, 4294901760
        %v3970 = vsub.f32 %v771, %v3969
        %v3971 = vand.u32 %v3970, 4294901760
        %3972 = vmatpush1.msra.mxu0 %v3971
        %3973 = vmatprep.subr.mxu0 0.0
        %v3974 = vand.u32 %v772, 4294901760
        %v3975 = vsub.f32 %v772, %v3974
        %v3976 = vand.u32 %v3975, 4294901760
        %3977 = vmatpush1.msra.mxu0 %v3976
        %3978 = vmatprep.subr.mxu0 0.0
        %v3979 = vand.u32 %v773, 4294901760
        %v3980 = vsub.f32 %v773, %v3979
        %v3981 = vand.u32 %v3980, 4294901760
        %3982 = vmatpush1.msra.mxu0 %v3981
        %3983 = vmatprep.subr.mxu0 0.0
        %v3984 = vand.u32 %v774, 4294901760
        %v3985 = vsub.f32 %v774, %v3984
        %v3986 = vand.u32 %v3985, 4294901760
        %3987 = vmatpush1.msra.mxu0 %v3986
        %3988 = vmatprep.subr.mxu0 0.0
        %3989 = vmatpush1.msra.mxu0 0.0
        %3990 = vmatprep.subr.mxu0 0.0
        %3991 = vmatpush1.msra.mxu0 0.0
        %3992 = vmatprep.subr.mxu0 0.0
        %3993 = vmatpush1.msra.mxu0 0.0
        %3994 = vmatprep.subr.mxu0 0.0
        %3995 = vmatpush1.msra.mxu0 0.0
        %3996 = vmatprep.subr.mxu0 0.0
        %3997 = vmatpush1.msra.mxu0 0.0
        %3998 = vmatprep.subr.mxu0 0.0
        %3999 = vmatpush1.msra.mxu0 0.0
        %4000 = vmatprep.subr.mxu0 0.0
        %4001 = vmatpush1.msra.mxu0 0.0
        %4002 = vmatprep.subr.mxu0 0.0
        %4003 = vmatpush1.msra.mxu0 0.0
        %4004 = vmatprep.subr.mxu0 0.0
        %4005 = vmatpush1.msra.mxu0 0.0
        %4006 = vmatprep.subr.mxu0 0.0
        %4007 = vmatpush1.msra.mxu0 0.0
        %4008 = vmatprep.subr.mxu0 0.0
        %4009 = vmatpush1.msra.mxu0 0.0
        %4010 = vmatprep.subr.mxu0 0.0
        %4011 = vmatpush1.msra.mxu0 0.0
        %4012 = vmatprep.subr.mxu0 0.0
        %4013 = vmatpush1.msra.mxu0 0.0
        %4014 = vmatprep.subr.mxu0 0.0
        %4015 = vmatpush1.msra.mxu0 0.0
        %4016 = vmatprep.subr.mxu0 0.0
        %4017 = vmatpush1.msra.mxu0 0.0
        %4018 = vmatprep.subr.mxu0 0.0
        %4019 = vmatpush1.msra.mxu0 0.0
        %4020 = vmatprep.mubr.f32.mxu0 0.0
        %v4021 = vand.u32 %v2992, 4294901760
        %4022 = vmatmul.mubr.f32.gmra.mrb[0].mxu0 %v4021
        %v4023 = vpop.f32.mrb[0].mxu0
        %v4024 = vadd.f32 %v3785, %v4023
        %v4025 = vpop.f32.mrb[0].mxu0
        %4026 = vmatprep.mubr.f32.mxu0 0.0
        %v4027 = vand.u32 %v2993, 4294901760
        %4028 = vmatmul.mubr.f32.gmra.mrb[0].mxu0 %v4027
        %v4029 = vpop.f32.mrb[0].mxu0
        %v4030 = vadd.f32 %v3793, %v4029
        %v4031 = vpop.f32.mrb[0].mxu0
        %4032 = vmatprep.mubr.f32.mxu0 0.0
        %v4033 = vand.u32 %v2994, 4294901760
        %4034 = vmatmul.mubr.f32.gmra.mrb[0].mxu0 %v4033
        %v4035 = vpop.f32.mrb[0].mxu0
        %v4036 = vadd.f32 %v3801, %v4035
        %v4037 = vpop.f32.mrb[0].mxu0
        %4038 = vmatprep.mubr.f32.mxu0 0.0
        %v4039 = vand.u32 %v2995, 4294901760
        %4040 = vmatmul.mubr.f32.gmra.mrb[0].mxu0 %v4039
        %v4041 = vpop.f32.mrb[0].mxu0
        %v4042 = vadd.f32 %v3809, %v4041
        %v4043 = vpop.f32.mrb[0].mxu0
        %4044 = vmatprep.mubr.f32.mxu0 0.0
        %v4045 = vand.u32 %v2996, 4294901760
        %4046 = vmatmul.mubr.f32.gmra.mrb[0].mxu0 %v4045
        %v4047 = vpop.f32.mrb[0].mxu0
        %v4048 = vadd.f32 %v3817, %v4047
        %v4049 = vpop.f32.mrb[0].mxu0
        %4050 = vmatprep.mubr.f32.mxu0 0.0
        %v4051 = vand.u32 %v2997, 4294901760
        %4052 = vmatmul.mubr.f32.gmra.mrb[0].mxu0 %v4051
        %v4053 = vpop.f32.mrb[0].mxu0
        %v4054 = vadd.f32 %v3825, %v4053
        %v4055 = vpop.f32.mrb[0].mxu0
        %4056 = vmatprep.mubr.f32.mxu0 0.0
        %v4057 = vand.u32 %v2998, 4294901760
        %4058 = vmatmul.mubr.f32.gmra.mrb[0].mxu0 %v4057
        %v4059 = vpop.f32.mrb[0].mxu0
        %v4060 = vadd.f32 %v3833, %v4059
        %v4061 = vpop.f32.mrb[0].mxu0
        %4062 = vmatprep.mubr.f32.mxu0 0.0
        %v4063 = vand.u32 %v2999, 4294901760
        %4064 = vmatmul.mubr.f32.gmra.mrb[0].mxu0 %v4063
        %v4065 = vpop.f32.mrb[0].mxu0
        %v4066 = vadd.f32 %v3841, %v4065
        %v4067 = vpop.f32.mrb[0].mxu0
        %4068 = vmatprep.mubr.f32.mxu0 0.0
        %v4069 = vand.u32 %v3000, 4294901760
        %4070 = vmatmul.mubr.f32.gmra.mrb[0].mxu0 %v4069
        %v4071 = vpop.f32.mrb[0].mxu0
        %v4072 = vadd.f32 %v3849, %v4071
        %v4073 = vpop.f32.mrb[0].mxu0
        %4074 = vmatprep.mubr.f32.mxu0 0.0
        %v4075 = vand.u32 %v3001, 4294901760
        %4076 = vmatmul.mubr.f32.gmra.mrb[0].mxu0 %v4075
        %v4077 = vpop.f32.mrb[0].mxu0
        %v4078 = vadd.f32 %v3857, %v4077
        %v4079 = vpop.f32.mrb[0].mxu0
        %4080 = vmatprep.mubr.f32.mxu0 0.0
        %v4081 = vand.u32 %v3002, 4294901760
        %4082 = vmatmul.mubr.f32.gmra.mrb[0].mxu0 %v4081
        %v4083 = vpop.f32.mrb[0].mxu0
        %v4084 = vadd.f32 %v3865, %v4083
        %v4085 = vpop.f32.mrb[0].mxu0
        %4086 = vmatprep.mubr.f32.mxu0 0.0
        %v4087 = vand.u32 %v3003, 4294901760
        %4088 = vmatmul.mubr.f32.gmra.mrb[0].mxu0 %v4087
        %v4089 = vpop.f32.mrb[0].mxu0
        %v4090 = vadd.f32 %v3873, %v4089
        %v4091 = vpop.f32.mrb[0].mxu0
        %4092 = vmatprep.mubr.f32.mxu0 0.0
        %v4093 = vand.u32 %v3004, 4294901760
        %4094 = vmatmul.mubr.f32.gmra.mrb[0].mxu0 %v4093
        %v4095 = vpop.f32.mrb[0].mxu0
        %v4096 = vadd.f32 %v3881, %v4095
        %v4097 = vpop.f32.mrb[0].mxu0
        %4098 = vmatprep.mubr.f32.mxu0 0.0
        %v4099 = vand.u32 %v3005, 4294901760
        %4100 = vmatmul.mubr.f32.gmra.mrb[0].mxu0 %v4099
        %v4101 = vpop.f32.mrb[0].mxu0
        %v4102 = vadd.f32 %v3889, %v4101
        %v4103 = vpop.f32.mrb[0].mxu0
        %4104 = vmatprep.mubr.f32.mxu0 0.0
        %v4105 = vand.u32 %v3006, 4294901760
        %4106 = vmatmul.mubr.f32.gmra.mrb[0].mxu0 %v4105
        %v4107 = vpop.f32.mrb[0].mxu0
        %v4108 = vadd.f32 %v3897, %v4107
        %v4109 = vpop.f32.mrb[0].mxu0
        %4110 = vmatprep.mubr.f32.mxu0 0.0
        %v4111 = vand.u32 %v3007, 4294901760
        %4112 = vmatmul.mubr.f32.gmra.mrb[0].mxu0 %v4111
        %v4113 = vpop.f32.mrb[0].mxu0
        %v4114 = vadd.f32 %v3905, %v4113
        %v4115 = vpop.f32.mrb[0].mxu0
        %4116 = vdwg.mxu0
        %4117 = vmatprep.subr.mxu0 0.0
        %v4118 = vand.u32 %v759, 4294901760
        %4119 = vmatpush1.msra.mxu0 %v4118
        %4120 = vmatprep.subr.mxu0 0.0
        %v4121 = vand.u32 %v760, 4294901760
        %4122 = vmatpush1.msra.mxu0 %v4121
        %4123 = vmatprep.subr.mxu0 0.0
        %v4124 = vand.u32 %v761, 4294901760
        %4125 = vmatpush1.msra.mxu0 %v4124
        %4126 = vmatprep.subr.mxu0 0.0
        %v4127 = vand.u32 %v762, 4294901760
        %4128 = vmatpush1.msra.mxu0 %v4127
        %4129 = vmatprep.subr.mxu0 0.0
        %v4130 = vand.u32 %v763, 4294901760
        %4131 = vmatpush1.msra.mxu0 %v4130
        %4132 = vmatprep.subr.mxu0 0.0
        %v4133 = vand.u32 %v764, 4294901760
        %4134 = vmatpush1.msra.mxu0 %v4133
        %4135 = vmatprep.subr.mxu0 0.0
        %v4136 = vand.u32 %v765, 4294901760
        %4137 = vmatpush1.msra.mxu0 %v4136
        %4138 = vmatprep.subr.mxu0 0.0
        %v4139 = vand.u32 %v766, 4294901760
        %4140 = vmatpush1.msra.mxu0 %v4139
        %4141 = vmatprep.subr.mxu0 0.0
        %v4142 = vand.u32 %v767, 4294901760
        %4143 = vmatpush1.msra.mxu0 %v4142
        %4144 = vmatprep.subr.mxu0 0.0
        %v4145 = vand.u32 %v768, 4294901760
        %4146 = vmatpush1.msra.mxu0 %v4145
        %4147 = vmatprep.subr.mxu0 0.0
        %v4148 = vand.u32 %v769, 4294901760
        %4149 = vmatpush1.msra.mxu0 %v4148
        %4150 = vmatprep.subr.mxu0 0.0
        %v4151 = vand.u32 %v770, 4294901760
        %4152 = vmatpush1.msra.mxu0 %v4151
        %4153 = vmatprep.subr.mxu0 0.0
        %v4154 = vand.u32 %v771, 4294901760
        %4155 = vmatpush1.msra.mxu0 %v4154
        %4156 = vmatprep.subr.mxu0 0.0
        %v4157 = vand.u32 %v772, 4294901760
        %4158 = vmatpush1.msra.mxu0 %v4157
        %4159 = vmatprep.subr.mxu0 0.0
        %v4160 = vand.u32 %v773, 4294901760
        %4161 = vmatpush1.msra.mxu0 %v4160
        %4162 = vmatprep.subr.mxu0 0.0
        %v4163 = vand.u32 %v774, 4294901760
        %4164 = vmatpush1.msra.mxu0 %v4163
        %4165 = vmatprep.subr.mxu0 0.0
        %4166 = vmatpush1.msra.mxu0 0.0
        %4167 = vmatprep.subr.mxu0 0.0
        %4168 = vmatpush1.msra.mxu0 0.0
        %4169 = vmatprep.subr.mxu0 0.0
        %4170 = vmatpush1.msra.mxu0 0.0
        %4171 = vmatprep.subr.mxu0 0.0
        %4172 = vmatpush1.msra.mxu0 0.0
        %4173 = vmatprep.subr.mxu0 0.0
        %4174 = vmatpush1.msra.mxu0 0.0
        %4175 = vmatprep.subr.mxu0 0.0
        %4176 = vmatpush1.msra.mxu0 0.0
        %4177 = vmatprep.subr.mxu0 0.0
        %4178 = vmatpush1.msra.mxu0 0.0
        %4179 = vmatprep.subr.mxu0 0.0
        %4180 = vmatpush1.msra.mxu0 0.0
        %4181 = vmatprep.subr.mxu0 0.0
        %4182 = vmatpush1.msra.mxu0 0.0
        %4183 = vmatprep.subr.mxu0 0.0
        %4184 = vmatpush1.msra.mxu0 0.0
        %4185 = vmatprep.subr.mxu0 0.0
        %4186 = vmatpush1.msra.mxu0 0.0
        %4187 = vmatprep.subr.mxu0 0.0
        %4188 = vmatpush1.msra.mxu0 0.0
        %4189 = vmatprep.subr.mxu0 0.0
        %4190 = vmatpush1.msra.mxu0 0.0
        %4191 = vmatprep.subr.mxu0 0.0
        %4192 = vmatpush1.msra.mxu0 0.0
        %4193 = vmatprep.subr.mxu0 0.0
        %4194 = vmatpush1.msra.mxu0 0.0
        %4195 = vmatprep.subr.mxu0 0.0
        %4196 = vmatpush1.msra.mxu0 0.0
        %4197 = vmatprep.mubr.f32.mxu0 0.0
        %v4198 = vand.u32 %v2992, 4294901760
        %4199 = vmatmul.mubr.f32.gmra.mrb[0].mxu0 %v4198
        %v4200 = vpop.f32.mrb[0].mxu0
        %v4201 = vadd.f32 %v4024, %v4200
        %v4202 = vpop.f32.mrb[0].mxu0
        %4203 = vmatprep.mubr.f32.mxu0 0.0
        %v4204 = vand.u32 %v2993, 4294901760
        %4205 = vmatmul.mubr.f32.gmra.mrb[0].mxu0 %v4204
        %v4206 = vpop.f32.mrb[0].mxu0
        %v4207 = vadd.f32 %v4030, %v4206
        %v4208 = vpop.f32.mrb[0].mxu0
        %4209 = vmatprep.mubr.f32.mxu0 0.0
        %v4210 = vand.u32 %v2994, 4294901760
        %4211 = vmatmul.mubr.f32.gmra.mrb[0].mxu0 %v4210
        %v4212 = vpop.f32.mrb[0].mxu0
        %v4213 = vadd.f32 %v4036, %v4212
        %v4214 = vpop.f32.mrb[0].mxu0
        %4215 = vmatprep.mubr.f32.mxu0 0.0
        %v4216 = vand.u32 %v2995, 4294901760
        %4217 = vmatmul.mubr.f32.gmra.mrb[0].mxu0 %v4216
        %v4218 = vpop.f32.mrb[0].mxu0
        %v4219 = vadd.f32 %v4042, %v4218
        %v4220 = vpop.f32.mrb[0].mxu0
        %4221 = vmatprep.mubr.f32.mxu0 0.0
        %v4222 = vand.u32 %v2996, 4294901760
        %4223 = vmatmul.mubr.f32.gmra.mrb[0].mxu0 %v4222
        %v4224 = vpop.f32.mrb[0].mxu0
        %v4225 = vadd.f32 %v4048, %v4224
        %v4226 = vpop.f32.mrb[0].mxu0
        %4227 = vmatprep.mubr.f32.mxu0 0.0
        %v4228 = vand.u32 %v2997, 4294901760
        %4229 = vmatmul.mubr.f32.gmra.mrb[0].mxu0 %v4228
        %v4230 = vpop.f32.mrb[0].mxu0
        %v4231 = vadd.f32 %v4054, %v4230
        %v4232 = vpop.f32.mrb[0].mxu0
        %4233 = vmatprep.mubr.f32.mxu0 0.0
        %v4234 = vand.u32 %v2998, 4294901760
        %4235 = vmatmul.mubr.f32.gmra.mrb[0].mxu0 %v4234
        %v4236 = vpop.f32.mrb[0].mxu0
        %v4237 = vadd.f32 %v4060, %v4236
        %v4238 = vpop.f32.mrb[0].mxu0
        %4239 = vmatprep.mubr.f32.mxu0 0.0
        %v4240 = vand.u32 %v2999, 4294901760
        %4241 = vmatmul.mubr.f32.gmra.mrb[0].mxu0 %v4240
        %v4242 = vpop.f32.mrb[0].mxu0
        %v4243 = vadd.f32 %v4066, %v4242
        %v4244 = vpop.f32.mrb[0].mxu0
        %4245 = vmatprep.mubr.f32.mxu0 0.0
        %v4246 = vand.u32 %v3000, 4294901760
        %4247 = vmatmul.mubr.f32.gmra.mrb[0].mxu0 %v4246
        %v4248 = vpop.f32.mrb[0].mxu0
        %v4249 = vadd.f32 %v4072, %v4248
        %v4250 = vpop.f32.mrb[0].mxu0
        %4251 = vmatprep.mubr.f32.mxu0 0.0
        %v4252 = vand.u32 %v3001, 4294901760
        %4253 = vmatmul.mubr.f32.gmra.mrb[0].mxu0 %v4252
        %v4254 = vpop.f32.mrb[0].mxu0
        %v4255 = vadd.f32 %v4078, %v4254
        %v4256 = vpop.f32.mrb[0].mxu0
        %4257 = vmatprep.mubr.f32.mxu0 0.0
        %v4258 = vand.u32 %v3002, 4294901760
        %4259 = vmatmul.mubr.f32.gmra.mrb[0].mxu0 %v4258
        %v4260 = vpop.f32.mrb[0].mxu0
        %v4261 = vadd.f32 %v4084, %v4260
        %v4262 = vpop.f32.mrb[0].mxu0
        %4263 = vmatprep.mubr.f32.mxu0 0.0
        %v4264 = vand.u32 %v3003, 4294901760
        %4265 = vmatmul.mubr.f32.gmra.mrb[0].mxu0 %v4264
        %v4266 = vpop.f32.mrb[0].mxu0
        %v4267 = vadd.f32 %v4090, %v4266
        %v4268 = vpop.f32.mrb[0].mxu0
        %4269 = vmatprep.mubr.f32.mxu0 0.0
        %v4270 = vand.u32 %v3004, 4294901760
        %4271 = vmatmul.mubr.f32.gmra.mrb[0].mxu0 %v4270
        %v4272 = vpop.f32.mrb[0].mxu0
        %v4273 = vadd.f32 %v4096, %v4272
        %v4274 = vpop.f32.mrb[0].mxu0
        %4275 = vmatprep.mubr.f32.mxu0 0.0
        %v4276 = vand.u32 %v3005, 4294901760
        %4277 = vmatmul.mubr.f32.gmra.mrb[0].mxu0 %v4276
        %v4278 = vpop.f32.mrb[0].mxu0
        %v4279 = vadd.f32 %v4102, %v4278
        %v4280 = vpop.f32.mrb[0].mxu0
        %4281 = vmatprep.mubr.f32.mxu0 0.0
        %v4282 = vand.u32 %v3006, 4294901760
        %4283 = vmatmul.mubr.f32.gmra.mrb[0].mxu0 %v4282
        %v4284 = vpop.f32.mrb[0].mxu0
        %v4285 = vadd.f32 %v4108, %v4284
        %v4286 = vpop.f32.mrb[0].mxu0
        %4287 = vmatprep.mubr.f32.mxu0 0.0
        %v4288 = vand.u32 %v3007, 4294901760
        %4289 = vmatmul.mubr.f32.gmra.mrb[0].mxu0 %v4288
        %v4290 = vpop.f32.mrb[0].mxu0
        %v4291 = vadd.f32 %v4114, %v4290
        %v4292 = vpop.f32.mrb[0].mxu0
        %4293 = vdwg.mxu0
        %v4294 = vmul.f32 %v2992, %v4201
        %v4295 = vmul.f32 %v2993, %v4207
        %v4296 = vmul.f32 %v2994, %v4213
        %v4297 = vmul.f32 %v2995, %v4219
        %v4298 = vmul.f32 %v2996, %v4225
        %v4299 = vmul.f32 %v2997, %v4231
        %v4300 = vmul.f32 %v2998, %v4237
        %v4301 = vmul.f32 %v2999, %v4243
        %v4302 = vmul.f32 %v3000, %v4249
        %v4303 = vmul.f32 %v3001, %v4255
        %v4304 = vmul.f32 %v3002, %v4261
        %v4305 = vmul.f32 %v3003, %v4267
        %v4306 = vmul.f32 %v3004, %v4273
        %v4307 = vmul.f32 %v3005, %v4279
        %v4308 = vmul.f32 %v3006, %v4285
        %v4309 = vmul.f32 %v3007, %v4291
        %v4310 = vrot.slane %v4294, 4
        %v4311 = vadd.f32 %v4294, %v4310
        %v4312 = vrot.slane %v4311, 2
        %v4313 = vadd.f32 %v4311, %v4312
        %v4314 = vrot.slane %v4313, 1
        %v4315 = vadd.f32 %v4313, %v4314
        %v4316 = vrot.slane %v4295, 4
        %v4317 = vadd.f32 %v4295, %v4316
        %v4318 = vrot.slane %v4317, 2
        %v4319 = vadd.f32 %v4317, %v4318
        %v4320 = vrot.slane %v4319, 1
        %v4321 = vadd.f32 %v4319, %v4320
        %v4322 = vrot.slane %v4296, 4
        %v4323 = vadd.f32 %v4296, %v4322
        %v4324 = vrot.slane %v4323, 2
        %v4325 = vadd.f32 %v4323, %v4324
        %v4326 = vrot.slane %v4325, 1
        %v4327 = vadd.f32 %v4325, %v4326
        %v4328 = vrot.slane %v4297, 4
        %v4329 = vadd.f32 %v4297, %v4328
        %v4330 = vrot.slane %v4329, 2
        %v4331 = vadd.f32 %v4329, %v4330
        %v4332 = vrot.slane %v4331, 1
        %v4333 = vadd.f32 %v4331, %v4332
        %v4334 = vrot.slane %v4298, 4
        %v4335 = vadd.f32 %v4298, %v4334
        %v4336 = vrot.slane %v4335, 2
        %v4337 = vadd.f32 %v4335, %v4336
        %v4338 = vrot.slane %v4337, 1
        %v4339 = vadd.f32 %v4337, %v4338
        %v4340 = vrot.slane %v4299, 4
        %v4341 = vadd.f32 %v4299, %v4340
        %v4342 = vrot.slane %v4341, 2
        %v4343 = vadd.f32 %v4341, %v4342
        %v4344 = vrot.slane %v4343, 1
        %v4345 = vadd.f32 %v4343, %v4344
        %v4346 = vrot.slane %v4300, 4
        %v4347 = vadd.f32 %v4300, %v4346
        %v4348 = vrot.slane %v4347, 2
        %v4349 = vadd.f32 %v4347, %v4348
        %v4350 = vrot.slane %v4349, 1
        %v4351 = vadd.f32 %v4349, %v4350
        %v4352 = vrot.slane %v4301, 4
        %v4353 = vadd.f32 %v4301, %v4352
        %v4354 = vrot.slane %v4353, 2
        %v4355 = vadd.f32 %v4353, %v4354
        %v4356 = vrot.slane %v4355, 1
        %v4357 = vadd.f32 %v4355, %v4356
        %v4358 = vrot.slane %v4302, 4
        %v4359 = vadd.f32 %v4302, %v4358
        %v4360 = vrot.slane %v4359, 2
        %v4361 = vadd.f32 %v4359, %v4360
        %v4362 = vrot.slane %v4361, 1
        %v4363 = vadd.f32 %v4361, %v4362
        %v4364 = vrot.slane %v4303, 4
        %v4365 = vadd.f32 %v4303, %v4364
        %v4366 = vrot.slane %v4365, 2
        %v4367 = vadd.f32 %v4365, %v4366
        %v4368 = vrot.slane %v4367, 1
        %v4369 = vadd.f32 %v4367, %v4368
        %v4370 = vrot.slane %v4304, 4
        %v4371 = vadd.f32 %v4304, %v4370
        %v4372 = vrot.slane %v4371, 2
        %v4373 = vadd.f32 %v4371, %v4372
        %v4374 = vrot.slane %v4373, 1
        %v4375 = vadd.f32 %v4373, %v4374
        %v4376 = vrot.slane %v4305, 4
        %v4377 = vadd.f32 %v4305, %v4376
        %v4378 = vrot.slane %v4377, 2
        %v4379 = vadd.f32 %v4377, %v4378
        %v4380 = vrot.slane %v4379, 1
        %v4381 = vadd.f32 %v4379, %v4380
        %v4382 = vrot.slane %v4306, 4
        %v4383 = vadd.f32 %v4306, %v4382
        %v4384 = vrot.slane %v4383, 2
        %v4385 = vadd.f32 %v4383, %v4384
        %v4386 = vrot.slane %v4385, 1
        %v4387 = vadd.f32 %v4385, %v4386
        %v4388 = vrot.slane %v4307, 4
        %v4389 = vadd.f32 %v4307, %v4388
        %v4390 = vrot.slane %v4389, 2
        %v4391 = vadd.f32 %v4389, %v4390
        %v4392 = vrot.slane %v4391, 1
        %v4393 = vadd.f32 %v4391, %v4392
        %v4394 = vrot.slane %v4308, 4
        %v4395 = vadd.f32 %v4308, %v4394
        %v4396 = vrot.slane %v4395, 2
        %v4397 = vadd.f32 %v4395, %v4396
        %v4398 = vrot.slane %v4397, 1
        %v4399 = vadd.f32 %v4397, %v4398
        %v4400 = vrot.slane %v4309, 4
        %v4401 = vadd.f32 %v4309, %v4400
        %v4402 = vrot.slane %v4401, 2
        %v4403 = vadd.f32 %v4401, %v4402
        %v4404 = vrot.slane %v4403, 1
        %v4405 = vadd.f32 %v4403, %v4404
        %v4422 = vsel %vm2221, %v4321, %v4315
        %v4423 = vsel %vm2223, %v4327, %v4422
        %v4424 = vsel %vm2225, %v4333, %v4423
        %v4425 = vsel %vm2227, %v4339, %v4424
        %v4426 = vsel %vm2229, %v4345, %v4425
        %v4427 = vsel %vm2231, %v4351, %v4426
        %v4428 = vsel %vm2233, %v4357, %v4427
        %v4429 = vsel %vm2221, %v4369, %v4363
        %v4430 = vsel %vm2223, %v4375, %v4429
        %v4431 = vsel %vm2225, %v4381, %v4430
        %v4432 = vsel %vm2227, %v4387, %v4431
        %v4433 = vsel %vm2229, %v4393, %v4432
        %v4434 = vsel %vm2231, %v4399, %v4433
        %v4435 = vsel %vm2233, %v4405, %v4434
        %4438 = vmatprep.subr.mxu0 0.0
        %v4439 = vand.u32 %v775, 4294901760
        %4440 = vmatpush1.msra.mxu0 %v4439
        %4441 = vmatprep.subr.mxu0 0.0
        %v4442 = vand.u32 %v776, 4294901760
        %4443 = vmatpush1.msra.mxu0 %v4442
        %4444 = vmatprep.subr.mxu0 0.0
        %v4445 = vand.u32 %v777, 4294901760
        %4446 = vmatpush1.msra.mxu0 %v4445
        %4447 = vmatprep.subr.mxu0 0.0
        %v4448 = vand.u32 %v778, 4294901760
        %4449 = vmatpush1.msra.mxu0 %v4448
        %4450 = vmatprep.subr.mxu0 0.0
        %v4451 = vand.u32 %v779, 4294901760
        %4452 = vmatpush1.msra.mxu0 %v4451
        %4453 = vmatprep.subr.mxu0 0.0
        %v4454 = vand.u32 %v780, 4294901760
        %4455 = vmatpush1.msra.mxu0 %v4454
        %4456 = vmatprep.subr.mxu0 0.0
        %v4457 = vand.u32 %v781, 4294901760
        %4458 = vmatpush1.msra.mxu0 %v4457
        %4459 = vmatprep.subr.mxu0 0.0
        %v4460 = vand.u32 %v782, 4294901760
        %4461 = vmatpush1.msra.mxu0 %v4460
        %4462 = vmatprep.subr.mxu0 0.0
        %v4463 = vand.u32 %v783, 4294901760
        %4464 = vmatpush1.msra.mxu0 %v4463
        %4465 = vmatprep.subr.mxu0 0.0
        %v4466 = vand.u32 %v784, 4294901760
        %4467 = vmatpush1.msra.mxu0 %v4466
        %4468 = vmatprep.subr.mxu0 0.0
        %v4469 = vand.u32 %v785, 4294901760
        %4470 = vmatpush1.msra.mxu0 %v4469
        %4471 = vmatprep.subr.mxu0 0.0
        %v4472 = vand.u32 %v786, 4294901760
        %4473 = vmatpush1.msra.mxu0 %v4472
        %4474 = vmatprep.subr.mxu0 0.0
        %v4475 = vand.u32 %v787, 4294901760
        %4476 = vmatpush1.msra.mxu0 %v4475
        %4477 = vmatprep.subr.mxu0 0.0
        %v4478 = vand.u32 %v788, 4294901760
        %4479 = vmatpush1.msra.mxu0 %v4478
        %4480 = vmatprep.subr.mxu0 0.0
        %v4481 = vand.u32 %v789, 4294901760
        %4482 = vmatpush1.msra.mxu0 %v4481
        %4483 = vmatprep.subr.mxu0 0.0
        %v4484 = vand.u32 %v790, 4294901760
        %4485 = vmatpush1.msra.mxu0 %v4484
        %4486 = vmatprep.subr.mxu0 0.0
        %4487 = vmatpush1.msra.mxu0 0.0
        %4488 = vmatprep.subr.mxu0 0.0
        %4489 = vmatpush1.msra.mxu0 0.0
        %4490 = vmatprep.subr.mxu0 0.0
        %4491 = vmatpush1.msra.mxu0 0.0
        %4492 = vmatprep.subr.mxu0 0.0
        %4493 = vmatpush1.msra.mxu0 0.0
        %4494 = vmatprep.subr.mxu0 0.0
        %4495 = vmatpush1.msra.mxu0 0.0
        %4496 = vmatprep.subr.mxu0 0.0
        %4497 = vmatpush1.msra.mxu0 0.0
        %4498 = vmatprep.subr.mxu0 0.0
        %4499 = vmatpush1.msra.mxu0 0.0
        %4500 = vmatprep.subr.mxu0 0.0
        %4501 = vmatpush1.msra.mxu0 0.0
        %4502 = vmatprep.subr.mxu0 0.0
        %4503 = vmatpush1.msra.mxu0 0.0
        %4504 = vmatprep.subr.mxu0 0.0
        %4505 = vmatpush1.msra.mxu0 0.0
        %4506 = vmatprep.subr.mxu0 0.0
        %4507 = vmatpush1.msra.mxu0 0.0
        %4508 = vmatprep.subr.mxu0 0.0
        %4509 = vmatpush1.msra.mxu0 0.0
        %4510 = vmatprep.subr.mxu0 0.0
        %4511 = vmatpush1.msra.mxu0 0.0
        %4512 = vmatprep.subr.mxu0 0.0
        %4513 = vmatpush1.msra.mxu0 0.0
        %4514 = vmatprep.subr.mxu0 0.0
        %4515 = vmatpush1.msra.mxu0 0.0
        %4516 = vmatprep.subr.mxu0 0.0
        %4517 = vmatpush1.msra.mxu0 0.0
        %4518 = vmatprep.mubr.f32.mxu0 0.0
        %v4519 = vand.u32 %v4428, 4294901760
        %v4520 = vsub.f32 %v4428, %v4519
        %v4521 = vand.u32 %v4520, 4294901760
        %v4522 = vsub.f32 %v4520, %v4521
        %v4523 = vand.u32 %v4522, 4294901760
        %4524 = vmatmul.mubr.f32.gmra.mrb[0].mxu0 %v4523
        %v4525 = vpop.f32.mrb[0].mxu0
        %v4526 = vadd.f32 0.0, %v4525
        %v4527 = vpop.f32.mrb[0].mxu0
        %4528 = vmatprep.mubr.f32.mxu0 0.0
        %v4529 = vand.u32 %v4435, 4294901760
        %v4530 = vsub.f32 %v4435, %v4529
        %v4531 = vand.u32 %v4530, 4294901760
        %v4532 = vsub.f32 %v4530, %v4531
        %v4533 = vand.u32 %v4532, 4294901760
        %4534 = vmatmul.mubr.f32.gmra.mrb[0].mxu0 %v4533
        %v4535 = vpop.f32.mrb[0].mxu0
        %v4536 = vadd.f32 0.0, %v4535
        %v4537 = vpop.f32.mrb[0].mxu0
        %4538 = vdwg.mxu0
        %4539 = vmatprep.subr.mxu0 0.0
        %v4540 = vand.u32 %v775, 4294901760
        %v4541 = vsub.f32 %v775, %v4540
        %v4542 = vand.u32 %v4541, 4294901760
        %v4543 = vsub.f32 %v4541, %v4542
        %v4544 = vand.u32 %v4543, 4294901760
        %4545 = vmatpush1.msra.mxu0 %v4544
        %4546 = vmatprep.subr.mxu0 0.0
        %v4547 = vand.u32 %v776, 4294901760
        %v4548 = vsub.f32 %v776, %v4547
        %v4549 = vand.u32 %v4548, 4294901760
        %v4550 = vsub.f32 %v4548, %v4549
        %v4551 = vand.u32 %v4550, 4294901760
        %4552 = vmatpush1.msra.mxu0 %v4551
        %4553 = vmatprep.subr.mxu0 0.0
        %v4554 = vand.u32 %v777, 4294901760
        %v4555 = vsub.f32 %v777, %v4554
        %v4556 = vand.u32 %v4555, 4294901760
        %v4557 = vsub.f32 %v4555, %v4556
        %v4558 = vand.u32 %v4557, 4294901760
        %4559 = vmatpush1.msra.mxu0 %v4558
        %4560 = vmatprep.subr.mxu0 0.0
        %v4561 = vand.u32 %v778, 4294901760
        %v4562 = vsub.f32 %v778, %v4561
        %v4563 = vand.u32 %v4562, 4294901760
        %v4564 = vsub.f32 %v4562, %v4563
        %v4565 = vand.u32 %v4564, 4294901760
        %4566 = vmatpush1.msra.mxu0 %v4565
        %4567 = vmatprep.subr.mxu0 0.0
        %v4568 = vand.u32 %v779, 4294901760
        %v4569 = vsub.f32 %v779, %v4568
        %v4570 = vand.u32 %v4569, 4294901760
        %v4571 = vsub.f32 %v4569, %v4570
        %v4572 = vand.u32 %v4571, 4294901760
        %4573 = vmatpush1.msra.mxu0 %v4572
        %4574 = vmatprep.subr.mxu0 0.0
        %v4575 = vand.u32 %v780, 4294901760
        %v4576 = vsub.f32 %v780, %v4575
        %v4577 = vand.u32 %v4576, 4294901760
        %v4578 = vsub.f32 %v4576, %v4577
        %v4579 = vand.u32 %v4578, 4294901760
        %4580 = vmatpush1.msra.mxu0 %v4579
        %4581 = vmatprep.subr.mxu0 0.0
        %v4582 = vand.u32 %v781, 4294901760
        %v4583 = vsub.f32 %v781, %v4582
        %v4584 = vand.u32 %v4583, 4294901760
        %v4585 = vsub.f32 %v4583, %v4584
        %v4586 = vand.u32 %v4585, 4294901760
        %4587 = vmatpush1.msra.mxu0 %v4586
        %4588 = vmatprep.subr.mxu0 0.0
        %v4589 = vand.u32 %v782, 4294901760
        %v4590 = vsub.f32 %v782, %v4589
        %v4591 = vand.u32 %v4590, 4294901760
        %v4592 = vsub.f32 %v4590, %v4591
        %v4593 = vand.u32 %v4592, 4294901760
        %4594 = vmatpush1.msra.mxu0 %v4593
        %4595 = vmatprep.subr.mxu0 0.0
        %v4596 = vand.u32 %v783, 4294901760
        %v4597 = vsub.f32 %v783, %v4596
        %v4598 = vand.u32 %v4597, 4294901760
        %v4599 = vsub.f32 %v4597, %v4598
        %v4600 = vand.u32 %v4599, 4294901760
        %4601 = vmatpush1.msra.mxu0 %v4600
        %4602 = vmatprep.subr.mxu0 0.0
        %v4603 = vand.u32 %v784, 4294901760
        %v4604 = vsub.f32 %v784, %v4603
        %v4605 = vand.u32 %v4604, 4294901760
        %v4606 = vsub.f32 %v4604, %v4605
        %v4607 = vand.u32 %v4606, 4294901760
        %4608 = vmatpush1.msra.mxu0 %v4607
        %4609 = vmatprep.subr.mxu0 0.0
        %v4610 = vand.u32 %v785, 4294901760
        %v4611 = vsub.f32 %v785, %v4610
        %v4612 = vand.u32 %v4611, 4294901760
        %v4613 = vsub.f32 %v4611, %v4612
        %v4614 = vand.u32 %v4613, 4294901760
        %4615 = vmatpush1.msra.mxu0 %v4614
        %4616 = vmatprep.subr.mxu0 0.0
        %v4617 = vand.u32 %v786, 4294901760
        %v4618 = vsub.f32 %v786, %v4617
        %v4619 = vand.u32 %v4618, 4294901760
        %v4620 = vsub.f32 %v4618, %v4619
        %v4621 = vand.u32 %v4620, 4294901760
        %4622 = vmatpush1.msra.mxu0 %v4621
        %4623 = vmatprep.subr.mxu0 0.0
        %v4624 = vand.u32 %v787, 4294901760
        %v4625 = vsub.f32 %v787, %v4624
        %v4626 = vand.u32 %v4625, 4294901760
        %v4627 = vsub.f32 %v4625, %v4626
        %v4628 = vand.u32 %v4627, 4294901760
        %4629 = vmatpush1.msra.mxu0 %v4628
        %4630 = vmatprep.subr.mxu0 0.0
        %v4631 = vand.u32 %v788, 4294901760
        %v4632 = vsub.f32 %v788, %v4631
        %v4633 = vand.u32 %v4632, 4294901760
        %v4634 = vsub.f32 %v4632, %v4633
        %v4635 = vand.u32 %v4634, 4294901760
        %4636 = vmatpush1.msra.mxu0 %v4635
        %4637 = vmatprep.subr.mxu0 0.0
        %v4638 = vand.u32 %v789, 4294901760
        %v4639 = vsub.f32 %v789, %v4638
        %v4640 = vand.u32 %v4639, 4294901760
        %v4641 = vsub.f32 %v4639, %v4640
        %v4642 = vand.u32 %v4641, 4294901760
        %4643 = vmatpush1.msra.mxu0 %v4642
        %4644 = vmatprep.subr.mxu0 0.0
        %v4645 = vand.u32 %v790, 4294901760
        %v4646 = vsub.f32 %v790, %v4645
        %v4647 = vand.u32 %v4646, 4294901760
        %v4648 = vsub.f32 %v4646, %v4647
        %v4649 = vand.u32 %v4648, 4294901760
        %4650 = vmatpush1.msra.mxu0 %v4649
        %4651 = vmatprep.subr.mxu0 0.0
        %4652 = vmatpush1.msra.mxu0 0.0
        %4653 = vmatprep.subr.mxu0 0.0
        %4654 = vmatpush1.msra.mxu0 0.0
        %4655 = vmatprep.subr.mxu0 0.0
        %4656 = vmatpush1.msra.mxu0 0.0
        %4657 = vmatprep.subr.mxu0 0.0
        %4658 = vmatpush1.msra.mxu0 0.0
        %4659 = vmatprep.subr.mxu0 0.0
        %4660 = vmatpush1.msra.mxu0 0.0
        %4661 = vmatprep.subr.mxu0 0.0
        %4662 = vmatpush1.msra.mxu0 0.0
        %4663 = vmatprep.subr.mxu0 0.0
        %4664 = vmatpush1.msra.mxu0 0.0
        %4665 = vmatprep.subr.mxu0 0.0
        %4666 = vmatpush1.msra.mxu0 0.0
        %4667 = vmatprep.subr.mxu0 0.0
        %4668 = vmatpush1.msra.mxu0 0.0
        %4669 = vmatprep.subr.mxu0 0.0
        %4670 = vmatpush1.msra.mxu0 0.0
        %4671 = vmatprep.subr.mxu0 0.0
        %4672 = vmatpush1.msra.mxu0 0.0
        %4673 = vmatprep.subr.mxu0 0.0
        %4674 = vmatpush1.msra.mxu0 0.0
        %4675 = vmatprep.subr.mxu0 0.0
        %4676 = vmatpush1.msra.mxu0 0.0
        %4677 = vmatprep.subr.mxu0 0.0
        %4678 = vmatpush1.msra.mxu0 0.0
        %4679 = vmatprep.subr.mxu0 0.0
        %4680 = vmatpush1.msra.mxu0 0.0
        %4681 = vmatprep.subr.mxu0 0.0
        %4682 = vmatpush1.msra.mxu0 0.0
        %4683 = vmatprep.mubr.f32.mxu0 0.0
        %v4684 = vand.u32 %v4428, 4294901760
        %4685 = vmatmul.mubr.f32.gmra.mrb[0].mxu0 %v4684
        %v4686 = vpop.f32.mrb[0].mxu0
        %v4687 = vadd.f32 %v4526, %v4686
        %v4688 = vpop.f32.mrb[0].mxu0
        %4689 = vmatprep.mubr.f32.mxu0 0.0
        %v4690 = vand.u32 %v4435, 4294901760
        %4691 = vmatmul.mubr.f32.gmra.mrb[0].mxu0 %v4690
        %v4692 = vpop.f32.mrb[0].mxu0
        %v4693 = vadd.f32 %v4536, %v4692
        %v4694 = vpop.f32.mrb[0].mxu0
        %4695 = vdwg.mxu0
        %4696 = vmatprep.subr.mxu0 0.0
        %v4697 = vand.u32 %v775, 4294901760
        %v4698 = vsub.f32 %v775, %v4697
        %4699 = vmatpush1.msra.mxu0 %v4698
        %4700 = vmatprep.subr.mxu0 0.0
        %v4701 = vand.u32 %v776, 4294901760
        %v4702 = vsub.f32 %v776, %v4701
        %4703 = vmatpush1.msra.mxu0 %v4702
        %4704 = vmatprep.subr.mxu0 0.0
        %v4705 = vand.u32 %v777, 4294901760
        %v4706 = vsub.f32 %v777, %v4705
        %4707 = vmatpush1.msra.mxu0 %v4706
        %4708 = vmatprep.subr.mxu0 0.0
        %v4709 = vand.u32 %v778, 4294901760
        %v4710 = vsub.f32 %v778, %v4709
        %4711 = vmatpush1.msra.mxu0 %v4710
        %4712 = vmatprep.subr.mxu0 0.0
        %v4713 = vand.u32 %v779, 4294901760
        %v4714 = vsub.f32 %v779, %v4713
        %4715 = vmatpush1.msra.mxu0 %v4714
        %4716 = vmatprep.subr.mxu0 0.0
        %v4717 = vand.u32 %v780, 4294901760
        %v4718 = vsub.f32 %v780, %v4717
        %4719 = vmatpush1.msra.mxu0 %v4718
        %4720 = vmatprep.subr.mxu0 0.0
        %v4721 = vand.u32 %v781, 4294901760
        %v4722 = vsub.f32 %v781, %v4721
        %4723 = vmatpush1.msra.mxu0 %v4722
        %4724 = vmatprep.subr.mxu0 0.0
        %v4725 = vand.u32 %v782, 4294901760
        %v4726 = vsub.f32 %v782, %v4725
        %4727 = vmatpush1.msra.mxu0 %v4726
        %4728 = vmatprep.subr.mxu0 0.0
        %v4729 = vand.u32 %v783, 4294901760
        %v4730 = vsub.f32 %v783, %v4729
        %4731 = vmatpush1.msra.mxu0 %v4730
        %4732 = vmatprep.subr.mxu0 0.0
        %v4733 = vand.u32 %v784, 4294901760
        %v4734 = vsub.f32 %v784, %v4733
        %4735 = vmatpush1.msra.mxu0 %v4734
        %4736 = vmatprep.subr.mxu0 0.0
        %v4737 = vand.u32 %v785, 4294901760
        %v4738 = vsub.f32 %v785, %v4737
        %4739 = vmatpush1.msra.mxu0 %v4738
        %4740 = vmatprep.subr.mxu0 0.0
        %v4741 = vand.u32 %v786, 4294901760
        %v4742 = vsub.f32 %v786, %v4741
        %4743 = vmatpush1.msra.mxu0 %v4742
        %4744 = vmatprep.subr.mxu0 0.0
        %v4745 = vand.u32 %v787, 4294901760
        %v4746 = vsub.f32 %v787, %v4745
        %4747 = vmatpush1.msra.mxu0 %v4746
        %4748 = vmatprep.subr.mxu0 0.0
        %v4749 = vand.u32 %v788, 4294901760
        %v4750 = vsub.f32 %v788, %v4749
        %4751 = vmatpush1.msra.mxu0 %v4750
        %4752 = vmatprep.subr.mxu0 0.0
        %v4753 = vand.u32 %v789, 4294901760
        %v4754 = vsub.f32 %v789, %v4753
        %4755 = vmatpush1.msra.mxu0 %v4754
        %4756 = vmatprep.subr.mxu0 0.0
        %v4757 = vand.u32 %v790, 4294901760
        %v4758 = vsub.f32 %v790, %v4757
        %4759 = vmatpush1.msra.mxu0 %v4758
        %4760 = vmatprep.subr.mxu0 0.0
        %4761 = vmatpush1.msra.mxu0 0.0
        %4762 = vmatprep.subr.mxu0 0.0
        %4763 = vmatpush1.msra.mxu0 0.0
        %4764 = vmatprep.subr.mxu0 0.0
        %4765 = vmatpush1.msra.mxu0 0.0
        %4766 = vmatprep.subr.mxu0 0.0
        %4767 = vmatpush1.msra.mxu0 0.0
        %4768 = vmatprep.subr.mxu0 0.0
        %4769 = vmatpush1.msra.mxu0 0.0
        %4770 = vmatprep.subr.mxu0 0.0
        %4771 = vmatpush1.msra.mxu0 0.0
        %4772 = vmatprep.subr.mxu0 0.0
        %4773 = vmatpush1.msra.mxu0 0.0
        %4774 = vmatprep.subr.mxu0 0.0
        %4775 = vmatpush1.msra.mxu0 0.0
        %4776 = vmatprep.subr.mxu0 0.0
        %4777 = vmatpush1.msra.mxu0 0.0
        %4778 = vmatprep.subr.mxu0 0.0
        %4779 = vmatpush1.msra.mxu0 0.0
        %4780 = vmatprep.subr.mxu0 0.0
        %4781 = vmatpush1.msra.mxu0 0.0
        %4782 = vmatprep.subr.mxu0 0.0
        %4783 = vmatpush1.msra.mxu0 0.0
        %4784 = vmatprep.subr.mxu0 0.0
        %4785 = vmatpush1.msra.mxu0 0.0
        %4786 = vmatprep.subr.mxu0 0.0
        %4787 = vmatpush1.msra.mxu0 0.0
        %4788 = vmatprep.subr.mxu0 0.0
        %4789 = vmatpush1.msra.mxu0 0.0
        %4790 = vmatprep.subr.mxu0 0.0
        %4791 = vmatpush1.msra.mxu0 0.0
        %4792 = vmatprep.mubr.f32.mxu0 0.0
        %v4793 = vand.u32 %v4428, 4294901760
        %v4794 = vsub.f32 %v4428, %v4793
        %4795 = vmatmul.mubr.f32.gmra.mrb[0].mxu0 %v4794
        %v4796 = vpop.f32.mrb[0].mxu0
        %v4797 = vadd.f32 %v4687, %v4796
        %v4798 = vpop.f32.mrb[0].mxu0
        %4799 = vmatprep.mubr.f32.mxu0 0.0
        %v4800 = vand.u32 %v4435, 4294901760
        %v4801 = vsub.f32 %v4435, %v4800
        %4802 = vmatmul.mubr.f32.gmra.mrb[0].mxu0 %v4801
        %v4803 = vpop.f32.mrb[0].mxu0
        %v4804 = vadd.f32 %v4693, %v4803
        %v4805 = vpop.f32.mrb[0].mxu0
        %4806 = vdwg.mxu0
        %4807 = vmatprep.subr.mxu0 0.0
        %v4808 = vand.u32 %v775, 4294901760
        %4809 = vmatpush1.msra.mxu0 %v4808
        %4810 = vmatprep.subr.mxu0 0.0
        %v4811 = vand.u32 %v776, 4294901760
        %4812 = vmatpush1.msra.mxu0 %v4811
        %4813 = vmatprep.subr.mxu0 0.0
        %v4814 = vand.u32 %v777, 4294901760
        %4815 = vmatpush1.msra.mxu0 %v4814
        %4816 = vmatprep.subr.mxu0 0.0
        %v4817 = vand.u32 %v778, 4294901760
        %4818 = vmatpush1.msra.mxu0 %v4817
        %4819 = vmatprep.subr.mxu0 0.0
        %v4820 = vand.u32 %v779, 4294901760
        %4821 = vmatpush1.msra.mxu0 %v4820
        %4822 = vmatprep.subr.mxu0 0.0
        %v4823 = vand.u32 %v780, 4294901760
        %4824 = vmatpush1.msra.mxu0 %v4823
        %4825 = vmatprep.subr.mxu0 0.0
        %v4826 = vand.u32 %v781, 4294901760
        %4827 = vmatpush1.msra.mxu0 %v4826
        %4828 = vmatprep.subr.mxu0 0.0
        %v4829 = vand.u32 %v782, 4294901760
        %4830 = vmatpush1.msra.mxu0 %v4829
        %4831 = vmatprep.subr.mxu0 0.0
        %v4832 = vand.u32 %v783, 4294901760
        %4833 = vmatpush1.msra.mxu0 %v4832
        %4834 = vmatprep.subr.mxu0 0.0
        %v4835 = vand.u32 %v784, 4294901760
        %4836 = vmatpush1.msra.mxu0 %v4835
        %4837 = vmatprep.subr.mxu0 0.0
        %v4838 = vand.u32 %v785, 4294901760
        %4839 = vmatpush1.msra.mxu0 %v4838
        %4840 = vmatprep.subr.mxu0 0.0
        %v4841 = vand.u32 %v786, 4294901760
        %4842 = vmatpush1.msra.mxu0 %v4841
        %4843 = vmatprep.subr.mxu0 0.0
        %v4844 = vand.u32 %v787, 4294901760
        %4845 = vmatpush1.msra.mxu0 %v4844
        %4846 = vmatprep.subr.mxu0 0.0
        %v4847 = vand.u32 %v788, 4294901760
        %4848 = vmatpush1.msra.mxu0 %v4847
        %4849 = vmatprep.subr.mxu0 0.0
        %v4850 = vand.u32 %v789, 4294901760
        %4851 = vmatpush1.msra.mxu0 %v4850
        %4852 = vmatprep.subr.mxu0 0.0
        %v4853 = vand.u32 %v790, 4294901760
        %4854 = vmatpush1.msra.mxu0 %v4853
        %4855 = vmatprep.subr.mxu0 0.0
        %4856 = vmatpush1.msra.mxu0 0.0
        %4857 = vmatprep.subr.mxu0 0.0
        %4858 = vmatpush1.msra.mxu0 0.0
        %4859 = vmatprep.subr.mxu0 0.0
        %4860 = vmatpush1.msra.mxu0 0.0
        %4861 = vmatprep.subr.mxu0 0.0
        %4862 = vmatpush1.msra.mxu0 0.0
        %4863 = vmatprep.subr.mxu0 0.0
        %4864 = vmatpush1.msra.mxu0 0.0
        %4865 = vmatprep.subr.mxu0 0.0
        %4866 = vmatpush1.msra.mxu0 0.0
        %4867 = vmatprep.subr.mxu0 0.0
        %4868 = vmatpush1.msra.mxu0 0.0
        %4869 = vmatprep.subr.mxu0 0.0
        %4870 = vmatpush1.msra.mxu0 0.0
        %4871 = vmatprep.subr.mxu0 0.0
        %4872 = vmatpush1.msra.mxu0 0.0
        %4873 = vmatprep.subr.mxu0 0.0
        %4874 = vmatpush1.msra.mxu0 0.0
        %4875 = vmatprep.subr.mxu0 0.0
        %4876 = vmatpush1.msra.mxu0 0.0
        %4877 = vmatprep.subr.mxu0 0.0
        %4878 = vmatpush1.msra.mxu0 0.0
        %4879 = vmatprep.subr.mxu0 0.0
        %4880 = vmatpush1.msra.mxu0 0.0
        %4881 = vmatprep.subr.mxu0 0.0
        %4882 = vmatpush1.msra.mxu0 0.0
        %4883 = vmatprep.subr.mxu0 0.0
        %4884 = vmatpush1.msra.mxu0 0.0
        %4885 = vmatprep.subr.mxu0 0.0
        %4886 = vmatpush1.msra.mxu0 0.0
        %4887 = vmatprep.mubr.f32.mxu0 0.0
        %v4888 = vand.u32 %v4428, 4294901760
        %v4889 = vsub.f32 %v4428, %v4888
        %v4890 = vand.u32 %v4889, 4294901760
        %4891 = vmatmul.mubr.f32.gmra.mrb[0].mxu0 %v4890
        %v4892 = vpop.f32.mrb[0].mxu0
        %v4893 = vadd.f32 %v4797, %v4892
        %v4894 = vpop.f32.mrb[0].mxu0
        %4895 = vmatprep.mubr.f32.mxu0 0.0
        %v4896 = vand.u32 %v4435, 4294901760
        %v4897 = vsub.f32 %v4435, %v4896
        %v4898 = vand.u32 %v4897, 4294901760
        %4899 = vmatmul.mubr.f32.gmra.mrb[0].mxu0 %v4898
        %v4900 = vpop.f32.mrb[0].mxu0
        %v4901 = vadd.f32 %v4804, %v4900
        %v4902 = vpop.f32.mrb[0].mxu0
        %4903 = vdwg.mxu0
        %4904 = vmatprep.subr.mxu0 0.0
        %v4905 = vand.u32 %v775, 4294901760
        %v4906 = vsub.f32 %v775, %v4905
        %v4907 = vand.u32 %v4906, 4294901760
        %4908 = vmatpush1.msra.mxu0 %v4907
        %4909 = vmatprep.subr.mxu0 0.0
        %v4910 = vand.u32 %v776, 4294901760
        %v4911 = vsub.f32 %v776, %v4910
        %v4912 = vand.u32 %v4911, 4294901760
        %4913 = vmatpush1.msra.mxu0 %v4912
        %4914 = vmatprep.subr.mxu0 0.0
        %v4915 = vand.u32 %v777, 4294901760
        %v4916 = vsub.f32 %v777, %v4915
        %v4917 = vand.u32 %v4916, 4294901760
        %4918 = vmatpush1.msra.mxu0 %v4917
        %4919 = vmatprep.subr.mxu0 0.0
        %v4920 = vand.u32 %v778, 4294901760
        %v4921 = vsub.f32 %v778, %v4920
        %v4922 = vand.u32 %v4921, 4294901760
        %4923 = vmatpush1.msra.mxu0 %v4922
        %4924 = vmatprep.subr.mxu0 0.0
        %v4925 = vand.u32 %v779, 4294901760
        %v4926 = vsub.f32 %v779, %v4925
        %v4927 = vand.u32 %v4926, 4294901760
        %4928 = vmatpush1.msra.mxu0 %v4927
        %4929 = vmatprep.subr.mxu0 0.0
        %v4930 = vand.u32 %v780, 4294901760
        %v4931 = vsub.f32 %v780, %v4930
        %v4932 = vand.u32 %v4931, 4294901760
        %4933 = vmatpush1.msra.mxu0 %v4932
        %4934 = vmatprep.subr.mxu0 0.0
        %v4935 = vand.u32 %v781, 4294901760
        %v4936 = vsub.f32 %v781, %v4935
        %v4937 = vand.u32 %v4936, 4294901760
        %4938 = vmatpush1.msra.mxu0 %v4937
        %4939 = vmatprep.subr.mxu0 0.0
        %v4940 = vand.u32 %v782, 4294901760
        %v4941 = vsub.f32 %v782, %v4940
        %v4942 = vand.u32 %v4941, 4294901760
        %4943 = vmatpush1.msra.mxu0 %v4942
        %4944 = vmatprep.subr.mxu0 0.0
        %v4945 = vand.u32 %v783, 4294901760
        %v4946 = vsub.f32 %v783, %v4945
        %v4947 = vand.u32 %v4946, 4294901760
        %4948 = vmatpush1.msra.mxu0 %v4947
        %4949 = vmatprep.subr.mxu0 0.0
        %v4950 = vand.u32 %v784, 4294901760
        %v4951 = vsub.f32 %v784, %v4950
        %v4952 = vand.u32 %v4951, 4294901760
        %4953 = vmatpush1.msra.mxu0 %v4952
        %4954 = vmatprep.subr.mxu0 0.0
        %v4955 = vand.u32 %v785, 4294901760
        %v4956 = vsub.f32 %v785, %v4955
        %v4957 = vand.u32 %v4956, 4294901760
        %4958 = vmatpush1.msra.mxu0 %v4957
        %4959 = vmatprep.subr.mxu0 0.0
        %v4960 = vand.u32 %v786, 4294901760
        %v4961 = vsub.f32 %v786, %v4960
        %v4962 = vand.u32 %v4961, 4294901760
        %4963 = vmatpush1.msra.mxu0 %v4962
        %4964 = vmatprep.subr.mxu0 0.0
        %v4965 = vand.u32 %v787, 4294901760
        %v4966 = vsub.f32 %v787, %v4965
        %v4967 = vand.u32 %v4966, 4294901760
        %4968 = vmatpush1.msra.mxu0 %v4967
        %4969 = vmatprep.subr.mxu0 0.0
        %v4970 = vand.u32 %v788, 4294901760
        %v4971 = vsub.f32 %v788, %v4970
        %v4972 = vand.u32 %v4971, 4294901760
        %4973 = vmatpush1.msra.mxu0 %v4972
        %4974 = vmatprep.subr.mxu0 0.0
        %v4975 = vand.u32 %v789, 4294901760
        %v4976 = vsub.f32 %v789, %v4975
        %v4977 = vand.u32 %v4976, 4294901760
        %4978 = vmatpush1.msra.mxu0 %v4977
        %4979 = vmatprep.subr.mxu0 0.0
        %v4980 = vand.u32 %v790, 4294901760
        %v4981 = vsub.f32 %v790, %v4980
        %v4982 = vand.u32 %v4981, 4294901760
        %4983 = vmatpush1.msra.mxu0 %v4982
        %4984 = vmatprep.subr.mxu0 0.0
        %4985 = vmatpush1.msra.mxu0 0.0
        %4986 = vmatprep.subr.mxu0 0.0
        %4987 = vmatpush1.msra.mxu0 0.0
        %4988 = vmatprep.subr.mxu0 0.0
        %4989 = vmatpush1.msra.mxu0 0.0
        %4990 = vmatprep.subr.mxu0 0.0
        %4991 = vmatpush1.msra.mxu0 0.0
        %4992 = vmatprep.subr.mxu0 0.0
        %4993 = vmatpush1.msra.mxu0 0.0
        %4994 = vmatprep.subr.mxu0 0.0
        %4995 = vmatpush1.msra.mxu0 0.0
        %4996 = vmatprep.subr.mxu0 0.0
        %4997 = vmatpush1.msra.mxu0 0.0
        %4998 = vmatprep.subr.mxu0 0.0
        %4999 = vmatpush1.msra.mxu0 0.0
        %5000 = vmatprep.subr.mxu0 0.0
        %5001 = vmatpush1.msra.mxu0 0.0
        %5002 = vmatprep.subr.mxu0 0.0
        %5003 = vmatpush1.msra.mxu0 0.0
        %5004 = vmatprep.subr.mxu0 0.0
        %5005 = vmatpush1.msra.mxu0 0.0
        %5006 = vmatprep.subr.mxu0 0.0
        %5007 = vmatpush1.msra.mxu0 0.0
        %5008 = vmatprep.subr.mxu0 0.0
        %5009 = vmatpush1.msra.mxu0 0.0
        %5010 = vmatprep.subr.mxu0 0.0
        %5011 = vmatpush1.msra.mxu0 0.0
        %5012 = vmatprep.subr.mxu0 0.0
        %5013 = vmatpush1.msra.mxu0 0.0
        %5014 = vmatprep.subr.mxu0 0.0
        %5015 = vmatpush1.msra.mxu0 0.0
        %5016 = vmatprep.mubr.f32.mxu0 0.0
        %v5017 = vand.u32 %v4428, 4294901760
        %5018 = vmatmul.mubr.f32.gmra.mrb[0].mxu0 %v5017
        %v5019 = vpop.f32.mrb[0].mxu0
        %v5020 = vadd.f32 %v4893, %v5019
        %v5021 = vpop.f32.mrb[0].mxu0
        %5022 = vmatprep.mubr.f32.mxu0 0.0
        %v5023 = vand.u32 %v4435, 4294901760
        %5024 = vmatmul.mubr.f32.gmra.mrb[0].mxu0 %v5023
        %v5025 = vpop.f32.mrb[0].mxu0
        %v5026 = vadd.f32 %v4901, %v5025
        %v5027 = vpop.f32.mrb[0].mxu0
        %5028 = vdwg.mxu0
        %5029 = vmatprep.subr.mxu0 0.0
        %v5030 = vand.u32 %v775, 4294901760
        %5031 = vmatpush1.msra.mxu0 %v5030
        %5032 = vmatprep.subr.mxu0 0.0
        %v5033 = vand.u32 %v776, 4294901760
        %5034 = vmatpush1.msra.mxu0 %v5033
        %5035 = vmatprep.subr.mxu0 0.0
        %v5036 = vand.u32 %v777, 4294901760
        %5037 = vmatpush1.msra.mxu0 %v5036
        %5038 = vmatprep.subr.mxu0 0.0
        %v5039 = vand.u32 %v778, 4294901760
        %5040 = vmatpush1.msra.mxu0 %v5039
        %5041 = vmatprep.subr.mxu0 0.0
        %v5042 = vand.u32 %v779, 4294901760
        %5043 = vmatpush1.msra.mxu0 %v5042
        %5044 = vmatprep.subr.mxu0 0.0
        %v5045 = vand.u32 %v780, 4294901760
        %5046 = vmatpush1.msra.mxu0 %v5045
        %5047 = vmatprep.subr.mxu0 0.0
        %v5048 = vand.u32 %v781, 4294901760
        %5049 = vmatpush1.msra.mxu0 %v5048
        %5050 = vmatprep.subr.mxu0 0.0
        %v5051 = vand.u32 %v782, 4294901760
        %5052 = vmatpush1.msra.mxu0 %v5051
        %5053 = vmatprep.subr.mxu0 0.0
        %v5054 = vand.u32 %v783, 4294901760
        %5055 = vmatpush1.msra.mxu0 %v5054
        %5056 = vmatprep.subr.mxu0 0.0
        %v5057 = vand.u32 %v784, 4294901760
        %5058 = vmatpush1.msra.mxu0 %v5057
        %5059 = vmatprep.subr.mxu0 0.0
        %v5060 = vand.u32 %v785, 4294901760
        %5061 = vmatpush1.msra.mxu0 %v5060
        %5062 = vmatprep.subr.mxu0 0.0
        %v5063 = vand.u32 %v786, 4294901760
        %5064 = vmatpush1.msra.mxu0 %v5063
        %5065 = vmatprep.subr.mxu0 0.0
        %v5066 = vand.u32 %v787, 4294901760
        %5067 = vmatpush1.msra.mxu0 %v5066
        %5068 = vmatprep.subr.mxu0 0.0
        %v5069 = vand.u32 %v788, 4294901760
        %5070 = vmatpush1.msra.mxu0 %v5069
        %5071 = vmatprep.subr.mxu0 0.0
        %v5072 = vand.u32 %v789, 4294901760
        %5073 = vmatpush1.msra.mxu0 %v5072
        %5074 = vmatprep.subr.mxu0 0.0
        %v5075 = vand.u32 %v790, 4294901760
        %5076 = vmatpush1.msra.mxu0 %v5075
        %5077 = vmatprep.subr.mxu0 0.0
        %5078 = vmatpush1.msra.mxu0 0.0
        %5079 = vmatprep.subr.mxu0 0.0
        %5080 = vmatpush1.msra.mxu0 0.0
        %5081 = vmatprep.subr.mxu0 0.0
        %5082 = vmatpush1.msra.mxu0 0.0
        %5083 = vmatprep.subr.mxu0 0.0
        %5084 = vmatpush1.msra.mxu0 0.0
        %5085 = vmatprep.subr.mxu0 0.0
        %5086 = vmatpush1.msra.mxu0 0.0
        %5087 = vmatprep.subr.mxu0 0.0
        %5088 = vmatpush1.msra.mxu0 0.0
        %5089 = vmatprep.subr.mxu0 0.0
        %5090 = vmatpush1.msra.mxu0 0.0
        %5091 = vmatprep.subr.mxu0 0.0
        %5092 = vmatpush1.msra.mxu0 0.0
        %5093 = vmatprep.subr.mxu0 0.0
        %5094 = vmatpush1.msra.mxu0 0.0
        %5095 = vmatprep.subr.mxu0 0.0
        %5096 = vmatpush1.msra.mxu0 0.0
        %5097 = vmatprep.subr.mxu0 0.0
        %5098 = vmatpush1.msra.mxu0 0.0
        %5099 = vmatprep.subr.mxu0 0.0
        %5100 = vmatpush1.msra.mxu0 0.0
        %5101 = vmatprep.subr.mxu0 0.0
        %5102 = vmatpush1.msra.mxu0 0.0
        %5103 = vmatprep.subr.mxu0 0.0
        %5104 = vmatpush1.msra.mxu0 0.0
        %5105 = vmatprep.subr.mxu0 0.0
        %5106 = vmatpush1.msra.mxu0 0.0
        %5107 = vmatprep.subr.mxu0 0.0
        %5108 = vmatpush1.msra.mxu0 0.0
        %5109 = vmatprep.mubr.f32.mxu0 0.0
        %v5110 = vand.u32 %v4428, 4294901760
        %5111 = vmatmul.mubr.f32.gmra.mrb[0].mxu0 %v5110
        %v5112 = vpop.f32.mrb[0].mxu0
        %v5113 = vadd.f32 %v5020, %v5112
        %v5114 = vpop.f32.mrb[0].mxu0
        %5115 = vmatprep.mubr.f32.mxu0 0.0
        %v5116 = vand.u32 %v4435, 4294901760
        %5117 = vmatmul.mubr.f32.gmra.mrb[0].mxu0 %v5116
        %v5118 = vpop.f32.mrb[0].mxu0
        %v5119 = vadd.f32 %v5026, %v5118
        %v5120 = vpop.f32.mrb[0].mxu0
        %5121 = vdwg.mxu0
        %5122 = vadd.xlane.f32.xlu0 %v5113
        %v5123 = vpop.xlane.xlu0 %5122
        %5124 = vadd.xlane.f32.xlu0 %v5119
        %v5125 = vpop.xlane.xlu0 %5124
        %v5126 = vmul.f32 %v5123, 0.0078125
        %v5127 = vmul.f32 %v5125, 0.0078125
        %v5128 = vsub.f32 %v5113, %v5126
        %v5129 = vsub.f32 %v5119, %v5127
        %v5130 = vmul.f32 %v5128, %v5128
        %v5131 = vmul.f32 %v5129, %v5129
        %5132 = vadd.xlane.f32.xlu0 %v5130
        %v5133 = vpop.xlane.xlu0 %5132
        %5134 = vadd.xlane.f32.xlu0 %v5131
        %v5135 = vpop.xlane.xlu0 %5134
        %v5136 = vmul.f32 %v5133, 0.007936508
        %v5137 = vmul.f32 %v5135, 0.007936508
        %v5138 = vrsqrt.pop %v5136
        %v5139 = vmul.f32 %v5136, %v5138
        %vm5140 = vcmp.eq.f32.partialorder %v5136, inf
        %v5141 = vsel %vm5140, %v5136, %v5139
        %vm5142 = vcmp.eq.f32.partialorder %v5136, 0.0
        %v5143 = vand.u32 %v5136, 2147483648
        %v5144 = vsel %vm5142, %v5143, %v5141
        %v5145 = vrsqrt.pop %v5137
        %v5146 = vmul.f32 %v5137, %v5145
        %vm5147 = vcmp.eq.f32.partialorder %v5137, inf
        %v5148 = vsel %vm5147, %v5137, %v5146
        %vm5149 = vcmp.eq.f32.partialorder %v5137, 0.0
        %v5150 = vand.u32 %v5137, 2147483648
        %v5151 = vsel %vm5149, %v5150, %v5148
        %v5152 = vadd.f32 %v5144, 1e-05
        %v5153 = vadd.f32 %v5151, 1e-05
        %v5154 = vrcp.pop %v5152
        %v5155 = vrcp.pop %v5153
        %v5156 = vmul.f32 %v5128, %v5154
        %v5157 = vmul.f32 %v5129, %v5155
        %s5158 = scalar_lea.vmem %s679, 8 [#allocation2]
        %v5159 = vld [vmem:[%s5158] sm:$0xff]
        %5161 = vset.pattern.permute.xlu0 0
        %5162 = vperm.xlu0 %5161, %v5159
        %v5163 = vpop.permute.xlu0 %5162
        %v5165 = vmul.f32 %v5156, %v5163
        %v5166 = vmul.f32 %v5157, %v5163
        %s5167 = scalar_lea.vmem %s686, 8 [#allocation3]
        %v5168 = vld [vmem:[%s5167] sm:$0xff]
        %5170 = vset.pattern.permute.xlu0 0
        %5171 = vperm.xlu0 %5170, %v5168
        %v5172 = vpop.permute.xlu0 %5171
        %v5174 = vadd.f32 %v5165, %v5172
        %v5175 = vadd.f32 %v5166, %v5172
        %v5176 = vxor.u32 %v5174, 2147483648
        %v5177 = vxor.u32 %v5175, 2147483648
        %v5178 = vmul.f32 %v5176, 1.442695
        %v5179 = vpow.pop %v5178
        %v5180 = vmul.f32 %v5177, 1.442695
        %v5181 = vpow.pop %v5180
        %v5182 = vadd.f32 %v5179, 1.0
        %v5183 = vadd.f32 %v5181, 1.0
        %v5184 = vrcp.pop %v5182
        %v5185 = vmul.f32 1.0, %v5184
        %v5186 = vrcp.pop %v5183
        %v5187 = vmul.f32 1.0, %v5186
        %v5188 = vadd.f32 %v791, %v2992
        %v5189 = vadd.f32 %v792, %v2993
        %v5190 = vadd.f32 %v793, %v2994
        %v5191 = vadd.f32 %v794, %v2995
        %v5192 = vadd.f32 %v795, %v2996
        %v5193 = vadd.f32 %v796, %v2997
        %v5194 = vadd.f32 %v797, %v2998
        %v5195 = vadd.f32 %v798, %v2999
        %v5196 = vadd.f32 %v799, %v3000
        %v5197 = vadd.f32 %v800, %v3001
        %v5198 = vadd.f32 %v801, %v3002
        %v5199 = vadd.f32 %v802, %v3003
        %v5200 = vadd.f32 %v803, %v3004
        %v5201 = vadd.f32 %v804, %v3005
        %v5202 = vadd.f32 %v805, %v3006
        %v5203 = vadd.f32 %v806, %v3007
        %v5204 = vadd.f32 %v2989, %v5185
        %v5205 = vadd.f32 %v2991, %v5187
        %v5206 = vld [vmem:[%s707] sm:$0xff]
        %v5207 = vld [vmem:[%s707 + $0x8] sm:$0xff]
        %v5208 = vld [vmem:[%s707 + $0x10] sm:$0xff]
        %v5209 = vld [vmem:[%s707 + $0x18] sm:$0xff]
        %v5210 = vld [vmem:[%s707 + $0x20] sm:$0xff]
        %v5211 = vld [vmem:[%s707 + $0x28] sm:$0xff]
        %v5212 = vld [vmem:[%s707 + $0x30] sm:$0xff]
        %v5213 = vld [vmem:[%s707 + $0x38] sm:$0xff]
        %v5214 = vld [vmem:[%s707 + $0x40] sm:$0xff]
        %v5215 = vld [vmem:[%s707 + $0x48] sm:$0xff]
        %v5216 = vld [vmem:[%s707 + $0x50] sm:$0xff]
        %v5217 = vld [vmem:[%s707 + $0x58] sm:$0xff]
        %v5218 = vld [vmem:[%s707 + $0x60] sm:$0xff]
        %v5219 = vld [vmem:[%s707 + $0x68] sm:$0xff]
        %v5220 = vld [vmem:[%s707 + $0x70] sm:$0xff]
        %v5221 = vld [vmem:[%s707 + $0x78] sm:$0xff]
        %5222 = vmatprep.subr.mxu0 0.0
        %v5223 = vand.u32 %v759, 4294901760
        %5224 = vmatpush1.msra.mxu0 %v5223
        %5225 = vmatprep.subr.mxu0 0.0
        %v5226 = vand.u32 %v760, 4294901760
        %5227 = vmatpush1.msra.mxu0 %v5226
        %5228 = vmatprep.subr.mxu0 0.0
        %v5229 = vand.u32 %v761, 4294901760
        %5230 = vmatpush1.msra.mxu0 %v5229
        %5231 = vmatprep.subr.mxu0 0.0
        %v5232 = vand.u32 %v762, 4294901760
        %5233 = vmatpush1.msra.mxu0 %v5232
        %5234 = vmatprep.subr.mxu0 0.0
        %v5235 = vand.u32 %v763, 4294901760
        %5236 = vmatpush1.msra.mxu0 %v5235
        %5237 = vmatprep.subr.mxu0 0.0
        %v5238 = vand.u32 %v764, 4294901760
        %5239 = vmatpush1.msra.mxu0 %v5238
        %5240 = vmatprep.subr.mxu0 0.0
        %v5241 = vand.u32 %v765, 4294901760
        %5242 = vmatpush1.msra.mxu0 %v5241
        %5243 = vmatprep.subr.mxu0 0.0
        %v5244 = vand.u32 %v766, 4294901760
        %5245 = vmatpush1.msra.mxu0 %v5244
        %5246 = vmatprep.subr.mxu0 0.0
        %v5247 = vand.u32 %v767, 4294901760
        %5248 = vmatpush1.msra.mxu0 %v5247
        %5249 = vmatprep.subr.mxu0 0.0
        %v5250 = vand.u32 %v768, 4294901760
        %5251 = vmatpush1.msra.mxu0 %v5250
        %5252 = vmatprep.subr.mxu0 0.0
        %v5253 = vand.u32 %v769, 4294901760
        %5254 = vmatpush1.msra.mxu0 %v5253
        %5255 = vmatprep.subr.mxu0 0.0
        %v5256 = vand.u32 %v770, 4294901760
        %5257 = vmatpush1.msra.mxu0 %v5256
        %5258 = vmatprep.subr.mxu0 0.0
        %v5259 = vand.u32 %v771, 4294901760
        %5260 = vmatpush1.msra.mxu0 %v5259
        %5261 = vmatprep.subr.mxu0 0.0
        %v5262 = vand.u32 %v772, 4294901760
        %5263 = vmatpush1.msra.mxu0 %v5262
        %5264 = vmatprep.subr.mxu0 0.0
        %v5265 = vand.u32 %v773, 4294901760
        %5266 = vmatpush1.msra.mxu0 %v5265
        %5267 = vmatprep.subr.mxu0 0.0
        %v5268 = vand.u32 %v774, 4294901760
        %5269 = vmatpush1.msra.mxu0 %v5268
        %5270 = vmatprep.subr.mxu0 0.0
        %5271 = vmatpush1.msra.mxu0 0.0
        %5272 = vmatprep.subr.mxu0 0.0
        %5273 = vmatpush1.msra.mxu0 0.0
        %5274 = vmatprep.subr.mxu0 0.0
        %5275 = vmatpush1.msra.mxu0 0.0
        %5276 = vmatprep.subr.mxu0 0.0
        %5277 = vmatpush1.msra.mxu0 0.0
        %5278 = vmatprep.subr.mxu0 0.0
        %5279 = vmatpush1.msra.mxu0 0.0
        %5280 = vmatprep.subr.mxu0 0.0
        %5281 = vmatpush1.msra.mxu0 0.0
        %5282 = vmatprep.subr.mxu0 0.0
        %5283 = vmatpush1.msra.mxu0 0.0
        %5284 = vmatprep.subr.mxu0 0.0
        %5285 = vmatpush1.msra.mxu0 0.0
        %5286 = vmatprep.subr.mxu0 0.0
        %5287 = vmatpush1.msra.mxu0 0.0
        %5288 = vmatprep.subr.mxu0 0.0
        %5289 = vmatpush1.msra.mxu0 0.0
        %5290 = vmatprep.subr.mxu0 0.0
        %5291 = vmatpush1.msra.mxu0 0.0
        %5292 = vmatprep.subr.mxu0 0.0
        %5293 = vmatpush1.msra.mxu0 0.0
        %5294 = vmatprep.subr.mxu0 0.0
        %5295 = vmatpush1.msra.mxu0 0.0
        %5296 = vmatprep.subr.mxu0 0.0
        %5297 = vmatpush1.msra.mxu0 0.0
        %5298 = vmatprep.subr.mxu0 0.0
        %5299 = vmatpush1.msra.mxu0 0.0
        %5300 = vmatprep.subr.mxu0 0.0
        %5301 = vmatpush1.msra.mxu0 0.0
        %5302 = vmatprep.mubr.f32.mxu0 0.0
        %v5303 = vand.u32 %v5206, 4294901760
        %v5304 = vsub.f32 %v5206, %v5303
        %v5305 = vand.u32 %v5304, 4294901760
        %v5306 = vsub.f32 %v5304, %v5305
        %v5307 = vand.u32 %v5306, 4294901760
        %5308 = vmatmul.mubr.f32.gmra.mrb[0].mxu0 %v5307
        %v5309 = vpop.f32.mrb[0].mxu0
        %v5310 = vadd.f32 0.0, %v5309
        %v5311 = vpop.f32.mrb[0].mxu0
        %5312 = vmatprep.mubr.f32.mxu0 0.0
        %v5313 = vand.u32 %v5207, 4294901760
        %v5314 = vsub.f32 %v5207, %v5313
        %v5315 = vand.u32 %v5314, 4294901760
        %v5316 = vsub.f32 %v5314, %v5315
        %v5317 = vand.u32 %v5316, 4294901760
        %5318 = vmatmul.mubr.f32.gmra.mrb[0].mxu0 %v5317
        %v5319 = vpop.f32.mrb[0].mxu0
        %v5320 = vadd.f32 0.0, %v5319
        %v5321 = vpop.f32.mrb[0].mxu0
        %5322 = vmatprep.mubr.f32.mxu0 0.0
        %v5323 = vand.u32 %v5208, 4294901760
        %v5324 = vsub.f32 %v5208, %v5323
        %v5325 = vand.u32 %v5324, 4294901760
        %v5326 = vsub.f32 %v5324, %v5325
        %v5327 = vand.u32 %v5326, 4294901760
        %5328 = vmatmul.mubr.f32.gmra.mrb[0].mxu0 %v5327
        %v5329 = vpop.f32.mrb[0].mxu0
        %v5330 = vadd.f32 0.0, %v5329
        %v5331 = vpop.f32.mrb[0].mxu0
        %5332 = vmatprep.mubr.f32.mxu0 0.0
        %v5333 = vand.u32 %v5209, 4294901760
        %v5334 = vsub.f32 %v5209, %v5333
        %v5335 = vand.u32 %v5334, 4294901760
        %v5336 = vsub.f32 %v5334, %v5335
        %v5337 = vand.u32 %v5336, 4294901760
        %5338 = vmatmul.mubr.f32.gmra.mrb[0].mxu0 %v5337
        %v5339 = vpop.f32.mrb[0].mxu0
        %v5340 = vadd.f32 0.0, %v5339
        %v5341 = vpop.f32.mrb[0].mxu0
        %5342 = vmatprep.mubr.f32.mxu0 0.0
        %v5343 = vand.u32 %v5210, 4294901760
        %v5344 = vsub.f32 %v5210, %v5343
        %v5345 = vand.u32 %v5344, 4294901760
        %v5346 = vsub.f32 %v5344, %v5345
        %v5347 = vand.u32 %v5346, 4294901760
        %5348 = vmatmul.mubr.f32.gmra.mrb[0].mxu0 %v5347
        %v5349 = vpop.f32.mrb[0].mxu0
        %v5350 = vadd.f32 0.0, %v5349
        %v5351 = vpop.f32.mrb[0].mxu0
        %5352 = vmatprep.mubr.f32.mxu0 0.0
        %v5353 = vand.u32 %v5211, 4294901760
        %v5354 = vsub.f32 %v5211, %v5353
        %v5355 = vand.u32 %v5354, 4294901760
        %v5356 = vsub.f32 %v5354, %v5355
        %v5357 = vand.u32 %v5356, 4294901760
        %5358 = vmatmul.mubr.f32.gmra.mrb[0].mxu0 %v5357
        %v5359 = vpop.f32.mrb[0].mxu0
        %v5360 = vadd.f32 0.0, %v5359
        %v5361 = vpop.f32.mrb[0].mxu0
        %5362 = vmatprep.mubr.f32.mxu0 0.0
        %v5363 = vand.u32 %v5212, 4294901760
        %v5364 = vsub.f32 %v5212, %v5363
        %v5365 = vand.u32 %v5364, 4294901760
        %v5366 = vsub.f32 %v5364, %v5365
        %v5367 = vand.u32 %v5366, 4294901760
        %5368 = vmatmul.mubr.f32.gmra.mrb[0].mxu0 %v5367
        %v5369 = vpop.f32.mrb[0].mxu0
        %v5370 = vadd.f32 0.0, %v5369
        %v5371 = vpop.f32.mrb[0].mxu0
        %5372 = vmatprep.mubr.f32.mxu0 0.0
        %v5373 = vand.u32 %v5213, 4294901760
        %v5374 = vsub.f32 %v5213, %v5373
        %v5375 = vand.u32 %v5374, 4294901760
        %v5376 = vsub.f32 %v5374, %v5375
        %v5377 = vand.u32 %v5376, 4294901760
        %5378 = vmatmul.mubr.f32.gmra.mrb[0].mxu0 %v5377
        %v5379 = vpop.f32.mrb[0].mxu0
        %v5380 = vadd.f32 0.0, %v5379
        %v5381 = vpop.f32.mrb[0].mxu0
        %5382 = vmatprep.mubr.f32.mxu0 0.0
        %v5383 = vand.u32 %v5214, 4294901760
        %v5384 = vsub.f32 %v5214, %v5383
        %v5385 = vand.u32 %v5384, 4294901760
        %v5386 = vsub.f32 %v5384, %v5385
        %v5387 = vand.u32 %v5386, 4294901760
        %5388 = vmatmul.mubr.f32.gmra.mrb[0].mxu0 %v5387
        %v5389 = vpop.f32.mrb[0].mxu0
        %v5390 = vadd.f32 0.0, %v5389
        %v5391 = vpop.f32.mrb[0].mxu0
        %5392 = vmatprep.mubr.f32.mxu0 0.0
        %v5393 = vand.u32 %v5215, 4294901760
        %v5394 = vsub.f32 %v5215, %v5393
        %v5395 = vand.u32 %v5394, 4294901760
        %v5396 = vsub.f32 %v5394, %v5395
        %v5397 = vand.u32 %v5396, 4294901760
        %5398 = vmatmul.mubr.f32.gmra.mrb[0].mxu0 %v5397
        %v5399 = vpop.f32.mrb[0].mxu0
        %v5400 = vadd.f32 0.0, %v5399
        %v5401 = vpop.f32.mrb[0].mxu0
        %5402 = vmatprep.mubr.f32.mxu0 0.0
        %v5403 = vand.u32 %v5216, 4294901760
        %v5404 = vsub.f32 %v5216, %v5403
        %v5405 = vand.u32 %v5404, 4294901760
        %v5406 = vsub.f32 %v5404, %v5405
        %v5407 = vand.u32 %v5406, 4294901760
        %5408 = vmatmul.mubr.f32.gmra.mrb[0].mxu0 %v5407
        %v5409 = vpop.f32.mrb[0].mxu0
        %v5410 = vadd.f32 0.0, %v5409
        %v5411 = vpop.f32.mrb[0].mxu0
        %5412 = vmatprep.mubr.f32.mxu0 0.0
        %v5413 = vand.u32 %v5217, 4294901760
        %v5414 = vsub.f32 %v5217, %v5413
        %v5415 = vand.u32 %v5414, 4294901760
        %v5416 = vsub.f32 %v5414, %v5415
        %v5417 = vand.u32 %v5416, 4294901760
        %5418 = vmatmul.mubr.f32.gmra.mrb[0].mxu0 %v5417
        %v5419 = vpop.f32.mrb[0].mxu0
        %v5420 = vadd.f32 0.0, %v5419
        %v5421 = vpop.f32.mrb[0].mxu0
        %5422 = vmatprep.mubr.f32.mxu0 0.0
        %v5423 = vand.u32 %v5218, 4294901760
        %v5424 = vsub.f32 %v5218, %v5423
        %v5425 = vand.u32 %v5424, 4294901760
        %v5426 = vsub.f32 %v5424, %v5425
        %v5427 = vand.u32 %v5426, 4294901760
        %5428 = vmatmul.mubr.f32.gmra.mrb[0].mxu0 %v5427
        %v5429 = vpop.f32.mrb[0].mxu0
        %v5430 = vadd.f32 0.0, %v5429
        %v5431 = vpop.f32.mrb[0].mxu0
        %5432 = vmatprep.mubr.f32.mxu0 0.0
        %v5433 = vand.u32 %v5219, 4294901760
        %v5434 = vsub.f32 %v5219, %v5433
        %v5435 = vand.u32 %v5434, 4294901760
        %v5436 = vsub.f32 %v5434, %v5435
        %v5437 = vand.u32 %v5436, 4294901760
        %5438 = vmatmul.mubr.f32.gmra.mrb[0].mxu0 %v5437
        %v5439 = vpop.f32.mrb[0].mxu0
        %v5440 = vadd.f32 0.0, %v5439
        %v5441 = vpop.f32.mrb[0].mxu0
        %5442 = vmatprep.mubr.f32.mxu0 0.0
        %v5443 = vand.u32 %v5220, 4294901760
        %v5444 = vsub.f32 %v5220, %v5443
        %v5445 = vand.u32 %v5444, 4294901760
        %v5446 = vsub.f32 %v5444, %v5445
        %v5447 = vand.u32 %v5446, 4294901760
        %5448 = vmatmul.mubr.f32.gmra.mrb[0].mxu0 %v5447
        %v5449 = vpop.f32.mrb[0].mxu0
        %v5450 = vadd.f32 0.0, %v5449
        %v5451 = vpop.f32.mrb[0].mxu0
        %5452 = vmatprep.mubr.f32.mxu0 0.0
        %v5453 = vand.u32 %v5221, 4294901760
        %v5454 = vsub.f32 %v5221, %v5453
        %v5455 = vand.u32 %v5454, 4294901760
        %v5456 = vsub.f32 %v5454, %v5455
        %v5457 = vand.u32 %v5456, 4294901760
        %5458 = vmatmul.mubr.f32.gmra.mrb[0].mxu0 %v5457
        %v5459 = vpop.f32.mrb[0].mxu0
        %v5460 = vadd.f32 0.0, %v5459
        %v5461 = vpop.f32.mrb[0].mxu0
        %5462 = vdwg.mxu0
        %5463 = vmatprep.subr.mxu0 0.0
        %v5464 = vand.u32 %v759, 4294901760
        %v5465 = vsub.f32 %v759, %v5464
        %v5466 = vand.u32 %v5465, 4294901760
        %v5467 = vsub.f32 %v5465, %v5466
        %v5468 = vand.u32 %v5467, 4294901760
        %5469 = vmatpush1.msra.mxu0 %v5468
        %5470 = vmatprep.subr.mxu0 0.0
        %v5471 = vand.u32 %v760, 4294901760
        %v5472 = vsub.f32 %v760, %v5471
        %v5473 = vand.u32 %v5472, 4294901760
        %v5474 = vsub.f32 %v5472, %v5473
        %v5475 = vand.u32 %v5474, 4294901760
        %5476 = vmatpush1.msra.mxu0 %v5475
        %5477 = vmatprep.subr.mxu0 0.0
        %v5478 = vand.u32 %v761, 4294901760
        %v5479 = vsub.f32 %v761, %v5478
        %v5480 = vand.u32 %v5479, 4294901760
        %v5481 = vsub.f32 %v5479, %v5480
        %v5482 = vand.u32 %v5481, 4294901760
        %5483 = vmatpush1.msra.mxu0 %v5482
        %5484 = vmatprep.subr.mxu0 0.0
        %v5485 = vand.u32 %v762, 4294901760
        %v5486 = vsub.f32 %v762, %v5485
        %v5487 = vand.u32 %v5486, 4294901760
        %v5488 = vsub.f32 %v5486, %v5487
        %v5489 = vand.u32 %v5488, 4294901760
        %5490 = vmatpush1.msra.mxu0 %v5489
        %5491 = vmatprep.subr.mxu0 0.0
        %v5492 = vand.u32 %v763, 4294901760
        %v5493 = vsub.f32 %v763, %v5492
        %v5494 = vand.u32 %v5493, 4294901760
        %v5495 = vsub.f32 %v5493, %v5494
        %v5496 = vand.u32 %v5495, 4294901760
        %5497 = vmatpush1.msra.mxu0 %v5496
        %5498 = vmatprep.subr.mxu0 0.0
        %v5499 = vand.u32 %v764, 4294901760
        %v5500 = vsub.f32 %v764, %v5499
        %v5501 = vand.u32 %v5500, 4294901760
        %v5502 = vsub.f32 %v5500, %v5501
        %v5503 = vand.u32 %v5502, 4294901760
        %5504 = vmatpush1.msra.mxu0 %v5503
        %5505 = vmatprep.subr.mxu0 0.0
        %v5506 = vand.u32 %v765, 4294901760
        %v5507 = vsub.f32 %v765, %v5506
        %v5508 = vand.u32 %v5507, 4294901760
        %v5509 = vsub.f32 %v5507, %v5508
        %v5510 = vand.u32 %v5509, 4294901760
        %5511 = vmatpush1.msra.mxu0 %v5510
        %5512 = vmatprep.subr.mxu0 0.0
        %v5513 = vand.u32 %v766, 4294901760
        %v5514 = vsub.f32 %v766, %v5513
        %v5515 = vand.u32 %v5514, 4294901760
        %v5516 = vsub.f32 %v5514, %v5515
        %v5517 = vand.u32 %v5516, 4294901760
        %5518 = vmatpush1.msra.mxu0 %v5517
        %5519 = vmatprep.subr.mxu0 0.0
        %v5520 = vand.u32 %v767, 4294901760
        %v5521 = vsub.f32 %v767, %v5520
        %v5522 = vand.u32 %v5521, 4294901760
        %v5523 = vsub.f32 %v5521, %v5522
        %v5524 = vand.u32 %v5523, 4294901760
        %5525 = vmatpush1.msra.mxu0 %v5524
        %5526 = vmatprep.subr.mxu0 0.0
        %v5527 = vand.u32 %v768, 4294901760
        %v5528 = vsub.f32 %v768, %v5527
        %v5529 = vand.u32 %v5528, 4294901760
        %v5530 = vsub.f32 %v5528, %v5529
        %v5531 = vand.u32 %v5530, 4294901760
        %5532 = vmatpush1.msra.mxu0 %v5531
        %5533 = vmatprep.subr.mxu0 0.0
        %v5534 = vand.u32 %v769, 4294901760
        %v5535 = vsub.f32 %v769, %v5534
        %v5536 = vand.u32 %v5535, 4294901760
        %v5537 = vsub.f32 %v5535, %v5536
        %v5538 = vand.u32 %v5537, 4294901760
        %5539 = vmatpush1.msra.mxu0 %v5538
        %5540 = vmatprep.subr.mxu0 0.0
        %v5541 = vand.u32 %v770, 4294901760
        %v5542 = vsub.f32 %v770, %v5541
        %v5543 = vand.u32 %v5542, 4294901760
        %v5544 = vsub.f32 %v5542, %v5543
        %v5545 = vand.u32 %v5544, 4294901760
        %5546 = vmatpush1.msra.mxu0 %v5545
        %5547 = vmatprep.subr.mxu0 0.0
        %v5548 = vand.u32 %v771, 4294901760
        %v5549 = vsub.f32 %v771, %v5548
        %v5550 = vand.u32 %v5549, 4294901760
        %v5551 = vsub.f32 %v5549, %v5550
        %v5552 = vand.u32 %v5551, 4294901760
        %5553 = vmatpush1.msra.mxu0 %v5552
        %5554 = vmatprep.subr.mxu0 0.0
        %v5555 = vand.u32 %v772, 4294901760
        %v5556 = vsub.f32 %v772, %v5555
        %v5557 = vand.u32 %v5556, 4294901760
        %v5558 = vsub.f32 %v5556, %v5557
        %v5559 = vand.u32 %v5558, 4294901760
        %5560 = vmatpush1.msra.mxu0 %v5559
        %5561 = vmatprep.subr.mxu0 0.0
        %v5562 = vand.u32 %v773, 4294901760
        %v5563 = vsub.f32 %v773, %v5562
        %v5564 = vand.u32 %v5563, 4294901760
        %v5565 = vsub.f32 %v5563, %v5564
        %v5566 = vand.u32 %v5565, 4294901760
        %5567 = vmatpush1.msra.mxu0 %v5566
        %5568 = vmatprep.subr.mxu0 0.0
        %v5569 = vand.u32 %v774, 4294901760
        %v5570 = vsub.f32 %v774, %v5569
        %v5571 = vand.u32 %v5570, 4294901760
        %v5572 = vsub.f32 %v5570, %v5571
        %v5573 = vand.u32 %v5572, 4294901760
        %5574 = vmatpush1.msra.mxu0 %v5573
        %5575 = vmatprep.subr.mxu0 0.0
        %5576 = vmatpush1.msra.mxu0 0.0
        %5577 = vmatprep.subr.mxu0 0.0
        %5578 = vmatpush1.msra.mxu0 0.0
        %5579 = vmatprep.subr.mxu0 0.0
        %5580 = vmatpush1.msra.mxu0 0.0
        %5581 = vmatprep.subr.mxu0 0.0
        %5582 = vmatpush1.msra.mxu0 0.0
        %5583 = vmatprep.subr.mxu0 0.0
        %5584 = vmatpush1.msra.mxu0 0.0
        %5585 = vmatprep.subr.mxu0 0.0
        %5586 = vmatpush1.msra.mxu0 0.0
        %5587 = vmatprep.subr.mxu0 0.0
        %5588 = vmatpush1.msra.mxu0 0.0
        %5589 = vmatprep.subr.mxu0 0.0
        %5590 = vmatpush1.msra.mxu0 0.0
        %5591 = vmatprep.subr.mxu0 0.0
        %5592 = vmatpush1.msra.mxu0 0.0
        %5593 = vmatprep.subr.mxu0 0.0
        %5594 = vmatpush1.msra.mxu0 0.0
        %5595 = vmatprep.subr.mxu0 0.0
        %5596 = vmatpush1.msra.mxu0 0.0
        %5597 = vmatprep.subr.mxu0 0.0
        %5598 = vmatpush1.msra.mxu0 0.0
        %5599 = vmatprep.subr.mxu0 0.0
        %5600 = vmatpush1.msra.mxu0 0.0
        %5601 = vmatprep.subr.mxu0 0.0
        %5602 = vmatpush1.msra.mxu0 0.0
        %5603 = vmatprep.subr.mxu0 0.0
        %5604 = vmatpush1.msra.mxu0 0.0
        %5605 = vmatprep.subr.mxu0 0.0
        %5606 = vmatpush1.msra.mxu0 0.0
        %5607 = vmatprep.mubr.f32.mxu0 0.0
        %v5608 = vand.u32 %v5206, 4294901760
        %5609 = vmatmul.mubr.f32.gmra.mrb[0].mxu0 %v5608
        %v5610 = vpop.f32.mrb[0].mxu0
        %v5611 = vadd.f32 %v5310, %v5610
        %v5612 = vpop.f32.mrb[0].mxu0
        %5613 = vmatprep.mubr.f32.mxu0 0.0
        %v5614 = vand.u32 %v5207, 4294901760
        %5615 = vmatmul.mubr.f32.gmra.mrb[0].mxu0 %v5614
        %v5616 = vpop.f32.mrb[0].mxu0
        %v5617 = vadd.f32 %v5320, %v5616
        %v5618 = vpop.f32.mrb[0].mxu0
        %5619 = vmatprep.mubr.f32.mxu0 0.0
        %v5620 = vand.u32 %v5208, 4294901760
        %5621 = vmatmul.mubr.f32.gmra.mrb[0].mxu0 %v5620
        %v5622 = vpop.f32.mrb[0].mxu0
        %v5623 = vadd.f32 %v5330, %v5622
        %v5624 = vpop.f32.mrb[0].mxu0
        %5625 = vmatprep.mubr.f32.mxu0 0.0
        %v5626 = vand.u32 %v5209, 4294901760
        %5627 = vmatmul.mubr.f32.gmra.mrb[0].mxu0 %v5626
        %v5628 = vpop.f32.mrb[0].mxu0
        %v5629 = vadd.f32 %v5340, %v5628
        %v5630 = vpop.f32.mrb[0].mxu0
        %5631 = vmatprep.mubr.f32.mxu0 0.0
        %v5632 = vand.u32 %v5210, 4294901760
        %5633 = vmatmul.mubr.f32.gmra.mrb[0].mxu0 %v5632
        %v5634 = vpop.f32.mrb[0].mxu0
        %v5635 = vadd.f32 %v5350, %v5634
        %v5636 = vpop.f32.mrb[0].mxu0
        %5637 = vmatprep.mubr.f32.mxu0 0.0
        %v5638 = vand.u32 %v5211, 4294901760
        %5639 = vmatmul.mubr.f32.gmra.mrb[0].mxu0 %v5638
        %v5640 = vpop.f32.mrb[0].mxu0
        %v5641 = vadd.f32 %v5360, %v5640
        %v5642 = vpop.f32.mrb[0].mxu0
        %5643 = vmatprep.mubr.f32.mxu0 0.0
        %v5644 = vand.u32 %v5212, 4294901760
        %5645 = vmatmul.mubr.f32.gmra.mrb[0].mxu0 %v5644
        %v5646 = vpop.f32.mrb[0].mxu0
        %v5647 = vadd.f32 %v5370, %v5646
        %v5648 = vpop.f32.mrb[0].mxu0
        %5649 = vmatprep.mubr.f32.mxu0 0.0
        %v5650 = vand.u32 %v5213, 4294901760
        %5651 = vmatmul.mubr.f32.gmra.mrb[0].mxu0 %v5650
        %v5652 = vpop.f32.mrb[0].mxu0
        %v5653 = vadd.f32 %v5380, %v5652
        %v5654 = vpop.f32.mrb[0].mxu0
        %5655 = vmatprep.mubr.f32.mxu0 0.0
        %v5656 = vand.u32 %v5214, 4294901760
        %5657 = vmatmul.mubr.f32.gmra.mrb[0].mxu0 %v5656
        %v5658 = vpop.f32.mrb[0].mxu0
        %v5659 = vadd.f32 %v5390, %v5658
        %v5660 = vpop.f32.mrb[0].mxu0
        %5661 = vmatprep.mubr.f32.mxu0 0.0
        %v5662 = vand.u32 %v5215, 4294901760
        %5663 = vmatmul.mubr.f32.gmra.mrb[0].mxu0 %v5662
        %v5664 = vpop.f32.mrb[0].mxu0
        %v5665 = vadd.f32 %v5400, %v5664
        %v5666 = vpop.f32.mrb[0].mxu0
        %5667 = vmatprep.mubr.f32.mxu0 0.0
        %v5668 = vand.u32 %v5216, 4294901760
        %5669 = vmatmul.mubr.f32.gmra.mrb[0].mxu0 %v5668
        %v5670 = vpop.f32.mrb[0].mxu0
        %v5671 = vadd.f32 %v5410, %v5670
        %v5672 = vpop.f32.mrb[0].mxu0
        %5673 = vmatprep.mubr.f32.mxu0 0.0
        %v5674 = vand.u32 %v5217, 4294901760
        %5675 = vmatmul.mubr.f32.gmra.mrb[0].mxu0 %v5674
        %v5676 = vpop.f32.mrb[0].mxu0
        %v5677 = vadd.f32 %v5420, %v5676
        %v5678 = vpop.f32.mrb[0].mxu0
        %5679 = vmatprep.mubr.f32.mxu0 0.0
        %v5680 = vand.u32 %v5218, 4294901760
        %5681 = vmatmul.mubr.f32.gmra.mrb[0].mxu0 %v5680
        %v5682 = vpop.f32.mrb[0].mxu0
        %v5683 = vadd.f32 %v5430, %v5682
        %v5684 = vpop.f32.mrb[0].mxu0
        %5685 = vmatprep.mubr.f32.mxu0 0.0
        %v5686 = vand.u32 %v5219, 4294901760
        %5687 = vmatmul.mubr.f32.gmra.mrb[0].mxu0 %v5686
        %v5688 = vpop.f32.mrb[0].mxu0
        %v5689 = vadd.f32 %v5440, %v5688
        %v5690 = vpop.f32.mrb[0].mxu0
        %5691 = vmatprep.mubr.f32.mxu0 0.0
        %v5692 = vand.u32 %v5220, 4294901760
        %5693 = vmatmul.mubr.f32.gmra.mrb[0].mxu0 %v5692
        %v5694 = vpop.f32.mrb[0].mxu0
        %v5695 = vadd.f32 %v5450, %v5694
        %v5696 = vpop.f32.mrb[0].mxu0
        %5697 = vmatprep.mubr.f32.mxu0 0.0
        %v5698 = vand.u32 %v5221, 4294901760
        %5699 = vmatmul.mubr.f32.gmra.mrb[0].mxu0 %v5698
        %v5700 = vpop.f32.mrb[0].mxu0
        %v5701 = vadd.f32 %v5460, %v5700
        %v5702 = vpop.f32.mrb[0].mxu0
        %5703 = vdwg.mxu0
        %5704 = vmatprep.subr.mxu0 0.0
        %v5705 = vand.u32 %v759, 4294901760
        %v5706 = vsub.f32 %v759, %v5705
        %5707 = vmatpush1.msra.mxu0 %v5706
        %5708 = vmatprep.subr.mxu0 0.0
        %v5709 = vand.u32 %v760, 4294901760
        %v5710 = vsub.f32 %v760, %v5709
        %5711 = vmatpush1.msra.mxu0 %v5710
        %5712 = vmatprep.subr.mxu0 0.0
        %v5713 = vand.u32 %v761, 4294901760
        %v5714 = vsub.f32 %v761, %v5713
        %5715 = vmatpush1.msra.mxu0 %v5714
        %5716 = vmatprep.subr.mxu0 0.0
        %v5717 = vand.u32 %v762, 4294901760
        %v5718 = vsub.f32 %v762, %v5717
        %5719 = vmatpush1.msra.mxu0 %v5718
        %5720 = vmatprep.subr.mxu0 0.0
        %v5721 = vand.u32 %v763, 4294901760
        %v5722 = vsub.f32 %v763, %v5721
        %5723 = vmatpush1.msra.mxu0 %v5722
        %5724 = vmatprep.subr.mxu0 0.0
        %v5725 = vand.u32 %v764, 4294901760
        %v5726 = vsub.f32 %v764, %v5725
        %5727 = vmatpush1.msra.mxu0 %v5726
        %5728 = vmatprep.subr.mxu0 0.0
        %v5729 = vand.u32 %v765, 4294901760
        %v5730 = vsub.f32 %v765, %v5729
        %5731 = vmatpush1.msra.mxu0 %v5730
        %5732 = vmatprep.subr.mxu0 0.0
        %v5733 = vand.u32 %v766, 4294901760
        %v5734 = vsub.f32 %v766, %v5733
        %5735 = vmatpush1.msra.mxu0 %v5734
        %5736 = vmatprep.subr.mxu0 0.0
        %v5737 = vand.u32 %v767, 4294901760
        %v5738 = vsub.f32 %v767, %v5737
        %5739 = vmatpush1.msra.mxu0 %v5738
        %5740 = vmatprep.subr.mxu0 0.0
        %v5741 = vand.u32 %v768, 4294901760
        %v5742 = vsub.f32 %v768, %v5741
        %5743 = vmatpush1.msra.mxu0 %v5742
        %5744 = vmatprep.subr.mxu0 0.0
        %v5745 = vand.u32 %v769, 4294901760
        %v5746 = vsub.f32 %v769, %v5745
        %5747 = vmatpush1.msra.mxu0 %v5746
        %5748 = vmatprep.subr.mxu0 0.0
        %v5749 = vand.u32 %v770, 4294901760
        %v5750 = vsub.f32 %v770, %v5749
        %5751 = vmatpush1.msra.mxu0 %v5750
        %5752 = vmatprep.subr.mxu0 0.0
        %v5753 = vand.u32 %v771, 4294901760
        %v5754 = vsub.f32 %v771, %v5753
        %5755 = vmatpush1.msra.mxu0 %v5754
        %5756 = vmatprep.subr.mxu0 0.0
        %v5757 = vand.u32 %v772, 4294901760
        %v5758 = vsub.f32 %v772, %v5757
        %5759 = vmatpush1.msra.mxu0 %v5758
        %5760 = vmatprep.subr.mxu0 0.0
        %v5761 = vand.u32 %v773, 4294901760
        %v5762 = vsub.f32 %v773, %v5761
        %5763 = vmatpush1.msra.mxu0 %v5762
        %5764 = vmatprep.subr.mxu0 0.0
        %v5765 = vand.u32 %v774, 4294901760
        %v5766 = vsub.f32 %v774, %v5765
        %5767 = vmatpush1.msra.mxu0 %v5766
        %5768 = vmatprep.subr.mxu0 0.0
        %5769 = vmatpush1.msra.mxu0 0.0
        %5770 = vmatprep.subr.mxu0 0.0
        %5771 = vmatpush1.msra.mxu0 0.0
        %5772 = vmatprep.subr.mxu0 0.0
        %5773 = vmatpush1.msra.mxu0 0.0
        %5774 = vmatprep.subr.mxu0 0.0
        %5775 = vmatpush1.msra.mxu0 0.0
        %5776 = vmatprep.subr.mxu0 0.0
        %5777 = vmatpush1.msra.mxu0 0.0
        %5778 = vmatprep.subr.mxu0 0.0
        %5779 = vmatpush1.msra.mxu0 0.0
        %5780 = vmatprep.subr.mxu0 0.0
        %5781 = vmatpush1.msra.mxu0 0.0
        %5782 = vmatprep.subr.mxu0 0.0
        %5783 = vmatpush1.msra.mxu0 0.0
        %5784 = vmatprep.subr.mxu0 0.0
        %5785 = vmatpush1.msra.mxu0 0.0
        %5786 = vmatprep.subr.mxu0 0.0
        %5787 = vmatpush1.msra.mxu0 0.0
        %5788 = vmatprep.subr.mxu0 0.0
        %5789 = vmatpush1.msra.mxu0 0.0
        %5790 = vmatprep.subr.mxu0 0.0
        %5791 = vmatpush1.msra.mxu0 0.0
        %5792 = vmatprep.subr.mxu0 0.0
        %5793 = vmatpush1.msra.mxu0 0.0
        %5794 = vmatprep.subr.mxu0 0.0
        %5795 = vmatpush1.msra.mxu0 0.0
        %5796 = vmatprep.subr.mxu0 0.0
        %5797 = vmatpush1.msra.mxu0 0.0
        %5798 = vmatprep.subr.mxu0 0.0
        %5799 = vmatpush1.msra.mxu0 0.0
        %5800 = vmatprep.mubr.f32.mxu0 0.0
        %v5801 = vand.u32 %v5206, 4294901760
        %v5802 = vsub.f32 %v5206, %v5801
        %5803 = vmatmul.mubr.f32.gmra.mrb[0].mxu0 %v5802
        %v5804 = vpop.f32.mrb[0].mxu0
        %v5805 = vadd.f32 %v5611, %v5804
        %v5806 = vpop.f32.mrb[0].mxu0
        %5807 = vmatprep.mubr.f32.mxu0 0.0
        %v5808 = vand.u32 %v5207, 4294901760
        %v5809 = vsub.f32 %v5207, %v5808
        %5810 = vmatmul.mubr.f32.gmra.mrb[0].mxu0 %v5809
        %v5811 = vpop.f32.mrb[0].mxu0
        %v5812 = vadd.f32 %v5617, %v5811
        %v5813 = vpop.f32.mrb[0].mxu0
        %5814 = vmatprep.mubr.f32.mxu0 0.0
        %v5815 = vand.u32 %v5208, 4294901760
        %v5816 = vsub.f32 %v5208, %v5815
        %5817 = vmatmul.mubr.f32.gmra.mrb[0].mxu0 %v5816
        %v5818 = vpop.f32.mrb[0].mxu0
        %v5819 = vadd.f32 %v5623, %v5818
        %v5820 = vpop.f32.mrb[0].mxu0
        %5821 = vmatprep.mubr.f32.mxu0 0.0
        %v5822 = vand.u32 %v5209, 4294901760
        %v5823 = vsub.f32 %v5209, %v5822
        %5824 = vmatmul.mubr.f32.gmra.mrb[0].mxu0 %v5823
        %v5825 = vpop.f32.mrb[0].mxu0
        %v5826 = vadd.f32 %v5629, %v5825
        %v5827 = vpop.f32.mrb[0].mxu0
        %5828 = vmatprep.mubr.f32.mxu0 0.0
        %v5829 = vand.u32 %v5210, 4294901760
        %v5830 = vsub.f32 %v5210, %v5829
        %5831 = vmatmul.mubr.f32.gmra.mrb[0].mxu0 %v5830
        %v5832 = vpop.f32.mrb[0].mxu0
        %v5833 = vadd.f32 %v5635, %v5832
        %v5834 = vpop.f32.mrb[0].mxu0
        %5835 = vmatprep.mubr.f32.mxu0 0.0
        %v5836 = vand.u32 %v5211, 4294901760
        %v5837 = vsub.f32 %v5211, %v5836
        %5838 = vmatmul.mubr.f32.gmra.mrb[0].mxu0 %v5837
        %v5839 = vpop.f32.mrb[0].mxu0
        %v5840 = vadd.f32 %v5641, %v5839
        %v5841 = vpop.f32.mrb[0].mxu0
        %5842 = vmatprep.mubr.f32.mxu0 0.0
        %v5843 = vand.u32 %v5212, 4294901760
        %v5844 = vsub.f32 %v5212, %v5843
        %5845 = vmatmul.mubr.f32.gmra.mrb[0].mxu0 %v5844
        %v5846 = vpop.f32.mrb[0].mxu0
        %v5847 = vadd.f32 %v5647, %v5846
        %v5848 = vpop.f32.mrb[0].mxu0
        %5849 = vmatprep.mubr.f32.mxu0 0.0
        %v5850 = vand.u32 %v5213, 4294901760
        %v5851 = vsub.f32 %v5213, %v5850
        %5852 = vmatmul.mubr.f32.gmra.mrb[0].mxu0 %v5851
        %v5853 = vpop.f32.mrb[0].mxu0
        %v5854 = vadd.f32 %v5653, %v5853
        %v5855 = vpop.f32.mrb[0].mxu0
        %5856 = vmatprep.mubr.f32.mxu0 0.0
        %v5857 = vand.u32 %v5214, 4294901760
        %v5858 = vsub.f32 %v5214, %v5857
        %5859 = vmatmul.mubr.f32.gmra.mrb[0].mxu0 %v5858
        %v5860 = vpop.f32.mrb[0].mxu0
        %v5861 = vadd.f32 %v5659, %v5860
        %v5862 = vpop.f32.mrb[0].mxu0
        %5863 = vmatprep.mubr.f32.mxu0 0.0
        %v5864 = vand.u32 %v5215, 4294901760
        %v5865 = vsub.f32 %v5215, %v5864
        %5866 = vmatmul.mubr.f32.gmra.mrb[0].mxu0 %v5865
        %v5867 = vpop.f32.mrb[0].mxu0
        %v5868 = vadd.f32 %v5665, %v5867
        %v5869 = vpop.f32.mrb[0].mxu0
        %5870 = vmatprep.mubr.f32.mxu0 0.0
        %v5871 = vand.u32 %v5216, 4294901760
        %v5872 = vsub.f32 %v5216, %v5871
        %5873 = vmatmul.mubr.f32.gmra.mrb[0].mxu0 %v5872
        %v5874 = vpop.f32.mrb[0].mxu0
        %v5875 = vadd.f32 %v5671, %v5874
        %v5876 = vpop.f32.mrb[0].mxu0
        %5877 = vmatprep.mubr.f32.mxu0 0.0
        %v5878 = vand.u32 %v5217, 4294901760
        %v5879 = vsub.f32 %v5217, %v5878
        %5880 = vmatmul.mubr.f32.gmra.mrb[0].mxu0 %v5879
        %v5881 = vpop.f32.mrb[0].mxu0
        %v5882 = vadd.f32 %v5677, %v5881
        %v5883 = vpop.f32.mrb[0].mxu0
        %5884 = vmatprep.mubr.f32.mxu0 0.0
        %v5885 = vand.u32 %v5218, 4294901760
        %v5886 = vsub.f32 %v5218, %v5885
        %5887 = vmatmul.mubr.f32.gmra.mrb[0].mxu0 %v5886
        %v5888 = vpop.f32.mrb[0].mxu0
        %v5889 = vadd.f32 %v5683, %v5888
        %v5890 = vpop.f32.mrb[0].mxu0
        %5891 = vmatprep.mubr.f32.mxu0 0.0
        %v5892 = vand.u32 %v5219, 4294901760
        %v5893 = vsub.f32 %v5219, %v5892
        %5894 = vmatmul.mubr.f32.gmra.mrb[0].mxu0 %v5893
        %v5895 = vpop.f32.mrb[0].mxu0
        %v5896 = vadd.f32 %v5689, %v5895
        %v5897 = vpop.f32.mrb[0].mxu0
        %5898 = vmatprep.mubr.f32.mxu0 0.0
        %v5899 = vand.u32 %v5220, 4294901760
        %v5900 = vsub.f32 %v5220, %v5899
        %5901 = vmatmul.mubr.f32.gmra.mrb[0].mxu0 %v5900
        %v5902 = vpop.f32.mrb[0].mxu0
        %v5903 = vadd.f32 %v5695, %v5902
        %v5904 = vpop.f32.mrb[0].mxu0
        %5905 = vmatprep.mubr.f32.mxu0 0.0
        %v5906 = vand.u32 %v5221, 4294901760
        %v5907 = vsub.f32 %v5221, %v5906
        %5908 = vmatmul.mubr.f32.gmra.mrb[0].mxu0 %v5907
        %v5909 = vpop.f32.mrb[0].mxu0
        %v5910 = vadd.f32 %v5701, %v5909
        %v5911 = vpop.f32.mrb[0].mxu0
        %5912 = vdwg.mxu0
        %5913 = vmatprep.subr.mxu0 0.0
        %v5914 = vand.u32 %v759, 4294901760
        %5915 = vmatpush1.msra.mxu0 %v5914
        %5916 = vmatprep.subr.mxu0 0.0
        %v5917 = vand.u32 %v760, 4294901760
        %5918 = vmatpush1.msra.mxu0 %v5917
        %5919 = vmatprep.subr.mxu0 0.0
        %v5920 = vand.u32 %v761, 4294901760
        %5921 = vmatpush1.msra.mxu0 %v5920
        %5922 = vmatprep.subr.mxu0 0.0
        %v5923 = vand.u32 %v762, 4294901760
        %5924 = vmatpush1.msra.mxu0 %v5923
        %5925 = vmatprep.subr.mxu0 0.0
        %v5926 = vand.u32 %v763, 4294901760
        %5927 = vmatpush1.msra.mxu0 %v5926
        %5928 = vmatprep.subr.mxu0 0.0
        %v5929 = vand.u32 %v764, 4294901760
        %5930 = vmatpush1.msra.mxu0 %v5929
        %5931 = vmatprep.subr.mxu0 0.0
        %v5932 = vand.u32 %v765, 4294901760
        %5933 = vmatpush1.msra.mxu0 %v5932
        %5934 = vmatprep.subr.mxu0 0.0
        %v5935 = vand.u32 %v766, 4294901760
        %5936 = vmatpush1.msra.mxu0 %v5935
        %5937 = vmatprep.subr.mxu0 0.0
        %v5938 = vand.u32 %v767, 4294901760
        %5939 = vmatpush1.msra.mxu0 %v5938
        %5940 = vmatprep.subr.mxu0 0.0
        %v5941 = vand.u32 %v768, 4294901760
        %5942 = vmatpush1.msra.mxu0 %v5941
        %5943 = vmatprep.subr.mxu0 0.0
        %v5944 = vand.u32 %v769, 4294901760
        %5945 = vmatpush1.msra.mxu0 %v5944
        %5946 = vmatprep.subr.mxu0 0.0
        %v5947 = vand.u32 %v770, 4294901760
        %5948 = vmatpush1.msra.mxu0 %v5947
        %5949 = vmatprep.subr.mxu0 0.0
        %v5950 = vand.u32 %v771, 4294901760
        %5951 = vmatpush1.msra.mxu0 %v5950
        %5952 = vmatprep.subr.mxu0 0.0
        %v5953 = vand.u32 %v772, 4294901760
        %5954 = vmatpush1.msra.mxu0 %v5953
        %5955 = vmatprep.subr.mxu0 0.0
        %v5956 = vand.u32 %v773, 4294901760
        %5957 = vmatpush1.msra.mxu0 %v5956
        %5958 = vmatprep.subr.mxu0 0.0
        %v5959 = vand.u32 %v774, 4294901760
        %5960 = vmatpush1.msra.mxu0 %v5959
        %5961 = vmatprep.subr.mxu0 0.0
        %5962 = vmatpush1.msra.mxu0 0.0
        %5963 = vmatprep.subr.mxu0 0.0
        %5964 = vmatpush1.msra.mxu0 0.0
        %5965 = vmatprep.subr.mxu0 0.0
        %5966 = vmatpush1.msra.mxu0 0.0
        %5967 = vmatprep.subr.mxu0 0.0
        %5968 = vmatpush1.msra.mxu0 0.0
        %5969 = vmatprep.subr.mxu0 0.0
        %5970 = vmatpush1.msra.mxu0 0.0
        %5971 = vmatprep.subr.mxu0 0.0
        %5972 = vmatpush1.msra.mxu0 0.0
        %5973 = vmatprep.subr.mxu0 0.0
        %5974 = vmatpush1.msra.mxu0 0.0
        %5975 = vmatprep.subr.mxu0 0.0
        %5976 = vmatpush1.msra.mxu0 0.0
        %5977 = vmatprep.subr.mxu0 0.0
        %5978 = vmatpush1.msra.mxu0 0.0
        %5979 = vmatprep.subr.mxu0 0.0
        %5980 = vmatpush1.msra.mxu0 0.0
        %5981 = vmatprep.subr.mxu0 0.0
        %5982 = vmatpush1.msra.mxu0 0.0
        %5983 = vmatprep.subr.mxu0 0.0
        %5984 = vmatpush1.msra.mxu0 0.0
        %5985 = vmatprep.subr.mxu0 0.0
        %5986 = vmatpush1.msra.mxu0 0.0
        %5987 = vmatprep.subr.mxu0 0.0
        %5988 = vmatpush1.msra.mxu0 0.0
        %5989 = vmatprep.subr.mxu0 0.0
        %5990 = vmatpush1.msra.mxu0 0.0
        %5991 = vmatprep.subr.mxu0 0.0
        %5992 = vmatpush1.msra.mxu0 0.0
        %5993 = vmatprep.mubr.f32.mxu0 0.0
        %v5994 = vand.u32 %v5206, 4294901760
        %v5995 = vsub.f32 %v5206, %v5994
        %v5996 = vand.u32 %v5995, 4294901760
        %5997 = vmatmul.mubr.f32.gmra.mrb[0].mxu0 %v5996
        %v5998 = vpop.f32.mrb[0].mxu0
        %v5999 = vadd.f32 %v5805, %v5998
        %v6000 = vpop.f32.mrb[0].mxu0
        %6001 = vmatprep.mubr.f32.mxu0 0.0
        %v6002 = vand.u32 %v5207, 4294901760
        %v6003 = vsub.f32 %v5207, %v6002
        %v6004 = vand.u32 %v6003, 4294901760
        %6005 = vmatmul.mubr.f32.gmra.mrb[0].mxu0 %v6004
        %v6006 = vpop.f32.mrb[0].mxu0
        %v6007 = vadd.f32 %v5812, %v6006
        %v6008 = vpop.f32.mrb[0].mxu0
        %6009 = vmatprep.mubr.f32.mxu0 0.0
        %v6010 = vand.u32 %v5208, 4294901760
        %v6011 = vsub.f32 %v5208, %v6010
        %v6012 = vand.u32 %v6011, 4294901760
        %6013 = vmatmul.mubr.f32.gmra.mrb[0].mxu0 %v6012
        %v6014 = vpop.f32.mrb[0].mxu0
        %v6015 = vadd.f32 %v5819, %v6014
        %v6016 = vpop.f32.mrb[0].mxu0
        %6017 = vmatprep.mubr.f32.mxu0 0.0
        %v6018 = vand.u32 %v5209, 4294901760
        %v6019 = vsub.f32 %v5209, %v6018
        %v6020 = vand.u32 %v6019, 4294901760
        %6021 = vmatmul.mubr.f32.gmra.mrb[0].mxu0 %v6020
        %v6022 = vpop.f32.mrb[0].mxu0
        %v6023 = vadd.f32 %v5826, %v6022
        %v6024 = vpop.f32.mrb[0].mxu0
        %6025 = vmatprep.mubr.f32.mxu0 0.0
        %v6026 = vand.u32 %v5210, 4294901760
        %v6027 = vsub.f32 %v5210, %v6026
        %v6028 = vand.u32 %v6027, 4294901760
        %6029 = vmatmul.mubr.f32.gmra.mrb[0].mxu0 %v6028
        %v6030 = vpop.f32.mrb[0].mxu0
        %v6031 = vadd.f32 %v5833, %v6030
        %v6032 = vpop.f32.mrb[0].mxu0
        %6033 = vmatprep.mubr.f32.mxu0 0.0
        %v6034 = vand.u32 %v5211, 4294901760
        %v6035 = vsub.f32 %v5211, %v6034
        %v6036 = vand.u32 %v6035, 4294901760
        %6037 = vmatmul.mubr.f32.gmra.mrb[0].mxu0 %v6036
        %v6038 = vpop.f32.mrb[0].mxu0
        %v6039 = vadd.f32 %v5840, %v6038
        %v6040 = vpop.f32.mrb[0].mxu0
        %6041 = vmatprep.mubr.f32.mxu0 0.0
        %v6042 = vand.u32 %v5212, 4294901760
        %v6043 = vsub.f32 %v5212, %v6042
        %v6044 = vand.u32 %v6043, 4294901760
        %6045 = vmatmul.mubr.f32.gmra.mrb[0].mxu0 %v6044
        %v6046 = vpop.f32.mrb[0].mxu0
        %v6047 = vadd.f32 %v5847, %v6046
        %v6048 = vpop.f32.mrb[0].mxu0
        %6049 = vmatprep.mubr.f32.mxu0 0.0
        %v6050 = vand.u32 %v5213, 4294901760
        %v6051 = vsub.f32 %v5213, %v6050
        %v6052 = vand.u32 %v6051, 4294901760
        %6053 = vmatmul.mubr.f32.gmra.mrb[0].mxu0 %v6052
        %v6054 = vpop.f32.mrb[0].mxu0
        %v6055 = vadd.f32 %v5854, %v6054
        %v6056 = vpop.f32.mrb[0].mxu0
        %6057 = vmatprep.mubr.f32.mxu0 0.0
        %v6058 = vand.u32 %v5214, 4294901760
        %v6059 = vsub.f32 %v5214, %v6058
        %v6060 = vand.u32 %v6059, 4294901760
        %6061 = vmatmul.mubr.f32.gmra.mrb[0].mxu0 %v6060
        %v6062 = vpop.f32.mrb[0].mxu0
        %v6063 = vadd.f32 %v5861, %v6062
        %v6064 = vpop.f32.mrb[0].mxu0
        %6065 = vmatprep.mubr.f32.mxu0 0.0
        %v6066 = vand.u32 %v5215, 4294901760
        %v6067 = vsub.f32 %v5215, %v6066
        %v6068 = vand.u32 %v6067, 4294901760
        %6069 = vmatmul.mubr.f32.gmra.mrb[0].mxu0 %v6068
        %v6070 = vpop.f32.mrb[0].mxu0
        %v6071 = vadd.f32 %v5868, %v6070
        %v6072 = vpop.f32.mrb[0].mxu0
        %6073 = vmatprep.mubr.f32.mxu0 0.0
        %v6074 = vand.u32 %v5216, 4294901760
        %v6075 = vsub.f32 %v5216, %v6074
        %v6076 = vand.u32 %v6075, 4294901760
        %6077 = vmatmul.mubr.f32.gmra.mrb[0].mxu0 %v6076
        %v6078 = vpop.f32.mrb[0].mxu0
        %v6079 = vadd.f32 %v5875, %v6078
        %v6080 = vpop.f32.mrb[0].mxu0
        %6081 = vmatprep.mubr.f32.mxu0 0.0
        %v6082 = vand.u32 %v5217, 4294901760
        %v6083 = vsub.f32 %v5217, %v6082
        %v6084 = vand.u32 %v6083, 4294901760
        %6085 = vmatmul.mubr.f32.gmra.mrb[0].mxu0 %v6084
        %v6086 = vpop.f32.mrb[0].mxu0
        %v6087 = vadd.f32 %v5882, %v6086
        %v6088 = vpop.f32.mrb[0].mxu0
        %6089 = vmatprep.mubr.f32.mxu0 0.0
        %v6090 = vand.u32 %v5218, 4294901760
        %v6091 = vsub.f32 %v5218, %v6090
        %v6092 = vand.u32 %v6091, 4294901760
        %6093 = vmatmul.mubr.f32.gmra.mrb[0].mxu0 %v6092
        %v6094 = vpop.f32.mrb[0].mxu0
        %v6095 = vadd.f32 %v5889, %v6094
        %v6096 = vpop.f32.mrb[0].mxu0
        %6097 = vmatprep.mubr.f32.mxu0 0.0
        %v6098 = vand.u32 %v5219, 4294901760
        %v6099 = vsub.f32 %v5219, %v6098
        %v6100 = vand.u32 %v6099, 4294901760
        %6101 = vmatmul.mubr.f32.gmra.mrb[0].mxu0 %v6100
        %v6102 = vpop.f32.mrb[0].mxu0
        %v6103 = vadd.f32 %v5896, %v6102
        %v6104 = vpop.f32.mrb[0].mxu0
        %6105 = vmatprep.mubr.f32.mxu0 0.0
        %v6106 = vand.u32 %v5220, 4294901760
        %v6107 = vsub.f32 %v5220, %v6106
        %v6108 = vand.u32 %v6107, 4294901760
        %6109 = vmatmul.mubr.f32.gmra.mrb[0].mxu0 %v6108
        %v6110 = vpop.f32.mrb[0].mxu0
        %v6111 = vadd.f32 %v5903, %v6110
        %v6112 = vpop.f32.mrb[0].mxu0
        %6113 = vmatprep.mubr.f32.mxu0 0.0
        %v6114 = vand.u32 %v5221, 4294901760
        %v6115 = vsub.f32 %v5221, %v6114
        %v6116 = vand.u32 %v6115, 4294901760
        %6117 = vmatmul.mubr.f32.gmra.mrb[0].mxu0 %v6116
        %v6118 = vpop.f32.mrb[0].mxu0
        %v6119 = vadd.f32 %v5910, %v6118
        %v6120 = vpop.f32.mrb[0].mxu0
        %6121 = vdwg.mxu0
        %6122 = vmatprep.subr.mxu0 0.0
        %v6123 = vand.u32 %v759, 4294901760
        %v6124 = vsub.f32 %v759, %v6123
        %v6125 = vand.u32 %v6124, 4294901760
        %6126 = vmatpush1.msra.mxu0 %v6125
        %6127 = vmatprep.subr.mxu0 0.0
        %v6128 = vand.u32 %v760, 4294901760
        %v6129 = vsub.f32 %v760, %v6128
        %v6130 = vand.u32 %v6129, 4294901760
        %6131 = vmatpush1.msra.mxu0 %v6130
        %6132 = vmatprep.subr.mxu0 0.0
        %v6133 = vand.u32 %v761, 4294901760
        %v6134 = vsub.f32 %v761, %v6133
        %v6135 = vand.u32 %v6134, 4294901760
        %6136 = vmatpush1.msra.mxu0 %v6135
        %6137 = vmatprep.subr.mxu0 0.0
        %v6138 = vand.u32 %v762, 4294901760
        %v6139 = vsub.f32 %v762, %v6138
        %v6140 = vand.u32 %v6139, 4294901760
        %6141 = vmatpush1.msra.mxu0 %v6140
        %6142 = vmatprep.subr.mxu0 0.0
        %v6143 = vand.u32 %v763, 4294901760
        %v6144 = vsub.f32 %v763, %v6143
        %v6145 = vand.u32 %v6144, 4294901760
        %6146 = vmatpush1.msra.mxu0 %v6145
        %6147 = vmatprep.subr.mxu0 0.0
        %v6148 = vand.u32 %v764, 4294901760
        %v6149 = vsub.f32 %v764, %v6148
        %v6150 = vand.u32 %v6149, 4294901760
        %6151 = vmatpush1.msra.mxu0 %v6150
        %6152 = vmatprep.subr.mxu0 0.0
        %v6153 = vand.u32 %v765, 4294901760
        %v6154 = vsub.f32 %v765, %v6153
        %v6155 = vand.u32 %v6154, 4294901760
        %6156 = vmatpush1.msra.mxu0 %v6155
        %6157 = vmatprep.subr.mxu0 0.0
        %v6158 = vand.u32 %v766, 4294901760
        %v6159 = vsub.f32 %v766, %v6158
        %v6160 = vand.u32 %v6159, 4294901760
        %6161 = vmatpush1.msra.mxu0 %v6160
        %6162 = vmatprep.subr.mxu0 0.0
        %v6163 = vand.u32 %v767, 4294901760
        %v6164 = vsub.f32 %v767, %v6163
        %v6165 = vand.u32 %v6164, 4294901760
        %6166 = vmatpush1.msra.mxu0 %v6165
        %6167 = vmatprep.subr.mxu0 0.0
        %v6168 = vand.u32 %v768, 4294901760
        %v6169 = vsub.f32 %v768, %v6168
        %v6170 = vand.u32 %v6169, 4294901760
        %6171 = vmatpush1.msra.mxu0 %v6170
        %6172 = vmatprep.subr.mxu0 0.0
        %v6173 = vand.u32 %v769, 4294901760
        %v6174 = vsub.f32 %v769, %v6173
        %v6175 = vand.u32 %v6174, 4294901760
        %6176 = vmatpush1.msra.mxu0 %v6175
        %6177 = vmatprep.subr.mxu0 0.0
        %v6178 = vand.u32 %v770, 4294901760
        %v6179 = vsub.f32 %v770, %v6178
        %v6180 = vand.u32 %v6179, 4294901760
        %6181 = vmatpush1.msra.mxu0 %v6180
        %6182 = vmatprep.subr.mxu0 0.0
        %v6183 = vand.u32 %v771, 4294901760
        %v6184 = vsub.f32 %v771, %v6183
        %v6185 = vand.u32 %v6184, 4294901760
        %6186 = vmatpush1.msra.mxu0 %v6185
        %6187 = vmatprep.subr.mxu0 0.0
        %v6188 = vand.u32 %v772, 4294901760
        %v6189 = vsub.f32 %v772, %v6188
        %v6190 = vand.u32 %v6189, 4294901760
        %6191 = vmatpush1.msra.mxu0 %v6190
        %6192 = vmatprep.subr.mxu0 0.0
        %v6193 = vand.u32 %v773, 4294901760
        %v6194 = vsub.f32 %v773, %v6193
        %v6195 = vand.u32 %v6194, 4294901760
        %6196 = vmatpush1.msra.mxu0 %v6195
        %6197 = vmatprep.subr.mxu0 0.0
        %v6198 = vand.u32 %v774, 4294901760
        %v6199 = vsub.f32 %v774, %v6198
        %v6200 = vand.u32 %v6199, 4294901760
        %6201 = vmatpush1.msra.mxu0 %v6200
        %6202 = vmatprep.subr.mxu0 0.0
        %6203 = vmatpush1.msra.mxu0 0.0
        %6204 = vmatprep.subr.mxu0 0.0
        %6205 = vmatpush1.msra.mxu0 0.0
        %6206 = vmatprep.subr.mxu0 0.0
        %6207 = vmatpush1.msra.mxu0 0.0
        %6208 = vmatprep.subr.mxu0 0.0
        %6209 = vmatpush1.msra.mxu0 0.0
        %6210 = vmatprep.subr.mxu0 0.0
        %6211 = vmatpush1.msra.mxu0 0.0
        %6212 = vmatprep.subr.mxu0 0.0
        %6213 = vmatpush1.msra.mxu0 0.0
        %6214 = vmatprep.subr.mxu0 0.0
        %6215 = vmatpush1.msra.mxu0 0.0
        %6216 = vmatprep.subr.mxu0 0.0
        %6217 = vmatpush1.msra.mxu0 0.0
        %6218 = vmatprep.subr.mxu0 0.0
        %6219 = vmatpush1.msra.mxu0 0.0
        %6220 = vmatprep.subr.mxu0 0.0
        %6221 = vmatpush1.msra.mxu0 0.0
        %6222 = vmatprep.subr.mxu0 0.0
        %6223 = vmatpush1.msra.mxu0 0.0
        %6224 = vmatprep.subr.mxu0 0.0
        %6225 = vmatpush1.msra.mxu0 0.0
        %6226 = vmatprep.subr.mxu0 0.0
        %6227 = vmatpush1.msra.mxu0 0.0
        %6228 = vmatprep.subr.mxu0 0.0
        %6229 = vmatpush1.msra.mxu0 0.0
        %6230 = vmatprep.subr.mxu0 0.0
        %6231 = vmatpush1.msra.mxu0 0.0
        %6232 = vmatprep.subr.mxu0 0.0
        %6233 = vmatpush1.msra.mxu0 0.0
        %6234 = vmatprep.mubr.f32.mxu0 0.0
        %v6235 = vand.u32 %v5206, 4294901760
        %6236 = vmatmul.mubr.f32.gmra.mrb[0].mxu0 %v6235
        %v6237 = vpop.f32.mrb[0].mxu0
        %v6238 = vadd.f32 %v5999, %v6237
        %v6239 = vpop.f32.mrb[0].mxu0
        %6240 = vmatprep.mubr.f32.mxu0 0.0
        %v6241 = vand.u32 %v5207, 4294901760
        %6242 = vmatmul.mubr.f32.gmra.mrb[0].mxu0 %v6241
        %v6243 = vpop.f32.mrb[0].mxu0
        %v6244 = vadd.f32 %v6007, %v6243
        %v6245 = vpop.f32.mrb[0].mxu0
        %6246 = vmatprep.mubr.f32.mxu0 0.0
        %v6247 = vand.u32 %v5208, 4294901760
        %6248 = vmatmul.mubr.f32.gmra.mrb[0].mxu0 %v6247
        %v6249 = vpop.f32.mrb[0].mxu0
        %v6250 = vadd.f32 %v6015, %v6249
        %v6251 = vpop.f32.mrb[0].mxu0
        %6252 = vmatprep.mubr.f32.mxu0 0.0
        %v6253 = vand.u32 %v5209, 4294901760
        %6254 = vmatmul.mubr.f32.gmra.mrb[0].mxu0 %v6253
        %v6255 = vpop.f32.mrb[0].mxu0
        %v6256 = vadd.f32 %v6023, %v6255
        %v6257 = vpop.f32.mrb[0].mxu0
        %6258 = vmatprep.mubr.f32.mxu0 0.0
        %v6259 = vand.u32 %v5210, 4294901760
        %6260 = vmatmul.mubr.f32.gmra.mrb[0].mxu0 %v6259
        %v6261 = vpop.f32.mrb[0].mxu0
        %v6262 = vadd.f32 %v6031, %v6261
        %v6263 = vpop.f32.mrb[0].mxu0
        %6264 = vmatprep.mubr.f32.mxu0 0.0
        %v6265 = vand.u32 %v5211, 4294901760
        %6266 = vmatmul.mubr.f32.gmra.mrb[0].mxu0 %v6265
        %v6267 = vpop.f32.mrb[0].mxu0
        %v6268 = vadd.f32 %v6039, %v6267
        %v6269 = vpop.f32.mrb[0].mxu0
        %6270 = vmatprep.mubr.f32.mxu0 0.0
        %v6271 = vand.u32 %v5212, 4294901760
        %6272 = vmatmul.mubr.f32.gmra.mrb[0].mxu0 %v6271
        %v6273 = vpop.f32.mrb[0].mxu0
        %v6274 = vadd.f32 %v6047, %v6273
        %v6275 = vpop.f32.mrb[0].mxu0
        %6276 = vmatprep.mubr.f32.mxu0 0.0
        %v6277 = vand.u32 %v5213, 4294901760
        %6278 = vmatmul.mubr.f32.gmra.mrb[0].mxu0 %v6277
        %v6279 = vpop.f32.mrb[0].mxu0
        %v6280 = vadd.f32 %v6055, %v6279
        %v6281 = vpop.f32.mrb[0].mxu0
        %6282 = vmatprep.mubr.f32.mxu0 0.0
        %v6283 = vand.u32 %v5214, 4294901760
        %6284 = vmatmul.mubr.f32.gmra.mrb[0].mxu0 %v6283
        %v6285 = vpop.f32.mrb[0].mxu0
        %v6286 = vadd.f32 %v6063, %v6285
        %v6287 = vpop.f32.mrb[0].mxu0
        %6288 = vmatprep.mubr.f32.mxu0 0.0
        %v6289 = vand.u32 %v5215, 4294901760
        %6290 = vmatmul.mubr.f32.gmra.mrb[0].mxu0 %v6289
        %v6291 = vpop.f32.mrb[0].mxu0
        %v6292 = vadd.f32 %v6071, %v6291
        %v6293 = vpop.f32.mrb[0].mxu0
        %6294 = vmatprep.mubr.f32.mxu0 0.0
        %v6295 = vand.u32 %v5216, 4294901760
        %6296 = vmatmul.mubr.f32.gmra.mrb[0].mxu0 %v6295
        %v6297 = vpop.f32.mrb[0].mxu0
        %v6298 = vadd.f32 %v6079, %v6297
        %v6299 = vpop.f32.mrb[0].mxu0
        %6300 = vmatprep.mubr.f32.mxu0 0.0
        %v6301 = vand.u32 %v5217, 4294901760
        %6302 = vmatmul.mubr.f32.gmra.mrb[0].mxu0 %v6301
        %v6303 = vpop.f32.mrb[0].mxu0
        %v6304 = vadd.f32 %v6087, %v6303
        %v6305 = vpop.f32.mrb[0].mxu0
        %6306 = vmatprep.mubr.f32.mxu0 0.0
        %v6307 = vand.u32 %v5218, 4294901760
        %6308 = vmatmul.mubr.f32.gmra.mrb[0].mxu0 %v6307
        %v6309 = vpop.f32.mrb[0].mxu0
        %v6310 = vadd.f32 %v6095, %v6309
        %v6311 = vpop.f32.mrb[0].mxu0
        %6312 = vmatprep.mubr.f32.mxu0 0.0
        %v6313 = vand.u32 %v5219, 4294901760
        %6314 = vmatmul.mubr.f32.gmra.mrb[0].mxu0 %v6313
        %v6315 = vpop.f32.mrb[0].mxu0
        %v6316 = vadd.f32 %v6103, %v6315
        %v6317 = vpop.f32.mrb[0].mxu0
        %6318 = vmatprep.mubr.f32.mxu0 0.0
        %v6319 = vand.u32 %v5220, 4294901760
        %6320 = vmatmul.mubr.f32.gmra.mrb[0].mxu0 %v6319
        %v6321 = vpop.f32.mrb[0].mxu0
        %v6322 = vadd.f32 %v6111, %v6321
        %v6323 = vpop.f32.mrb[0].mxu0
        %6324 = vmatprep.mubr.f32.mxu0 0.0
        %v6325 = vand.u32 %v5221, 4294901760
        %6326 = vmatmul.mubr.f32.gmra.mrb[0].mxu0 %v6325
        %v6327 = vpop.f32.mrb[0].mxu0
        %v6328 = vadd.f32 %v6119, %v6327
        %v6329 = vpop.f32.mrb[0].mxu0
        %6330 = vdwg.mxu0
        %6331 = vmatprep.subr.mxu0 0.0
        %v6332 = vand.u32 %v759, 4294901760
        %6333 = vmatpush1.msra.mxu0 %v6332
        %6334 = vmatprep.subr.mxu0 0.0
        %v6335 = vand.u32 %v760, 4294901760
        %6336 = vmatpush1.msra.mxu0 %v6335
        %6337 = vmatprep.subr.mxu0 0.0
        %v6338 = vand.u32 %v761, 4294901760
        %6339 = vmatpush1.msra.mxu0 %v6338
        %6340 = vmatprep.subr.mxu0 0.0
        %v6341 = vand.u32 %v762, 4294901760
        %6342 = vmatpush1.msra.mxu0 %v6341
        %6343 = vmatprep.subr.mxu0 0.0
        %v6344 = vand.u32 %v763, 4294901760
        %6345 = vmatpush1.msra.mxu0 %v6344
        %6346 = vmatprep.subr.mxu0 0.0
        %v6347 = vand.u32 %v764, 4294901760
        %6348 = vmatpush1.msra.mxu0 %v6347
        %6349 = vmatprep.subr.mxu0 0.0
        %v6350 = vand.u32 %v765, 4294901760
        %6351 = vmatpush1.msra.mxu0 %v6350
        %6352 = vmatprep.subr.mxu0 0.0
        %v6353 = vand.u32 %v766, 4294901760
        %6354 = vmatpush1.msra.mxu0 %v6353
        %6355 = vmatprep.subr.mxu0 0.0
        %v6356 = vand.u32 %v767, 4294901760
        %6357 = vmatpush1.msra.mxu0 %v6356
        %6358 = vmatprep.subr.mxu0 0.0
        %v6359 = vand.u32 %v768, 4294901760
        %6360 = vmatpush1.msra.mxu0 %v6359
        %6361 = vmatprep.subr.mxu0 0.0
        %v6362 = vand.u32 %v769, 4294901760
        %6363 = vmatpush1.msra.mxu0 %v6362
        %6364 = vmatprep.subr.mxu0 0.0
        %v6365 = vand.u32 %v770, 4294901760
        %6366 = vmatpush1.msra.mxu0 %v6365
        %6367 = vmatprep.subr.mxu0 0.0
        %v6368 = vand.u32 %v771, 4294901760
        %6369 = vmatpush1.msra.mxu0 %v6368
        %6370 = vmatprep.subr.mxu0 0.0
        %v6371 = vand.u32 %v772, 4294901760
        %6372 = vmatpush1.msra.mxu0 %v6371
        %6373 = vmatprep.subr.mxu0 0.0
        %v6374 = vand.u32 %v773, 4294901760
        %6375 = vmatpush1.msra.mxu0 %v6374
        %6376 = vmatprep.subr.mxu0 0.0
        %v6377 = vand.u32 %v774, 4294901760
        %6378 = vmatpush1.msra.mxu0 %v6377
        %6379 = vmatprep.subr.mxu0 0.0
        %6380 = vmatpush1.msra.mxu0 0.0
        %6381 = vmatprep.subr.mxu0 0.0
        %6382 = vmatpush1.msra.mxu0 0.0
        %6383 = vmatprep.subr.mxu0 0.0
        %6384 = vmatpush1.msra.mxu0 0.0
        %6385 = vmatprep.subr.mxu0 0.0
        %6386 = vmatpush1.msra.mxu0 0.0
        %6387 = vmatprep.subr.mxu0 0.0
        %6388 = vmatpush1.msra.mxu0 0.0
        %6389 = vmatprep.subr.mxu0 0.0
        %6390 = vmatpush1.msra.mxu0 0.0
        %6391 = vmatprep.subr.mxu0 0.0
        %6392 = vmatpush1.msra.mxu0 0.0
        %6393 = vmatprep.subr.mxu0 0.0
        %6394 = vmatpush1.msra.mxu0 0.0
        %6395 = vmatprep.subr.mxu0 0.0
        %6396 = vmatpush1.msra.mxu0 0.0
        %6397 = vmatprep.subr.mxu0 0.0
        %6398 = vmatpush1.msra.mxu0 0.0
        %6399 = vmatprep.subr.mxu0 0.0
        %6400 = vmatpush1.msra.mxu0 0.0
        %6401 = vmatprep.subr.mxu0 0.0
        %6402 = vmatpush1.msra.mxu0 0.0
        %6403 = vmatprep.subr.mxu0 0.0
        %6404 = vmatpush1.msra.mxu0 0.0
        %6405 = vmatprep.subr.mxu0 0.0
        %6406 = vmatpush1.msra.mxu0 0.0
        %6407 = vmatprep.subr.mxu0 0.0
        %6408 = vmatpush1.msra.mxu0 0.0
        %6409 = vmatprep.subr.mxu0 0.0
        %6410 = vmatpush1.msra.mxu0 0.0
        %6411 = vmatprep.mubr.f32.mxu0 0.0
        %v6412 = vand.u32 %v5206, 4294901760
        %6413 = vmatmul.mubr.f32.gmra.mrb[0].mxu0 %v6412
        %v6414 = vpop.f32.mrb[0].mxu0
        %v6415 = vadd.f32 %v6238, %v6414
        %v6416 = vpop.f32.mrb[0].mxu0
        %6417 = vmatprep.mubr.f32.mxu0 0.0
        %v6418 = vand.u32 %v5207, 4294901760
        %6419 = vmatmul.mubr.f32.gmra.mrb[0].mxu0 %v6418
        %v6420 = vpop.f32.mrb[0].mxu0
        %v6421 = vadd.f32 %v6244, %v6420
        %v6422 = vpop.f32.mrb[0].mxu0
        %6423 = vmatprep.mubr.f32.mxu0 0.0
        %v6424 = vand.u32 %v5208, 4294901760
        %6425 = vmatmul.mubr.f32.gmra.mrb[0].mxu0 %v6424
        %v6426 = vpop.f32.mrb[0].mxu0
        %v6427 = vadd.f32 %v6250, %v6426
        %v6428 = vpop.f32.mrb[0].mxu0
        %6429 = vmatprep.mubr.f32.mxu0 0.0
        %v6430 = vand.u32 %v5209, 4294901760
        %6431 = vmatmul.mubr.f32.gmra.mrb[0].mxu0 %v6430
        %v6432 = vpop.f32.mrb[0].mxu0
        %v6433 = vadd.f32 %v6256, %v6432
        %v6434 = vpop.f32.mrb[0].mxu0
        %6435 = vmatprep.mubr.f32.mxu0 0.0
        %v6436 = vand.u32 %v5210, 4294901760
        %6437 = vmatmul.mubr.f32.gmra.mrb[0].mxu0 %v6436
        %v6438 = vpop.f32.mrb[0].mxu0
        %v6439 = vadd.f32 %v6262, %v6438
        %v6440 = vpop.f32.mrb[0].mxu0
        %6441 = vmatprep.mubr.f32.mxu0 0.0
        %v6442 = vand.u32 %v5211, 4294901760
        %6443 = vmatmul.mubr.f32.gmra.mrb[0].mxu0 %v6442
        %v6444 = vpop.f32.mrb[0].mxu0
        %v6445 = vadd.f32 %v6268, %v6444
        %v6446 = vpop.f32.mrb[0].mxu0
        %6447 = vmatprep.mubr.f32.mxu0 0.0
        %v6448 = vand.u32 %v5212, 4294901760
        %6449 = vmatmul.mubr.f32.gmra.mrb[0].mxu0 %v6448
        %v6450 = vpop.f32.mrb[0].mxu0
        %v6451 = vadd.f32 %v6274, %v6450
        %v6452 = vpop.f32.mrb[0].mxu0
        %6453 = vmatprep.mubr.f32.mxu0 0.0
        %v6454 = vand.u32 %v5213, 4294901760
        %6455 = vmatmul.mubr.f32.gmra.mrb[0].mxu0 %v6454
        %v6456 = vpop.f32.mrb[0].mxu0
        %v6457 = vadd.f32 %v6280, %v6456
        %v6458 = vpop.f32.mrb[0].mxu0
        %6459 = vmatprep.mubr.f32.mxu0 0.0
        %v6460 = vand.u32 %v5214, 4294901760
        %6461 = vmatmul.mubr.f32.gmra.mrb[0].mxu0 %v6460
        %v6462 = vpop.f32.mrb[0].mxu0
        %v6463 = vadd.f32 %v6286, %v6462
        %v6464 = vpop.f32.mrb[0].mxu0
        %6465 = vmatprep.mubr.f32.mxu0 0.0
        %v6466 = vand.u32 %v5215, 4294901760
        %6467 = vmatmul.mubr.f32.gmra.mrb[0].mxu0 %v6466
        %v6468 = vpop.f32.mrb[0].mxu0
        %v6469 = vadd.f32 %v6292, %v6468
        %v6470 = vpop.f32.mrb[0].mxu0
        %6471 = vmatprep.mubr.f32.mxu0 0.0
        %v6472 = vand.u32 %v5216, 4294901760
        %6473 = vmatmul.mubr.f32.gmra.mrb[0].mxu0 %v6472
        %v6474 = vpop.f32.mrb[0].mxu0
        %v6475 = vadd.f32 %v6298, %v6474
        %v6476 = vpop.f32.mrb[0].mxu0
        %6477 = vmatprep.mubr.f32.mxu0 0.0
        %v6478 = vand.u32 %v5217, 4294901760
        %6479 = vmatmul.mubr.f32.gmra.mrb[0].mxu0 %v6478
        %v6480 = vpop.f32.mrb[0].mxu0
        %v6481 = vadd.f32 %v6304, %v6480
        %v6482 = vpop.f32.mrb[0].mxu0
        %6483 = vmatprep.mubr.f32.mxu0 0.0
        %v6484 = vand.u32 %v5218, 4294901760
        %6485 = vmatmul.mubr.f32.gmra.mrb[0].mxu0 %v6484
        %v6486 = vpop.f32.mrb[0].mxu0
        %v6487 = vadd.f32 %v6310, %v6486
        %v6488 = vpop.f32.mrb[0].mxu0
        %6489 = vmatprep.mubr.f32.mxu0 0.0
        %v6490 = vand.u32 %v5219, 4294901760
        %6491 = vmatmul.mubr.f32.gmra.mrb[0].mxu0 %v6490
        %v6492 = vpop.f32.mrb[0].mxu0
        %v6493 = vadd.f32 %v6316, %v6492
        %v6494 = vpop.f32.mrb[0].mxu0
        %6495 = vmatprep.mubr.f32.mxu0 0.0
        %v6496 = vand.u32 %v5220, 4294901760
        %6497 = vmatmul.mubr.f32.gmra.mrb[0].mxu0 %v6496
        %v6498 = vpop.f32.mrb[0].mxu0
        %v6499 = vadd.f32 %v6322, %v6498
        %v6500 = vpop.f32.mrb[0].mxu0
        %6501 = vmatprep.mubr.f32.mxu0 0.0
        %v6502 = vand.u32 %v5221, 4294901760
        %6503 = vmatmul.mubr.f32.gmra.mrb[0].mxu0 %v6502
        %v6504 = vpop.f32.mrb[0].mxu0
        %v6505 = vadd.f32 %v6328, %v6504
        %v6506 = vpop.f32.mrb[0].mxu0
        %6507 = vdwg.mxu0
        %v6508 = vmul.f32 %v5206, %v6415
        %v6509 = vmul.f32 %v5207, %v6421
        %v6510 = vmul.f32 %v5208, %v6427
        %v6511 = vmul.f32 %v5209, %v6433
        %v6512 = vmul.f32 %v5210, %v6439
        %v6513 = vmul.f32 %v5211, %v6445
        %v6514 = vmul.f32 %v5212, %v6451
        %v6515 = vmul.f32 %v5213, %v6457
        %v6516 = vmul.f32 %v5214, %v6463
        %v6517 = vmul.f32 %v5215, %v6469
        %v6518 = vmul.f32 %v5216, %v6475
        %v6519 = vmul.f32 %v5217, %v6481
        %v6520 = vmul.f32 %v5218, %v6487
        %v6521 = vmul.f32 %v5219, %v6493
        %v6522 = vmul.f32 %v5220, %v6499
        %v6523 = vmul.f32 %v5221, %v6505
        %v6524 = vrot.slane %v6508, 4
        %v6525 = vadd.f32 %v6508, %v6524
        %v6526 = vrot.slane %v6525, 2
        %v6527 = vadd.f32 %v6525, %v6526
        %v6528 = vrot.slane %v6527, 1
        %v6529 = vadd.f32 %v6527, %v6528
        %v6530 = vrot.slane %v6509, 4
        %v6531 = vadd.f32 %v6509, %v6530
        %v6532 = vrot.slane %v6531, 2
        %v6533 = vadd.f32 %v6531, %v6532
        %v6534 = vrot.slane %v6533, 1
        %v6535 = vadd.f32 %v6533, %v6534
        %v6536 = vrot.slane %v6510, 4
        %v6537 = vadd.f32 %v6510, %v6536
        %v6538 = vrot.slane %v6537, 2
        %v6539 = vadd.f32 %v6537, %v6538
        %v6540 = vrot.slane %v6539, 1
        %v6541 = vadd.f32 %v6539, %v6540
        %v6542 = vrot.slane %v6511, 4
        %v6543 = vadd.f32 %v6511, %v6542
        %v6544 = vrot.slane %v6543, 2
        %v6545 = vadd.f32 %v6543, %v6544
        %v6546 = vrot.slane %v6545, 1
        %v6547 = vadd.f32 %v6545, %v6546
        %v6548 = vrot.slane %v6512, 4
        %v6549 = vadd.f32 %v6512, %v6548
        %v6550 = vrot.slane %v6549, 2
        %v6551 = vadd.f32 %v6549, %v6550
        %v6552 = vrot.slane %v6551, 1
        %v6553 = vadd.f32 %v6551, %v6552
        %v6554 = vrot.slane %v6513, 4
        %v6555 = vadd.f32 %v6513, %v6554
        %v6556 = vrot.slane %v6555, 2
        %v6557 = vadd.f32 %v6555, %v6556
        %v6558 = vrot.slane %v6557, 1
        %v6559 = vadd.f32 %v6557, %v6558
        %v6560 = vrot.slane %v6514, 4
        %v6561 = vadd.f32 %v6514, %v6560
        %v6562 = vrot.slane %v6561, 2
        %v6563 = vadd.f32 %v6561, %v6562
        %v6564 = vrot.slane %v6563, 1
        %v6565 = vadd.f32 %v6563, %v6564
        %v6566 = vrot.slane %v6515, 4
        %v6567 = vadd.f32 %v6515, %v6566
        %v6568 = vrot.slane %v6567, 2
        %v6569 = vadd.f32 %v6567, %v6568
        %v6570 = vrot.slane %v6569, 1
        %v6571 = vadd.f32 %v6569, %v6570
        %v6572 = vrot.slane %v6516, 4
        %v6573 = vadd.f32 %v6516, %v6572
        %v6574 = vrot.slane %v6573, 2
        %v6575 = vadd.f32 %v6573, %v6574
        %v6576 = vrot.slane %v6575, 1
        %v6577 = vadd.f32 %v6575, %v6576
        %v6578 = vrot.slane %v6517, 4
        %v6579 = vadd.f32 %v6517, %v6578
        %v6580 = vrot.slane %v6579, 2
        %v6581 = vadd.f32 %v6579, %v6580
        %v6582 = vrot.slane %v6581, 1
        %v6583 = vadd.f32 %v6581, %v6582
        %v6584 = vrot.slane %v6518, 4
        %v6585 = vadd.f32 %v6518, %v6584
        %v6586 = vrot.slane %v6585, 2
        %v6587 = vadd.f32 %v6585, %v6586
        %v6588 = vrot.slane %v6587, 1
        %v6589 = vadd.f32 %v6587, %v6588
        %v6590 = vrot.slane %v6519, 4
        %v6591 = vadd.f32 %v6519, %v6590
        %v6592 = vrot.slane %v6591, 2
        %v6593 = vadd.f32 %v6591, %v6592
        %v6594 = vrot.slane %v6593, 1
        %v6595 = vadd.f32 %v6593, %v6594
        %v6596 = vrot.slane %v6520, 4
        %v6597 = vadd.f32 %v6520, %v6596
        %v6598 = vrot.slane %v6597, 2
        %v6599 = vadd.f32 %v6597, %v6598
        %v6600 = vrot.slane %v6599, 1
        %v6601 = vadd.f32 %v6599, %v6600
        %v6602 = vrot.slane %v6521, 4
        %v6603 = vadd.f32 %v6521, %v6602
        %v6604 = vrot.slane %v6603, 2
        %v6605 = vadd.f32 %v6603, %v6604
        %v6606 = vrot.slane %v6605, 1
        %v6607 = vadd.f32 %v6605, %v6606
        %v6608 = vrot.slane %v6522, 4
        %v6609 = vadd.f32 %v6522, %v6608
        %v6610 = vrot.slane %v6609, 2
        %v6611 = vadd.f32 %v6609, %v6610
        %v6612 = vrot.slane %v6611, 1
        %v6613 = vadd.f32 %v6611, %v6612
        %v6614 = vrot.slane %v6523, 4
        %v6615 = vadd.f32 %v6523, %v6614
        %v6616 = vrot.slane %v6615, 2
        %v6617 = vadd.f32 %v6615, %v6616
        %v6618 = vrot.slane %v6617, 1
        %v6619 = vadd.f32 %v6617, %v6618
        %v6636 = vsel %vm2221, %v6535, %v6529
        %v6637 = vsel %vm2223, %v6541, %v6636
        %v6638 = vsel %vm2225, %v6547, %v6637
        %v6639 = vsel %vm2227, %v6553, %v6638
        %v6640 = vsel %vm2229, %v6559, %v6639
        %v6641 = vsel %vm2231, %v6565, %v6640
        %v6642 = vsel %vm2233, %v6571, %v6641
        %v6643 = vsel %vm2221, %v6583, %v6577
        %v6644 = vsel %vm2223, %v6589, %v6643
        %v6645 = vsel %vm2225, %v6595, %v6644
        %v6646 = vsel %vm2227, %v6601, %v6645
        %v6647 = vsel %vm2229, %v6607, %v6646
        %v6648 = vsel %vm2231, %v6613, %v6647
        %v6649 = vsel %vm2233, %v6619, %v6648
        %6652 = vmatprep.subr.mxu0 0.0
        %v6653 = vand.u32 %v775, 4294901760
        %6654 = vmatpush1.msra.mxu0 %v6653
        %6655 = vmatprep.subr.mxu0 0.0
        %v6656 = vand.u32 %v776, 4294901760
        %6657 = vmatpush1.msra.mxu0 %v6656
        %6658 = vmatprep.subr.mxu0 0.0
        %v6659 = vand.u32 %v777, 4294901760
        %6660 = vmatpush1.msra.mxu0 %v6659
        %6661 = vmatprep.subr.mxu0 0.0
        %v6662 = vand.u32 %v778, 4294901760
        %6663 = vmatpush1.msra.mxu0 %v6662
        %6664 = vmatprep.subr.mxu0 0.0
        %v6665 = vand.u32 %v779, 4294901760
        %6666 = vmatpush1.msra.mxu0 %v6665
        %6667 = vmatprep.subr.mxu0 0.0
        %v6668 = vand.u32 %v780, 4294901760
        %6669 = vmatpush1.msra.mxu0 %v6668
        %6670 = vmatprep.subr.mxu0 0.0
        %v6671 = vand.u32 %v781, 4294901760
        %6672 = vmatpush1.msra.mxu0 %v6671
        %6673 = vmatprep.subr.mxu0 0.0
        %v6674 = vand.u32 %v782, 4294901760
        %6675 = vmatpush1.msra.mxu0 %v6674
        %6676 = vmatprep.subr.mxu0 0.0
        %v6677 = vand.u32 %v783, 4294901760
        %6678 = vmatpush1.msra.mxu0 %v6677
        %6679 = vmatprep.subr.mxu0 0.0
        %v6680 = vand.u32 %v784, 4294901760
        %6681 = vmatpush1.msra.mxu0 %v6680
        %6682 = vmatprep.subr.mxu0 0.0
        %v6683 = vand.u32 %v785, 4294901760
        %6684 = vmatpush1.msra.mxu0 %v6683
        %6685 = vmatprep.subr.mxu0 0.0
        %v6686 = vand.u32 %v786, 4294901760
        %6687 = vmatpush1.msra.mxu0 %v6686
        %6688 = vmatprep.subr.mxu0 0.0
        %v6689 = vand.u32 %v787, 4294901760
        %6690 = vmatpush1.msra.mxu0 %v6689
        %6691 = vmatprep.subr.mxu0 0.0
        %v6692 = vand.u32 %v788, 4294901760
        %6693 = vmatpush1.msra.mxu0 %v6692
        %6694 = vmatprep.subr.mxu0 0.0
        %v6695 = vand.u32 %v789, 4294901760
        %6696 = vmatpush1.msra.mxu0 %v6695
        %6697 = vmatprep.subr.mxu0 0.0
        %v6698 = vand.u32 %v790, 4294901760
        %6699 = vmatpush1.msra.mxu0 %v6698
        %6700 = vmatprep.subr.mxu0 0.0
        %6701 = vmatpush1.msra.mxu0 0.0
        %6702 = vmatprep.subr.mxu0 0.0
        %6703 = vmatpush1.msra.mxu0 0.0
        %6704 = vmatprep.subr.mxu0 0.0
        %6705 = vmatpush1.msra.mxu0 0.0
        %6706 = vmatprep.subr.mxu0 0.0
        %6707 = vmatpush1.msra.mxu0 0.0
        %6708 = vmatprep.subr.mxu0 0.0
        %6709 = vmatpush1.msra.mxu0 0.0
        %6710 = vmatprep.subr.mxu0 0.0
        %6711 = vmatpush1.msra.mxu0 0.0
        %6712 = vmatprep.subr.mxu0 0.0
        %6713 = vmatpush1.msra.mxu0 0.0
        %6714 = vmatprep.subr.mxu0 0.0
        %6715 = vmatpush1.msra.mxu0 0.0
        %6716 = vmatprep.subr.mxu0 0.0
        %6717 = vmatpush1.msra.mxu0 0.0
        %6718 = vmatprep.subr.mxu0 0.0
        %6719 = vmatpush1.msra.mxu0 0.0
        %6720 = vmatprep.subr.mxu0 0.0
        %6721 = vmatpush1.msra.mxu0 0.0
        %6722 = vmatprep.subr.mxu0 0.0
        %6723 = vmatpush1.msra.mxu0 0.0
        %6724 = vmatprep.subr.mxu0 0.0
        %6725 = vmatpush1.msra.mxu0 0.0
        %6726 = vmatprep.subr.mxu0 0.0
        %6727 = vmatpush1.msra.mxu0 0.0
        %6728 = vmatprep.subr.mxu0 0.0
        %6729 = vmatpush1.msra.mxu0 0.0
        %6730 = vmatprep.subr.mxu0 0.0
        %6731 = vmatpush1.msra.mxu0 0.0
        %6732 = vmatprep.mubr.f32.mxu0 0.0
        %v6733 = vand.u32 %v6642, 4294901760
        %v6734 = vsub.f32 %v6642, %v6733
        %v6735 = vand.u32 %v6734, 4294901760
        %v6736 = vsub.f32 %v6734, %v6735
        %v6737 = vand.u32 %v6736, 4294901760
        %6738 = vmatmul.mubr.f32.gmra.mrb[0].mxu0 %v6737
        %v6739 = vpop.f32.mrb[0].mxu0
        %v6740 = vadd.f32 0.0, %v6739
        %v6741 = vpop.f32.mrb[0].mxu0
        %6742 = vmatprep.mubr.f32.mxu0 0.0
        %v6743 = vand.u32 %v6649, 4294901760
        %v6744 = vsub.f32 %v6649, %v6743
        %v6745 = vand.u32 %v6744, 4294901760
        %v6746 = vsub.f32 %v6744, %v6745
        %v6747 = vand.u32 %v6746, 4294901760
        %6748 = vmatmul.mubr.f32.gmra.mrb[0].mxu0 %v6747
        %v6749 = vpop.f32.mrb[0].mxu0
        %v6750 = vadd.f32 0.0, %v6749
        %v6751 = vpop.f32.mrb[0].mxu0
        %6752 = vdwg.mxu0
        %6753 = vmatprep.subr.mxu0 0.0
        %v6754 = vand.u32 %v775, 4294901760
        %v6755 = vsub.f32 %v775, %v6754
        %v6756 = vand.u32 %v6755, 4294901760
        %v6757 = vsub.f32 %v6755, %v6756
        %v6758 = vand.u32 %v6757, 4294901760
        %6759 = vmatpush1.msra.mxu0 %v6758
        %6760 = vmatprep.subr.mxu0 0.0
        %v6761 = vand.u32 %v776, 4294901760
        %v6762 = vsub.f32 %v776, %v6761
        %v6763 = vand.u32 %v6762, 4294901760
        %v6764 = vsub.f32 %v6762, %v6763
        %v6765 = vand.u32 %v6764, 4294901760
        %6766 = vmatpush1.msra.mxu0 %v6765
        %6767 = vmatprep.subr.mxu0 0.0
        %v6768 = vand.u32 %v777, 4294901760
        %v6769 = vsub.f32 %v777, %v6768
        %v6770 = vand.u32 %v6769, 4294901760
        %v6771 = vsub.f32 %v6769, %v6770
        %v6772 = vand.u32 %v6771, 4294901760
        %6773 = vmatpush1.msra.mxu0 %v6772
        %6774 = vmatprep.subr.mxu0 0.0
        %v6775 = vand.u32 %v778, 4294901760
        %v6776 = vsub.f32 %v778, %v6775
        %v6777 = vand.u32 %v6776, 4294901760
        %v6778 = vsub.f32 %v6776, %v6777
        %v6779 = vand.u32 %v6778, 4294901760
        %6780 = vmatpush1.msra.mxu0 %v6779
        %6781 = vmatprep.subr.mxu0 0.0
        %v6782 = vand.u32 %v779, 4294901760
        %v6783 = vsub.f32 %v779, %v6782
        %v6784 = vand.u32 %v6783, 4294901760
        %v6785 = vsub.f32 %v6783, %v6784
        %v6786 = vand.u32 %v6785, 4294901760
        %6787 = vmatpush1.msra.mxu0 %v6786
        %6788 = vmatprep.subr.mxu0 0.0
        %v6789 = vand.u32 %v780, 4294901760
        %v6790 = vsub.f32 %v780, %v6789
        %v6791 = vand.u32 %v6790, 4294901760
        %v6792 = vsub.f32 %v6790, %v6791
        %v6793 = vand.u32 %v6792, 4294901760
        %6794 = vmatpush1.msra.mxu0 %v6793
        %6795 = vmatprep.subr.mxu0 0.0
        %v6796 = vand.u32 %v781, 4294901760
        %v6797 = vsub.f32 %v781, %v6796
        %v6798 = vand.u32 %v6797, 4294901760
        %v6799 = vsub.f32 %v6797, %v6798
        %v6800 = vand.u32 %v6799, 4294901760
        %6801 = vmatpush1.msra.mxu0 %v6800
        %6802 = vmatprep.subr.mxu0 0.0
        %v6803 = vand.u32 %v782, 4294901760
        %v6804 = vsub.f32 %v782, %v6803
        %v6805 = vand.u32 %v6804, 4294901760
        %v6806 = vsub.f32 %v6804, %v6805
        %v6807 = vand.u32 %v6806, 4294901760
        %6808 = vmatpush1.msra.mxu0 %v6807
        %6809 = vmatprep.subr.mxu0 0.0
        %v6810 = vand.u32 %v783, 4294901760
        %v6811 = vsub.f32 %v783, %v6810
        %v6812 = vand.u32 %v6811, 4294901760
        %v6813 = vsub.f32 %v6811, %v6812
        %v6814 = vand.u32 %v6813, 4294901760
        %6815 = vmatpush1.msra.mxu0 %v6814
        %6816 = vmatprep.subr.mxu0 0.0
        %v6817 = vand.u32 %v784, 4294901760
        %v6818 = vsub.f32 %v784, %v6817
        %v6819 = vand.u32 %v6818, 4294901760
        %v6820 = vsub.f32 %v6818, %v6819
        %v6821 = vand.u32 %v6820, 4294901760
        %6822 = vmatpush1.msra.mxu0 %v6821
        %6823 = vmatprep.subr.mxu0 0.0
        %v6824 = vand.u32 %v785, 4294901760
        %v6825 = vsub.f32 %v785, %v6824
        %v6826 = vand.u32 %v6825, 4294901760
        %v6827 = vsub.f32 %v6825, %v6826
        %v6828 = vand.u32 %v6827, 4294901760
        %6829 = vmatpush1.msra.mxu0 %v6828
        %6830 = vmatprep.subr.mxu0 0.0
        %v6831 = vand.u32 %v786, 4294901760
        %v6832 = vsub.f32 %v786, %v6831
        %v6833 = vand.u32 %v6832, 4294901760
        %v6834 = vsub.f32 %v6832, %v6833
        %v6835 = vand.u32 %v6834, 4294901760
        %6836 = vmatpush1.msra.mxu0 %v6835
        %6837 = vmatprep.subr.mxu0 0.0
        %v6838 = vand.u32 %v787, 4294901760
        %v6839 = vsub.f32 %v787, %v6838
        %v6840 = vand.u32 %v6839, 4294901760
        %v6841 = vsub.f32 %v6839, %v6840
        %v6842 = vand.u32 %v6841, 4294901760
        %6843 = vmatpush1.msra.mxu0 %v6842
        %6844 = vmatprep.subr.mxu0 0.0
        %v6845 = vand.u32 %v788, 4294901760
        %v6846 = vsub.f32 %v788, %v6845
        %v6847 = vand.u32 %v6846, 4294901760
        %v6848 = vsub.f32 %v6846, %v6847
        %v6849 = vand.u32 %v6848, 4294901760
        %6850 = vmatpush1.msra.mxu0 %v6849
        %6851 = vmatprep.subr.mxu0 0.0
        %v6852 = vand.u32 %v789, 4294901760
        %v6853 = vsub.f32 %v789, %v6852
        %v6854 = vand.u32 %v6853, 4294901760
        %v6855 = vsub.f32 %v6853, %v6854
        %v6856 = vand.u32 %v6855, 4294901760
        %6857 = vmatpush1.msra.mxu0 %v6856
        %6858 = vmatprep.subr.mxu0 0.0
        %v6859 = vand.u32 %v790, 4294901760
        %v6860 = vsub.f32 %v790, %v6859
        %v6861 = vand.u32 %v6860, 4294901760
        %v6862 = vsub.f32 %v6860, %v6861
        %v6863 = vand.u32 %v6862, 4294901760
        %6864 = vmatpush1.msra.mxu0 %v6863
        %6865 = vmatprep.subr.mxu0 0.0
        %6866 = vmatpush1.msra.mxu0 0.0
        %6867 = vmatprep.subr.mxu0 0.0
        %6868 = vmatpush1.msra.mxu0 0.0
        %6869 = vmatprep.subr.mxu0 0.0
        %6870 = vmatpush1.msra.mxu0 0.0
        %6871 = vmatprep.subr.mxu0 0.0
        %6872 = vmatpush1.msra.mxu0 0.0
        %6873 = vmatprep.subr.mxu0 0.0
        %6874 = vmatpush1.msra.mxu0 0.0
        %6875 = vmatprep.subr.mxu0 0.0
        %6876 = vmatpush1.msra.mxu0 0.0
        %6877 = vmatprep.subr.mxu0 0.0
        %6878 = vmatpush1.msra.mxu0 0.0
        %6879 = vmatprep.subr.mxu0 0.0
        %6880 = vmatpush1.msra.mxu0 0.0
        %6881 = vmatprep.subr.mxu0 0.0
        %6882 = vmatpush1.msra.mxu0 0.0
        %6883 = vmatprep.subr.mxu0 0.0
        %6884 = vmatpush1.msra.mxu0 0.0
        %6885 = vmatprep.subr.mxu0 0.0
        %6886 = vmatpush1.msra.mxu0 0.0
        %6887 = vmatprep.subr.mxu0 0.0
        %6888 = vmatpush1.msra.mxu0 0.0
        %6889 = vmatprep.subr.mxu0 0.0
        %6890 = vmatpush1.msra.mxu0 0.0
        %6891 = vmatprep.subr.mxu0 0.0
        %6892 = vmatpush1.msra.mxu0 0.0
        %6893 = vmatprep.subr.mxu0 0.0
        %6894 = vmatpush1.msra.mxu0 0.0
        %6895 = vmatprep.subr.mxu0 0.0
        %6896 = vmatpush1.msra.mxu0 0.0
        %6897 = vmatprep.mubr.f32.mxu0 0.0
        %v6898 = vand.u32 %v6642, 4294901760
        %6899 = vmatmul.mubr.f32.gmra.mrb[0].mxu0 %v6898
        %v6900 = vpop.f32.mrb[0].mxu0
        %v6901 = vadd.f32 %v6740, %v6900
        %v6902 = vpop.f32.mrb[0].mxu0
        %6903 = vmatprep.mubr.f32.mxu0 0.0
        %v6904 = vand.u32 %v6649, 4294901760
        %6905 = vmatmul.mubr.f32.gmra.mrb[0].mxu0 %v6904
        %v6906 = vpop.f32.mrb[0].mxu0
        %v6907 = vadd.f32 %v6750, %v6906
        %v6908 = vpop.f32.mrb[0].mxu0
        %6909 = vdwg.mxu0
        %6910 = vmatprep.subr.mxu0 0.0
        %v6911 = vand.u32 %v775, 4294901760
        %v6912 = vsub.f32 %v775, %v6911
        %6913 = vmatpush1.msra.mxu0 %v6912
        %6914 = vmatprep.subr.mxu0 0.0
        %v6915 = vand.u32 %v776, 4294901760
        %v6916 = vsub.f32 %v776, %v6915
        %6917 = vmatpush1.msra.mxu0 %v6916
        %6918 = vmatprep.subr.mxu0 0.0
        %v6919 = vand.u32 %v777, 4294901760
        %v6920 = vsub.f32 %v777, %v6919
        %6921 = vmatpush1.msra.mxu0 %v6920
        %6922 = vmatprep.subr.mxu0 0.0
        %v6923 = vand.u32 %v778, 4294901760
        %v6924 = vsub.f32 %v778, %v6923
        %6925 = vmatpush1.msra.mxu0 %v6924
        %6926 = vmatprep.subr.mxu0 0.0
        %v6927 = vand.u32 %v779, 4294901760
        %v6928 = vsub.f32 %v779, %v6927
        %6929 = vmatpush1.msra.mxu0 %v6928
        %6930 = vmatprep.subr.mxu0 0.0
        %v6931 = vand.u32 %v780, 4294901760
        %v6932 = vsub.f32 %v780, %v6931
        %6933 = vmatpush1.msra.mxu0 %v6932
        %6934 = vmatprep.subr.mxu0 0.0
        %v6935 = vand.u32 %v781, 4294901760
        %v6936 = vsub.f32 %v781, %v6935
        %6937 = vmatpush1.msra.mxu0 %v6936
        %6938 = vmatprep.subr.mxu0 0.0
        %v6939 = vand.u32 %v782, 4294901760
        %v6940 = vsub.f32 %v782, %v6939
        %6941 = vmatpush1.msra.mxu0 %v6940
        %6942 = vmatprep.subr.mxu0 0.0
        %v6943 = vand.u32 %v783, 4294901760
        %v6944 = vsub.f32 %v783, %v6943
        %6945 = vmatpush1.msra.mxu0 %v6944
        %6946 = vmatprep.subr.mxu0 0.0
        %v6947 = vand.u32 %v784, 4294901760
        %v6948 = vsub.f32 %v784, %v6947
        %6949 = vmatpush1.msra.mxu0 %v6948
        %6950 = vmatprep.subr.mxu0 0.0
        %v6951 = vand.u32 %v785, 4294901760
        %v6952 = vsub.f32 %v785, %v6951
        %6953 = vmatpush1.msra.mxu0 %v6952
        %6954 = vmatprep.subr.mxu0 0.0
        %v6955 = vand.u32 %v786, 4294901760
        %v6956 = vsub.f32 %v786, %v6955
        %6957 = vmatpush1.msra.mxu0 %v6956
        %6958 = vmatprep.subr.mxu0 0.0
        %v6959 = vand.u32 %v787, 4294901760
        %v6960 = vsub.f32 %v787, %v6959
        %6961 = vmatpush1.msra.mxu0 %v6960
        %6962 = vmatprep.subr.mxu0 0.0
        %v6963 = vand.u32 %v788, 4294901760
        %v6964 = vsub.f32 %v788, %v6963
        %6965 = vmatpush1.msra.mxu0 %v6964
        %6966 = vmatprep.subr.mxu0 0.0
        %v6967 = vand.u32 %v789, 4294901760
        %v6968 = vsub.f32 %v789, %v6967
        %6969 = vmatpush1.msra.mxu0 %v6968
        %6970 = vmatprep.subr.mxu0 0.0
        %v6971 = vand.u32 %v790, 4294901760
        %v6972 = vsub.f32 %v790, %v6971
        %6973 = vmatpush1.msra.mxu0 %v6972
        %6974 = vmatprep.subr.mxu0 0.0
        %6975 = vmatpush1.msra.mxu0 0.0
        %6976 = vmatprep.subr.mxu0 0.0
        %6977 = vmatpush1.msra.mxu0 0.0
        %6978 = vmatprep.subr.mxu0 0.0
        %6979 = vmatpush1.msra.mxu0 0.0
        %6980 = vmatprep.subr.mxu0 0.0
        %6981 = vmatpush1.msra.mxu0 0.0
        %6982 = vmatprep.subr.mxu0 0.0
        %6983 = vmatpush1.msra.mxu0 0.0
        %6984 = vmatprep.subr.mxu0 0.0
        %6985 = vmatpush1.msra.mxu0 0.0
        %6986 = vmatprep.subr.mxu0 0.0
        %6987 = vmatpush1.msra.mxu0 0.0
        %6988 = vmatprep.subr.mxu0 0.0
        %6989 = vmatpush1.msra.mxu0 0.0
        %6990 = vmatprep.subr.mxu0 0.0
        %6991 = vmatpush1.msra.mxu0 0.0
        %6992 = vmatprep.subr.mxu0 0.0
        %6993 = vmatpush1.msra.mxu0 0.0
        %6994 = vmatprep.subr.mxu0 0.0
        %6995 = vmatpush1.msra.mxu0 0.0
        %6996 = vmatprep.subr.mxu0 0.0
        %6997 = vmatpush1.msra.mxu0 0.0
        %6998 = vmatprep.subr.mxu0 0.0
        %6999 = vmatpush1.msra.mxu0 0.0
        %7000 = vmatprep.subr.mxu0 0.0
        %7001 = vmatpush1.msra.mxu0 0.0
        %7002 = vmatprep.subr.mxu0 0.0
        %7003 = vmatpush1.msra.mxu0 0.0
        %7004 = vmatprep.subr.mxu0 0.0
        %7005 = vmatpush1.msra.mxu0 0.0
        %7006 = vmatprep.mubr.f32.mxu0 0.0
        %v7007 = vand.u32 %v6642, 4294901760
        %v7008 = vsub.f32 %v6642, %v7007
        %7009 = vmatmul.mubr.f32.gmra.mrb[0].mxu0 %v7008
        %v7010 = vpop.f32.mrb[0].mxu0
        %v7011 = vadd.f32 %v6901, %v7010
        %v7012 = vpop.f32.mrb[0].mxu0
        %7013 = vmatprep.mubr.f32.mxu0 0.0
        %v7014 = vand.u32 %v6649, 4294901760
        %v7015 = vsub.f32 %v6649, %v7014
        %7016 = vmatmul.mubr.f32.gmra.mrb[0].mxu0 %v7015
        %v7017 = vpop.f32.mrb[0].mxu0
        %v7018 = vadd.f32 %v6907, %v7017
        %v7019 = vpop.f32.mrb[0].mxu0
        %7020 = vdwg.mxu0
        %7021 = vmatprep.subr.mxu0 0.0
        %v7022 = vand.u32 %v775, 4294901760
        %7023 = vmatpush1.msra.mxu0 %v7022
        %7024 = vmatprep.subr.mxu0 0.0
        %v7025 = vand.u32 %v776, 4294901760
        %7026 = vmatpush1.msra.mxu0 %v7025
        %7027 = vmatprep.subr.mxu0 0.0
        %v7028 = vand.u32 %v777, 4294901760
        %7029 = vmatpush1.msra.mxu0 %v7028
        %7030 = vmatprep.subr.mxu0 0.0
        %v7031 = vand.u32 %v778, 4294901760
        %7032 = vmatpush1.msra.mxu0 %v7031
        %7033 = vmatprep.subr.mxu0 0.0
        %v7034 = vand.u32 %v779, 4294901760
        %7035 = vmatpush1.msra.mxu0 %v7034
        %7036 = vmatprep.subr.mxu0 0.0
        %v7037 = vand.u32 %v780, 4294901760
        %7038 = vmatpush1.msra.mxu0 %v7037
        %7039 = vmatprep.subr.mxu0 0.0
        %v7040 = vand.u32 %v781, 4294901760
        %7041 = vmatpush1.msra.mxu0 %v7040
        %7042 = vmatprep.subr.mxu0 0.0
        %v7043 = vand.u32 %v782, 4294901760
        %7044 = vmatpush1.msra.mxu0 %v7043
        %7045 = vmatprep.subr.mxu0 0.0
        %v7046 = vand.u32 %v783, 4294901760
        %7047 = vmatpush1.msra.mxu0 %v7046
        %7048 = vmatprep.subr.mxu0 0.0
        %v7049 = vand.u32 %v784, 4294901760
        %7050 = vmatpush1.msra.mxu0 %v7049
        %7051 = vmatprep.subr.mxu0 0.0
        %v7052 = vand.u32 %v785, 4294901760
        %7053 = vmatpush1.msra.mxu0 %v7052
        %7054 = vmatprep.subr.mxu0 0.0
        %v7055 = vand.u32 %v786, 4294901760
        %7056 = vmatpush1.msra.mxu0 %v7055
        %7057 = vmatprep.subr.mxu0 0.0
        %v7058 = vand.u32 %v787, 4294901760
        %7059 = vmatpush1.msra.mxu0 %v7058
        %7060 = vmatprep.subr.mxu0 0.0
        %v7061 = vand.u32 %v788, 4294901760
        %7062 = vmatpush1.msra.mxu0 %v7061
        %7063 = vmatprep.subr.mxu0 0.0
        %v7064 = vand.u32 %v789, 4294901760
        %7065 = vmatpush1.msra.mxu0 %v7064
        %7066 = vmatprep.subr.mxu0 0.0
        %v7067 = vand.u32 %v790, 4294901760
        %7068 = vmatpush1.msra.mxu0 %v7067
        %7069 = vmatprep.subr.mxu0 0.0
        %7070 = vmatpush1.msra.mxu0 0.0
        %7071 = vmatprep.subr.mxu0 0.0
        %7072 = vmatpush1.msra.mxu0 0.0
        %7073 = vmatprep.subr.mxu0 0.0
        %7074 = vmatpush1.msra.mxu0 0.0
        %7075 = vmatprep.subr.mxu0 0.0
        %7076 = vmatpush1.msra.mxu0 0.0
        %7077 = vmatprep.subr.mxu0 0.0
        %7078 = vmatpush1.msra.mxu0 0.0
        %7079 = vmatprep.subr.mxu0 0.0
        %7080 = vmatpush1.msra.mxu0 0.0
        %7081 = vmatprep.subr.mxu0 0.0
        %7082 = vmatpush1.msra.mxu0 0.0
        %7083 = vmatprep.subr.mxu0 0.0
        %7084 = vmatpush1.msra.mxu0 0.0
        %7085 = vmatprep.subr.mxu0 0.0
        %7086 = vmatpush1.msra.mxu0 0.0
        %7087 = vmatprep.subr.mxu0 0.0
        %7088 = vmatpush1.msra.mxu0 0.0
        %7089 = vmatprep.subr.mxu0 0.0
        %7090 = vmatpush1.msra.mxu0 0.0
        %7091 = vmatprep.subr.mxu0 0.0
        %7092 = vmatpush1.msra.mxu0 0.0
        %7093 = vmatprep.subr.mxu0 0.0
        %7094 = vmatpush1.msra.mxu0 0.0
        %7095 = vmatprep.subr.mxu0 0.0
        %7096 = vmatpush1.msra.mxu0 0.0
        %7097 = vmatprep.subr.mxu0 0.0
        %7098 = vmatpush1.msra.mxu0 0.0
        %7099 = vmatprep.subr.mxu0 0.0
        %7100 = vmatpush1.msra.mxu0 0.0
        %7101 = vmatprep.mubr.f32.mxu0 0.0
        %v7102 = vand.u32 %v6642, 4294901760
        %v7103 = vsub.f32 %v6642, %v7102
        %v7104 = vand.u32 %v7103, 4294901760
        %7105 = vmatmul.mubr.f32.gmra.mrb[0].mxu0 %v7104
        %v7106 = vpop.f32.mrb[0].mxu0
        %v7107 = vadd.f32 %v7011, %v7106
        %v7108 = vpop.f32.mrb[0].mxu0
        %7109 = vmatprep.mubr.f32.mxu0 0.0
        %v7110 = vand.u32 %v6649, 4294901760
        %v7111 = vsub.f32 %v6649, %v7110
        %v7112 = vand.u32 %v7111, 4294901760
        %7113 = vmatmul.mubr.f32.gmra.mrb[0].mxu0 %v7112
        %v7114 = vpop.f32.mrb[0].mxu0
        %v7115 = vadd.f32 %v7018, %v7114
        %v7116 = vpop.f32.mrb[0].mxu0
        %7117 = vdwg.mxu0
        %7118 = vmatprep.subr.mxu0 0.0
        %v7119 = vand.u32 %v775, 4294901760
        %v7120 = vsub.f32 %v775, %v7119
        %v7121 = vand.u32 %v7120, 4294901760
        %7122 = vmatpush1.msra.mxu0 %v7121
        %7123 = vmatprep.subr.mxu0 0.0
        %v7124 = vand.u32 %v776, 4294901760
        %v7125 = vsub.f32 %v776, %v7124
        %v7126 = vand.u32 %v7125, 4294901760
        %7127 = vmatpush1.msra.mxu0 %v7126
        %7128 = vmatprep.subr.mxu0 0.0
        %v7129 = vand.u32 %v777, 4294901760
        %v7130 = vsub.f32 %v777, %v7129
        %v7131 = vand.u32 %v7130, 4294901760
        %7132 = vmatpush1.msra.mxu0 %v7131
        %7133 = vmatprep.subr.mxu0 0.0
        %v7134 = vand.u32 %v778, 4294901760
        %v7135 = vsub.f32 %v778, %v7134
        %v7136 = vand.u32 %v7135, 4294901760
        %7137 = vmatpush1.msra.mxu0 %v7136
        %7138 = vmatprep.subr.mxu0 0.0
        %v7139 = vand.u32 %v779, 4294901760
        %v7140 = vsub.f32 %v779, %v7139
        %v7141 = vand.u32 %v7140, 4294901760
        %7142 = vmatpush1.msra.mxu0 %v7141
        %7143 = vmatprep.subr.mxu0 0.0
        %v7144 = vand.u32 %v780, 4294901760
        %v7145 = vsub.f32 %v780, %v7144
        %v7146 = vand.u32 %v7145, 4294901760
        %7147 = vmatpush1.msra.mxu0 %v7146
        %7148 = vmatprep.subr.mxu0 0.0
        %v7149 = vand.u32 %v781, 4294901760
        %v7150 = vsub.f32 %v781, %v7149
        %v7151 = vand.u32 %v7150, 4294901760
        %7152 = vmatpush1.msra.mxu0 %v7151
        %7153 = vmatprep.subr.mxu0 0.0
        %v7154 = vand.u32 %v782, 4294901760
        %v7155 = vsub.f32 %v782, %v7154
        %v7156 = vand.u32 %v7155, 4294901760
        %7157 = vmatpush1.msra.mxu0 %v7156
        %7158 = vmatprep.subr.mxu0 0.0
        %v7159 = vand.u32 %v783, 4294901760
        %v7160 = vsub.f32 %v783, %v7159
        %v7161 = vand.u32 %v7160, 4294901760
        %7162 = vmatpush1.msra.mxu0 %v7161
        %7163 = vmatprep.subr.mxu0 0.0
        %v7164 = vand.u32 %v784, 4294901760
        %v7165 = vsub.f32 %v784, %v7164
        %v7166 = vand.u32 %v7165, 4294901760
        %7167 = vmatpush1.msra.mxu0 %v7166
        %7168 = vmatprep.subr.mxu0 0.0
        %v7169 = vand.u32 %v785, 4294901760
        %v7170 = vsub.f32 %v785, %v7169
        %v7171 = vand.u32 %v7170, 4294901760
        %7172 = vmatpush1.msra.mxu0 %v7171
        %7173 = vmatprep.subr.mxu0 0.0
        %v7174 = vand.u32 %v786, 4294901760
        %v7175 = vsub.f32 %v786, %v7174
        %v7176 = vand.u32 %v7175, 4294901760
        %7177 = vmatpush1.msra.mxu0 %v7176
        %7178 = vmatprep.subr.mxu0 0.0
        %v7179 = vand.u32 %v787, 4294901760
        %v7180 = vsub.f32 %v787, %v7179
        %v7181 = vand.u32 %v7180, 4294901760
        %7182 = vmatpush1.msra.mxu0 %v7181
        %7183 = vmatprep.subr.mxu0 0.0
        %v7184 = vand.u32 %v788, 4294901760
        %v7185 = vsub.f32 %v788, %v7184
        %v7186 = vand.u32 %v7185, 4294901760
        %7187 = vmatpush1.msra.mxu0 %v7186
        %7188 = vmatprep.subr.mxu0 0.0
        %v7189 = vand.u32 %v789, 4294901760
        %v7190 = vsub.f32 %v789, %v7189
        %v7191 = vand.u32 %v7190, 4294901760
        %7192 = vmatpush1.msra.mxu0 %v7191
        %7193 = vmatprep.subr.mxu0 0.0
        %v7194 = vand.u32 %v790, 4294901760
        %v7195 = vsub.f32 %v790, %v7194
        %v7196 = vand.u32 %v7195, 4294901760
        %7197 = vmatpush1.msra.mxu0 %v7196
        %7198 = vmatprep.subr.mxu0 0.0
        %7199 = vmatpush1.msra.mxu0 0.0
        %7200 = vmatprep.subr.mxu0 0.0
        %7201 = vmatpush1.msra.mxu0 0.0
        %7202 = vmatprep.subr.mxu0 0.0
        %7203 = vmatpush1.msra.mxu0 0.0
        %7204 = vmatprep.subr.mxu0 0.0
        %7205 = vmatpush1.msra.mxu0 0.0
        %7206 = vmatprep.subr.mxu0 0.0
        %7207 = vmatpush1.msra.mxu0 0.0
        %7208 = vmatprep.subr.mxu0 0.0
        %7209 = vmatpush1.msra.mxu0 0.0
        %7210 = vmatprep.subr.mxu0 0.0
        %7211 = vmatpush1.msra.mxu0 0.0
        %7212 = vmatprep.subr.mxu0 0.0
        %7213 = vmatpush1.msra.mxu0 0.0
        %7214 = vmatprep.subr.mxu0 0.0
        %7215 = vmatpush1.msra.mxu0 0.0
        %7216 = vmatprep.subr.mxu0 0.0
        %7217 = vmatpush1.msra.mxu0 0.0
        %7218 = vmatprep.subr.mxu0 0.0
        %7219 = vmatpush1.msra.mxu0 0.0
        %7220 = vmatprep.subr.mxu0 0.0
        %7221 = vmatpush1.msra.mxu0 0.0
        %7222 = vmatprep.subr.mxu0 0.0
        %7223 = vmatpush1.msra.mxu0 0.0
        %7224 = vmatprep.subr.mxu0 0.0
        %7225 = vmatpush1.msra.mxu0 0.0
        %7226 = vmatprep.subr.mxu0 0.0
        %7227 = vmatpush1.msra.mxu0 0.0
        %7228 = vmatprep.subr.mxu0 0.0
        %7229 = vmatpush1.msra.mxu0 0.0
        %7230 = vmatprep.mubr.f32.mxu0 0.0
        %v7231 = vand.u32 %v6642, 4294901760
        %7232 = vmatmul.mubr.f32.gmra.mrb[0].mxu0 %v7231
        %v7233 = vpop.f32.mrb[0].mxu0
        %v7234 = vadd.f32 %v7107, %v7233
        %v7235 = vpop.f32.mrb[0].mxu0
        %7236 = vmatprep.mubr.f32.mxu0 0.0
        %v7237 = vand.u32 %v6649, 4294901760
        %7238 = vmatmul.mubr.f32.gmra.mrb[0].mxu0 %v7237
        %v7239 = vpop.f32.mrb[0].mxu0
        %v7240 = vadd.f32 %v7115, %v7239
        %v7241 = vpop.f32.mrb[0].mxu0
        %7242 = vdwg.mxu0
        %7243 = vmatprep.subr.mxu0 0.0
        %v7244 = vand.u32 %v775, 4294901760
        %7245 = vmatpush1.msra.mxu0 %v7244
        %7246 = vmatprep.subr.mxu0 0.0
        %v7247 = vand.u32 %v776, 4294901760
        %7248 = vmatpush1.msra.mxu0 %v7247
        %7249 = vmatprep.subr.mxu0 0.0
        %v7250 = vand.u32 %v777, 4294901760
        %7251 = vmatpush1.msra.mxu0 %v7250
        %7252 = vmatprep.subr.mxu0 0.0
        %v7253 = vand.u32 %v778, 4294901760
        %7254 = vmatpush1.msra.mxu0 %v7253
        %7255 = vmatprep.subr.mxu0 0.0
        %v7256 = vand.u32 %v779, 4294901760
        %7257 = vmatpush1.msra.mxu0 %v7256
        %7258 = vmatprep.subr.mxu0 0.0
        %v7259 = vand.u32 %v780, 4294901760
        %7260 = vmatpush1.msra.mxu0 %v7259
        %7261 = vmatprep.subr.mxu0 0.0
        %v7262 = vand.u32 %v781, 4294901760
        %7263 = vmatpush1.msra.mxu0 %v7262
        %7264 = vmatprep.subr.mxu0 0.0
        %v7265 = vand.u32 %v782, 4294901760
        %7266 = vmatpush1.msra.mxu0 %v7265
        %7267 = vmatprep.subr.mxu0 0.0
        %v7268 = vand.u32 %v783, 4294901760
        %7269 = vmatpush1.msra.mxu0 %v7268
        %7270 = vmatprep.subr.mxu0 0.0
        %v7271 = vand.u32 %v784, 4294901760
        %7272 = vmatpush1.msra.mxu0 %v7271
        %7273 = vmatprep.subr.mxu0 0.0
        %v7274 = vand.u32 %v785, 4294901760
        %7275 = vmatpush1.msra.mxu0 %v7274
        %7276 = vmatprep.subr.mxu0 0.0
        %v7277 = vand.u32 %v786, 4294901760
        %7278 = vmatpush1.msra.mxu0 %v7277
        %7279 = vmatprep.subr.mxu0 0.0
        %v7280 = vand.u32 %v787, 4294901760
        %7281 = vmatpush1.msra.mxu0 %v7280
        %7282 = vmatprep.subr.mxu0 0.0
        %v7283 = vand.u32 %v788, 4294901760
        %7284 = vmatpush1.msra.mxu0 %v7283
        %7285 = vmatprep.subr.mxu0 0.0
        %v7286 = vand.u32 %v789, 4294901760
        %7287 = vmatpush1.msra.mxu0 %v7286
        %7288 = vmatprep.subr.mxu0 0.0
        %v7289 = vand.u32 %v790, 4294901760
        %7290 = vmatpush1.msra.mxu0 %v7289
        %7291 = vmatprep.subr.mxu0 0.0
        %7292 = vmatpush1.msra.mxu0 0.0
        %7293 = vmatprep.subr.mxu0 0.0
        %7294 = vmatpush1.msra.mxu0 0.0
        %7295 = vmatprep.subr.mxu0 0.0
        %7296 = vmatpush1.msra.mxu0 0.0
        %7297 = vmatprep.subr.mxu0 0.0
        %7298 = vmatpush1.msra.mxu0 0.0
        %7299 = vmatprep.subr.mxu0 0.0
        %7300 = vmatpush1.msra.mxu0 0.0
        %7301 = vmatprep.subr.mxu0 0.0
        %7302 = vmatpush1.msra.mxu0 0.0
        %7303 = vmatprep.subr.mxu0 0.0
        %7304 = vmatpush1.msra.mxu0 0.0
        %7305 = vmatprep.subr.mxu0 0.0
        %7306 = vmatpush1.msra.mxu0 0.0
        %7307 = vmatprep.subr.mxu0 0.0
        %7308 = vmatpush1.msra.mxu0 0.0
        %7309 = vmatprep.subr.mxu0 0.0
        %7310 = vmatpush1.msra.mxu0 0.0
        %7311 = vmatprep.subr.mxu0 0.0
        %7312 = vmatpush1.msra.mxu0 0.0
        %7313 = vmatprep.subr.mxu0 0.0
        %7314 = vmatpush1.msra.mxu0 0.0
        %7315 = vmatprep.subr.mxu0 0.0
        %7316 = vmatpush1.msra.mxu0 0.0
        %7317 = vmatprep.subr.mxu0 0.0
        %7318 = vmatpush1.msra.mxu0 0.0
        %7319 = vmatprep.subr.mxu0 0.0
        %7320 = vmatpush1.msra.mxu0 0.0
        %7321 = vmatprep.subr.mxu0 0.0
        %7322 = vmatpush1.msra.mxu0 0.0
        %7323 = vmatprep.mubr.f32.mxu0 0.0
        %v7324 = vand.u32 %v6642, 4294901760
        %7325 = vmatmul.mubr.f32.gmra.mrb[0].mxu0 %v7324
        %v7326 = vpop.f32.mrb[0].mxu0
        %v7327 = vadd.f32 %v7234, %v7326
        %v7328 = vpop.f32.mrb[0].mxu0
        %7329 = vmatprep.mubr.f32.mxu0 0.0
        %v7330 = vand.u32 %v6649, 4294901760
        %7331 = vmatmul.mubr.f32.gmra.mrb[0].mxu0 %v7330
        %v7332 = vpop.f32.mrb[0].mxu0
        %v7333 = vadd.f32 %v7240, %v7332
        %v7334 = vpop.f32.mrb[0].mxu0
        %7335 = vdwg.mxu0
        %7336 = vadd.xlane.f32.xlu0 %v7327
        %v7337 = vpop.xlane.xlu0 %7336
        %7338 = vadd.xlane.f32.xlu0 %v7333
        %v7339 = vpop.xlane.xlu0 %7338
        %v7340 = vmul.f32 %v7337, 0.0078125
        %v7341 = vmul.f32 %v7339, 0.0078125
        %v7342 = vsub.f32 %v7327, %v7340
        %v7343 = vsub.f32 %v7333, %v7341
        %v7344 = vmul.f32 %v7342, %v7342
        %v7345 = vmul.f32 %v7343, %v7343
        %7346 = vadd.xlane.f32.xlu0 %v7344
        %v7347 = vpop.xlane.xlu0 %7346
        %7348 = vadd.xlane.f32.xlu0 %v7345
        %v7349 = vpop.xlane.xlu0 %7348
        %v7350 = vmul.f32 %v7347, 0.007936508
        %v7351 = vmul.f32 %v7349, 0.007936508
        %v7352 = vrsqrt.pop %v7350
        %v7353 = vmul.f32 %v7350, %v7352
        %vm7354 = vcmp.eq.f32.partialorder %v7350, inf
        %v7355 = vsel %vm7354, %v7350, %v7353
        %vm7356 = vcmp.eq.f32.partialorder %v7350, 0.0
        %v7357 = vand.u32 %v7350, 2147483648
        %v7358 = vsel %vm7356, %v7357, %v7355
        %v7359 = vrsqrt.pop %v7351
        %v7360 = vmul.f32 %v7351, %v7359
        %vm7361 = vcmp.eq.f32.partialorder %v7351, inf
        %v7362 = vsel %vm7361, %v7351, %v7360
        %vm7363 = vcmp.eq.f32.partialorder %v7351, 0.0
        %v7364 = vand.u32 %v7351, 2147483648
        %v7365 = vsel %vm7363, %v7364, %v7362
        %v7366 = vadd.f32 %v7358, 1e-05
        %v7367 = vadd.f32 %v7365, 1e-05
        %v7368 = vrcp.pop %v7366
        %v7369 = vrcp.pop %v7367
        %v7370 = vmul.f32 %v7342, %v7368
        %v7371 = vmul.f32 %v7343, %v7369
        %s7372 = scalar_lea.vmem %s679, 16 [#allocation2]
        %v7373 = vld [vmem:[%s7372] sm:$0xff]
        %7375 = vset.pattern.permute.xlu0 0
        %7376 = vperm.xlu0 %7375, %v7373
        %v7377 = vpop.permute.xlu0 %7376
        %v7379 = vmul.f32 %v7370, %v7377
        %v7380 = vmul.f32 %v7371, %v7377
        %s7381 = scalar_lea.vmem %s686, 16 [#allocation3]
        %v7382 = vld [vmem:[%s7381] sm:$0xff]
        %7384 = vset.pattern.permute.xlu0 0
        %7385 = vperm.xlu0 %7384, %v7382
        %v7386 = vpop.permute.xlu0 %7385
        %v7388 = vadd.f32 %v7379, %v7386
        %v7389 = vadd.f32 %v7380, %v7386
        %v7390 = vxor.u32 %v7388, 2147483648
        %v7391 = vxor.u32 %v7389, 2147483648
        %v7392 = vmul.f32 %v7390, 1.442695
        %v7393 = vpow.pop %v7392
        %v7394 = vmul.f32 %v7391, 1.442695
        %v7395 = vpow.pop %v7394
        %v7396 = vadd.f32 %v7393, 1.0
        %v7397 = vadd.f32 %v7395, 1.0
        %v7398 = vrcp.pop %v7396
        %v7399 = vmul.f32 1.0, %v7398
        %v7400 = vrcp.pop %v7397
        %v7401 = vmul.f32 1.0, %v7400
        %v7402 = vadd.f32 %v5188, %v5206
        %v7403 = vadd.f32 %v5189, %v5207
        %v7404 = vadd.f32 %v5190, %v5208
        %v7405 = vadd.f32 %v5191, %v5209
        %v7406 = vadd.f32 %v5192, %v5210
        %v7407 = vadd.f32 %v5193, %v5211
        %v7408 = vadd.f32 %v5194, %v5212
        %v7409 = vadd.f32 %v5195, %v5213
        %v7410 = vadd.f32 %v5196, %v5214
        %v7411 = vadd.f32 %v5197, %v5215
        %v7412 = vadd.f32 %v5198, %v5216
        %v7413 = vadd.f32 %v5199, %v5217
        %v7414 = vadd.f32 %v5200, %v5218
        %v7415 = vadd.f32 %v5201, %v5219
        %v7416 = vadd.f32 %v5202, %v5220
        %v7417 = vadd.f32 %v5203, %v5221
        %v7418 = vadd.f32 %v5204, %v7399
        %v7419 = vadd.f32 %v5205, %v7401
        %v7420 = vmul.f32 %v7418, 0.11111111
        %v7421 = vmul.f32 %v7419, 0.11111111
        %v7424 = vcombine.high %v7420, %v7420
        %v7426 = vunpack.c.l.s4 1966171168
        %v7427 = vunpack.c.0.s8 %v7426
        %v7428 = vlaneseq
        %v7429 = vshrl.u32 %v7428, 7
        %v7430 = vsub.s32 %v7427, %v7429
        %v7431 = vrot.slane %v7420, %v7430
        %v7433 = vunpack.c.l.s4 1966171168
        %v7434 = vunpack.c.0.s8 %v7433
        %v7435 = vlaneseq
        %v7436 = vshrl.u32 %v7435, 7
        %v7437 = vsub.s32 %v7434, %v7436
        %v7438 = vrot.slane %v7424, %v7437
        %v7439 = vcombine.high %v7431, %v7431
        %v7440 = vcombine.high %v7438, %v7438
        %v7442 = vunpack.c.l.s4 1966171168
        %v7443 = vunpack.c.0.s8 %v7442
        %v7444 = vlaneseq
        %v7445 = vshrl.u32 %v7444, 7
        %v7446 = vsub.s32 %v7443, %v7445
        %v7447 = vrot.slane %v7431, %v7446
        %v7449 = vunpack.c.l.s4 1966171168
        %v7450 = vunpack.c.0.s8 %v7449
        %v7451 = vlaneseq
        %v7452 = vshrl.u32 %v7451, 7
        %v7453 = vsub.s32 %v7450, %v7452
        %v7454 = vrot.slane %v7438, %v7453
        %v7456 = vunpack.c.l.s4 1966171168
        %v7457 = vunpack.c.0.s8 %v7456
        %v7458 = vlaneseq
        %v7459 = vshrl.u32 %v7458, 7
        %v7460 = vsub.s32 %v7457, %v7459
        %v7461 = vrot.slane %v7439, %v7460
        %v7463 = vunpack.c.l.s4 1966171168
        %v7464 = vunpack.c.0.s8 %v7463
        %v7465 = vlaneseq
        %v7466 = vshrl.u32 %v7465, 7
        %v7467 = vsub.s32 %v7464, %v7466
        %v7468 = vrot.slane %v7440, %v7467
        %v7469 = vcombine.high %v7447, %v7447
        %v7470 = vcombine.high %v7454, %v7454
        %v7471 = vcombine.high %v7461, %v7461
        %v7472 = vcombine.high %v7468, %v7468
        %v7473 = vcombine.high %v7421, %v7421
        %v7475 = vunpack.c.l.s4 1966171168
        %v7476 = vunpack.c.0.s8 %v7475
        %v7477 = vlaneseq
        %v7478 = vshrl.u32 %v7477, 7
        %v7479 = vsub.s32 %v7476, %v7478
        %v7480 = vrot.slane %v7421, %v7479
        %v7482 = vunpack.c.l.s4 1966171168
        %v7483 = vunpack.c.0.s8 %v7482
        %v7484 = vlaneseq
        %v7485 = vshrl.u32 %v7484, 7
        %v7486 = vsub.s32 %v7483, %v7485
        %v7487 = vrot.slane %v7473, %v7486
        %v7488 = vcombine.high %v7480, %v7480
        %v7489 = vcombine.high %v7487, %v7487
        %v7491 = vunpack.c.l.s4 1966171168
        %v7492 = vunpack.c.0.s8 %v7491
        %v7493 = vlaneseq
        %v7494 = vshrl.u32 %v7493, 7
        %v7495 = vsub.s32 %v7492, %v7494
        %v7496 = vrot.slane %v7480, %v7495
        %v7498 = vunpack.c.l.s4 1966171168
        %v7499 = vunpack.c.0.s8 %v7498
        %v7500 = vlaneseq
        %v7501 = vshrl.u32 %v7500, 7
        %v7502 = vsub.s32 %v7499, %v7501
        %v7503 = vrot.slane %v7487, %v7502
        %v7505 = vunpack.c.l.s4 1966171168
        %v7506 = vunpack.c.0.s8 %v7505
        %v7507 = vlaneseq
        %v7508 = vshrl.u32 %v7507, 7
        %v7509 = vsub.s32 %v7506, %v7508
        %v7510 = vrot.slane %v7488, %v7509
        %v7512 = vunpack.c.l.s4 1966171168
        %v7513 = vunpack.c.0.s8 %v7512
        %v7514 = vlaneseq
        %v7515 = vshrl.u32 %v7514, 7
        %v7516 = vsub.s32 %v7513, %v7515
        %v7517 = vrot.slane %v7489, %v7516
        %v7518 = vcombine.high %v7496, %v7496
        %v7519 = vcombine.high %v7503, %v7503
        %v7520 = vcombine.high %v7510, %v7510
        %v7521 = vcombine.high %v7517, %v7517
        %v7522 = vlaneseq
        %v7523 = vshrl.u32 %v7522, 7
        %v7524 = vsub.s32 0, %v7523
        %v7525 = vrot.slane %v7447, %v7524
        %v7526 = vlaneseq
        %v7527 = vshrl.u32 %v7526, 7
        %v7528 = vsub.s32 0, %v7527
        %v7529 = vrot.slane %v7461, %v7528
        %v7530 = vlaneseq
        %v7531 = vshrl.u32 %v7530, 7
        %v7532 = vsub.s32 0, %v7531
        %v7533 = vrot.slane %v7469, %v7532
        %v7534 = vlaneseq
        %v7535 = vshrl.u32 %v7534, 7
        %v7536 = vsub.s32 0, %v7535
        %v7537 = vrot.slane %v7471, %v7536
        %v7538 = vlaneseq
        %v7539 = vshrl.u32 %v7538, 7
        %v7540 = vsub.s32 0, %v7539
        %v7541 = vrot.slane %v7454, %v7540
        %v7542 = vlaneseq
        %v7543 = vshrl.u32 %v7542, 7
        %v7544 = vsub.s32 0, %v7543
        %v7545 = vrot.slane %v7468, %v7544
        %v7546 = vlaneseq
        %v7547 = vshrl.u32 %v7546, 7
        %v7548 = vsub.s32 0, %v7547
        %v7549 = vrot.slane %v7470, %v7548
        %v7550 = vlaneseq
        %v7551 = vshrl.u32 %v7550, 7
        %v7552 = vsub.s32 0, %v7551
        %v7553 = vrot.slane %v7472, %v7552
        %v7554 = vlaneseq
        %v7555 = vshrl.u32 %v7554, 7
        %v7556 = vsub.s32 0, %v7555
        %v7557 = vrot.slane %v7496, %v7556
        %v7558 = vlaneseq
        %v7559 = vshrl.u32 %v7558, 7
        %v7560 = vsub.s32 0, %v7559
        %v7561 = vrot.slane %v7510, %v7560
        %v7562 = vlaneseq
        %v7563 = vshrl.u32 %v7562, 7
        %v7564 = vsub.s32 0, %v7563
        %v7565 = vrot.slane %v7518, %v7564
        %v7566 = vlaneseq
        %v7567 = vshrl.u32 %v7566, 7
        %v7568 = vsub.s32 0, %v7567
        %v7569 = vrot.slane %v7520, %v7568
        %v7570 = vlaneseq
        %v7571 = vshrl.u32 %v7570, 7
        %v7572 = vsub.s32 0, %v7571
        %v7573 = vrot.slane %v7503, %v7572
        %v7574 = vlaneseq
        %v7575 = vshrl.u32 %v7574, 7
        %v7576 = vsub.s32 0, %v7575
        %v7577 = vrot.slane %v7517, %v7576
        %v7578 = vlaneseq
        %v7579 = vshrl.u32 %v7578, 7
        %v7580 = vsub.s32 0, %v7579
        %v7581 = vrot.slane %v7519, %v7580
        %v7582 = vlaneseq
        %v7583 = vshrl.u32 %v7582, 7
        %v7584 = vsub.s32 0, %v7583
        %v7585 = vrot.slane %v7521, %v7584
        %v7602 = vmul.f32 %v7402, %v7525
        %v7603 = vmul.f32 %v7403, %v7529
        %v7604 = vmul.f32 %v7404, %v7533
        %v7605 = vmul.f32 %v7405, %v7537
        %v7606 = vmul.f32 %v7406, %v7541
        %v7607 = vmul.f32 %v7407, %v7545
        %v7608 = vmul.f32 %v7408, %v7549
        %v7609 = vmul.f32 %v7409, %v7553
        %v7610 = vmul.f32 %v7410, %v7557
        %v7611 = vmul.f32 %v7411, %v7561
        %v7612 = vmul.f32 %v7412, %v7565
        %v7613 = vmul.f32 %v7413, %v7569
        %v7614 = vmul.f32 %v7414, %v7573
        %v7615 = vmul.f32 %v7415, %v7577
        %v7616 = vmul.f32 %v7416, %v7581
        %v7617 = vmul.f32 %v7417, %v7585
        %7618 = vst [vmem:[%s750] sm:$0xff] %v7602
        %7619 = vst [vmem:[%s750 + $0x8] sm:$0xff] %v7603
        %7620 = vst [vmem:[%s750 + $0x10] sm:$0xff] %v7604
        %7621 = vst [vmem:[%s750 + $0x18] sm:$0xff] %v7605
        %7622 = vst [vmem:[%s750 + $0x20] sm:$0xff] %v7606
        %7623 = vst [vmem:[%s750 + $0x28] sm:$0xff] %v7607
        %7624 = vst [vmem:[%s750 + $0x30] sm:$0xff] %v7608
        %7625 = vst [vmem:[%s750 + $0x38] sm:$0xff] %v7609
        %7626 = vst [vmem:[%s750 + $0x40] sm:$0xff] %v7610
        %7627 = vst [vmem:[%s750 + $0x48] sm:$0xff] %v7611
        %7628 = vst [vmem:[%s750 + $0x50] sm:$0xff] %v7612
        %7629 = vst [vmem:[%s750 + $0x58] sm:$0xff] %v7613
        %7630 = vst [vmem:[%s750 + $0x60] sm:$0xff] %v7614
        %7631 = vst [vmem:[%s750 + $0x68] sm:$0xff] %v7615
        %7632 = vst [vmem:[%s750 + $0x70] sm:$0xff] %v7616
        %7633 = vst [vmem:[%s750 + $0x78] sm:$0xff] %v7617
        %s7634 = sand.u32 %s218, 1
        %s7635 = sand.u32 %s218, 1
        %s7636 = smul.addr %s7635, 128
        %s7637 = scalar_lea.vmem [#allocation7], %s7636
        // Predicated region
        $region239: #{spatial_weight_forward.1} parent=217 // pred_check
          %p7638 = pneg %p228
        $region240: #{spatial_weight_forward.1} parent=217 // pred_check_branch
          %7640 = sbr.rel (%p7638) target = $region242
        $region241: #{spatial_weight_forward.1} parent=217 // pred_region
          %s7641 = smul.u32 2, %s22
          %s7642 = smul.u32 8, %s23
          %s7643 = smul.addr %s7641, 32
          %s7644 = sadd.s32 %s7642, %s7643
          %s7645 = smul.addr %s7644, 8
          %s7646 = scalar_lea.vmem %s7, %s7645
          // Predicated region
          $region243: #{spatial_weight_forward.1} parent=241 // pred_check
            _
          $region244: #{spatial_weight_forward.1} parent=241 // pred_check_branch
            %7648 = sbr.rel (0) target = $region246
          $region245: #{spatial_weight_forward.1} parent=241 // pred_region
            // Predicated region
            $region247: #{spatial_weight_forward.1} parent=245 // pred_check
              _
            $region248: #{spatial_weight_forward.1} parent=245 // pred_check_branch
              %7650 = sbr.rel (0) target = $region250
            $region249: #{spatial_weight_forward.1} parent=245 // pred_region
              // Predicated region
              $region262: #{spatial_weight_forward.1} parent=249 // pred_check
                _
              $region263: #{spatial_weight_forward.1} parent=249 // pred_check_branch
                %7695 = sbr.rel (0) target = $region265
              $region264: #{spatial_weight_forward.1} parent=249 // pred_region
                loop: start=0, step=1, limit=1
                $region266: #{spatial_weight_forward.1} parent=264 // loop_pre_header
                  _
                $region267: #{spatial_weight_forward.1} parent=264 // loop_header
                  %s7697 = sphi 0, %s7701
                  %p7698 = scmp.ge.s32.totalorder %s7697, 1
                  %s7702 = sphi %s7637, %s7637
                  %s7703 = sphi %s7646, %s7646
                $region268: #{spatial_weight_forward.1} parent=264 // loop_header_branch
                  %7700 = sbr.rel (%p7698) target = $region272
                $region269: #{spatial_weight_forward.1} parent=264 // loop_body
                  %v7704 = vld [vmem:[%s7702] sm:$0xff]
                  %7705 = vst [vmem:[%s7703] sm:$0xff] %v7704
                  %v7706 = vld [vmem:[%s7702 + $0x8] sm:$0xff]
                  %7707 = vst [vmem:[%s7703 + $0x8] sm:$0xff] %v7706
                  %v7708 = vld [vmem:[%s7702 + $0x10] sm:$0xff]
                  %7709 = vst [vmem:[%s7703 + $0x10] sm:$0xff] %v7708
                  %v7710 = vld [vmem:[%s7702 + $0x18] sm:$0xff]
                  %7711 = vst [vmem:[%s7703 + $0x18] sm:$0xff] %v7710
                  %v7712 = vld [vmem:[%s7702 + $0x20] sm:$0xff]
                  %7713 = vst [vmem:[%s7703 + $0x20] sm:$0xff] %v7712
                  %v7714 = vld [vmem:[%s7702 + $0x28] sm:$0xff]
                  %7715 = vst [vmem:[%s7703 + $0x28] sm:$0xff] %v7714
                  %v7716 = vld [vmem:[%s7702 + $0x30] sm:$0xff]
                  %7717 = vst [vmem:[%s7703 + $0x30] sm:$0xff] %v7716
                  %v7718 = vld [vmem:[%s7702 + $0x38] sm:$0xff]
                  %7719 = vst [vmem:[%s7703 + $0x38] sm:$0xff] %v7718
                  %v7720 = vld [vmem:[%s7702 + $0x40] sm:$0xff]
                  %7721 = vst [vmem:[%s7703 + $0x100] sm:$0xff] %v7720
                  %v7722 = vld [vmem:[%s7702 + $0x48] sm:$0xff]
                  %7723 = vst [vmem:[%s7703 + $0x108] sm:$0xff] %v7722
                  %v7724 = vld [vmem:[%s7702 + $0x50] sm:$0xff]
                  %7725 = vst [vmem:[%s7703 + $0x110] sm:$0xff] %v7724
                  %v7726 = vld [vmem:[%s7702 + $0x58] sm:$0xff]
                  %7727 = vst [vmem:[%s7703 + $0x118] sm:$0xff] %v7726
                  %v7728 = vld [vmem:[%s7702 + $0x60] sm:$0xff]
                  %7729 = vst [vmem:[%s7703 + $0x120] sm:$0xff] %v7728
                  %v7730 = vld [vmem:[%s7702 + $0x68] sm:$0xff]
                  %7731 = vst [vmem:[%s7703 + $0x128] sm:$0xff] %v7730
                  %v7732 = vld [vmem:[%s7702 + $0x70] sm:$0xff]
                  %7733 = vst [vmem:[%s7703 + $0x130] sm:$0xff] %v7732
                  %v7734 = vld [vmem:[%s7702 + $0x78] sm:$0xff]
                  %7735 = vst [vmem:[%s7703 + $0x138] sm:$0xff] %v7734
                $region270: #{spatial_weight_forward.1} parent=264 // loop_footer
                  %s7701 = sadd.s32 1, %s7697
                $region271: #{spatial_weight_forward.1} parent=264 // loop_footer_branch
                  %7696 = sbr.rel target = $region267
                $region272: #{spatial_weight_forward.1} parent=264 // loop_exit
                  _
              $region265: #{spatial_weight_forward.1} parent=249 // pred_fallthru
                _
              // Predicated region
              $region273: #{spatial_weight_forward.1} parent=249 // pred_check
                _
              $region274: #{spatial_weight_forward.1} parent=249 // pred_check_branch
                %7737 = sbr.rel target = $region276
              $region275: #{spatial_weight_forward.1} parent=249 // pred_region
                _
              $region276: #{spatial_weight_forward.1} parent=249 // pred_fallthru
                _
            $region250: #{spatial_weight_forward.1} parent=245 // pred_fallthru
              _
            // Predicated region
            $region251: #{spatial_weight_forward.1} parent=245 // pred_check
              _
            $region252: #{spatial_weight_forward.1} parent=245 // pred_check_branch
              %7652 = sbr.rel target = $region254
            $region253: #{spatial_weight_forward.1} parent=245 // pred_region
              loop: start=0, step=1, limit=1
              $region255: #{spatial_weight_forward.1} parent=253 // loop_pre_header
                _
              $region256: #{spatial_weight_forward.1} parent=253 // loop_header
                %s7655 = sphi 0, %s7659
                %p7656 = scmp.ge.s32.totalorder %s7655, 1
                %s7660 = sphi %s7637, %s7637
                %s7661 = sphi %s7646, %s7646
              $region257: #{spatial_weight_forward.1} parent=253 // loop_header_branch
                %7658 = sbr.rel (%p7656) target = $region261
              $region258: #{spatial_weight_forward.1} parent=253 // loop_body
                %v7662 = vld [vmem:[%s7660] sm:$0xff]
                %7663 = vst [vmem:[%s7661] sm:$0xff] %v7662
                %v7664 = vld [vmem:[%s7660 + $0x8] sm:$0xff]
                %7665 = vst [vmem:[%s7661 + $0x8] sm:$0xff] %v7664
                %v7666 = vld [vmem:[%s7660 + $0x10] sm:$0xff]
                %7667 = vst [vmem:[%s7661 + $0x10] sm:$0xff] %v7666
                %v7668 = vld [vmem:[%s7660 + $0x18] sm:$0xff]
                %7669 = vst [vmem:[%s7661 + $0x18] sm:$0xff] %v7668
                %v7670 = vld [vmem:[%s7660 + $0x20] sm:$0xff]
                %7671 = vst [vmem:[%s7661 + $0x20] sm:$0xff] %v7670
                %v7672 = vld [vmem:[%s7660 + $0x28] sm:$0xff]
                %7673 = vst [vmem:[%s7661 + $0x28] sm:$0xff] %v7672
                %v7674 = vld [vmem:[%s7660 + $0x30] sm:$0xff]
                %7675 = vst [vmem:[%s7661 + $0x30] sm:$0xff] %v7674
                %v7676 = vld [vmem:[%s7660 + $0x38] sm:$0xff]
                %7677 = vst [vmem:[%s7661 + $0x38] sm:$0xff] %v7676
                %v7678 = vld [vmem:[%s7660 + $0x40] sm:$0xff]
                %7679 = vst [vmem:[%s7661 + $0x100] sm:$0xff] %v7678
                %v7680 = vld [vmem:[%s7660 + $0x48] sm:$0xff]
                %7681 = vst [vmem:[%s7661 + $0x108] sm:$0xff] %v7680
                %v7682 = vld [vmem:[%s7660 + $0x50] sm:$0xff]
                %7683 = vst [vmem:[%s7661 + $0x110] sm:$0xff] %v7682
                %v7684 = vld [vmem:[%s7660 + $0x58] sm:$0xff]
                %7685 = vst [vmem:[%s7661 + $0x118] sm:$0xff] %v7684
                %v7686 = vld [vmem:[%s7660 + $0x60] sm:$0xff]
                %7687 = vst [vmem:[%s7661 + $0x120] sm:$0xff] %v7686
                %v7688 = vld [vmem:[%s7660 + $0x68] sm:$0xff]
                %7689 = vst [vmem:[%s7661 + $0x128] sm:$0xff] %v7688
                %v7690 = vld [vmem:[%s7660 + $0x70] sm:$0xff]
                %7691 = vst [vmem:[%s7661 + $0x130] sm:$0xff] %v7690
                %v7692 = vld [vmem:[%s7660 + $0x78] sm:$0xff]
                %7693 = vst [vmem:[%s7661 + $0x138] sm:$0xff] %v7692
              $region259: #{spatial_weight_forward.1} parent=253 // loop_footer
                %s7659 = sadd.s32 1, %s7655
              $region260: #{spatial_weight_forward.1} parent=253 // loop_footer_branch
                %7654 = sbr.rel target = $region256
              $region261: #{spatial_weight_forward.1} parent=253 // loop_exit
                _
            $region254: #{spatial_weight_forward.1} parent=245 // pred_fallthru
              _
          $region246: #{spatial_weight_forward.1} parent=241 // pred_fallthru
            _
          %7738 = vnop
        $region242: #{spatial_weight_forward.1} parent=217 // pred_fallthru
          _
      $region218: #{spatial_weight_forward.1} parent=5 // pred_fallthru
        _
      %p7739 = scmp.le.s32.totalorder 2, %s13
      // Predicated region
      $region277: #{spatial_weight_forward.1} parent=5 // pred_check
        %p7740 = pneg %p7739
      $region278: #{spatial_weight_forward.1} parent=5 // pred_check_branch
        %7742 = sbr.rel (%p7740) target = $region280
      $region279: #{spatial_weight_forward.1} parent=5 // pred_region
        %s7743 = ssub.s32 %s13, 2
        // Predicated region
        $region281: #{spatial_weight_forward.1} parent=279 // pred_check
          %p7744 = pneg %p234
        $region282: #{spatial_weight_forward.1} parent=279 // pred_check_branch
          %7746 = sbr.rel (%p7744) target = $region284
        $region283: #{spatial_weight_forward.1} parent=279 // pred_region
          %s7747 = sand.u32 %s219, 1
          %s7748 = sand.u32 %s219, 1
          %s7749 = smul.addr %s7748, 128
          %s7750 = scalar_lea.vmem [#allocation7], %s7749
        $region284: #{spatial_weight_forward.1} parent=279 // pred_fallthru
          _
      $region280: #{spatial_weight_forward.1} parent=5 // pred_fallthru
        _
    $region6: #{spatial_weight_forward.1} parent=1 // loop_footer
      %s17 = sadd.s32 1, %s13
    $region7: #{spatial_weight_forward.1} parent=1 // loop_footer_branch
      %12 = sbr.rel target = $region3
    $region8: #{spatial_weight_forward.1} parent=1 // loop_exit
      _

</llo_original>
